<compile_context>
chip_gen: v6e
topology: v6e:2x2x1
jax: 0.10.0
libtpu: 0.0.40
codegen_flags: <defaults>
</compile_context>

<pallas_src>
import functools
import math

import jax
import jax.numpy as jnp
from jax.experimental import pallas as pl
from jax.experimental.pallas import tpu as pltpu

HIDDEN = (500, 400, 300, 200, 100, 50)
LEAKY_SLOPE = 0.01
BN_EPS = 1e-5


def _round_up(n, m=128):
    return ((n + m - 1) // m) * m


# --------------------------------------------------------------------------
# Kernel
# --------------------------------------------------------------------------
def fc_classifier_kernel(*refs, num_layers, out_valid):
    """refs = (x, w_0 ... w_{num_layers-1}, slab, out).

    w_i are bf16 (MXU operands), slab is f32 with rows
    [b_0, gamma_0, beta_0, b_1, gamma_1, beta_1, ..., b_last],
    each row zero-padded to the widest (padded) layer width.
    """
    x_ref = refs[0]
    w_refs = refs[1:1 + num_layers]
    slab_ref = refs[1 + num_layers]
    out_ref = refs[2 + num_layers]

    slab = slab_ref[...]                      # (3*num_bn + 1, max_width) f32
    h = x_ref[...].astype(jnp.float32)        # (B, in_pad)
    inv_b = 1.0 / h.shape[0]                  # static

    num_bn = num_layers - 1
    for i in range(num_bn):
        w = w_refs[i][...]                    # (in_pad, out_pad) bf16
        n_out = w.shape[1]
        b     = slab[3 * i    : 3 * i + 1, :n_out]
        gamma = slab[3 * i + 1: 3 * i + 2, :n_out]
        beta  = slab[3 * i + 2: 3 * i + 3, :n_out]

        # Linear: bf16 operands on the MXU, f32 accumulation.
        h = jnp.dot(h.astype(jnp.bfloat16), w,
                    preferred_element_type=jnp.float32) + b
        # LeakyReLU(0.01)
        h = jnp.where(h >= 0, h, LEAKY_SLOPE * h)

        # BatchNorm1d (training mode, biased batch var), folded to scale/shift.
        mean = jnp.sum(h, axis=0, keepdims=True) * inv_b
        mean_sq = jnp.sum(h * h, axis=0, keepdims=True) * inv_b
        var = jnp.maximum(mean_sq - mean * mean, 0.0)
        scale = gamma * jax.lax.rsqrt(var + BN_EPS)   # padded gamma==0 -> scale 0
        shift = beta - mean * scale
        h = h * scale + shift

    # Final Linear.
    w_last = w_refs[num_bn][...]
    n_last = w_last.shape[1]
    b_last = slab[3 * num_bn: 3 * num_bn + 1, :n_last]
    logits = jnp.dot(h.astype(jnp.bfloat16), w_last,
                     preferred_element_type=jnp.float32) + b_last

    # Mask padded output columns, then LogSoftmax(dim=-1).
    col = jax.lax.broadcasted_iota(jnp.int32, logits.shape, 1)
    logits = jnp.where(col < out_valid, logits, jnp.float32(-1e30))

    m = jnp.max(logits, axis=-1, keepdims=True)
    shifted = logits - m
    lse = jnp.log(jnp.sum(jnp.exp(shifted), axis=-1, keepdims=True))
    out_ref[...] = (shifted - lse).astype(out_ref.dtype)


# --------------------------------------------------------------------------
# Parameters (logical, unpadded) and packing (padded, DMA-friendly)
# --------------------------------------------------------------------------
def init_params(key, input_size, output_size):
    """torch.nn.Linear default init U(-1/sqrt(fan_in), 1/sqrt(fan_in));
    BatchNorm gamma=1, beta=0.  Weights stored as [in, out] (x @ W + b)."""
    sizes = (input_size,) + HIDDEN + (output_size,)
    layers = []
    for i in range(len(sizes) - 1):
        fan_in, fan_out = sizes[i], sizes[i + 1]
        key, kw, kb = jax.random.split(key, 3)
        bound = 1.0 / math.sqrt(fan_in)
        w = jax.random.uniform(kw, (fan_in, fan_out), jnp.float32, -bound, bound)
        b = jax.random.uniform(kb, (fan_out,), jnp.float32, -bound, bound)
        if i < len(HIDDEN):
            layers.append(dict(w=w, b=b,
                               gamma=jnp.ones((fan_out,), jnp.float32),
                               beta=jnp.zeros((fan_out,), jnp.float32)))
        else:
            layers.append(dict(w=w, b=b))
    return layers


def pack_params(layers):
    """Zero-pad feature dims to multiples of 128, store weights as bf16 (MXU
    operand dtype -> half the HBM->VMEM bytes), and pack the per-layer small
    vectors into one f32 slab (9 lane-aligned kernel inputs total).  Padded
    gamma/beta/bias entries are 0, so padded features stay exactly 0."""
    num_bn = len(layers) - 1
    padded_ws = []
    max_out = 0
    for lyr in layers:
        fi, fo = lyr["w"].shape
        fi_p, fo_p = _round_up(fi), _round_up(fo)
        max_out = max(max_out, fo_p)
        w_pad = jnp.zeros((fi_p, fo_p), jnp.float32).at[:fi, :fo].set(lyr["w"])
        padded_ws.append(w_pad.astype(jnp.bfloat16))

    slab = jnp.zeros((3 * num_bn + 1, max_out), jnp.float32)
    for i, lyr in enumerate(layers[:-1]):
        fo = lyr["w"].shape[1]
        slab = slab.at[3 * i,     :fo].set(lyr["b"])
        slab = slab.at[3 * i + 1, :fo].set(lyr["gamma"])
        slab = slab.at[3 * i + 2, :fo].set(lyr["beta"])
    fo_last = layers[-1]["w"].shape[1]
    slab = slab.at[3 * num_bn, :fo_last].set(layers[-1]["b"])
    return tuple(padded_ws), slab


# --------------------------------------------------------------------------
# Wrapper
# --------------------------------------------------------------------------
@functools.partial(jax.jit, static_argnames=("output_size",))
def fc_classifier_forward(x, weights, slab, output_size):
    batch = x.shape[0]
    num_layers = len(weights)
    in_pad = weights[0].shape[0]
    out_pad = weights[-1].shape[1]

    x_pad = jnp.pad(x.astype(jnp.float32), ((0, 0), (0, in_pad - x.shape[1])))

    vmem = pl.BlockSpec(memory_space=pltpu.MemorySpace.VMEM)
    kernel = functools.partial(fc_classifier_kernel,
                               num_layers=num_layers, out_valid=output_size)

    out_padded = pl.pallas_call(
        kernel,
        out_shape=jax.ShapeDtypeStruct((batch, out_pad), jnp.float32),
        in_specs=[vmem] * (2 + num_layers),
        out_specs=vmem,
        compiler_params=pltpu.CompilerParams(vmem_limit_bytes=16 << 20),
    )(x_pad, *weights, slab)

    return out_padded[:, :output_size]


# --------------------------------------------------------------------------
# Pure-JAX reference (same bf16 MXU-operand convention) for validation
# --------------------------------------------------------------------------
def reference_forward(x, layers):
    h = x.astype(jnp.float32)
    for lyr in layers[:-1]:
        h = jnp.dot(h.astype(jnp.bfloat16), lyr["w"].astype(jnp.bfloat16),
                    preferred_element_type=jnp.float32) + lyr["b"]
        h = jnp.where(h >= 0, h, LEAKY_SLOPE * h)
        mean = jnp.mean(h, axis=0, keepdims=True)
        var = jnp.mean((h - mean) ** 2, axis=0, keepdims=True)   # biased var
        h = (h - mean) * jax.lax.rsqrt(var + BN_EPS) * lyr["gamma"] + lyr["beta"]
    logits = jnp.dot(h.astype(jnp.bfloat16), layers[-1]["w"].astype(jnp.bfloat16),
                     preferred_element_type=jnp.float32) + layers[-1]["b"]
    return jax.nn.log_softmax(logits, axis=-1)


if __name__ == "__main__":
    # Small, MNIST-flavored shapes; batch=128 so the MXU M-dimension is filled.
    batch, input_size, output_size = 128, 64, 10

    key = jax.random.PRNGKey(0)
    key_x, key_p = jax.random.split(key)
    x = jax.random.normal(key_x, (batch, input_size), jnp.float32)

    layers = init_params(key_p, input_size, output_size)
    weights, slab = pack_params(layers)

    y = fc_classifier_forward(x, weights, slab, output_size)
    y = jax.block_until_ready(y)

    assert y.shape == (batch, output_size)
    # log-softmax rows must (log-)sum to ~0
    assert jnp.allclose(jnp.sum(jnp.exp(y), axis=-1), 1.0, atol=1e-4)

    # Validate padding / packing / masking / bf16 weights against an unpadded reference.
    y_ref = reference_forward(x, layers)
    max_err = float(jnp.max(jnp.abs(y - y_ref)))
    assert max_err < 2e-2, f"max |err| vs reference = {max_err}"

    print("KERNEL_OK")
</pallas_src>

<mosaic_0001>
module attributes {stable_mosaic.version = 11 : i64} {
  func.func @fc_classifier_kernel(%arg0: memref<128x128xf32, #tpu.memory_space<vmem>>, %arg1: memref<128x512xbf16, #tpu.memory_space<vmem>>, %arg2: memref<512x512xbf16, #tpu.memory_space<vmem>>, %arg3: memref<512x384xbf16, #tpu.memory_space<vmem>>, %arg4: memref<384x256xbf16, #tpu.memory_space<vmem>>, %arg5: memref<256x128xbf16, #tpu.memory_space<vmem>>, %arg6: memref<128x128xbf16, #tpu.memory_space<vmem>>, %arg7: memref<128x128xbf16, #tpu.memory_space<vmem>>, %arg8: memref<19x512xf32, #tpu.memory_space<vmem>>, %arg9: memref<128x128xf32, #tpu.memory_space<vmem>>) attributes {dimension_semantics = [], scalar_prefetch = 0 : i64, scratch_operands = 0 : i64, tpu.core_type = #tpu.core_type<tc>} {
    %c0 = arith.constant 0 : index
    %c0_0 = arith.constant 0 : index
    %0 = vector.load %arg8[%c0, %c0_0] : memref<19x512xf32, #tpu.memory_space<vmem>>, vector<19x512xf32>
    %c0_1 = arith.constant 0 : index
    %c0_2 = arith.constant 0 : index
    %1 = vector.load %arg0[%c0_1, %c0_2] : memref<128x128xf32, #tpu.memory_space<vmem>>, vector<128x128xf32>
    %c0_3 = arith.constant 0 : index
    %c0_4 = arith.constant 0 : index
    %2 = vector.load %arg1[%c0_3, %c0_4] : memref<128x512xbf16, #tpu.memory_space<vmem>>, vector<128x512xbf16>
    %3 = vector.extract_strided_slice %0 {offsets = [0, 0], sizes = [1, 512], strides = [1, 1]} : vector<19x512xf32> to vector<1x512xf32>
    %4 = vector.extract_strided_slice %0 {offsets = [1, 0], sizes = [1, 512], strides = [1, 1]} : vector<19x512xf32> to vector<1x512xf32>
    %5 = vector.extract_strided_slice %0 {offsets = [2, 0], sizes = [1, 512], strides = [1, 1]} : vector<19x512xf32> to vector<1x512xf32>
    %6 = arith.truncf %1 : vector<128x128xf32> to vector<128x128xbf16>
    %cst = arith.constant dense<0.000000e+00> : vector<128x512xf32>
    %7 = tpu.matmul %6, %2, %cst {dimension_numbers = #tpu.dot_dimension_numbers<[1], [0], [0], [1], [0, 0, 1, 1], [], []>} : vector<128x128xbf16>, vector<128x512xbf16>, vector<128x512xf32> -> vector<128x512xf32>
    %8 = vector.broadcast %3 : vector<1x512xf32> to vector<128x512xf32>
    %9 = arith.addf %7, %8 : vector<128x512xf32>
    %cst_5 = arith.constant 0.000000e+00 : f32
    %10 = vector.broadcast %cst_5 : f32 to vector<128x512xf32>
    %11 = arith.cmpf oge, %9, %10 : vector<128x512xf32>
    %cst_6 = arith.constant 0.00999999977 : f32
    %12 = vector.broadcast %cst_6 : f32 to vector<128x512xf32>
    %13 = arith.mulf %12, %9 : vector<128x512xf32>
    %14 = arith.select %11, %9, %13 : vector<128x512xi1>, vector<128x512xf32>
    %cst_7 = arith.constant dense<0.000000e+00> : vector<512xf32>
    %15 = vector.multi_reduction <add>, %14, %cst_7 [0] : vector<128x512xf32> to vector<512xf32>
    %16 = vector.shape_cast %15 : vector<512xf32> to vector<1x512xf32>
    %cst_8 = arith.constant 7.812500e-03 : f32
    %17 = vector.broadcast %cst_8 : f32 to vector<1x512xf32>
    %18 = arith.mulf %16, %17 : vector<1x512xf32>
    %19 = arith.mulf %14, %14 : vector<128x512xf32>
    %cst_9 = arith.constant dense<0.000000e+00> : vector<512xf32>
    %20 = vector.multi_reduction <add>, %19, %cst_9 [0] : vector<128x512xf32> to vector<512xf32>
    %21 = vector.shape_cast %20 : vector<512xf32> to vector<1x512xf32>
    %cst_10 = arith.constant 7.812500e-03 : f32
    %22 = vector.broadcast %cst_10 : f32 to vector<1x512xf32>
    %23 = arith.mulf %21, %22 : vector<1x512xf32>
    %24 = arith.mulf %18, %18 : vector<1x512xf32>
    %25 = arith.subf %23, %24 : vector<1x512xf32>
    %cst_11 = arith.constant 0.000000e+00 : f32
    %26 = vector.broadcast %cst_11 : f32 to vector<1x512xf32>
    %27 = arith.maximumf %25, %26 : vector<1x512xf32>
    %cst_12 = arith.constant 9.99999974E-6 : f32
    %28 = vector.broadcast %cst_12 : f32 to vector<1x512xf32>
    %29 = arith.addf %27, %28 : vector<1x512xf32>
    %30 = math.rsqrt %29 : vector<1x512xf32>
    %31 = arith.mulf %4, %30 : vector<1x512xf32>
    %32 = arith.mulf %18, %31 : vector<1x512xf32>
    %33 = arith.subf %5, %32 : vector<1x512xf32>
    %34 = vector.broadcast %31 : vector<1x512xf32> to vector<128x512xf32>
    %35 = arith.mulf %14, %34 : vector<128x512xf32>
    %36 = vector.broadcast %33 : vector<1x512xf32> to vector<128x512xf32>
    %37 = arith.addf %35, %36 : vector<128x512xf32>
    %c0_13 = arith.constant 0 : index
    %c0_14 = arith.constant 0 : index
    %38 = vector.load %arg2[%c0_13, %c0_14] : memref<512x512xbf16, #tpu.memory_space<vmem>>, vector<512x512xbf16>
    %39 = vector.extract_strided_slice %0 {offsets = [3, 0], sizes = [1, 512], strides = [1, 1]} : vector<19x512xf32> to vector<1x512xf32>
    %40 = vector.extract_strided_slice %0 {offsets = [4, 0], sizes = [1, 512], strides = [1, 1]} : vector<19x512xf32> to vector<1x512xf32>
    %41 = vector.extract_strided_slice %0 {offsets = [5, 0], sizes = [1, 512], strides = [1, 1]} : vector<19x512xf32> to vector<1x512xf32>
    %42 = arith.truncf %37 : vector<128x512xf32> to vector<128x512xbf16>
    %cst_15 = arith.constant dense<0.000000e+00> : vector<128x512xf32>
    %43 = tpu.matmul %42, %38, %cst_15 {dimension_numbers = #tpu.dot_dimension_numbers<[1], [0], [0], [1], [0, 0, 1, 1], [], []>} : vector<128x512xbf16>, vector<512x512xbf16>, vector<128x512xf32> -> vector<128x512xf32>
    %44 = vector.broadcast %39 : vector<1x512xf32> to vector<128x512xf32>
    %45 = arith.addf %43, %44 : vector<128x512xf32>
    %cst_16 = arith.constant 0.000000e+00 : f32
    %46 = vector.broadcast %cst_16 : f32 to vector<128x512xf32>
    %47 = arith.cmpf oge, %45, %46 : vector<128x512xf32>
    %cst_17 = arith.constant 0.00999999977 : f32
    %48 = vector.broadcast %cst_17 : f32 to vector<128x512xf32>
    %49 = arith.mulf %48, %45 : vector<128x512xf32>
    %50 = arith.select %47, %45, %49 : vector<128x512xi1>, vector<128x512xf32>
    %cst_18 = arith.constant dense<0.000000e+00> : vector<512xf32>
    %51 = vector.multi_reduction <add>, %50, %cst_18 [0] : vector<128x512xf32> to vector<512xf32>
    %52 = vector.shape_cast %51 : vector<512xf32> to vector<1x512xf32>
    %cst_19 = arith.constant 7.812500e-03 : f32
    %53 = vector.broadcast %cst_19 : f32 to vector<1x512xf32>
    %54 = arith.mulf %52, %53 : vector<1x512xf32>
    %55 = arith.mulf %50, %50 : vector<128x512xf32>
    %cst_20 = arith.constant dense<0.000000e+00> : vector<512xf32>
    %56 = vector.multi_reduction <add>, %55, %cst_20 [0] : vector<128x512xf32> to vector<512xf32>
    %57 = vector.shape_cast %56 : vector<512xf32> to vector<1x512xf32>
    %cst_21 = arith.constant 7.812500e-03 : f32
    %58 = vector.broadcast %cst_21 : f32 to vector<1x512xf32>
    %59 = arith.mulf %57, %58 : vector<1x512xf32>
    %60 = arith.mulf %54, %54 : vector<1x512xf32>
    %61 = arith.subf %59, %60 : vector<1x512xf32>
    %cst_22 = arith.constant 0.000000e+00 : f32
    %62 = vector.broadcast %cst_22 : f32 to vector<1x512xf32>
    %63 = arith.maximumf %61, %62 : vector<1x512xf32>
    %cst_23 = arith.constant 9.99999974E-6 : f32
    %64 = vector.broadcast %cst_23 : f32 to vector<1x512xf32>
    %65 = arith.addf %63, %64 : vector<1x512xf32>
    %66 = math.rsqrt %65 : vector<1x512xf32>
    %67 = arith.mulf %40, %66 : vector<1x512xf32>
    %68 = arith.mulf %54, %67 : vector<1x512xf32>
    %69 = arith.subf %41, %68 : vector<1x512xf32>
    %70 = vector.broadcast %67 : vector<1x512xf32> to vector<128x512xf32>
    %71 = arith.mulf %50, %70 : vector<128x512xf32>
    %72 = vector.broadcast %69 : vector<1x512xf32> to vector<128x512xf32>
    %73 = arith.addf %71, %72 : vector<128x512xf32>
    %c0_24 = arith.constant 0 : index
    %c0_25 = arith.constant 0 : index
    %74 = vector.load %arg3[%c0_24, %c0_25] : memref<512x384xbf16, #tpu.memory_space<vmem>>, vector<512x384xbf16>
    %75 = vector.extract_strided_slice %0 {offsets = [6, 0], sizes = [1, 384], strides = [1, 1]} : vector<19x512xf32> to vector<1x384xf32>
    %76 = vector.extract_strided_slice %0 {offsets = [7, 0], sizes = [1, 384], strides = [1, 1]} : vector<19x512xf32> to vector<1x384xf32>
    %77 = vector.extract_strided_slice %0 {offsets = [8, 0], sizes = [1, 384], strides = [1, 1]} : vector<19x512xf32> to vector<1x384xf32>
    %78 = arith.truncf %73 : vector<128x512xf32> to vector<128x512xbf16>
    %cst_26 = arith.constant dense<0.000000e+00> : vector<128x384xf32>
    %79 = tpu.matmul %78, %74, %cst_26 {dimension_numbers = #tpu.dot_dimension_numbers<[1], [0], [0], [1], [0, 0, 1, 1], [], []>} : vector<128x512xbf16>, vector<512x384xbf16>, vector<128x384xf32> -> vector<128x384xf32>
    %80 = vector.broadcast %75 : vector<1x384xf32> to vector<128x384xf32>
    %81 = arith.addf %79, %80 : vector<128x384xf32>
    %cst_27 = arith.constant 0.000000e+00 : f32
    %82 = vector.broadcast %cst_27 : f32 to vector<128x384xf32>
    %83 = arith.cmpf oge, %81, %82 : vector<128x384xf32>
    %cst_28 = arith.constant 0.00999999977 : f32
    %84 = vector.broadcast %cst_28 : f32 to vector<128x384xf32>
    %85 = arith.mulf %84, %81 : vector<128x384xf32>
    %86 = arith.select %83, %81, %85 : vector<128x384xi1>, vector<128x384xf32>
    %cst_29 = arith.constant dense<0.000000e+00> : vector<384xf32>
    %87 = vector.multi_reduction <add>, %86, %cst_29 [0] : vector<128x384xf32> to vector<384xf32>
    %88 = vector.shape_cast %87 : vector<384xf32> to vector<1x384xf32>
    %cst_30 = arith.constant 7.812500e-03 : f32
    %89 = vector.broadcast %cst_30 : f32 to vector<1x384xf32>
    %90 = arith.mulf %88, %89 : vector<1x384xf32>
    %91 = arith.mulf %86, %86 : vector<128x384xf32>
    %cst_31 = arith.constant dense<0.000000e+00> : vector<384xf32>
    %92 = vector.multi_reduction <add>, %91, %cst_31 [0] : vector<128x384xf32> to vector<384xf32>
    %93 = vector.shape_cast %92 : vector<384xf32> to vector<1x384xf32>
    %cst_32 = arith.constant 7.812500e-03 : f32
    %94 = vector.broadcast %cst_32 : f32 to vector<1x384xf32>
    %95 = arith.mulf %93, %94 : vector<1x384xf32>
    %96 = arith.mulf %90, %90 : vector<1x384xf32>
    %97 = arith.subf %95, %96 : vector<1x384xf32>
    %cst_33 = arith.constant 0.000000e+00 : f32
    %98 = vector.broadcast %cst_33 : f32 to vector<1x384xf32>
    %99 = arith.maximumf %97, %98 : vector<1x384xf32>
    %cst_34 = arith.constant 9.99999974E-6 : f32
    %100 = vector.broadcast %cst_34 : f32 to vector<1x384xf32>
    %101 = arith.addf %99, %100 : vector<1x384xf32>
    %102 = math.rsqrt %101 : vector<1x384xf32>
    %103 = arith.mulf %76, %102 : vector<1x384xf32>
    %104 = arith.mulf %90, %103 : vector<1x384xf32>
    %105 = arith.subf %77, %104 : vector<1x384xf32>
    %106 = vector.broadcast %103 : vector<1x384xf32> to vector<128x384xf32>
    %107 = arith.mulf %86, %106 : vector<128x384xf32>
    %108 = vector.broadcast %105 : vector<1x384xf32> to vector<128x384xf32>
    %109 = arith.addf %107, %108 : vector<128x384xf32>
    %c0_35 = arith.constant 0 : index
    %c0_36 = arith.constant 0 : index
    %110 = vector.load %arg4[%c0_35, %c0_36] : memref<384x256xbf16, #tpu.memory_space<vmem>>, vector<384x256xbf16>
    %111 = vector.extract_strided_slice %0 {offsets = [9, 0], sizes = [1, 256], strides = [1, 1]} : vector<19x512xf32> to vector<1x256xf32>
    %112 = vector.extract_strided_slice %0 {offsets = [10, 0], sizes = [1, 256], strides = [1, 1]} : vector<19x512xf32> to vector<1x256xf32>
    %113 = vector.extract_strided_slice %0 {offsets = [11, 0], sizes = [1, 256], strides = [1, 1]} : vector<19x512xf32> to vector<1x256xf32>
    %114 = arith.truncf %109 : vector<128x384xf32> to vector<128x384xbf16>
    %cst_37 = arith.constant dense<0.000000e+00> : vector<128x256xf32>
    %115 = tpu.matmul %114, %110, %cst_37 {dimension_numbers = #tpu.dot_dimension_numbers<[1], [0], [0], [1], [0, 0, 1, 1], [], []>} : vector<128x384xbf16>, vector<384x256xbf16>, vector<128x256xf32> -> vector<128x256xf32>
    %116 = vector.broadcast %111 : vector<1x256xf32> to vector<128x256xf32>
    %117 = arith.addf %115, %116 : vector<128x256xf32>
    %cst_38 = arith.constant 0.000000e+00 : f32
    %118 = vector.broadcast %cst_38 : f32 to vector<128x256xf32>
    %119 = arith.cmpf oge, %117, %118 : vector<128x256xf32>
    %cst_39 = arith.constant 0.00999999977 : f32
    %120 = vector.broadcast %cst_39 : f32 to vector<128x256xf32>
    %121 = arith.mulf %120, %117 : vector<128x256xf32>
    %122 = arith.select %119, %117, %121 : vector<128x256xi1>, vector<128x256xf32>
    %cst_40 = arith.constant dense<0.000000e+00> : vector<256xf32>
    %123 = vector.multi_reduction <add>, %122, %cst_40 [0] : vector<128x256xf32> to vector<256xf32>
    %124 = vector.shape_cast %123 : vector<256xf32> to vector<1x256xf32>
    %cst_41 = arith.constant 7.812500e-03 : f32
    %125 = vector.broadcast %cst_41 : f32 to vector<1x256xf32>
    %126 = arith.mulf %124, %125 : vector<1x256xf32>
    %127 = arith.mulf %122, %122 : vector<128x256xf32>
    %cst_42 = arith.constant dense<0.000000e+00> : vector<256xf32>
    %128 = vector.multi_reduction <add>, %127, %cst_42 [0] : vector<128x256xf32> to vector<256xf32>
    %129 = vector.shape_cast %128 : vector<256xf32> to vector<1x256xf32>
    %cst_43 = arith.constant 7.812500e-03 : f32
    %130 = vector.broadcast %cst_43 : f32 to vector<1x256xf32>
    %131 = arith.mulf %129, %130 : vector<1x256xf32>
    %132 = arith.mulf %126, %126 : vector<1x256xf32>
    %133 = arith.subf %131, %132 : vector<1x256xf32>
    %cst_44 = arith.constant 0.000000e+00 : f32
    %134 = vector.broadcast %cst_44 : f32 to vector<1x256xf32>
    %135 = arith.maximumf %133, %134 : vector<1x256xf32>
    %cst_45 = arith.constant 9.99999974E-6 : f32
    %136 = vector.broadcast %cst_45 : f32 to vector<1x256xf32>
    %137 = arith.addf %135, %136 : vector<1x256xf32>
    %138 = math.rsqrt %137 : vector<1x256xf32>
    %139 = arith.mulf %112, %138 : vector<1x256xf32>
    %140 = arith.mulf %126, %139 : vector<1x256xf32>
    %141 = arith.subf %113, %140 : vector<1x256xf32>
    %142 = vector.broadcast %139 : vector<1x256xf32> to vector<128x256xf32>
    %143 = arith.mulf %122, %142 : vector<128x256xf32>
    %144 = vector.broadcast %141 : vector<1x256xf32> to vector<128x256xf32>
    %145 = arith.addf %143, %144 : vector<128x256xf32>
    %c0_46 = arith.constant 0 : index
    %c0_47 = arith.constant 0 : index
    %146 = vector.load %arg5[%c0_46, %c0_47] : memref<256x128xbf16, #tpu.memory_space<vmem>>, vector<256x128xbf16>
    %147 = vector.extract_strided_slice %0 {offsets = [12, 0], sizes = [1, 128], strides = [1, 1]} : vector<19x512xf32> to vector<1x128xf32>
    %148 = vector.extract_strided_slice %0 {offsets = [13, 0], sizes = [1, 128], strides = [1, 1]} : vector<19x512xf32> to vector<1x128xf32>
    %149 = vector.extract_strided_slice %0 {offsets = [14, 0], sizes = [1, 128], strides = [1, 1]} : vector<19x512xf32> to vector<1x128xf32>
    %150 = arith.truncf %145 : vector<128x256xf32> to vector<128x256xbf16>
    %cst_48 = arith.constant dense<0.000000e+00> : vector<128x128xf32>
    %151 = tpu.matmul %150, %146, %cst_48 {dimension_numbers = #tpu.dot_dimension_numbers<[1], [0], [0], [1], [0, 0, 1, 1], [], []>} : vector<128x256xbf16>, vector<256x128xbf16>, vector<128x128xf32> -> vector<128x128xf32>
    %152 = vector.broadcast %147 : vector<1x128xf32> to vector<128x128xf32>
    %153 = arith.addf %151, %152 : vector<128x128xf32>
    %cst_49 = arith.constant 0.000000e+00 : f32
    %154 = vector.broadcast %cst_49 : f32 to vector<128x128xf32>
    %155 = arith.cmpf oge, %153, %154 : vector<128x128xf32>
    %cst_50 = arith.constant 0.00999999977 : f32
    %156 = vector.broadcast %cst_50 : f32 to vector<128x128xf32>
    %157 = arith.mulf %156, %153 : vector<128x128xf32>
    %158 = arith.select %155, %153, %157 : vector<128x128xi1>, vector<128x128xf32>
    %cst_51 = arith.constant dense<0.000000e+00> : vector<128xf32>
    %159 = vector.multi_reduction <add>, %158, %cst_51 [0] : vector<128x128xf32> to vector<128xf32>
    %160 = vector.shape_cast %159 : vector<128xf32> to vector<1x128xf32>
    %cst_52 = arith.constant 7.812500e-03 : f32
    %161 = vector.broadcast %cst_52 : f32 to vector<1x128xf32>
    %162 = arith.mulf %160, %161 : vector<1x128xf32>
    %163 = arith.mulf %158, %158 : vector<128x128xf32>
    %cst_53 = arith.constant dense<0.000000e+00> : vector<128xf32>
    %164 = vector.multi_reduction <add>, %163, %cst_53 [0] : vector<128x128xf32> to vector<128xf32>
    %165 = vector.shape_cast %164 : vector<128xf32> to vector<1x128xf32>
    %cst_54 = arith.constant 7.812500e-03 : f32
    %166 = vector.broadcast %cst_54 : f32 to vector<1x128xf32>
    %167 = arith.mulf %165, %166 : vector<1x128xf32>
    %168 = arith.mulf %162, %162 : vector<1x128xf32>
    %169 = arith.subf %167, %168 : vector<1x128xf32>
    %cst_55 = arith.constant 0.000000e+00 : f32
    %170 = vector.broadcast %cst_55 : f32 to vector<1x128xf32>
    %171 = arith.maximumf %169, %170 : vector<1x128xf32>
    %cst_56 = arith.constant 9.99999974E-6 : f32
    %172 = vector.broadcast %cst_56 : f32 to vector<1x128xf32>
    %173 = arith.addf %171, %172 : vector<1x128xf32>
    %174 = math.rsqrt %173 : vector<1x128xf32>
    %175 = arith.mulf %148, %174 : vector<1x128xf32>
    %176 = arith.mulf %162, %175 : vector<1x128xf32>
    %177 = arith.subf %149, %176 : vector<1x128xf32>
    %178 = vector.broadcast %175 : vector<1x128xf32> to vector<128x128xf32>
    %179 = arith.mulf %158, %178 : vector<128x128xf32>
    %180 = vector.broadcast %177 : vector<1x128xf32> to vector<128x128xf32>
    %181 = arith.addf %179, %180 : vector<128x128xf32>
    %c0_57 = arith.constant 0 : index
    %c0_58 = arith.constant 0 : index
    %182 = vector.load %arg6[%c0_57, %c0_58] : memref<128x128xbf16, #tpu.memory_space<vmem>>, vector<128x128xbf16>
    %183 = vector.extract_strided_slice %0 {offsets = [15, 0], sizes = [1, 128], strides = [1, 1]} : vector<19x512xf32> to vector<1x128xf32>
    %184 = vector.extract_strided_slice %0 {offsets = [16, 0], sizes = [1, 128], strides = [1, 1]} : vector<19x512xf32> to vector<1x128xf32>
    %185 = vector.extract_strided_slice %0 {offsets = [17, 0], sizes = [1, 128], strides = [1, 1]} : vector<19x512xf32> to vector<1x128xf32>
    %186 = arith.truncf %181 : vector<128x128xf32> to vector<128x128xbf16>
    %cst_59 = arith.constant dense<0.000000e+00> : vector<128x128xf32>
    %187 = tpu.matmul %186, %182, %cst_59 {dimension_numbers = #tpu.dot_dimension_numbers<[1], [0], [0], [1], [0, 0, 1, 1], [], []>} : vector<128x128xbf16>, vector<128x128xbf16>, vector<128x128xf32> -> vector<128x128xf32>
    %188 = vector.broadcast %183 : vector<1x128xf32> to vector<128x128xf32>
    %189 = arith.addf %187, %188 : vector<128x128xf32>
    %cst_60 = arith.constant 0.000000e+00 : f32
    %190 = vector.broadcast %cst_60 : f32 to vector<128x128xf32>
    %191 = arith.cmpf oge, %189, %190 : vector<128x128xf32>
    %cst_61 = arith.constant 0.00999999977 : f32
    %192 = vector.broadcast %cst_61 : f32 to vector<128x128xf32>
    %193 = arith.mulf %192, %189 : vector<128x128xf32>
    %194 = arith.select %191, %189, %193 : vector<128x128xi1>, vector<128x128xf32>
    %cst_62 = arith.constant dense<0.000000e+00> : vector<128xf32>
    %195 = vector.multi_reduction <add>, %194, %cst_62 [0] : vector<128x128xf32> to vector<128xf32>
    %196 = vector.shape_cast %195 : vector<128xf32> to vector<1x128xf32>
    %cst_63 = arith.constant 7.812500e-03 : f32
    %197 = vector.broadcast %cst_63 : f32 to vector<1x128xf32>
    %198 = arith.mulf %196, %197 : vector<1x128xf32>
    %199 = arith.mulf %194, %194 : vector<128x128xf32>
    %cst_64 = arith.constant dense<0.000000e+00> : vector<128xf32>
    %200 = vector.multi_reduction <add>, %199, %cst_64 [0] : vector<128x128xf32> to vector<128xf32>
    %201 = vector.shape_cast %200 : vector<128xf32> to vector<1x128xf32>
    %cst_65 = arith.constant 7.812500e-03 : f32
    %202 = vector.broadcast %cst_65 : f32 to vector<1x128xf32>
    %203 = arith.mulf %201, %202 : vector<1x128xf32>
    %204 = arith.mulf %198, %198 : vector<1x128xf32>
    %205 = arith.subf %203, %204 : vector<1x128xf32>
    %cst_66 = arith.constant 0.000000e+00 : f32
    %206 = vector.broadcast %cst_66 : f32 to vector<1x128xf32>
    %207 = arith.maximumf %205, %206 : vector<1x128xf32>
    %cst_67 = arith.constant 9.99999974E-6 : f32
    %208 = vector.broadcast %cst_67 : f32 to vector<1x128xf32>
    %209 = arith.addf %207, %208 : vector<1x128xf32>
    %210 = math.rsqrt %209 : vector<1x128xf32>
    %211 = arith.mulf %184, %210 : vector<1x128xf32>
    %212 = arith.mulf %198, %211 : vector<1x128xf32>
    %213 = arith.subf %185, %212 : vector<1x128xf32>
    %214 = vector.broadcast %211 : vector<1x128xf32> to vector<128x128xf32>
    %215 = arith.mulf %194, %214 : vector<128x128xf32>
    %216 = vector.broadcast %213 : vector<1x128xf32> to vector<128x128xf32>
    %217 = arith.addf %215, %216 : vector<128x128xf32>
    %c0_68 = arith.constant 0 : index
    %c0_69 = arith.constant 0 : index
    %218 = vector.load %arg7[%c0_68, %c0_69] : memref<128x128xbf16, #tpu.memory_space<vmem>>, vector<128x128xbf16>
    %219 = vector.extract_strided_slice %0 {offsets = [18, 0], sizes = [1, 128], strides = [1, 1]} : vector<19x512xf32> to vector<1x128xf32>
    %220 = arith.truncf %217 : vector<128x128xf32> to vector<128x128xbf16>
    %cst_70 = arith.constant dense<0.000000e+00> : vector<128x128xf32>
    %221 = tpu.matmul %220, %218, %cst_70 {dimension_numbers = #tpu.dot_dimension_numbers<[1], [0], [0], [1], [0, 0, 1, 1], [], []>} : vector<128x128xbf16>, vector<128x128xbf16>, vector<128x128xf32> -> vector<128x128xf32>
    %222 = vector.broadcast %219 : vector<1x128xf32> to vector<128x128xf32>
    %223 = arith.addf %221, %222 : vector<128x128xf32>
    %224 = tpu.iota {dimensions = array<i32: 1>} : vector<128x128xi32>
    %c10_i32 = arith.constant 10 : i32
    %225 = vector.broadcast %c10_i32 : i32 to vector<128x128xi32>
    %226 = arith.cmpi slt, %224, %225 : vector<128x128xi32>
    %cst_71 = arith.constant -1.000000e+30 : f32
    %227 = vector.broadcast %cst_71 : f32 to vector<128x128xf32>
    %228 = arith.select %226, %223, %227 : vector<128x128xi1>, vector<128x128xf32>
    %cst_72 = arith.constant dense<0xFF800000> : vector<128xf32>
    %229 = vector.multi_reduction <maximumf>, %228, %cst_72 [1] : vector<128x128xf32> to vector<128xf32>
    %230 = vector.shape_cast %229 : vector<128xf32> to vector<128x1xf32>
    %231 = vector.broadcast %230 : vector<128x1xf32> to vector<128x128xf32>
    %232 = arith.subf %228, %231 : vector<128x128xf32>
    %233 = math.exp %232 : vector<128x128xf32>
    %cst_73 = arith.constant dense<0.000000e+00> : vector<128xf32>
    %234 = vector.multi_reduction <add>, %233, %cst_73 [1] : vector<128x128xf32> to vector<128xf32>
    %235 = vector.shape_cast %234 : vector<128xf32> to vector<128x1xf32>
    %236 = math.log %235 : vector<128x1xf32>
    %237 = vector.broadcast %236 : vector<128x1xf32> to vector<128x128xf32>
    %238 = arith.subf %232, %237 : vector<128x128xf32>
    %c0_74 = arith.constant 0 : index
    %c0_75 = arith.constant 0 : index
    %239 = vector.load %arg9[%c0_74, %c0_75] : memref<128x128xf32, #tpu.memory_space<vmem>>, vector<128x128xf32>
    tpu.vector_store %arg9[%c0_74, %c0_75], %238 {strides = array<i32>} : memref<128x128xf32, #tpu.memory_space<vmem>>, vector<128x128xf32>,
    return
  }
}

</mosaic_0001>

<llo_original>
// kernel: fc_classifier_forward.1
$region0: #{fc_classifier_forward.1}
  #allocation0 [shape = 'u32[]', space=smem, size = 0x4, offset = 0x4, fixed_abs, tag = 'smem constant byte address 0x4 - core index']
  #allocation1 [shape = 'u32[144,128]{1,0:T(1,128)}', space=vmem, size = 0x12000, scoped, tag = 'internal scratch']
  %s0 = inlined_call_operand.vmem [shape: f32[128,128], index: 0, kind: input, shape index: {}]
  %s1 = inlined_call_operand.hbm [shape: bf16[128,512], index: 1, kind: input, shape index: {}]
  %s2 = inlined_call_operand.hbm [shape: bf16[512,512], index: 2, kind: input, shape index: {}]
  %s3 = inlined_call_operand.hbm [shape: bf16[512,384], index: 3, kind: input, shape index: {}]
  %s4 = inlined_call_operand.vmem [shape: bf16[384,256], index: 4, kind: input, shape index: {}]
  %s5 = inlined_call_operand.hbm [shape: bf16[256,128], index: 5, kind: input, shape index: {}]
  %s6 = inlined_call_operand.vmem [shape: bf16[128,128], index: 6, kind: input, shape index: {}]
  %s7 = inlined_call_operand.hbm [shape: bf16[128,128], index: 7, kind: input, shape index: {}]
  %s8 = inlined_call_operand.hbm [shape: f32[19,512], index: 8, kind: input, shape index: {}]
  %s9 = inlined_call_operand.vmem [shape: f32[128,128], index: 9, kind: output, shape index: {}]
  %s10 = sld [smem:[#allocation0]]
  $region70: #{fc_classifier_forward.1} parent=0
    _
  %s12 = ssub.s32 1, %s10
  %s13 = scalar_select 0, %s12, %s10
  $region1: #{fc_classifier_forward.1} parent=0
    #allocation2 [shape = 'u8[131072]{0}', space=vmem, size = 0x20000, scoped, tag = 'input window, operand 1, single buffered']
    #allocation3 [shape = 's32[1]{0}', space=sflag, size = 0x4, scoped, tag = 'scoped memory for fc_classifier_forward.1']
    #allocation4 [shape = 'u8[524288]{0}', space=vmem, size = 0x80000, scoped, tag = 'input window, operand 2, single buffered']
    #allocation5 [shape = 's32[1]{0}', space=sflag, size = 0x4, scoped, tag = 'scoped memory for fc_classifier_forward.1']
    #allocation6 [shape = 'u8[393216]{0}', space=vmem, size = 0x60000, scoped, tag = 'input window, operand 3, single buffered']
    #allocation7 [shape = 'u8[65536]{0}', space=vmem, size = 0x10000, scoped, tag = 'input window, operand 5, single buffered']
    #allocation8 [shape = 's32[1]{0}', space=sflag, size = 0x4, scoped, tag = 'scoped memory for fc_classifier_forward.1']
    #allocation9 [shape = 'u8[32768]{0}', space=vmem, size = 0x8000, scoped, tag = 'input window, operand 7, single buffered']
    #allocation10 [shape = 'u8[49152]{0}', space=vmem, size = 0xc000, scoped, tag = 'input window, operand 8, single buffered']
    #allocation11 [shape = 's32[1]{0}', space=sflag, size = 0x4, scoped, tag = 'scoped memory for fc_classifier_forward.1']
    %14 = vsyncpa [#allocation3], 0
    %15 = vsyncpa [#allocation5], 0
    %16 = vsyncpa [#allocation8], 0
    %17 = vsyncpa [#allocation11], 0
    // Predicated region
    $region2: #{fc_classifier_forward.1} parent=1 // pred_check
      _
    $region3: #{fc_classifier_forward.1} parent=1 // pred_check_branch
      %19 = sbr.rel (0) target = $region5
    $region4: #{fc_classifier_forward.1} parent=1 // pred_region
      _
    $region5: #{fc_classifier_forward.1} parent=1 // pred_fallthru
      _
    // Predicated region
    $region6: #{fc_classifier_forward.1} parent=1 // pred_check
      _
    $region7: #{fc_classifier_forward.1} parent=1 // pred_check_branch
      %21 = sbr.rel (0) target = $region9
    $region8: #{fc_classifier_forward.1} parent=1 // pred_region
      %s23 = ssub.s32 4096, 4096
      %24 = vsyncadd [#allocation3], %s23
      %s25 = sshll.u32 [#allocation2], 4
      %s26 = int_to_ptr.vmem [resolvable:$true] %s25
      %31 = dma.hbm_to_vmem [thread:$0]  %s1, 4096, %s26, [#allocation3], 256, 256, 16
    $region9: #{fc_classifier_forward.1} parent=1 // pred_fallthru
      _
    // Predicated region
    $region10: #{fc_classifier_forward.1} parent=1 // pred_check
      _
    $region11: #{fc_classifier_forward.1} parent=1 // pred_check_branch
      %33 = sbr.rel (0) target = $region13
    $region12: #{fc_classifier_forward.1} parent=1 // pred_region
      %s35 = ssub.s32 16384, 16384
      %36 = vsyncadd [#allocation5], %s35
      %s37 = sshll.u32 [#allocation4], 4
      %s38 = int_to_ptr.vmem [resolvable:$true] %s37
      %43 = dma.hbm_to_vmem [thread:$0]  %s2, 16384, %s38, [#allocation5], 256, 256, 16
    $region13: #{fc_classifier_forward.1} parent=1 // pred_fallthru
      _
    // Predicated region
    $region14: #{fc_classifier_forward.1} parent=1 // pred_check
      _
    $region15: #{fc_classifier_forward.1} parent=1 // pred_check_branch
      %45 = sbr.rel (0) target = $region17
    $region16: #{fc_classifier_forward.1} parent=1 // pred_region
      %s47 = ssub.s32 12288, 12288
      %48 = vsyncadd [#allocation5], %s47
      %s49 = sshll.u32 [#allocation6], 4
      %s50 = int_to_ptr.vmem [resolvable:$true] %s49
      %55 = dma.hbm_to_vmem [thread:$0]  %s3, 12288, %s50, [#allocation5], 192, 192, 12
    $region17: #{fc_classifier_forward.1} parent=1 // pred_fallthru
      _
    // Predicated region
    $region18: #{fc_classifier_forward.1} parent=1 // pred_check
      _
    $region19: #{fc_classifier_forward.1} parent=1 // pred_check_branch
      %57 = sbr.rel (0) target = $region21
    $region20: #{fc_classifier_forward.1} parent=1 // pred_region
      _
    $region21: #{fc_classifier_forward.1} parent=1 // pred_fallthru
      _
    // Predicated region
    $region22: #{fc_classifier_forward.1} parent=1 // pred_check
      _
    $region23: #{fc_classifier_forward.1} parent=1 // pred_check_branch
      %59 = sbr.rel (0) target = $region25
    $region24: #{fc_classifier_forward.1} parent=1 // pred_region
      %s61 = ssub.s32 2048, 2048
      %62 = vsyncadd [#allocation8], %s61
      %s63 = sshll.u32 [#allocation7], 4
      %s64 = int_to_ptr.vmem [resolvable:$true] %s63
      %69 = dma.hbm_to_vmem [thread:$0]  %s5, 2048, %s64, [#allocation8], 64, 64, 4
    $region25: #{fc_classifier_forward.1} parent=1 // pred_fallthru
      _
    // Predicated region
    $region26: #{fc_classifier_forward.1} parent=1 // pred_check
      _
    $region27: #{fc_classifier_forward.1} parent=1 // pred_check_branch
      %71 = sbr.rel (0) target = $region29
    $region28: #{fc_classifier_forward.1} parent=1 // pred_region
      _
    $region29: #{fc_classifier_forward.1} parent=1 // pred_fallthru
      _
    // Predicated region
    $region30: #{fc_classifier_forward.1} parent=1 // pred_check
      _
    $region31: #{fc_classifier_forward.1} parent=1 // pred_check_branch
      %73 = sbr.rel (0) target = $region33
    $region32: #{fc_classifier_forward.1} parent=1 // pred_region
      %s75 = ssub.s32 1024, 1024
      %76 = vsyncadd [#allocation8], %s75
      %s77 = sshll.u32 [#allocation9], 4
      %s78 = int_to_ptr.vmem [resolvable:$true] %s77
      %83 = dma.hbm_to_vmem [thread:$0]  %s7, 1024, %s78, [#allocation8], 64, 64, 4
    $region33: #{fc_classifier_forward.1} parent=1 // pred_fallthru
      _
    // Predicated region
    $region34: #{fc_classifier_forward.1} parent=1 // pred_check
      _
    $region35: #{fc_classifier_forward.1} parent=1 // pred_check_branch
      %85 = sbr.rel (0) target = $region37
    $region36: #{fc_classifier_forward.1} parent=1 // pred_region
      %s87 = ssub.s32 1536, 1536
      %88 = vsyncadd [#allocation11], %s87
      %s89 = sshll.u32 [#allocation10], 4
      %s90 = int_to_ptr.vmem [resolvable:$true] %s89
      %95 = dma.hbm_to_vmem [thread:$0]  %s8, 1536, %s90, [#allocation11], 512, 512, 32
    $region37: #{fc_classifier_forward.1} parent=1 // pred_fallthru
      _
    // Predicated region
    $region38: #{fc_classifier_forward.1} parent=1 // pred_check
      _
    $region39: #{fc_classifier_forward.1} parent=1 // pred_check_branch
      %97 = sbr.rel (0) target = $region41
    $region40: #{fc_classifier_forward.1} parent=1 // pred_region
      %98 = dma.done [#allocation3], 4096
    $region41: #{fc_classifier_forward.1} parent=1 // pred_fallthru
      _
    // Predicated region
    $region42: #{fc_classifier_forward.1} parent=1 // pred_check
      _
    $region43: #{fc_classifier_forward.1} parent=1 // pred_check_branch
      %100 = sbr.rel (0) target = $region45
    $region44: #{fc_classifier_forward.1} parent=1 // pred_region
      %101 = dma.done [#allocation5], 16384
    $region45: #{fc_classifier_forward.1} parent=1 // pred_fallthru
      _
    // Predicated region
    $region46: #{fc_classifier_forward.1} parent=1 // pred_check
      _
    $region47: #{fc_classifier_forward.1} parent=1 // pred_check_branch
      %103 = sbr.rel (0) target = $region49
    $region48: #{fc_classifier_forward.1} parent=1 // pred_region
      %104 = dma.done [#allocation5], 12288
    $region49: #{fc_classifier_forward.1} parent=1 // pred_fallthru
      _
    // Predicated region
    $region50: #{fc_classifier_forward.1} parent=1 // pred_check
      _
    $region51: #{fc_classifier_forward.1} parent=1 // pred_check_branch
      %106 = sbr.rel (0) target = $region53
    $region52: #{fc_classifier_forward.1} parent=1 // pred_region
      %107 = dma.done [#allocation8], 2048
    $region53: #{fc_classifier_forward.1} parent=1 // pred_fallthru
      _
    // Predicated region
    $region54: #{fc_classifier_forward.1} parent=1 // pred_check
      _
    $region55: #{fc_classifier_forward.1} parent=1 // pred_check_branch
      %109 = sbr.rel (0) target = $region57
    $region56: #{fc_classifier_forward.1} parent=1 // pred_region
      %110 = dma.done [#allocation8], 1024
    $region57: #{fc_classifier_forward.1} parent=1 // pred_fallthru
      _
    // Predicated region
    $region58: #{fc_classifier_forward.1} parent=1 // pred_check
      _
    $region59: #{fc_classifier_forward.1} parent=1 // pred_check_branch
      %112 = sbr.rel (0) target = $region61
    $region60: #{fc_classifier_forward.1} parent=1 // pred_region
      %113 = dma.done [#allocation11], 1536
    $region61: #{fc_classifier_forward.1} parent=1 // pred_fallthru
      _
    %v115 = vld [vmem:[#allocation10] sm:$0xff]
    %v116 = vld [vmem:[#allocation10 + $0x8] sm:$0xff]
    %v117 = vld [vmem:[#allocation10 + $0x10] sm:$0xff]
    %v118 = vld [vmem:[#allocation10 + $0x18] sm:$0xff]
    %v119 = vld [vmem:[#allocation10 + $0x20] sm:$0xff]
    %v120 = vld [vmem:[#allocation10 + $0x28] sm:$0xff]
    %v121 = vld [vmem:[#allocation10 + $0x30] sm:$0xff]
    %v122 = vld [vmem:[#allocation10 + $0x40] sm:$0x7]
    %v123 = vld [vmem:[%s0] sm:$0xff]
    %v124 = vld [vmem:[%s0 + $0x8] sm:$0xff]
    %v125 = vld [vmem:[%s0 + $0x10] sm:$0xff]
    %v126 = vld [vmem:[%s0 + $0x18] sm:$0xff]
    %v127 = vld [vmem:[%s0 + $0x20] sm:$0xff]
    %v128 = vld [vmem:[%s0 + $0x28] sm:$0xff]
    %v129 = vld [vmem:[%s0 + $0x30] sm:$0xff]
    %v130 = vld [vmem:[%s0 + $0x38] sm:$0xff]
    %v131 = vld [vmem:[%s0 + $0x40] sm:$0xff]
    %v132 = vld [vmem:[%s0 + $0x48] sm:$0xff]
    %v133 = vld [vmem:[%s0 + $0x50] sm:$0xff]
    %v134 = vld [vmem:[%s0 + $0x58] sm:$0xff]
    %v135 = vld [vmem:[%s0 + $0x60] sm:$0xff]
    %v136 = vld [vmem:[%s0 + $0x68] sm:$0xff]
    %v137 = vld [vmem:[%s0 + $0x70] sm:$0xff]
    %v138 = vld [vmem:[%s0 + $0x78] sm:$0xff]
    %v139 = vld [vmem:[#allocation2] sm:$0xff]
    %v140 = vld [vmem:[#allocation2 + $0x8] sm:$0xff]
    %v141 = vld [vmem:[#allocation2 + $0x10] sm:$0xff]
    %v142 = vld [vmem:[#allocation2 + $0x18] sm:$0xff]
    %v143 = vld [vmem:[#allocation2 + $0x20] sm:$0xff]
    %v144 = vld [vmem:[#allocation2 + $0x28] sm:$0xff]
    %v145 = vld [vmem:[#allocation2 + $0x30] sm:$0xff]
    %v146 = vld [vmem:[#allocation2 + $0x38] sm:$0xff]
    %v147 = vld [vmem:[#allocation2 + $0x40] sm:$0xff]
    %v148 = vld [vmem:[#allocation2 + $0x48] sm:$0xff]
    %v149 = vld [vmem:[#allocation2 + $0x50] sm:$0xff]
    %v150 = vld [vmem:[#allocation2 + $0x58] sm:$0xff]
    %v151 = vld [vmem:[#allocation2 + $0x60] sm:$0xff]
    %v152 = vld [vmem:[#allocation2 + $0x68] sm:$0xff]
    %v153 = vld [vmem:[#allocation2 + $0x70] sm:$0xff]
    %v154 = vld [vmem:[#allocation2 + $0x78] sm:$0xff]
    %v155 = vld [vmem:[#allocation2 + $0x80] sm:$0xff]
    %v156 = vld [vmem:[#allocation2 + $0x88] sm:$0xff]
    %v157 = vld [vmem:[#allocation2 + $0x90] sm:$0xff]
    %v158 = vld [vmem:[#allocation2 + $0x98] sm:$0xff]
    %v159 = vld [vmem:[#allocation2 + $0xa0] sm:$0xff]
    %v160 = vld [vmem:[#allocation2 + $0xa8] sm:$0xff]
    %v161 = vld [vmem:[#allocation2 + $0xb0] sm:$0xff]
    %v162 = vld [vmem:[#allocation2 + $0xb8] sm:$0xff]
    %v163 = vld [vmem:[#allocation2 + $0xc0] sm:$0xff]
    %v164 = vld [vmem:[#allocation2 + $0xc8] sm:$0xff]
    %v165 = vld [vmem:[#allocation2 + $0xd0] sm:$0xff]
    %v166 = vld [vmem:[#allocation2 + $0xd8] sm:$0xff]
    %v167 = vld [vmem:[#allocation2 + $0xe0] sm:$0xff]
    %v168 = vld [vmem:[#allocation2 + $0xe8] sm:$0xff]
    %v169 = vld [vmem:[#allocation2 + $0xf0] sm:$0xff]
    %v170 = vld [vmem:[#allocation2 + $0xf8] sm:$0xff]
    %v171 = vpack.c.bf16 %v124, %v123
    %v172 = vpack.c.bf16 %v126, %v125
    %v173 = vpack.c.bf16 %v128, %v127
    %v174 = vpack.c.bf16 %v130, %v129
    %v175 = vpack.c.bf16 %v132, %v131
    %v176 = vpack.c.bf16 %v134, %v133
    %v177 = vpack.c.bf16 %v136, %v135
    %v178 = vpack.c.bf16 %v138, %v137
    %v179 = vlaneseq
    %v180 = vshrl.u32 %v179, 7
    %v181 = vsub.s32 0, %v180
    %v182 = vrot.slane %v115, %v181
    %v183 = vlaneseq
    %v184 = vshrl.u32 %v183, 7
    %v185 = vsub.s32 0, %v184
    %v186 = vrot.slane %v116, %v185
    %v187 = vlaneseq
    %v188 = vshrl.u32 %v187, 7
    %v189 = vsub.s32 0, %v188
    %v190 = vrot.slane %v117, %v189
    %v191 = vlaneseq
    %v192 = vshrl.u32 %v191, 7
    %v193 = vsub.s32 0, %v192
    %v194 = vrot.slane %v118, %v193
    %v227 = vunpack.c.l.b16 %v139
    %v228 = vunpack.c.h.b16 %v139
    %v229 = vunpack.c.l.b16 %v140
    %v230 = vunpack.c.h.b16 %v140
    %v231 = vunpack.c.l.b16 %v141
    %v232 = vunpack.c.h.b16 %v141
    %v233 = vunpack.c.l.b16 %v142
    %v234 = vunpack.c.h.b16 %v142
    %v235 = vunpack.c.l.b16 %v143
    %v236 = vunpack.c.h.b16 %v143
    %v237 = vunpack.c.l.b16 %v144
    %v238 = vunpack.c.h.b16 %v144
    %v239 = vunpack.c.l.b16 %v145
    %v240 = vunpack.c.h.b16 %v145
    %v241 = vunpack.c.l.b16 %v146
    %v242 = vunpack.c.h.b16 %v146
    %v243 = vunpack.c.l.b16 %v147
    %v244 = vunpack.c.h.b16 %v147
    %v245 = vunpack.c.l.b16 %v148
    %v246 = vunpack.c.h.b16 %v148
    %v247 = vunpack.c.l.b16 %v149
    %v248 = vunpack.c.h.b16 %v149
    %v249 = vunpack.c.l.b16 %v150
    %v250 = vunpack.c.h.b16 %v150
    %v251 = vunpack.c.l.b16 %v151
    %v252 = vunpack.c.h.b16 %v151
    %v253 = vunpack.c.l.b16 %v152
    %v254 = vunpack.c.h.b16 %v152
    %v255 = vunpack.c.l.b16 %v153
    %v256 = vunpack.c.h.b16 %v153
    %v257 = vunpack.c.l.b16 %v154
    %v258 = vunpack.c.h.b16 %v154
    %v259 = vunpack.c.l.b16 %v155
    %v260 = vunpack.c.h.b16 %v155
    %v261 = vunpack.c.l.b16 %v156
    %v262 = vunpack.c.h.b16 %v156
    %v263 = vunpack.c.l.b16 %v157
    %v264 = vunpack.c.h.b16 %v157
    %v265 = vunpack.c.l.b16 %v158
    %v266 = vunpack.c.h.b16 %v158
    %v267 = vunpack.c.l.b16 %v159
    %v268 = vunpack.c.h.b16 %v159
    %v269 = vunpack.c.l.b16 %v160
    %v270 = vunpack.c.h.b16 %v160
    %v271 = vunpack.c.l.b16 %v161
    %v272 = vunpack.c.h.b16 %v161
    %v273 = vunpack.c.l.b16 %v162
    %v274 = vunpack.c.h.b16 %v162
    %v275 = vunpack.c.l.b16 %v163
    %v276 = vunpack.c.h.b16 %v163
    %v277 = vunpack.c.l.b16 %v164
    %v278 = vunpack.c.h.b16 %v164
    %v279 = vunpack.c.l.b16 %v165
    %v280 = vunpack.c.h.b16 %v165
    %v281 = vunpack.c.l.b16 %v166
    %v282 = vunpack.c.h.b16 %v166
    %v283 = vunpack.c.l.b16 %v167
    %v284 = vunpack.c.h.b16 %v167
    %v285 = vunpack.c.l.b16 %v168
    %v286 = vunpack.c.h.b16 %v168
    %v287 = vunpack.c.l.b16 %v169
    %v288 = vunpack.c.h.b16 %v169
    %v289 = vunpack.c.l.b16 %v170
    %v290 = vunpack.c.h.b16 %v170
    %v291 = vpack.c.b16 %v231, %v227
    %v292 = vpack.c.b16 %v232, %v228
    %v293 = vpack.c.b16 %v233, %v229
    %v294 = vpack.c.b16 %v234, %v230
    %v295 = vpack.c.b16 %v239, %v235
    %v296 = vpack.c.b16 %v240, %v236
    %v297 = vpack.c.b16 %v241, %v237
    %v298 = vpack.c.b16 %v242, %v238
    %v299 = vpack.c.b16 %v247, %v243
    %v300 = vpack.c.b16 %v248, %v244
    %v301 = vpack.c.b16 %v249, %v245
    %v302 = vpack.c.b16 %v250, %v246
    %v303 = vpack.c.b16 %v255, %v251
    %v304 = vpack.c.b16 %v256, %v252
    %v305 = vpack.c.b16 %v257, %v253
    %v306 = vpack.c.b16 %v258, %v254
    %v307 = vpack.c.b16 %v263, %v259
    %v308 = vpack.c.b16 %v264, %v260
    %v309 = vpack.c.b16 %v265, %v261
    %v310 = vpack.c.b16 %v266, %v262
    %v311 = vpack.c.b16 %v271, %v267
    %v312 = vpack.c.b16 %v272, %v268
    %v313 = vpack.c.b16 %v273, %v269
    %v314 = vpack.c.b16 %v274, %v270
    %v315 = vpack.c.b16 %v279, %v275
    %v316 = vpack.c.b16 %v280, %v276
    %v317 = vpack.c.b16 %v281, %v277
    %v318 = vpack.c.b16 %v282, %v278
    %v319 = vpack.c.b16 %v287, %v283
    %v320 = vpack.c.b16 %v288, %v284
    %v321 = vpack.c.b16 %v289, %v285
    %v322 = vpack.c.b16 %v290, %v286
    %355 = vmatprep.subr.bf16.mxu0 %v320
    %356 = vmatpush1.bf16.msra.mxu0 %v319
    %357 = vmatprep.subr.bf16.mxu0 %v316
    %358 = vmatpush1.bf16.msra.mxu0 %v315
    %359 = vmatprep.subr.bf16.mxu0 %v312
    %360 = vmatpush1.bf16.msra.mxu0 %v311
    %361 = vmatprep.subr.bf16.mxu0 %v308
    %362 = vmatpush1.bf16.msra.mxu0 %v307
    %363 = vmatprep.subr.bf16.mxu0 %v304
    %364 = vmatpush1.bf16.msra.mxu0 %v303
    %365 = vmatprep.subr.bf16.mxu0 %v300
    %366 = vmatpush1.bf16.msra.mxu0 %v299
    %367 = vmatprep.subr.bf16.mxu0 %v296
    %368 = vmatpush1.bf16.msra.mxu0 %v295
    %369 = vmatprep.subr.bf16.mxu0 %v292
    %370 = vmatpush1.bf16.msra.mxu0 %v291
    %371 = vmatprep.subr.bf16.mxu0 0
    %372 = vmatpush2.bf16.msra.mxu0 0
    %373 = vmatprep.subr.bf16.mxu0 0
    %374 = vmatpush2.bf16.msra.mxu0 0
    %375 = vmatprep.subr.bf16.mxu0 0
    %376 = vmatpush2.bf16.msra.mxu0 0
    %377 = vmatprep.subr.bf16.mxu0 0
    %378 = vmatpush2.bf16.msra.mxu0 0
    %379 = vmatprep.subr.bf16.mxu0 0
    %380 = vmatpush2.bf16.msra.mxu0 0
    %381 = vmatprep.subr.bf16.mxu0 0
    %382 = vmatpush2.bf16.msra.mxu0 0
    %383 = vmatprep.subr.bf16.mxu0 0
    %384 = vmatpush2.bf16.msra.mxu0 0
    %385 = vmatprep.subr.bf16.mxu0 0
    %386 = vmatpush2.bf16.msra.mxu0 0
    %387 = vmatprep.mubr.bf16.mxu0 0
    %388 = vmatmul.mubr.bf16.gmra.mxu0 %v171
    %v389 = vpop.f32.mrf.mxu0
    %v390 = vadd.f32 %v182, %v389
    %v391 = vpop.f32.mrf.mxu0
    %v392 = vadd.f32 %v186, %v391
    %v393 = vpop.f32.mrf.mxu0
    %v394 = vadd.f32 %v182, %v393
    %v395 = vpop.f32.mrf.mxu0
    %v396 = vadd.f32 %v186, %v395
    %397 = vmatprep.mubr.bf16.mxu0 0
    %398 = vmatmul.mubr.bf16.gmra.mxu0 %v172
    %v399 = vpop.f32.mrf.mxu0
    %v400 = vadd.f32 %v182, %v399
    %v401 = vpop.f32.mrf.mxu0
    %v402 = vadd.f32 %v186, %v401
    %v403 = vpop.f32.mrf.mxu0
    %v404 = vadd.f32 %v182, %v403
    %v405 = vpop.f32.mrf.mxu0
    %v406 = vadd.f32 %v186, %v405
    %407 = vmatprep.mubr.bf16.mxu0 0
    %408 = vmatmul.mubr.bf16.gmra.mxu0 %v173
    %v409 = vpop.f32.mrf.mxu0
    %v410 = vadd.f32 %v182, %v409
    %v411 = vpop.f32.mrf.mxu0
    %v412 = vadd.f32 %v186, %v411
    %v413 = vpop.f32.mrf.mxu0
    %v414 = vadd.f32 %v182, %v413
    %v415 = vpop.f32.mrf.mxu0
    %v416 = vadd.f32 %v186, %v415
    %417 = vmatprep.mubr.bf16.mxu0 0
    %418 = vmatmul.mubr.bf16.gmra.mxu0 %v174
    %v419 = vpop.f32.mrf.mxu0
    %v420 = vadd.f32 %v182, %v419
    %v421 = vpop.f32.mrf.mxu0
    %v422 = vadd.f32 %v186, %v421
    %v423 = vpop.f32.mrf.mxu0
    %v424 = vadd.f32 %v182, %v423
    %v425 = vpop.f32.mrf.mxu0
    %v426 = vadd.f32 %v186, %v425
    %427 = vmatprep.mubr.bf16.mxu0 0
    %428 = vmatmul.mubr.bf16.gmra.mxu0 %v175
    %v429 = vpop.f32.mrf.mxu0
    %v430 = vadd.f32 %v182, %v429
    %v431 = vpop.f32.mrf.mxu0
    %v432 = vadd.f32 %v186, %v431
    %v433 = vpop.f32.mrf.mxu0
    %v434 = vadd.f32 %v182, %v433
    %v435 = vpop.f32.mrf.mxu0
    %v436 = vadd.f32 %v186, %v435
    %437 = vmatprep.mubr.bf16.mxu0 0
    %438 = vmatmul.mubr.bf16.gmra.mxu0 %v176
    %v439 = vpop.f32.mrf.mxu0
    %v440 = vadd.f32 %v182, %v439
    %v441 = vpop.f32.mrf.mxu0
    %v442 = vadd.f32 %v186, %v441
    %v443 = vpop.f32.mrf.mxu0
    %v444 = vadd.f32 %v182, %v443
    %v445 = vpop.f32.mrf.mxu0
    %v446 = vadd.f32 %v186, %v445
    %447 = vmatprep.mubr.bf16.mxu0 0
    %448 = vmatmul.mubr.bf16.gmra.mxu0 %v177
    %v449 = vpop.f32.mrf.mxu0
    %v450 = vadd.f32 %v182, %v449
    %v451 = vpop.f32.mrf.mxu0
    %v452 = vadd.f32 %v186, %v451
    %v453 = vpop.f32.mrf.mxu0
    %v454 = vadd.f32 %v182, %v453
    %v455 = vpop.f32.mrf.mxu0
    %v456 = vadd.f32 %v186, %v455
    %457 = vmatprep.mubr.bf16.mxu0 0
    %458 = vmatmul.mubr.bf16.gmra.mxu0 %v178
    %v459 = vpop.f32.mrf.mxu0
    %v460 = vadd.f32 %v182, %v459
    %v461 = vpop.f32.mrf.mxu0
    %v462 = vadd.f32 %v186, %v461
    %v463 = vpop.f32.mrf.mxu0
    %v464 = vadd.f32 %v182, %v463
    %v465 = vpop.f32.mrf.mxu0
    %v466 = vadd.f32 %v186, %v465
    %467 = vdwg.mxu0
    %468 = vmatprep.subr.bf16.mxu0 %v322
    %469 = vmatpush1.bf16.msra.mxu0 %v321
    %470 = vmatprep.subr.bf16.mxu0 %v318
    %471 = vmatpush1.bf16.msra.mxu0 %v317
    %472 = vmatprep.subr.bf16.mxu0 %v314
    %473 = vmatpush1.bf16.msra.mxu0 %v313
    %474 = vmatprep.subr.bf16.mxu0 %v310
    %475 = vmatpush1.bf16.msra.mxu0 %v309
    %476 = vmatprep.subr.bf16.mxu0 %v306
    %477 = vmatpush1.bf16.msra.mxu0 %v305
    %478 = vmatprep.subr.bf16.mxu0 %v302
    %479 = vmatpush1.bf16.msra.mxu0 %v301
    %480 = vmatprep.subr.bf16.mxu0 %v298
    %481 = vmatpush1.bf16.msra.mxu0 %v297
    %482 = vmatprep.subr.bf16.mxu0 %v294
    %483 = vmatpush1.bf16.msra.mxu0 %v293
    %484 = vmatprep.subr.bf16.mxu0 0
    %485 = vmatpush2.bf16.msra.mxu0 0
    %486 = vmatprep.subr.bf16.mxu0 0
    %487 = vmatpush2.bf16.msra.mxu0 0
    %488 = vmatprep.subr.bf16.mxu0 0
    %489 = vmatpush2.bf16.msra.mxu0 0
    %490 = vmatprep.subr.bf16.mxu0 0
    %491 = vmatpush2.bf16.msra.mxu0 0
    %492 = vmatprep.subr.bf16.mxu0 0
    %493 = vmatpush2.bf16.msra.mxu0 0
    %494 = vmatprep.subr.bf16.mxu0 0
    %495 = vmatpush2.bf16.msra.mxu0 0
    %496 = vmatprep.subr.bf16.mxu0 0
    %497 = vmatpush2.bf16.msra.mxu0 0
    %498 = vmatprep.subr.bf16.mxu0 0
    %499 = vmatpush2.bf16.msra.mxu0 0
    %500 = vmatprep.mubr.bf16.mxu0 0
    %501 = vmatmul.mubr.bf16.gmra.mxu0 %v171
    %v502 = vpop.f32.mrf.mxu0
    %v503 = vadd.f32 %v190, %v502
    %v504 = vpop.f32.mrf.mxu0
    %v505 = vadd.f32 %v194, %v504
    %v506 = vpop.f32.mrf.mxu0
    %v507 = vadd.f32 %v190, %v506
    %v508 = vpop.f32.mrf.mxu0
    %v509 = vadd.f32 %v194, %v508
    %510 = vmatprep.mubr.bf16.mxu0 0
    %511 = vmatmul.mubr.bf16.gmra.mxu0 %v172
    %v512 = vpop.f32.mrf.mxu0
    %v513 = vadd.f32 %v190, %v512
    %v514 = vpop.f32.mrf.mxu0
    %v515 = vadd.f32 %v194, %v514
    %v516 = vpop.f32.mrf.mxu0
    %v517 = vadd.f32 %v190, %v516
    %v518 = vpop.f32.mrf.mxu0
    %v519 = vadd.f32 %v194, %v518
    %520 = vmatprep.mubr.bf16.mxu0 0
    %521 = vmatmul.mubr.bf16.gmra.mxu0 %v173
    %v522 = vpop.f32.mrf.mxu0
    %v523 = vadd.f32 %v190, %v522
    %v524 = vpop.f32.mrf.mxu0
    %v525 = vadd.f32 %v194, %v524
    %v526 = vpop.f32.mrf.mxu0
    %v527 = vadd.f32 %v190, %v526
    %v528 = vpop.f32.mrf.mxu0
    %v529 = vadd.f32 %v194, %v528
    %530 = vmatprep.mubr.bf16.mxu0 0
    %531 = vmatmul.mubr.bf16.gmra.mxu0 %v174
    %v532 = vpop.f32.mrf.mxu0
    %v533 = vadd.f32 %v190, %v532
    %v534 = vpop.f32.mrf.mxu0
    %v535 = vadd.f32 %v194, %v534
    %v536 = vpop.f32.mrf.mxu0
    %v537 = vadd.f32 %v190, %v536
    %v538 = vpop.f32.mrf.mxu0
    %v539 = vadd.f32 %v194, %v538
    %540 = vmatprep.mubr.bf16.mxu0 0
    %541 = vmatmul.mubr.bf16.gmra.mxu0 %v175
    %v542 = vpop.f32.mrf.mxu0
    %v543 = vadd.f32 %v190, %v542
    %v544 = vpop.f32.mrf.mxu0
    %v545 = vadd.f32 %v194, %v544
    %v546 = vpop.f32.mrf.mxu0
    %v547 = vadd.f32 %v190, %v546
    %v548 = vpop.f32.mrf.mxu0
    %v549 = vadd.f32 %v194, %v548
    %550 = vmatprep.mubr.bf16.mxu0 0
    %551 = vmatmul.mubr.bf16.gmra.mxu0 %v176
    %v552 = vpop.f32.mrf.mxu0
    %v553 = vadd.f32 %v190, %v552
    %v554 = vpop.f32.mrf.mxu0
    %v555 = vadd.f32 %v194, %v554
    %v556 = vpop.f32.mrf.mxu0
    %v557 = vadd.f32 %v190, %v556
    %v558 = vpop.f32.mrf.mxu0
    %v559 = vadd.f32 %v194, %v558
    %560 = vmatprep.mubr.bf16.mxu0 0
    %561 = vmatmul.mubr.bf16.gmra.mxu0 %v177
    %v562 = vpop.f32.mrf.mxu0
    %v563 = vadd.f32 %v190, %v562
    %v564 = vpop.f32.mrf.mxu0
    %v565 = vadd.f32 %v194, %v564
    %v566 = vpop.f32.mrf.mxu0
    %v567 = vadd.f32 %v190, %v566
    %v568 = vpop.f32.mrf.mxu0
    %v569 = vadd.f32 %v194, %v568
    %570 = vmatprep.mubr.bf16.mxu0 0
    %571 = vmatmul.mubr.bf16.gmra.mxu0 %v178
    %v572 = vpop.f32.mrf.mxu0
    %v573 = vadd.f32 %v190, %v572
    %v574 = vpop.f32.mrf.mxu0
    %v575 = vadd.f32 %v194, %v574
    %v576 = vpop.f32.mrf.mxu0
    %v577 = vadd.f32 %v190, %v576
    %v578 = vpop.f32.mrf.mxu0
    %v579 = vadd.f32 %v194, %v578
    %580 = vdwg.mxu0
    %vm581 = vcmp.ge.f32.partialorder %v390, 0.0
    %vm582 = vcmp.ge.f32.partialorder %v392, 0.0
    %vm583 = vcmp.ge.f32.partialorder %v503, 0.0
    %vm584 = vcmp.ge.f32.partialorder %v505, 0.0
    %vm585 = vcmp.ge.f32.partialorder %v394, 0.0
    %vm586 = vcmp.ge.f32.partialorder %v396, 0.0
    %vm587 = vcmp.ge.f32.partialorder %v507, 0.0
    %vm588 = vcmp.ge.f32.partialorder %v509, 0.0
    %vm589 = vcmp.ge.f32.partialorder %v400, 0.0
    %vm590 = vcmp.ge.f32.partialorder %v402, 0.0
    %vm591 = vcmp.ge.f32.partialorder %v513, 0.0
    %vm592 = vcmp.ge.f32.partialorder %v515, 0.0
    %vm593 = vcmp.ge.f32.partialorder %v404, 0.0
    %vm594 = vcmp.ge.f32.partialorder %v406, 0.0
    %vm595 = vcmp.ge.f32.partialorder %v517, 0.0
    %vm596 = vcmp.ge.f32.partialorder %v519, 0.0
    %vm597 = vcmp.ge.f32.partialorder %v410, 0.0
    %vm598 = vcmp.ge.f32.partialorder %v412, 0.0
    %vm599 = vcmp.ge.f32.partialorder %v523, 0.0
    %vm600 = vcmp.ge.f32.partialorder %v525, 0.0
    %vm601 = vcmp.ge.f32.partialorder %v414, 0.0
    %vm602 = vcmp.ge.f32.partialorder %v416, 0.0
    %vm603 = vcmp.ge.f32.partialorder %v527, 0.0
    %vm604 = vcmp.ge.f32.partialorder %v529, 0.0
    %vm605 = vcmp.ge.f32.partialorder %v420, 0.0
    %vm606 = vcmp.ge.f32.partialorder %v422, 0.0
    %vm607 = vcmp.ge.f32.partialorder %v533, 0.0
    %vm608 = vcmp.ge.f32.partialorder %v535, 0.0
    %vm609 = vcmp.ge.f32.partialorder %v424, 0.0
    %vm610 = vcmp.ge.f32.partialorder %v426, 0.0
    %vm611 = vcmp.ge.f32.partialorder %v537, 0.0
    %vm612 = vcmp.ge.f32.partialorder %v539, 0.0
    %vm613 = vcmp.ge.f32.partialorder %v430, 0.0
    %vm614 = vcmp.ge.f32.partialorder %v432, 0.0
    %vm615 = vcmp.ge.f32.partialorder %v543, 0.0
    %vm616 = vcmp.ge.f32.partialorder %v545, 0.0
    %vm617 = vcmp.ge.f32.partialorder %v434, 0.0
    %vm618 = vcmp.ge.f32.partialorder %v436, 0.0
    %vm619 = vcmp.ge.f32.partialorder %v547, 0.0
    %vm620 = vcmp.ge.f32.partialorder %v549, 0.0
    %vm621 = vcmp.ge.f32.partialorder %v440, 0.0
    %vm622 = vcmp.ge.f32.partialorder %v442, 0.0
    %vm623 = vcmp.ge.f32.partialorder %v553, 0.0
    %vm624 = vcmp.ge.f32.partialorder %v555, 0.0
    %vm625 = vcmp.ge.f32.partialorder %v444, 0.0
    %vm626 = vcmp.ge.f32.partialorder %v446, 0.0
    %vm627 = vcmp.ge.f32.partialorder %v557, 0.0
    %vm628 = vcmp.ge.f32.partialorder %v559, 0.0
    %vm629 = vcmp.ge.f32.partialorder %v450, 0.0
    %vm630 = vcmp.ge.f32.partialorder %v452, 0.0
    %vm631 = vcmp.ge.f32.partialorder %v563, 0.0
    %vm632 = vcmp.ge.f32.partialorder %v565, 0.0
    %vm633 = vcmp.ge.f32.partialorder %v454, 0.0
    %vm634 = vcmp.ge.f32.partialorder %v456, 0.0
    %vm635 = vcmp.ge.f32.partialorder %v567, 0.0
    %vm636 = vcmp.ge.f32.partialorder %v569, 0.0
    %vm637 = vcmp.ge.f32.partialorder %v460, 0.0
    %vm638 = vcmp.ge.f32.partialorder %v462, 0.0
    %vm639 = vcmp.ge.f32.partialorder %v573, 0.0
    %vm640 = vcmp.ge.f32.partialorder %v575, 0.0
    %vm641 = vcmp.ge.f32.partialorder %v464, 0.0
    %vm642 = vcmp.ge.f32.partialorder %v466, 0.0
    %vm643 = vcmp.ge.f32.partialorder %v577, 0.0
    %vm644 = vcmp.ge.f32.partialorder %v579, 0.0
    %v645 = vmul.f32 %v390, 0.01
    %v646 = vmul.f32 %v392, 0.01
    %v647 = vmul.f32 %v503, 0.01
    %v648 = vmul.f32 %v505, 0.01
    %v649 = vmul.f32 %v394, 0.01
    %v650 = vmul.f32 %v396, 0.01
    %v651 = vmul.f32 %v507, 0.01
    %v652 = vmul.f32 %v509, 0.01
    %v653 = vmul.f32 %v400, 0.01
    %v654 = vmul.f32 %v402, 0.01
    %v655 = vmul.f32 %v513, 0.01
    %v656 = vmul.f32 %v515, 0.01
    %v657 = vmul.f32 %v404, 0.01
    %v658 = vmul.f32 %v406, 0.01
    %v659 = vmul.f32 %v517, 0.01
    %v660 = vmul.f32 %v519, 0.01
    %v661 = vmul.f32 %v410, 0.01
    %v662 = vmul.f32 %v412, 0.01
    %v663 = vmul.f32 %v523, 0.01
    %v664 = vmul.f32 %v525, 0.01
    %v665 = vmul.f32 %v414, 0.01
    %v666 = vmul.f32 %v416, 0.01
    %v667 = vmul.f32 %v527, 0.01
    %v668 = vmul.f32 %v529, 0.01
    %v669 = vmul.f32 %v420, 0.01
    %v670 = vmul.f32 %v422, 0.01
    %v671 = vmul.f32 %v533, 0.01
    %v672 = vmul.f32 %v535, 0.01
    %v673 = vmul.f32 %v424, 0.01
    %v674 = vmul.f32 %v426, 0.01
    %v675 = vmul.f32 %v537, 0.01
    %v676 = vmul.f32 %v539, 0.01
    %v677 = vmul.f32 %v430, 0.01
    %v678 = vmul.f32 %v432, 0.01
    %v679 = vmul.f32 %v543, 0.01
    %v680 = vmul.f32 %v545, 0.01
    %v681 = vmul.f32 %v434, 0.01
    %v682 = vmul.f32 %v436, 0.01
    %v683 = vmul.f32 %v547, 0.01
    %v684 = vmul.f32 %v549, 0.01
    %v685 = vmul.f32 %v440, 0.01
    %v686 = vmul.f32 %v442, 0.01
    %v687 = vmul.f32 %v553, 0.01
    %v688 = vmul.f32 %v555, 0.01
    %v689 = vmul.f32 %v444, 0.01
    %v690 = vmul.f32 %v446, 0.01
    %v691 = vmul.f32 %v557, 0.01
    %v692 = vmul.f32 %v559, 0.01
    %v693 = vmul.f32 %v450, 0.01
    %v694 = vmul.f32 %v452, 0.01
    %v695 = vmul.f32 %v563, 0.01
    %v696 = vmul.f32 %v565, 0.01
    %v697 = vmul.f32 %v454, 0.01
    %v698 = vmul.f32 %v456, 0.01
    %v699 = vmul.f32 %v567, 0.01
    %v700 = vmul.f32 %v569, 0.01
    %v701 = vmul.f32 %v460, 0.01
    %v702 = vmul.f32 %v462, 0.01
    %v703 = vmul.f32 %v573, 0.01
    %v704 = vmul.f32 %v575, 0.01
    %v705 = vmul.f32 %v464, 0.01
    %v706 = vmul.f32 %v466, 0.01
    %v707 = vmul.f32 %v577, 0.01
    %v708 = vmul.f32 %v579, 0.01
    %v709 = vsel %vm581, %v390, %v645
    %v710 = vsel %vm582, %v392, %v646
    %v711 = vsel %vm583, %v503, %v647
    %v712 = vsel %vm584, %v505, %v648
    %v713 = vsel %vm585, %v394, %v649
    %v714 = vsel %vm586, %v396, %v650
    %v715 = vsel %vm587, %v507, %v651
    %v716 = vsel %vm588, %v509, %v652
    %v717 = vsel %vm589, %v400, %v653
    %v718 = vsel %vm590, %v402, %v654
    %v719 = vsel %vm591, %v513, %v655
    %v720 = vsel %vm592, %v515, %v656
    %v721 = vsel %vm593, %v404, %v657
    %v722 = vsel %vm594, %v406, %v658
    %v723 = vsel %vm595, %v517, %v659
    %v724 = vsel %vm596, %v519, %v660
    %v725 = vsel %vm597, %v410, %v661
    %v726 = vsel %vm598, %v412, %v662
    %v727 = vsel %vm599, %v523, %v663
    %v728 = vsel %vm600, %v525, %v664
    %v729 = vsel %vm601, %v414, %v665
    %v730 = vsel %vm602, %v416, %v666
    %v731 = vsel %vm603, %v527, %v667
    %v732 = vsel %vm604, %v529, %v668
    %v733 = vsel %vm605, %v420, %v669
    %v734 = vsel %vm606, %v422, %v670
    %v735 = vsel %vm607, %v533, %v671
    %v736 = vsel %vm608, %v535, %v672
    %v737 = vsel %vm609, %v424, %v673
    %v738 = vsel %vm610, %v426, %v674
    %v739 = vsel %vm611, %v537, %v675
    %v740 = vsel %vm612, %v539, %v676
    %v741 = vsel %vm613, %v430, %v677
    %v742 = vsel %vm614, %v432, %v678
    %v743 = vsel %vm615, %v543, %v679
    %v744 = vsel %vm616, %v545, %v680
    %v745 = vsel %vm617, %v434, %v681
    %v746 = vsel %vm618, %v436, %v682
    %v747 = vsel %vm619, %v547, %v683
    %v748 = vsel %vm620, %v549, %v684
    %v749 = vsel %vm621, %v440, %v685
    %v750 = vsel %vm622, %v442, %v686
    %v751 = vsel %vm623, %v553, %v687
    %v752 = vsel %vm624, %v555, %v688
    %v753 = vsel %vm625, %v444, %v689
    %v754 = vsel %vm626, %v446, %v690
    %v755 = vsel %vm627, %v557, %v691
    %v756 = vsel %vm628, %v559, %v692
    %v757 = vsel %vm629, %v450, %v693
    %v758 = vsel %vm630, %v452, %v694
    %v759 = vsel %vm631, %v563, %v695
    %v760 = vsel %vm632, %v565, %v696
    %v761 = vsel %vm633, %v454, %v697
    %v762 = vsel %vm634, %v456, %v698
    %v763 = vsel %vm635, %v567, %v699
    %v764 = vsel %vm636, %v569, %v700
    %v765 = vsel %vm637, %v460, %v701
    %v766 = vsel %vm638, %v462, %v702
    %v767 = vsel %vm639, %v573, %v703
    %v768 = vsel %vm640, %v575, %v704
    %v769 = vsel %vm641, %v464, %v705
    %v770 = vsel %vm642, %v466, %v706
    %v771 = vsel %vm643, %v577, %v707
    %v772 = vsel %vm644, %v579, %v708
    %v773 = vadd.f32 %v709, %v713
    %v774 = vadd.f32 %v773, %v717
    %v775 = vadd.f32 %v774, %v721
    %v776 = vadd.f32 %v775, %v725
    %v777 = vadd.f32 %v776, %v729
    %v778 = vadd.f32 %v777, %v733
    %v779 = vadd.f32 %v778, %v737
    %v780 = vadd.f32 %v779, %v741
    %v781 = vadd.f32 %v780, %v745
    %v782 = vadd.f32 %v781, %v749
    %v783 = vadd.f32 %v782, %v753
    %v784 = vadd.f32 %v783, %v757
    %v785 = vadd.f32 %v784, %v761
    %v786 = vadd.f32 %v785, %v765
    %v787 = vadd.f32 %v786, %v769
    %v788 = vrot.slane %v787, 4
    %v789 = vadd.f32 %v787, %v788
    %v790 = vrot.slane %v789, 2
    %v791 = vadd.f32 %v789, %v790
    %v792 = vrot.slane %v791, 1
    %v793 = vadd.f32 %v791, %v792
    %v794 = vadd.f32 %v710, %v714
    %v795 = vadd.f32 %v794, %v718
    %v796 = vadd.f32 %v795, %v722
    %v797 = vadd.f32 %v796, %v726
    %v798 = vadd.f32 %v797, %v730
    %v799 = vadd.f32 %v798, %v734
    %v800 = vadd.f32 %v799, %v738
    %v801 = vadd.f32 %v800, %v742
    %v802 = vadd.f32 %v801, %v746
    %v803 = vadd.f32 %v802, %v750
    %v804 = vadd.f32 %v803, %v754
    %v805 = vadd.f32 %v804, %v758
    %v806 = vadd.f32 %v805, %v762
    %v807 = vadd.f32 %v806, %v766
    %v808 = vadd.f32 %v807, %v770
    %v809 = vrot.slane %v808, 4
    %v810 = vadd.f32 %v808, %v809
    %v811 = vrot.slane %v810, 2
    %v812 = vadd.f32 %v810, %v811
    %v813 = vrot.slane %v812, 1
    %v814 = vadd.f32 %v812, %v813
    %v815 = vadd.f32 %v711, %v715
    %v816 = vadd.f32 %v815, %v719
    %v817 = vadd.f32 %v816, %v723
    %v818 = vadd.f32 %v817, %v727
    %v819 = vadd.f32 %v818, %v731
    %v820 = vadd.f32 %v819, %v735
    %v821 = vadd.f32 %v820, %v739
    %v822 = vadd.f32 %v821, %v743
    %v823 = vadd.f32 %v822, %v747
    %v824 = vadd.f32 %v823, %v751
    %v825 = vadd.f32 %v824, %v755
    %v826 = vadd.f32 %v825, %v759
    %v827 = vadd.f32 %v826, %v763
    %v828 = vadd.f32 %v827, %v767
    %v829 = vadd.f32 %v828, %v771
    %v830 = vrot.slane %v829, 4
    %v831 = vadd.f32 %v829, %v830
    %v832 = vrot.slane %v831, 2
    %v833 = vadd.f32 %v831, %v832
    %v834 = vrot.slane %v833, 1
    %v835 = vadd.f32 %v833, %v834
    %v836 = vadd.f32 %v712, %v716
    %v837 = vadd.f32 %v836, %v720
    %v838 = vadd.f32 %v837, %v724
    %v839 = vadd.f32 %v838, %v728
    %v840 = vadd.f32 %v839, %v732
    %v841 = vadd.f32 %v840, %v736
    %v842 = vadd.f32 %v841, %v740
    %v843 = vadd.f32 %v842, %v744
    %v844 = vadd.f32 %v843, %v748
    %v845 = vadd.f32 %v844, %v752
    %v846 = vadd.f32 %v845, %v756
    %v847 = vadd.f32 %v846, %v760
    %v848 = vadd.f32 %v847, %v764
    %v849 = vadd.f32 %v848, %v768
    %v850 = vadd.f32 %v849, %v772
    %v851 = vrot.slane %v850, 4
    %v852 = vadd.f32 %v850, %v851
    %v853 = vrot.slane %v852, 2
    %v854 = vadd.f32 %v852, %v853
    %v855 = vrot.slane %v854, 1
    %v856 = vadd.f32 %v854, %v855
    %v857 = vmul.f32 %v793, 0.0078125
    %v858 = vmul.f32 %v814, 0.0078125
    %v859 = vmul.f32 %v835, 0.0078125
    %v860 = vmul.f32 %v856, 0.0078125
    %v861 = vmul.f32 %v709, %v709
    %v862 = vmul.f32 %v710, %v710
    %v863 = vmul.f32 %v711, %v711
    %v864 = vmul.f32 %v712, %v712
    %v865 = vmul.f32 %v713, %v713
    %v866 = vmul.f32 %v714, %v714
    %v867 = vmul.f32 %v715, %v715
    %v868 = vmul.f32 %v716, %v716
    %v869 = vmul.f32 %v717, %v717
    %v870 = vmul.f32 %v718, %v718
    %v871 = vmul.f32 %v719, %v719
    %v872 = vmul.f32 %v720, %v720
    %v873 = vmul.f32 %v721, %v721
    %v874 = vmul.f32 %v722, %v722
    %v875 = vmul.f32 %v723, %v723
    %v876 = vmul.f32 %v724, %v724
    %v877 = vmul.f32 %v725, %v725
    %v878 = vmul.f32 %v726, %v726
    %v879 = vmul.f32 %v727, %v727
    %v880 = vmul.f32 %v728, %v728
    %v881 = vmul.f32 %v729, %v729
    %v882 = vmul.f32 %v730, %v730
    %v883 = vmul.f32 %v731, %v731
    %v884 = vmul.f32 %v732, %v732
    %v885 = vmul.f32 %v733, %v733
    %v886 = vmul.f32 %v734, %v734
    %v887 = vmul.f32 %v735, %v735
    %v888 = vmul.f32 %v736, %v736
    %v889 = vmul.f32 %v737, %v737
    %v890 = vmul.f32 %v738, %v738
    %v891 = vmul.f32 %v739, %v739
    %v892 = vmul.f32 %v740, %v740
    %v893 = vmul.f32 %v741, %v741
    %v894 = vmul.f32 %v742, %v742
    %v895 = vmul.f32 %v743, %v743
    %v896 = vmul.f32 %v744, %v744
    %v897 = vmul.f32 %v745, %v745
    %v898 = vmul.f32 %v746, %v746
    %v899 = vmul.f32 %v747, %v747
    %v900 = vmul.f32 %v748, %v748
    %v901 = vmul.f32 %v749, %v749
    %v902 = vmul.f32 %v750, %v750
    %v903 = vmul.f32 %v751, %v751
    %v904 = vmul.f32 %v752, %v752
    %v905 = vmul.f32 %v753, %v753
    %v906 = vmul.f32 %v754, %v754
    %v907 = vmul.f32 %v755, %v755
    %v908 = vmul.f32 %v756, %v756
    %v909 = vmul.f32 %v757, %v757
    %v910 = vmul.f32 %v758, %v758
    %v911 = vmul.f32 %v759, %v759
    %v912 = vmul.f32 %v760, %v760
    %v913 = vmul.f32 %v761, %v761
    %v914 = vmul.f32 %v762, %v762
    %v915 = vmul.f32 %v763, %v763
    %v916 = vmul.f32 %v764, %v764
    %v917 = vmul.f32 %v765, %v765
    %v918 = vmul.f32 %v766, %v766
    %v919 = vmul.f32 %v767, %v767
    %v920 = vmul.f32 %v768, %v768
    %v921 = vmul.f32 %v769, %v769
    %v922 = vmul.f32 %v770, %v770
    %v923 = vmul.f32 %v771, %v771
    %v924 = vmul.f32 %v772, %v772
    %v925 = vadd.f32 %v861, %v865
    %v926 = vadd.f32 %v925, %v869
    %v927 = vadd.f32 %v926, %v873
    %v928 = vadd.f32 %v927, %v877
    %v929 = vadd.f32 %v928, %v881
    %v930 = vadd.f32 %v929, %v885
    %v931 = vadd.f32 %v930, %v889
    %v932 = vadd.f32 %v931, %v893
    %v933 = vadd.f32 %v932, %v897
    %v934 = vadd.f32 %v933, %v901
    %v935 = vadd.f32 %v934, %v905
    %v936 = vadd.f32 %v935, %v909
    %v937 = vadd.f32 %v936, %v913
    %v938 = vadd.f32 %v937, %v917
    %v939 = vadd.f32 %v938, %v921
    %v940 = vrot.slane %v939, 4
    %v941 = vadd.f32 %v939, %v940
    %v942 = vrot.slane %v941, 2
    %v943 = vadd.f32 %v941, %v942
    %v944 = vrot.slane %v943, 1
    %v945 = vadd.f32 %v943, %v944
    %v946 = vadd.f32 %v862, %v866
    %v947 = vadd.f32 %v946, %v870
    %v948 = vadd.f32 %v947, %v874
    %v949 = vadd.f32 %v948, %v878
    %v950 = vadd.f32 %v949, %v882
    %v951 = vadd.f32 %v950, %v886
    %v952 = vadd.f32 %v951, %v890
    %v953 = vadd.f32 %v952, %v894
    %v954 = vadd.f32 %v953, %v898
    %v955 = vadd.f32 %v954, %v902
    %v956 = vadd.f32 %v955, %v906
    %v957 = vadd.f32 %v956, %v910
    %v958 = vadd.f32 %v957, %v914
    %v959 = vadd.f32 %v958, %v918
    %v960 = vadd.f32 %v959, %v922
    %v961 = vrot.slane %v960, 4
    %v962 = vadd.f32 %v960, %v961
    %v963 = vrot.slane %v962, 2
    %v964 = vadd.f32 %v962, %v963
    %v965 = vrot.slane %v964, 1
    %v966 = vadd.f32 %v964, %v965
    %v967 = vadd.f32 %v863, %v867
    %v968 = vadd.f32 %v967, %v871
    %v969 = vadd.f32 %v968, %v875
    %v970 = vadd.f32 %v969, %v879
    %v971 = vadd.f32 %v970, %v883
    %v972 = vadd.f32 %v971, %v887
    %v973 = vadd.f32 %v972, %v891
    %v974 = vadd.f32 %v973, %v895
    %v975 = vadd.f32 %v974, %v899
    %v976 = vadd.f32 %v975, %v903
    %v977 = vadd.f32 %v976, %v907
    %v978 = vadd.f32 %v977, %v911
    %v979 = vadd.f32 %v978, %v915
    %v980 = vadd.f32 %v979, %v919
    %v981 = vadd.f32 %v980, %v923
    %v982 = vrot.slane %v981, 4
    %v983 = vadd.f32 %v981, %v982
    %v984 = vrot.slane %v983, 2
    %v985 = vadd.f32 %v983, %v984
    %v986 = vrot.slane %v985, 1
    %v987 = vadd.f32 %v985, %v986
    %v988 = vadd.f32 %v864, %v868
    %v989 = vadd.f32 %v988, %v872
    %v990 = vadd.f32 %v989, %v876
    %v991 = vadd.f32 %v990, %v880
    %v992 = vadd.f32 %v991, %v884
    %v993 = vadd.f32 %v992, %v888
    %v994 = vadd.f32 %v993, %v892
    %v995 = vadd.f32 %v994, %v896
    %v996 = vadd.f32 %v995, %v900
    %v997 = vadd.f32 %v996, %v904
    %v998 = vadd.f32 %v997, %v908
    %v999 = vadd.f32 %v998, %v912
    %v1000 = vadd.f32 %v999, %v916
    %v1001 = vadd.f32 %v1000, %v920
    %v1002 = vadd.f32 %v1001, %v924
    %v1003 = vrot.slane %v1002, 4
    %v1004 = vadd.f32 %v1002, %v1003
    %v1005 = vrot.slane %v1004, 2
    %v1006 = vadd.f32 %v1004, %v1005
    %v1007 = vrot.slane %v1006, 1
    %v1008 = vadd.f32 %v1006, %v1007
    %v1009 = vmul.f32 %v945, 0.0078125
    %v1010 = vmul.f32 %v966, 0.0078125
    %v1011 = vmul.f32 %v987, 0.0078125
    %v1012 = vmul.f32 %v1008, 0.0078125
    %v1013 = vmul.f32 %v857, %v857
    %v1014 = vmul.f32 %v858, %v858
    %v1015 = vmul.f32 %v859, %v859
    %v1016 = vmul.f32 %v860, %v860
    %v1017 = vsub.f32 %v1009, %v1013
    %v1018 = vsub.f32 %v1010, %v1014
    %v1019 = vsub.f32 %v1011, %v1015
    %v1020 = vsub.f32 %v1012, %v1016
    %v1021 = vmax.f32 %v1017, 0.0
    %v1022 = vmax.f32 %v1018, 0.0
    %v1023 = vmax.f32 %v1019, 0.0
    %v1024 = vmax.f32 %v1020, 0.0
    %v1025 = vadd.f32 %v1021, 1e-05
    %v1026 = vadd.f32 %v1022, 1e-05
    %v1027 = vadd.f32 %v1023, 1e-05
    %v1028 = vadd.f32 %v1024, 1e-05
    %v1029 = vrsqrt.pop %v1025
    %v1030 = vrsqrt.pop %v1026
    %v1031 = vrsqrt.pop %v1027
    %v1032 = vrsqrt.pop %v1028
    %v1033 = vmul.f32 %v115, %v1029
    %v1034 = vmul.f32 %v116, %v1030
    %v1035 = vmul.f32 %v117, %v1031
    %v1036 = vmul.f32 %v118, %v1032
    %v1037 = vmul.f32 %v857, %v1033
    %v1038 = vmul.f32 %v858, %v1034
    %v1039 = vmul.f32 %v859, %v1035
    %v1040 = vmul.f32 %v860, %v1036
    %v1045 = vrot.slane %v1037, 7
    %v1046 = vrot.slane %v1038, 7
    %v1047 = vrot.slane %v1039, 7
    %v1048 = vrot.slane %v1040, 7
    %v1053 = vsub.f32 %v115, %v1045
    %v1054 = vsub.f32 %v116, %v1046
    %v1055 = vsub.f32 %v117, %v1047
    %v1056 = vsub.f32 %v118, %v1048
    %v1057 = vlaneseq
    %v1058 = vshrl.u32 %v1057, 7
    %v1059 = vsub.s32 1, %v1058
    %v1060 = vrot.slane %v1033, %v1059
    %v1061 = vlaneseq
    %v1062 = vshrl.u32 %v1061, 7
    %v1063 = vsub.s32 1, %v1062
    %v1064 = vrot.slane %v1034, %v1063
    %v1065 = vlaneseq
    %v1066 = vshrl.u32 %v1065, 7
    %v1067 = vsub.s32 1, %v1066
    %v1068 = vrot.slane %v1035, %v1067
    %v1069 = vlaneseq
    %v1070 = vshrl.u32 %v1069, 7
    %v1071 = vsub.s32 1, %v1070
    %v1072 = vrot.slane %v1036, %v1071
    %v1073 = vmul.f32 %v709, %v1060
    %v1074 = vmul.f32 %v710, %v1064
    %v1075 = vmul.f32 %v711, %v1068
    %v1076 = vmul.f32 %v712, %v1072
    %v1077 = vmul.f32 %v713, %v1060
    %v1078 = vmul.f32 %v714, %v1064
    %v1079 = vmul.f32 %v715, %v1068
    %v1080 = vmul.f32 %v716, %v1072
    %v1081 = vmul.f32 %v717, %v1060
    %v1082 = vmul.f32 %v718, %v1064
    %v1083 = vmul.f32 %v719, %v1068
    %v1084 = vmul.f32 %v720, %v1072
    %v1085 = vmul.f32 %v721, %v1060
    %v1086 = vmul.f32 %v722, %v1064
    %v1087 = vmul.f32 %v723, %v1068
    %v1088 = vmul.f32 %v724, %v1072
    %v1089 = vmul.f32 %v725, %v1060
    %v1090 = vmul.f32 %v726, %v1064
    %v1091 = vmul.f32 %v727, %v1068
    %v1092 = vmul.f32 %v728, %v1072
    %v1093 = vmul.f32 %v729, %v1060
    %v1094 = vmul.f32 %v730, %v1064
    %v1095 = vmul.f32 %v731, %v1068
    %v1096 = vmul.f32 %v732, %v1072
    %v1097 = vmul.f32 %v733, %v1060
    %v1098 = vmul.f32 %v734, %v1064
    %v1099 = vmul.f32 %v735, %v1068
    %v1100 = vmul.f32 %v736, %v1072
    %v1101 = vmul.f32 %v737, %v1060
    %v1102 = vmul.f32 %v738, %v1064
    %v1103 = vmul.f32 %v739, %v1068
    %v1104 = vmul.f32 %v740, %v1072
    %v1105 = vmul.f32 %v741, %v1060
    %v1106 = vmul.f32 %v742, %v1064
    %v1107 = vmul.f32 %v743, %v1068
    %v1108 = vmul.f32 %v744, %v1072
    %v1109 = vmul.f32 %v745, %v1060
    %v1110 = vmul.f32 %v746, %v1064
    %v1111 = vmul.f32 %v747, %v1068
    %v1112 = vmul.f32 %v748, %v1072
    %v1113 = vmul.f32 %v749, %v1060
    %v1114 = vmul.f32 %v750, %v1064
    %v1115 = vmul.f32 %v751, %v1068
    %v1116 = vmul.f32 %v752, %v1072
    %v1117 = vmul.f32 %v753, %v1060
    %v1118 = vmul.f32 %v754, %v1064
    %v1119 = vmul.f32 %v755, %v1068
    %v1120 = vmul.f32 %v756, %v1072
    %v1121 = vmul.f32 %v757, %v1060
    %v1122 = vmul.f32 %v758, %v1064
    %v1123 = vmul.f32 %v759, %v1068
    %v1124 = vmul.f32 %v760, %v1072
    %v1125 = vmul.f32 %v761, %v1060
    %v1126 = vmul.f32 %v762, %v1064
    %v1127 = vmul.f32 %v763, %v1068
    %v1128 = vmul.f32 %v764, %v1072
    %v1129 = vmul.f32 %v765, %v1060
    %v1130 = vmul.f32 %v766, %v1064
    %v1131 = vmul.f32 %v767, %v1068
    %v1132 = vmul.f32 %v768, %v1072
    %v1133 = vmul.f32 %v769, %v1060
    %v1134 = vmul.f32 %v770, %v1064
    %v1135 = vmul.f32 %v771, %v1068
    %v1136 = vmul.f32 %v772, %v1072
    %v1137 = vlaneseq
    %v1138 = vshrl.u32 %v1137, 7
    %v1139 = vsub.s32 2, %v1138
    %v1140 = vrot.slane %v1053, %v1139
    %v1141 = vlaneseq
    %v1142 = vshrl.u32 %v1141, 7
    %v1143 = vsub.s32 2, %v1142
    %v1144 = vrot.slane %v1054, %v1143
    %v1145 = vlaneseq
    %v1146 = vshrl.u32 %v1145, 7
    %v1147 = vsub.s32 2, %v1146
    %v1148 = vrot.slane %v1055, %v1147
    %v1149 = vlaneseq
    %v1150 = vshrl.u32 %v1149, 7
    %v1151 = vsub.s32 2, %v1150
    %v1152 = vrot.slane %v1056, %v1151
    %v1153 = vadd.f32 %v1073, %v1140
    %v1154 = vadd.f32 %v1074, %v1144
    %v1155 = vadd.f32 %v1075, %v1148
    %v1156 = vadd.f32 %v1076, %v1152
    %v1157 = vadd.f32 %v1077, %v1140
    %v1158 = vadd.f32 %v1078, %v1144
    %v1159 = vadd.f32 %v1079, %v1148
    %v1160 = vadd.f32 %v1080, %v1152
    %v1161 = vadd.f32 %v1081, %v1140
    %v1162 = vadd.f32 %v1082, %v1144
    %v1163 = vadd.f32 %v1083, %v1148
    %v1164 = vadd.f32 %v1084, %v1152
    %v1165 = vadd.f32 %v1085, %v1140
    %v1166 = vadd.f32 %v1086, %v1144
    %v1167 = vadd.f32 %v1087, %v1148
    %v1168 = vadd.f32 %v1088, %v1152
    %v1169 = vadd.f32 %v1089, %v1140
    %v1170 = vadd.f32 %v1090, %v1144
    %v1171 = vadd.f32 %v1091, %v1148
    %v1172 = vadd.f32 %v1092, %v1152
    %v1173 = vadd.f32 %v1093, %v1140
    %v1174 = vadd.f32 %v1094, %v1144
    %v1175 = vadd.f32 %v1095, %v1148
    %v1176 = vadd.f32 %v1096, %v1152
    %v1177 = vadd.f32 %v1097, %v1140
    %v1178 = vadd.f32 %v1098, %v1144
    %v1179 = vadd.f32 %v1099, %v1148
    %v1180 = vadd.f32 %v1100, %v1152
    %v1181 = vadd.f32 %v1101, %v1140
    %v1182 = vadd.f32 %v1102, %v1144
    %v1183 = vadd.f32 %v1103, %v1148
    %v1184 = vadd.f32 %v1104, %v1152
    %v1185 = vadd.f32 %v1105, %v1140
    %v1186 = vadd.f32 %v1106, %v1144
    %v1187 = vadd.f32 %v1107, %v1148
    %v1188 = vadd.f32 %v1108, %v1152
    %v1189 = vadd.f32 %v1109, %v1140
    %v1190 = vadd.f32 %v1110, %v1144
    %v1191 = vadd.f32 %v1111, %v1148
    %v1192 = vadd.f32 %v1112, %v1152
    %v1193 = vadd.f32 %v1113, %v1140
    %v1194 = vadd.f32 %v1114, %v1144
    %v1195 = vadd.f32 %v1115, %v1148
    %v1196 = vadd.f32 %v1116, %v1152
    %v1197 = vadd.f32 %v1117, %v1140
    %v1198 = vadd.f32 %v1118, %v1144
    %v1199 = vadd.f32 %v1119, %v1148
    %v1200 = vadd.f32 %v1120, %v1152
    %v1201 = vadd.f32 %v1121, %v1140
    %v1202 = vadd.f32 %v1122, %v1144
    %v1203 = vadd.f32 %v1123, %v1148
    %v1204 = vadd.f32 %v1124, %v1152
    %v1205 = vadd.f32 %v1125, %v1140
    %v1206 = vadd.f32 %v1126, %v1144
    %v1207 = vadd.f32 %v1127, %v1148
    %v1208 = vadd.f32 %v1128, %v1152
    %v1209 = vadd.f32 %v1129, %v1140
    %v1210 = vadd.f32 %v1130, %v1144
    %v1211 = vadd.f32 %v1131, %v1148
    %v1212 = vadd.f32 %v1132, %v1152
    %v1213 = vadd.f32 %v1133, %v1140
    %v1214 = vadd.f32 %v1134, %v1144
    %v1215 = vadd.f32 %v1135, %v1148
    %v1216 = vadd.f32 %v1136, %v1152
    %v1217 = vld [vmem:[#allocation4] sm:$0xff]
    %v1218 = vld [vmem:[#allocation4 + $0x8] sm:$0xff]
    %v1219 = vld [vmem:[#allocation4 + $0x10] sm:$0xff]
    %v1220 = vld [vmem:[#allocation4 + $0x18] sm:$0xff]
    %v1221 = vld [vmem:[#allocation4 + $0x20] sm:$0xff]
    %v1222 = vld [vmem:[#allocation4 + $0x28] sm:$0xff]
    %v1223 = vld [vmem:[#allocation4 + $0x30] sm:$0xff]
    %v1224 = vld [vmem:[#allocation4 + $0x38] sm:$0xff]
    %v1225 = vld [vmem:[#allocation4 + $0x40] sm:$0xff]
    %v1226 = vld [vmem:[#allocation4 + $0x48] sm:$0xff]
    %v1227 = vld [vmem:[#allocation4 + $0x50] sm:$0xff]
    %v1228 = vld [vmem:[#allocation4 + $0x58] sm:$0xff]
    %v1229 = vld [vmem:[#allocation4 + $0x60] sm:$0xff]
    %v1230 = vld [vmem:[#allocation4 + $0x68] sm:$0xff]
    %v1231 = vld [vmem:[#allocation4 + $0x70] sm:$0xff]
    %v1232 = vld [vmem:[#allocation4 + $0x78] sm:$0xff]
    %v1233 = vld [vmem:[#allocation4 + $0x80] sm:$0xff]
    %v1234 = vld [vmem:[#allocation4 + $0x88] sm:$0xff]
    %v1235 = vld [vmem:[#allocation4 + $0x90] sm:$0xff]
    %v1236 = vld [vmem:[#allocation4 + $0x98] sm:$0xff]
    %v1237 = vld [vmem:[#allocation4 + $0xa0] sm:$0xff]
    %v1238 = vld [vmem:[#allocation4 + $0xa8] sm:$0xff]
    %v1239 = vld [vmem:[#allocation4 + $0xb0] sm:$0xff]
    %v1240 = vld [vmem:[#allocation4 + $0xb8] sm:$0xff]
    %v1241 = vld [vmem:[#allocation4 + $0xc0] sm:$0xff]
    %v1242 = vld [vmem:[#allocation4 + $0xc8] sm:$0xff]
    %v1243 = vld [vmem:[#allocation4 + $0xd0] sm:$0xff]
    %v1244 = vld [vmem:[#allocation4 + $0xd8] sm:$0xff]
    %v1245 = vld [vmem:[#allocation4 + $0xe0] sm:$0xff]
    %v1246 = vld [vmem:[#allocation4 + $0xe8] sm:$0xff]
    %v1247 = vld [vmem:[#allocation4 + $0xf0] sm:$0xff]
    %v1248 = vld [vmem:[#allocation4 + $0xf8] sm:$0xff]
    %v1249 = vld [vmem:[#allocation4 + $0x100] sm:$0xff]
    %v1250 = vld [vmem:[#allocation4 + $0x108] sm:$0xff]
    %v1251 = vld [vmem:[#allocation4 + $0x110] sm:$0xff]
    %v1252 = vld [vmem:[#allocation4 + $0x118] sm:$0xff]
    %v1253 = vld [vmem:[#allocation4 + $0x120] sm:$0xff]
    %v1254 = vld [vmem:[#allocation4 + $0x128] sm:$0xff]
    %v1255 = vld [vmem:[#allocation4 + $0x130] sm:$0xff]
    %v1256 = vld [vmem:[#allocation4 + $0x138] sm:$0xff]
    %v1257 = vld [vmem:[#allocation4 + $0x140] sm:$0xff]
    %v1258 = vld [vmem:[#allocation4 + $0x148] sm:$0xff]
    %v1259 = vld [vmem:[#allocation4 + $0x150] sm:$0xff]
    %v1260 = vld [vmem:[#allocation4 + $0x158] sm:$0xff]
    %v1261 = vld [vmem:[#allocation4 + $0x160] sm:$0xff]
    %v1262 = vld [vmem:[#allocation4 + $0x168] sm:$0xff]
    %v1263 = vld [vmem:[#allocation4 + $0x170] sm:$0xff]
    %v1264 = vld [vmem:[#allocation4 + $0x178] sm:$0xff]
    %v1265 = vld [vmem:[#allocation4 + $0x180] sm:$0xff]
    %v1266 = vld [vmem:[#allocation4 + $0x188] sm:$0xff]
    %v1267 = vld [vmem:[#allocation4 + $0x190] sm:$0xff]
    %v1268 = vld [vmem:[#allocation4 + $0x198] sm:$0xff]
    %v1269 = vld [vmem:[#allocation4 + $0x1a0] sm:$0xff]
    %v1270 = vld [vmem:[#allocation4 + $0x1a8] sm:$0xff]
    %v1271 = vld [vmem:[#allocation4 + $0x1b0] sm:$0xff]
    %v1272 = vld [vmem:[#allocation4 + $0x1b8] sm:$0xff]
    %v1273 = vld [vmem:[#allocation4 + $0x1c0] sm:$0xff]
    %v1274 = vld [vmem:[#allocation4 + $0x1c8] sm:$0xff]
    %v1275 = vld [vmem:[#allocation4 + $0x1d0] sm:$0xff]
    %v1276 = vld [vmem:[#allocation4 + $0x1d8] sm:$0xff]
    %v1277 = vld [vmem:[#allocation4 + $0x1e0] sm:$0xff]
    %v1278 = vld [vmem:[#allocation4 + $0x1e8] sm:$0xff]
    %v1279 = vld [vmem:[#allocation4 + $0x1f0] sm:$0xff]
    %v1280 = vld [vmem:[#allocation4 + $0x1f8] sm:$0xff]
    %v1281 = vld [vmem:[#allocation4 + $0x200] sm:$0xff]
    %v1282 = vld [vmem:[#allocation4 + $0x208] sm:$0xff]
    %v1283 = vld [vmem:[#allocation4 + $0x210] sm:$0xff]
    %v1284 = vld [vmem:[#allocation4 + $0x218] sm:$0xff]
    %v1285 = vld [vmem:[#allocation4 + $0x220] sm:$0xff]
    %v1286 = vld [vmem:[#allocation4 + $0x228] sm:$0xff]
    %v1287 = vld [vmem:[#allocation4 + $0x230] sm:$0xff]
    %v1288 = vld [vmem:[#allocation4 + $0x238] sm:$0xff]
    %v1289 = vld [vmem:[#allocation4 + $0x240] sm:$0xff]
    %v1290 = vld [vmem:[#allocation4 + $0x248] sm:$0xff]
    %v1291 = vld [vmem:[#allocation4 + $0x250] sm:$0xff]
    %v1292 = vld [vmem:[#allocation4 + $0x258] sm:$0xff]
    %v1293 = vld [vmem:[#allocation4 + $0x260] sm:$0xff]
    %v1294 = vld [vmem:[#allocation4 + $0x268] sm:$0xff]
    %v1295 = vld [vmem:[#allocation4 + $0x270] sm:$0xff]
    %v1296 = vld [vmem:[#allocation4 + $0x278] sm:$0xff]
    %v1297 = vld [vmem:[#allocation4 + $0x280] sm:$0xff]
    %v1298 = vld [vmem:[#allocation4 + $0x288] sm:$0xff]
    %v1299 = vld [vmem:[#allocation4 + $0x290] sm:$0xff]
    %v1300 = vld [vmem:[#allocation4 + $0x298] sm:$0xff]
    %v1301 = vld [vmem:[#allocation4 + $0x2a0] sm:$0xff]
    %v1302 = vld [vmem:[#allocation4 + $0x2a8] sm:$0xff]
    %v1303 = vld [vmem:[#allocation4 + $0x2b0] sm:$0xff]
    %v1304 = vld [vmem:[#allocation4 + $0x2b8] sm:$0xff]
    %v1305 = vld [vmem:[#allocation4 + $0x2c0] sm:$0xff]
    %v1306 = vld [vmem:[#allocation4 + $0x2c8] sm:$0xff]
    %v1307 = vld [vmem:[#allocation4 + $0x2d0] sm:$0xff]
    %v1308 = vld [vmem:[#allocation4 + $0x2d8] sm:$0xff]
    %v1309 = vld [vmem:[#allocation4 + $0x2e0] sm:$0xff]
    %v1310 = vld [vmem:[#allocation4 + $0x2e8] sm:$0xff]
    %v1311 = vld [vmem:[#allocation4 + $0x2f0] sm:$0xff]
    %v1312 = vld [vmem:[#allocation4 + $0x2f8] sm:$0xff]
    %v1313 = vld [vmem:[#allocation4 + $0x300] sm:$0xff]
    %v1314 = vld [vmem:[#allocation4 + $0x308] sm:$0xff]
    %v1315 = vld [vmem:[#allocation4 + $0x310] sm:$0xff]
    %v1316 = vld [vmem:[#allocation4 + $0x318] sm:$0xff]
    %v1317 = vld [vmem:[#allocation4 + $0x320] sm:$0xff]
    %v1318 = vld [vmem:[#allocation4 + $0x328] sm:$0xff]
    %v1319 = vld [vmem:[#allocation4 + $0x330] sm:$0xff]
    %v1320 = vld [vmem:[#allocation4 + $0x338] sm:$0xff]
    %v1321 = vld [vmem:[#allocation4 + $0x340] sm:$0xff]
    %v1322 = vld [vmem:[#allocation4 + $0x348] sm:$0xff]
    %v1323 = vld [vmem:[#allocation4 + $0x350] sm:$0xff]
    %v1324 = vld [vmem:[#allocation4 + $0x358] sm:$0xff]
    %v1325 = vld [vmem:[#allocation4 + $0x360] sm:$0xff]
    %v1326 = vld [vmem:[#allocation4 + $0x368] sm:$0xff]
    %v1327 = vld [vmem:[#allocation4 + $0x370] sm:$0xff]
    %v1328 = vld [vmem:[#allocation4 + $0x378] sm:$0xff]
    %v1329 = vld [vmem:[#allocation4 + $0x380] sm:$0xff]
    %v1330 = vld [vmem:[#allocation4 + $0x388] sm:$0xff]
    %v1331 = vld [vmem:[#allocation4 + $0x390] sm:$0xff]
    %v1332 = vld [vmem:[#allocation4 + $0x398] sm:$0xff]
    %v1333 = vld [vmem:[#allocation4 + $0x3a0] sm:$0xff]
    %v1334 = vld [vmem:[#allocation4 + $0x3a8] sm:$0xff]
    %v1335 = vld [vmem:[#allocation4 + $0x3b0] sm:$0xff]
    %v1336 = vld [vmem:[#allocation4 + $0x3b8] sm:$0xff]
    %v1337 = vld [vmem:[#allocation4 + $0x3c0] sm:$0xff]
    %v1338 = vld [vmem:[#allocation4 + $0x3c8] sm:$0xff]
    %v1339 = vld [vmem:[#allocation4 + $0x3d0] sm:$0xff]
    %v1340 = vld [vmem:[#allocation4 + $0x3d8] sm:$0xff]
    %v1341 = vld [vmem:[#allocation4 + $0x3e0] sm:$0xff]
    %v1342 = vld [vmem:[#allocation4 + $0x3e8] sm:$0xff]
    %v1343 = vld [vmem:[#allocation4 + $0x3f0] sm:$0xff]
    %v1344 = vld [vmem:[#allocation4 + $0x3f8] sm:$0xff]
    %v1345 = vpack.c.bf16 %v1157, %v1153
    %v1346 = vpack.c.bf16 %v1158, %v1154
    %v1347 = vpack.c.bf16 %v1159, %v1155
    %v1348 = vpack.c.bf16 %v1160, %v1156
    %v1349 = vpack.c.bf16 %v1165, %v1161
    %v1350 = vpack.c.bf16 %v1166, %v1162
    %v1351 = vpack.c.bf16 %v1167, %v1163
    %v1352 = vpack.c.bf16 %v1168, %v1164
    %v1353 = vpack.c.bf16 %v1173, %v1169
    %v1354 = vpack.c.bf16 %v1174, %v1170
    %v1355 = vpack.c.bf16 %v1175, %v1171
    %v1356 = vpack.c.bf16 %v1176, %v1172
    %v1357 = vpack.c.bf16 %v1181, %v1177
    %v1358 = vpack.c.bf16 %v1182, %v1178
    %v1359 = vpack.c.bf16 %v1183, %v1179
    %v1360 = vpack.c.bf16 %v1184, %v1180
    %v1361 = vpack.c.bf16 %v1189, %v1185
    %v1362 = vpack.c.bf16 %v1190, %v1186
    %v1363 = vpack.c.bf16 %v1191, %v1187
    %v1364 = vpack.c.bf16 %v1192, %v1188
    %v1365 = vpack.c.bf16 %v1197, %v1193
    %v1366 = vpack.c.bf16 %v1198, %v1194
    %v1367 = vpack.c.bf16 %v1199, %v1195
    %v1368 = vpack.c.bf16 %v1200, %v1196
    %v1369 = vpack.c.bf16 %v1205, %v1201
    %v1370 = vpack.c.bf16 %v1206, %v1202
    %v1371 = vpack.c.bf16 %v1207, %v1203
    %v1372 = vpack.c.bf16 %v1208, %v1204
    %v1373 = vpack.c.bf16 %v1213, %v1209
    %v1374 = vpack.c.bf16 %v1214, %v1210
    %v1375 = vpack.c.bf16 %v1215, %v1211
    %v1376 = vpack.c.bf16 %v1216, %v1212
    %v1377 = vlaneseq
    %v1378 = vshrl.u32 %v1377, 7
    %v1379 = vsub.s32 3, %v1378
    %v1380 = vrot.slane %v115, %v1379
    %v1381 = vlaneseq
    %v1382 = vshrl.u32 %v1381, 7
    %v1383 = vsub.s32 3, %v1382
    %v1384 = vrot.slane %v116, %v1383
    %v1385 = vlaneseq
    %v1386 = vshrl.u32 %v1385, 7
    %v1387 = vsub.s32 3, %v1386
    %v1388 = vrot.slane %v117, %v1387
    %v1389 = vlaneseq
    %v1390 = vshrl.u32 %v1389, 7
    %v1391 = vsub.s32 3, %v1390
    %v1392 = vrot.slane %v118, %v1391
    %v1521 = vunpack.c.l.b16 %v1217
    %v1522 = vunpack.c.h.b16 %v1217
    %v1523 = vunpack.c.l.b16 %v1218
    %v1524 = vunpack.c.h.b16 %v1218
    %v1525 = vunpack.c.l.b16 %v1219
    %v1526 = vunpack.c.h.b16 %v1219
    %v1527 = vunpack.c.l.b16 %v1220
    %v1528 = vunpack.c.h.b16 %v1220
    %v1529 = vunpack.c.l.b16 %v1221
    %v1530 = vunpack.c.h.b16 %v1221
    %v1531 = vunpack.c.l.b16 %v1222
    %v1532 = vunpack.c.h.b16 %v1222
    %v1533 = vunpack.c.l.b16 %v1223
    %v1534 = vunpack.c.h.b16 %v1223
    %v1535 = vunpack.c.l.b16 %v1224
    %v1536 = vunpack.c.h.b16 %v1224
    %v1537 = vunpack.c.l.b16 %v1225
    %v1538 = vunpack.c.h.b16 %v1225
    %v1539 = vunpack.c.l.b16 %v1226
    %v1540 = vunpack.c.h.b16 %v1226
    %v1541 = vunpack.c.l.b16 %v1227
    %v1542 = vunpack.c.h.b16 %v1227
    %v1543 = vunpack.c.l.b16 %v1228
    %v1544 = vunpack.c.h.b16 %v1228
    %v1545 = vunpack.c.l.b16 %v1229
    %v1546 = vunpack.c.h.b16 %v1229
    %v1547 = vunpack.c.l.b16 %v1230
    %v1548 = vunpack.c.h.b16 %v1230
    %v1549 = vunpack.c.l.b16 %v1231
    %v1550 = vunpack.c.h.b16 %v1231
    %v1551 = vunpack.c.l.b16 %v1232
    %v1552 = vunpack.c.h.b16 %v1232
    %v1553 = vunpack.c.l.b16 %v1233
    %v1554 = vunpack.c.h.b16 %v1233
    %v1555 = vunpack.c.l.b16 %v1234
    %v1556 = vunpack.c.h.b16 %v1234
    %v1557 = vunpack.c.l.b16 %v1235
    %v1558 = vunpack.c.h.b16 %v1235
    %v1559 = vunpack.c.l.b16 %v1236
    %v1560 = vunpack.c.h.b16 %v1236
    %v1561 = vunpack.c.l.b16 %v1237
    %v1562 = vunpack.c.h.b16 %v1237
    %v1563 = vunpack.c.l.b16 %v1238
    %v1564 = vunpack.c.h.b16 %v1238
    %v1565 = vunpack.c.l.b16 %v1239
    %v1566 = vunpack.c.h.b16 %v1239
    %v1567 = vunpack.c.l.b16 %v1240
    %v1568 = vunpack.c.h.b16 %v1240
    %v1569 = vunpack.c.l.b16 %v1241
    %v1570 = vunpack.c.h.b16 %v1241
    %v1571 = vunpack.c.l.b16 %v1242
    %v1572 = vunpack.c.h.b16 %v1242
    %v1573 = vunpack.c.l.b16 %v1243
    %v1574 = vunpack.c.h.b16 %v1243
    %v1575 = vunpack.c.l.b16 %v1244
    %v1576 = vunpack.c.h.b16 %v1244
    %v1577 = vunpack.c.l.b16 %v1245
    %v1578 = vunpack.c.h.b16 %v1245
    %v1579 = vunpack.c.l.b16 %v1246
    %v1580 = vunpack.c.h.b16 %v1246
    %v1581 = vunpack.c.l.b16 %v1247
    %v1582 = vunpack.c.h.b16 %v1247
    %v1583 = vunpack.c.l.b16 %v1248
    %v1584 = vunpack.c.h.b16 %v1248
    %v1585 = vunpack.c.l.b16 %v1249
    %v1586 = vunpack.c.h.b16 %v1249
    %v1587 = vunpack.c.l.b16 %v1250
    %v1588 = vunpack.c.h.b16 %v1250
    %v1589 = vunpack.c.l.b16 %v1251
    %v1590 = vunpack.c.h.b16 %v1251
    %v1591 = vunpack.c.l.b16 %v1252
    %v1592 = vunpack.c.h.b16 %v1252
    %v1593 = vunpack.c.l.b16 %v1253
    %v1594 = vunpack.c.h.b16 %v1253
    %v1595 = vunpack.c.l.b16 %v1254
    %v1596 = vunpack.c.h.b16 %v1254
    %v1597 = vunpack.c.l.b16 %v1255
    %v1598 = vunpack.c.h.b16 %v1255
    %v1599 = vunpack.c.l.b16 %v1256
    %v1600 = vunpack.c.h.b16 %v1256
    %v1601 = vunpack.c.l.b16 %v1257
    %v1602 = vunpack.c.h.b16 %v1257
    %v1603 = vunpack.c.l.b16 %v1258
    %v1604 = vunpack.c.h.b16 %v1258
    %v1605 = vunpack.c.l.b16 %v1259
    %v1606 = vunpack.c.h.b16 %v1259
    %v1607 = vunpack.c.l.b16 %v1260
    %v1608 = vunpack.c.h.b16 %v1260
    %v1609 = vunpack.c.l.b16 %v1261
    %v1610 = vunpack.c.h.b16 %v1261
    %v1611 = vunpack.c.l.b16 %v1262
    %v1612 = vunpack.c.h.b16 %v1262
    %v1613 = vunpack.c.l.b16 %v1263
    %v1614 = vunpack.c.h.b16 %v1263
    %v1615 = vunpack.c.l.b16 %v1264
    %v1616 = vunpack.c.h.b16 %v1264
    %v1617 = vunpack.c.l.b16 %v1265
    %v1618 = vunpack.c.h.b16 %v1265
    %v1619 = vunpack.c.l.b16 %v1266
    %v1620 = vunpack.c.h.b16 %v1266
    %v1621 = vunpack.c.l.b16 %v1267
    %v1622 = vunpack.c.h.b16 %v1267
    %v1623 = vunpack.c.l.b16 %v1268
    %v1624 = vunpack.c.h.b16 %v1268
    %v1625 = vunpack.c.l.b16 %v1269
    %v1626 = vunpack.c.h.b16 %v1269
    %v1627 = vunpack.c.l.b16 %v1270
    %v1628 = vunpack.c.h.b16 %v1270
    %v1629 = vunpack.c.l.b16 %v1271
    %v1630 = vunpack.c.h.b16 %v1271
    %v1631 = vunpack.c.l.b16 %v1272
    %v1632 = vunpack.c.h.b16 %v1272
    %v1633 = vunpack.c.l.b16 %v1273
    %v1634 = vunpack.c.h.b16 %v1273
    %v1635 = vunpack.c.l.b16 %v1274
    %v1636 = vunpack.c.h.b16 %v1274
    %v1637 = vunpack.c.l.b16 %v1275
    %v1638 = vunpack.c.h.b16 %v1275
    %v1639 = vunpack.c.l.b16 %v1276
    %v1640 = vunpack.c.h.b16 %v1276
    %v1641 = vunpack.c.l.b16 %v1277
    %v1642 = vunpack.c.h.b16 %v1277
    %v1643 = vunpack.c.l.b16 %v1278
    %v1644 = vunpack.c.h.b16 %v1278
    %v1645 = vunpack.c.l.b16 %v1279
    %v1646 = vunpack.c.h.b16 %v1279
    %v1647 = vunpack.c.l.b16 %v1280
    %v1648 = vunpack.c.h.b16 %v1280
    %v1649 = vunpack.c.l.b16 %v1281
    %v1650 = vunpack.c.h.b16 %v1281
    %v1651 = vunpack.c.l.b16 %v1282
    %v1652 = vunpack.c.h.b16 %v1282
    %v1653 = vunpack.c.l.b16 %v1283
    %v1654 = vunpack.c.h.b16 %v1283
    %v1655 = vunpack.c.l.b16 %v1284
    %v1656 = vunpack.c.h.b16 %v1284
    %v1657 = vunpack.c.l.b16 %v1285
    %v1658 = vunpack.c.h.b16 %v1285
    %v1659 = vunpack.c.l.b16 %v1286
    %v1660 = vunpack.c.h.b16 %v1286
    %v1661 = vunpack.c.l.b16 %v1287
    %v1662 = vunpack.c.h.b16 %v1287
    %v1663 = vunpack.c.l.b16 %v1288
    %v1664 = vunpack.c.h.b16 %v1288
    %v1665 = vunpack.c.l.b16 %v1289
    %v1666 = vunpack.c.h.b16 %v1289
    %v1667 = vunpack.c.l.b16 %v1290
    %v1668 = vunpack.c.h.b16 %v1290
    %v1669 = vunpack.c.l.b16 %v1291
    %v1670 = vunpack.c.h.b16 %v1291
    %v1671 = vunpack.c.l.b16 %v1292
    %v1672 = vunpack.c.h.b16 %v1292
    %v1673 = vunpack.c.l.b16 %v1293
    %v1674 = vunpack.c.h.b16 %v1293
    %v1675 = vunpack.c.l.b16 %v1294
    %v1676 = vunpack.c.h.b16 %v1294
    %v1677 = vunpack.c.l.b16 %v1295
    %v1678 = vunpack.c.h.b16 %v1295
    %v1679 = vunpack.c.l.b16 %v1296
    %v1680 = vunpack.c.h.b16 %v1296
    %v1681 = vunpack.c.l.b16 %v1297
    %v1682 = vunpack.c.h.b16 %v1297
    %v1683 = vunpack.c.l.b16 %v1298
    %v1684 = vunpack.c.h.b16 %v1298
    %v1685 = vunpack.c.l.b16 %v1299
    %v1686 = vunpack.c.h.b16 %v1299
    %v1687 = vunpack.c.l.b16 %v1300
    %v1688 = vunpack.c.h.b16 %v1300
    %v1689 = vunpack.c.l.b16 %v1301
    %v1690 = vunpack.c.h.b16 %v1301
    %v1691 = vunpack.c.l.b16 %v1302
    %v1692 = vunpack.c.h.b16 %v1302
    %v1693 = vunpack.c.l.b16 %v1303
    %v1694 = vunpack.c.h.b16 %v1303
    %v1695 = vunpack.c.l.b16 %v1304
    %v1696 = vunpack.c.h.b16 %v1304
    %v1697 = vunpack.c.l.b16 %v1305
    %v1698 = vunpack.c.h.b16 %v1305
    %v1699 = vunpack.c.l.b16 %v1306
    %v1700 = vunpack.c.h.b16 %v1306
    %v1701 = vunpack.c.l.b16 %v1307
    %v1702 = vunpack.c.h.b16 %v1307
    %v1703 = vunpack.c.l.b16 %v1308
    %v1704 = vunpack.c.h.b16 %v1308
    %v1705 = vunpack.c.l.b16 %v1309
    %v1706 = vunpack.c.h.b16 %v1309
    %v1707 = vunpack.c.l.b16 %v1310
    %v1708 = vunpack.c.h.b16 %v1310
    %v1709 = vunpack.c.l.b16 %v1311
    %v1710 = vunpack.c.h.b16 %v1311
    %v1711 = vunpack.c.l.b16 %v1312
    %v1712 = vunpack.c.h.b16 %v1312
    %v1713 = vunpack.c.l.b16 %v1313
    %v1714 = vunpack.c.h.b16 %v1313
    %v1715 = vunpack.c.l.b16 %v1314
    %v1716 = vunpack.c.h.b16 %v1314
    %v1717 = vunpack.c.l.b16 %v1315
    %v1718 = vunpack.c.h.b16 %v1315
    %v1719 = vunpack.c.l.b16 %v1316
    %v1720 = vunpack.c.h.b16 %v1316
    %v1721 = vunpack.c.l.b16 %v1317
    %v1722 = vunpack.c.h.b16 %v1317
    %v1723 = vunpack.c.l.b16 %v1318
    %v1724 = vunpack.c.h.b16 %v1318
    %v1725 = vunpack.c.l.b16 %v1319
    %v1726 = vunpack.c.h.b16 %v1319
    %v1727 = vunpack.c.l.b16 %v1320
    %v1728 = vunpack.c.h.b16 %v1320
    %v1729 = vunpack.c.l.b16 %v1321
    %v1730 = vunpack.c.h.b16 %v1321
    %v1731 = vunpack.c.l.b16 %v1322
    %v1732 = vunpack.c.h.b16 %v1322
    %v1733 = vunpack.c.l.b16 %v1323
    %v1734 = vunpack.c.h.b16 %v1323
    %v1735 = vunpack.c.l.b16 %v1324
    %v1736 = vunpack.c.h.b16 %v1324
    %v1737 = vunpack.c.l.b16 %v1325
    %v1738 = vunpack.c.h.b16 %v1325
    %v1739 = vunpack.c.l.b16 %v1326
    %v1740 = vunpack.c.h.b16 %v1326
    %v1741 = vunpack.c.l.b16 %v1327
    %v1742 = vunpack.c.h.b16 %v1327
    %v1743 = vunpack.c.l.b16 %v1328
    %v1744 = vunpack.c.h.b16 %v1328
    %v1745 = vunpack.c.l.b16 %v1329
    %v1746 = vunpack.c.h.b16 %v1329
    %v1747 = vunpack.c.l.b16 %v1330
    %v1748 = vunpack.c.h.b16 %v1330
    %v1749 = vunpack.c.l.b16 %v1331
    %v1750 = vunpack.c.h.b16 %v1331
    %v1751 = vunpack.c.l.b16 %v1332
    %v1752 = vunpack.c.h.b16 %v1332
    %v1753 = vunpack.c.l.b16 %v1333
    %v1754 = vunpack.c.h.b16 %v1333
    %v1755 = vunpack.c.l.b16 %v1334
    %v1756 = vunpack.c.h.b16 %v1334
    %v1757 = vunpack.c.l.b16 %v1335
    %v1758 = vunpack.c.h.b16 %v1335
    %v1759 = vunpack.c.l.b16 %v1336
    %v1760 = vunpack.c.h.b16 %v1336
    %v1761 = vunpack.c.l.b16 %v1337
    %v1762 = vunpack.c.h.b16 %v1337
    %v1763 = vunpack.c.l.b16 %v1338
    %v1764 = vunpack.c.h.b16 %v1338
    %v1765 = vunpack.c.l.b16 %v1339
    %v1766 = vunpack.c.h.b16 %v1339
    %v1767 = vunpack.c.l.b16 %v1340
    %v1768 = vunpack.c.h.b16 %v1340
    %v1769 = vunpack.c.l.b16 %v1341
    %v1770 = vunpack.c.h.b16 %v1341
    %v1771 = vunpack.c.l.b16 %v1342
    %v1772 = vunpack.c.h.b16 %v1342
    %v1773 = vunpack.c.l.b16 %v1343
    %v1774 = vunpack.c.h.b16 %v1343
    %v1775 = vunpack.c.l.b16 %v1344
    %v1776 = vunpack.c.h.b16 %v1344
    %v1777 = vpack.c.b16 %v1525, %v1521
    %v1778 = vpack.c.b16 %v1526, %v1522
    %v1779 = vpack.c.b16 %v1527, %v1523
    %v1780 = vpack.c.b16 %v1528, %v1524
    %v1781 = vpack.c.b16 %v1533, %v1529
    %v1782 = vpack.c.b16 %v1534, %v1530
    %v1783 = vpack.c.b16 %v1535, %v1531
    %v1784 = vpack.c.b16 %v1536, %v1532
    %v1785 = vpack.c.b16 %v1541, %v1537
    %v1786 = vpack.c.b16 %v1542, %v1538
    %v1787 = vpack.c.b16 %v1543, %v1539
    %v1788 = vpack.c.b16 %v1544, %v1540
    %v1789 = vpack.c.b16 %v1549, %v1545
    %v1790 = vpack.c.b16 %v1550, %v1546
    %v1791 = vpack.c.b16 %v1551, %v1547
    %v1792 = vpack.c.b16 %v1552, %v1548
    %v1793 = vpack.c.b16 %v1557, %v1553
    %v1794 = vpack.c.b16 %v1558, %v1554
    %v1795 = vpack.c.b16 %v1559, %v1555
    %v1796 = vpack.c.b16 %v1560, %v1556
    %v1797 = vpack.c.b16 %v1565, %v1561
    %v1798 = vpack.c.b16 %v1566, %v1562
    %v1799 = vpack.c.b16 %v1567, %v1563
    %v1800 = vpack.c.b16 %v1568, %v1564
    %v1801 = vpack.c.b16 %v1573, %v1569
    %v1802 = vpack.c.b16 %v1574, %v1570
    %v1803 = vpack.c.b16 %v1575, %v1571
    %v1804 = vpack.c.b16 %v1576, %v1572
    %v1805 = vpack.c.b16 %v1581, %v1577
    %v1806 = vpack.c.b16 %v1582, %v1578
    %v1807 = vpack.c.b16 %v1583, %v1579
    %v1808 = vpack.c.b16 %v1584, %v1580
    %v1809 = vpack.c.b16 %v1589, %v1585
    %v1810 = vpack.c.b16 %v1590, %v1586
    %v1811 = vpack.c.b16 %v1591, %v1587
    %v1812 = vpack.c.b16 %v1592, %v1588
    %v1813 = vpack.c.b16 %v1597, %v1593
    %v1814 = vpack.c.b16 %v1598, %v1594
    %v1815 = vpack.c.b16 %v1599, %v1595
    %v1816 = vpack.c.b16 %v1600, %v1596
    %v1817 = vpack.c.b16 %v1605, %v1601
    %v1818 = vpack.c.b16 %v1606, %v1602
    %v1819 = vpack.c.b16 %v1607, %v1603
    %v1820 = vpack.c.b16 %v1608, %v1604
    %v1821 = vpack.c.b16 %v1613, %v1609
    %v1822 = vpack.c.b16 %v1614, %v1610
    %v1823 = vpack.c.b16 %v1615, %v1611
    %v1824 = vpack.c.b16 %v1616, %v1612
    %v1825 = vpack.c.b16 %v1621, %v1617
    %v1826 = vpack.c.b16 %v1622, %v1618
    %v1827 = vpack.c.b16 %v1623, %v1619
    %v1828 = vpack.c.b16 %v1624, %v1620
    %v1829 = vpack.c.b16 %v1629, %v1625
    %v1830 = vpack.c.b16 %v1630, %v1626
    %v1831 = vpack.c.b16 %v1631, %v1627
    %v1832 = vpack.c.b16 %v1632, %v1628
    %v1833 = vpack.c.b16 %v1637, %v1633
    %v1834 = vpack.c.b16 %v1638, %v1634
    %v1835 = vpack.c.b16 %v1639, %v1635
    %v1836 = vpack.c.b16 %v1640, %v1636
    %v1837 = vpack.c.b16 %v1645, %v1641
    %v1838 = vpack.c.b16 %v1646, %v1642
    %v1839 = vpack.c.b16 %v1647, %v1643
    %v1840 = vpack.c.b16 %v1648, %v1644
    %v1841 = vpack.c.b16 %v1653, %v1649
    %v1842 = vpack.c.b16 %v1654, %v1650
    %v1843 = vpack.c.b16 %v1655, %v1651
    %v1844 = vpack.c.b16 %v1656, %v1652
    %v1845 = vpack.c.b16 %v1661, %v1657
    %v1846 = vpack.c.b16 %v1662, %v1658
    %v1847 = vpack.c.b16 %v1663, %v1659
    %v1848 = vpack.c.b16 %v1664, %v1660
    %v1849 = vpack.c.b16 %v1669, %v1665
    %v1850 = vpack.c.b16 %v1670, %v1666
    %v1851 = vpack.c.b16 %v1671, %v1667
    %v1852 = vpack.c.b16 %v1672, %v1668
    %v1853 = vpack.c.b16 %v1677, %v1673
    %v1854 = vpack.c.b16 %v1678, %v1674
    %v1855 = vpack.c.b16 %v1679, %v1675
    %v1856 = vpack.c.b16 %v1680, %v1676
    %v1857 = vpack.c.b16 %v1685, %v1681
    %v1858 = vpack.c.b16 %v1686, %v1682
    %v1859 = vpack.c.b16 %v1687, %v1683
    %v1860 = vpack.c.b16 %v1688, %v1684
    %v1861 = vpack.c.b16 %v1693, %v1689
    %v1862 = vpack.c.b16 %v1694, %v1690
    %v1863 = vpack.c.b16 %v1695, %v1691
    %v1864 = vpack.c.b16 %v1696, %v1692
    %v1865 = vpack.c.b16 %v1701, %v1697
    %v1866 = vpack.c.b16 %v1702, %v1698
    %v1867 = vpack.c.b16 %v1703, %v1699
    %v1868 = vpack.c.b16 %v1704, %v1700
    %v1869 = vpack.c.b16 %v1709, %v1705
    %v1870 = vpack.c.b16 %v1710, %v1706
    %v1871 = vpack.c.b16 %v1711, %v1707
    %v1872 = vpack.c.b16 %v1712, %v1708
    %v1873 = vpack.c.b16 %v1717, %v1713
    %v1874 = vpack.c.b16 %v1718, %v1714
    %v1875 = vpack.c.b16 %v1719, %v1715
    %v1876 = vpack.c.b16 %v1720, %v1716
    %v1877 = vpack.c.b16 %v1725, %v1721
    %v1878 = vpack.c.b16 %v1726, %v1722
    %v1879 = vpack.c.b16 %v1727, %v1723
    %v1880 = vpack.c.b16 %v1728, %v1724
    %v1881 = vpack.c.b16 %v1733, %v1729
    %v1882 = vpack.c.b16 %v1734, %v1730
    %v1883 = vpack.c.b16 %v1735, %v1731
    %v1884 = vpack.c.b16 %v1736, %v1732
    %v1885 = vpack.c.b16 %v1741, %v1737
    %v1886 = vpack.c.b16 %v1742, %v1738
    %v1887 = vpack.c.b16 %v1743, %v1739
    %v1888 = vpack.c.b16 %v1744, %v1740
    %v1889 = vpack.c.b16 %v1749, %v1745
    %v1890 = vpack.c.b16 %v1750, %v1746
    %v1891 = vpack.c.b16 %v1751, %v1747
    %v1892 = vpack.c.b16 %v1752, %v1748
    %v1893 = vpack.c.b16 %v1757, %v1753
    %v1894 = vpack.c.b16 %v1758, %v1754
    %v1895 = vpack.c.b16 %v1759, %v1755
    %v1896 = vpack.c.b16 %v1760, %v1756
    %v1897 = vpack.c.b16 %v1765, %v1761
    %v1898 = vpack.c.b16 %v1766, %v1762
    %v1899 = vpack.c.b16 %v1767, %v1763
    %v1900 = vpack.c.b16 %v1768, %v1764
    %v1901 = vpack.c.b16 %v1773, %v1769
    %v1902 = vpack.c.b16 %v1774, %v1770
    %v1903 = vpack.c.b16 %v1775, %v1771
    %v1904 = vpack.c.b16 %v1776, %v1772
    %2033 = vmatprep.subr.bf16.mxu0 %v1806
    %2034 = vmatpush1.bf16.msra.mxu0 %v1805
    %2035 = vmatprep.subr.bf16.mxu0 %v1802
    %2036 = vmatpush1.bf16.msra.mxu0 %v1801
    %2037 = vmatprep.subr.bf16.mxu0 %v1798
    %2038 = vmatpush1.bf16.msra.mxu0 %v1797
    %2039 = vmatprep.subr.bf16.mxu0 %v1794
    %2040 = vmatpush1.bf16.msra.mxu0 %v1793
    %2041 = vmatprep.subr.bf16.mxu0 %v1790
    %2042 = vmatpush1.bf16.msra.mxu0 %v1789
    %2043 = vmatprep.subr.bf16.mxu0 %v1786
    %2044 = vmatpush1.bf16.msra.mxu0 %v1785
    %2045 = vmatprep.subr.bf16.mxu0 %v1782
    %2046 = vmatpush1.bf16.msra.mxu0 %v1781
    %2047 = vmatprep.subr.bf16.mxu0 %v1778
    %2048 = vmatpush1.bf16.msra.mxu0 %v1777
    %2049 = vmatprep.subr.bf16.mxu0 %v1838
    %2050 = vmatpush2.bf16.msra.mxu0 %v1837
    %2051 = vmatprep.subr.bf16.mxu0 %v1834
    %2052 = vmatpush2.bf16.msra.mxu0 %v1833
    %2053 = vmatprep.subr.bf16.mxu0 %v1830
    %2054 = vmatpush2.bf16.msra.mxu0 %v1829
    %2055 = vmatprep.subr.bf16.mxu0 %v1826
    %2056 = vmatpush2.bf16.msra.mxu0 %v1825
    %2057 = vmatprep.subr.bf16.mxu0 %v1822
    %2058 = vmatpush2.bf16.msra.mxu0 %v1821
    %2059 = vmatprep.subr.bf16.mxu0 %v1818
    %2060 = vmatpush2.bf16.msra.mxu0 %v1817
    %2061 = vmatprep.subr.bf16.mxu0 %v1814
    %2062 = vmatpush2.bf16.msra.mxu0 %v1813
    %2063 = vmatprep.subr.bf16.mxu0 %v1810
    %2064 = vmatpush2.bf16.msra.mxu0 %v1809
    %2065 = vmatprep.mubr.bf16.mxu0 %v1346
    %2066 = vmatmul.mubr.bf16.gmra.mxu0 %v1345
    %v2067 = vpop.f32.mrf.mxu0
    %v2068 = vadd.f32 %v1380, %v2067
    %v2069 = vpop.f32.mrf.mxu0
    %v2070 = vadd.f32 %v1384, %v2069
    %v2071 = vpop.f32.mrf.mxu0
    %v2072 = vadd.f32 %v1380, %v2071
    %v2073 = vpop.f32.mrf.mxu0
    %v2074 = vadd.f32 %v1384, %v2073
    %2075 = vmatprep.mubr.bf16.mxu0 %v1350
    %2076 = vmatmul.mubr.bf16.gmra.mxu0 %v1349
    %v2077 = vpop.f32.mrf.mxu0
    %v2078 = vadd.f32 %v1380, %v2077
    %v2079 = vpop.f32.mrf.mxu0
    %v2080 = vadd.f32 %v1384, %v2079
    %v2081 = vpop.f32.mrf.mxu0
    %v2082 = vadd.f32 %v1380, %v2081
    %v2083 = vpop.f32.mrf.mxu0
    %v2084 = vadd.f32 %v1384, %v2083
    %2085 = vmatprep.mubr.bf16.mxu0 %v1354
    %2086 = vmatmul.mubr.bf16.gmra.mxu0 %v1353
    %v2087 = vpop.f32.mrf.mxu0
    %v2088 = vadd.f32 %v1380, %v2087
    %v2089 = vpop.f32.mrf.mxu0
    %v2090 = vadd.f32 %v1384, %v2089
    %v2091 = vpop.f32.mrf.mxu0
    %v2092 = vadd.f32 %v1380, %v2091
    %v2093 = vpop.f32.mrf.mxu0
    %v2094 = vadd.f32 %v1384, %v2093
    %2095 = vmatprep.mubr.bf16.mxu0 %v1358
    %2096 = vmatmul.mubr.bf16.gmra.mxu0 %v1357
    %v2097 = vpop.f32.mrf.mxu0
    %v2098 = vadd.f32 %v1380, %v2097
    %v2099 = vpop.f32.mrf.mxu0
    %v2100 = vadd.f32 %v1384, %v2099
    %v2101 = vpop.f32.mrf.mxu0
    %v2102 = vadd.f32 %v1380, %v2101
    %v2103 = vpop.f32.mrf.mxu0
    %v2104 = vadd.f32 %v1384, %v2103
    %2105 = vmatprep.mubr.bf16.mxu0 %v1362
    %2106 = vmatmul.mubr.bf16.gmra.mxu0 %v1361
    %v2107 = vpop.f32.mrf.mxu0
    %v2108 = vadd.f32 %v1380, %v2107
    %v2109 = vpop.f32.mrf.mxu0
    %v2110 = vadd.f32 %v1384, %v2109
    %v2111 = vpop.f32.mrf.mxu0
    %v2112 = vadd.f32 %v1380, %v2111
    %v2113 = vpop.f32.mrf.mxu0
    %v2114 = vadd.f32 %v1384, %v2113
    %2115 = vmatprep.mubr.bf16.mxu0 %v1366
    %2116 = vmatmul.mubr.bf16.gmra.mxu0 %v1365
    %v2117 = vpop.f32.mrf.mxu0
    %v2118 = vadd.f32 %v1380, %v2117
    %v2119 = vpop.f32.mrf.mxu0
    %v2120 = vadd.f32 %v1384, %v2119
    %v2121 = vpop.f32.mrf.mxu0
    %v2122 = vadd.f32 %v1380, %v2121
    %v2123 = vpop.f32.mrf.mxu0
    %v2124 = vadd.f32 %v1384, %v2123
    %2125 = vmatprep.mubr.bf16.mxu0 %v1370
    %2126 = vmatmul.mubr.bf16.gmra.mxu0 %v1369
    %v2127 = vpop.f32.mrf.mxu0
    %v2128 = vadd.f32 %v1380, %v2127
    %v2129 = vpop.f32.mrf.mxu0
    %v2130 = vadd.f32 %v1384, %v2129
    %v2131 = vpop.f32.mrf.mxu0
    %v2132 = vadd.f32 %v1380, %v2131
    %v2133 = vpop.f32.mrf.mxu0
    %v2134 = vadd.f32 %v1384, %v2133
    %2135 = vmatprep.mubr.bf16.mxu0 %v1374
    %2136 = vmatmul.mubr.bf16.gmra.mxu0 %v1373
    %v2137 = vpop.f32.mrf.mxu0
    %v2138 = vadd.f32 %v1380, %v2137
    %v2139 = vpop.f32.mrf.mxu0
    %v2140 = vadd.f32 %v1384, %v2139
    %v2141 = vpop.f32.mrf.mxu0
    %v2142 = vadd.f32 %v1380, %v2141
    %v2143 = vpop.f32.mrf.mxu0
    %v2144 = vadd.f32 %v1384, %v2143
    %2145 = vdwg.mxu0
    %2146 = vmatprep.subr.bf16.mxu0 %v1870
    %2147 = vmatpush1.bf16.msra.mxu0 %v1869
    %2148 = vmatprep.subr.bf16.mxu0 %v1866
    %2149 = vmatpush1.bf16.msra.mxu0 %v1865
    %2150 = vmatprep.subr.bf16.mxu0 %v1862
    %2151 = vmatpush1.bf16.msra.mxu0 %v1861
    %2152 = vmatprep.subr.bf16.mxu0 %v1858
    %2153 = vmatpush1.bf16.msra.mxu0 %v1857
    %2154 = vmatprep.subr.bf16.mxu0 %v1854
    %2155 = vmatpush1.bf16.msra.mxu0 %v1853
    %2156 = vmatprep.subr.bf16.mxu0 %v1850
    %2157 = vmatpush1.bf16.msra.mxu0 %v1849
    %2158 = vmatprep.subr.bf16.mxu0 %v1846
    %2159 = vmatpush1.bf16.msra.mxu0 %v1845
    %2160 = vmatprep.subr.bf16.mxu0 %v1842
    %2161 = vmatpush1.bf16.msra.mxu0 %v1841
    %2162 = vmatprep.subr.bf16.mxu0 %v1902
    %2163 = vmatpush2.bf16.msra.mxu0 %v1901
    %2164 = vmatprep.subr.bf16.mxu0 %v1898
    %2165 = vmatpush2.bf16.msra.mxu0 %v1897
    %2166 = vmatprep.subr.bf16.mxu0 %v1894
    %2167 = vmatpush2.bf16.msra.mxu0 %v1893
    %2168 = vmatprep.subr.bf16.mxu0 %v1890
    %2169 = vmatpush2.bf16.msra.mxu0 %v1889
    %2170 = vmatprep.subr.bf16.mxu0 %v1886
    %2171 = vmatpush2.bf16.msra.mxu0 %v1885
    %2172 = vmatprep.subr.bf16.mxu0 %v1882
    %2173 = vmatpush2.bf16.msra.mxu0 %v1881
    %2174 = vmatprep.subr.bf16.mxu0 %v1878
    %2175 = vmatpush2.bf16.msra.mxu0 %v1877
    %2176 = vmatprep.subr.bf16.mxu0 %v1874
    %2177 = vmatpush2.bf16.msra.mxu0 %v1873
    %2178 = vmatprep.mubr.bf16.mxu0 %v1348
    %2179 = vmatmul.mubr.bf16.gmra.mxu0 %v1347
    %v2180 = vpop.f32.mrf.mxu0
    %v2181 = vadd.f32 %v2068, %v2180
    %v2182 = vpop.f32.mrf.mxu0
    %v2183 = vadd.f32 %v2070, %v2182
    %v2184 = vpop.f32.mrf.mxu0
    %v2185 = vadd.f32 %v2072, %v2184
    %v2186 = vpop.f32.mrf.mxu0
    %v2187 = vadd.f32 %v2074, %v2186
    %2188 = vmatprep.mubr.bf16.mxu0 %v1352
    %2189 = vmatmul.mubr.bf16.gmra.mxu0 %v1351
    %v2190 = vpop.f32.mrf.mxu0
    %v2191 = vadd.f32 %v2078, %v2190
    %v2192 = vpop.f32.mrf.mxu0
    %v2193 = vadd.f32 %v2080, %v2192
    %v2194 = vpop.f32.mrf.mxu0
    %v2195 = vadd.f32 %v2082, %v2194
    %v2196 = vpop.f32.mrf.mxu0
    %v2197 = vadd.f32 %v2084, %v2196
    %2198 = vmatprep.mubr.bf16.mxu0 %v1356
    %2199 = vmatmul.mubr.bf16.gmra.mxu0 %v1355
    %v2200 = vpop.f32.mrf.mxu0
    %v2201 = vadd.f32 %v2088, %v2200
    %v2202 = vpop.f32.mrf.mxu0
    %v2203 = vadd.f32 %v2090, %v2202
    %v2204 = vpop.f32.mrf.mxu0
    %v2205 = vadd.f32 %v2092, %v2204
    %v2206 = vpop.f32.mrf.mxu0
    %v2207 = vadd.f32 %v2094, %v2206
    %2208 = vmatprep.mubr.bf16.mxu0 %v1360
    %2209 = vmatmul.mubr.bf16.gmra.mxu0 %v1359
    %v2210 = vpop.f32.mrf.mxu0
    %v2211 = vadd.f32 %v2098, %v2210
    %v2212 = vpop.f32.mrf.mxu0
    %v2213 = vadd.f32 %v2100, %v2212
    %v2214 = vpop.f32.mrf.mxu0
    %v2215 = vadd.f32 %v2102, %v2214
    %v2216 = vpop.f32.mrf.mxu0
    %v2217 = vadd.f32 %v2104, %v2216
    %2218 = vmatprep.mubr.bf16.mxu0 %v1364
    %2219 = vmatmul.mubr.bf16.gmra.mxu0 %v1363
    %v2220 = vpop.f32.mrf.mxu0
    %v2221 = vadd.f32 %v2108, %v2220
    %v2222 = vpop.f32.mrf.mxu0
    %v2223 = vadd.f32 %v2110, %v2222
    %v2224 = vpop.f32.mrf.mxu0
    %v2225 = vadd.f32 %v2112, %v2224
    %v2226 = vpop.f32.mrf.mxu0
    %v2227 = vadd.f32 %v2114, %v2226
    %2228 = vmatprep.mubr.bf16.mxu0 %v1368
    %2229 = vmatmul.mubr.bf16.gmra.mxu0 %v1367
    %v2230 = vpop.f32.mrf.mxu0
    %v2231 = vadd.f32 %v2118, %v2230
    %v2232 = vpop.f32.mrf.mxu0
    %v2233 = vadd.f32 %v2120, %v2232
    %v2234 = vpop.f32.mrf.mxu0
    %v2235 = vadd.f32 %v2122, %v2234
    %v2236 = vpop.f32.mrf.mxu0
    %v2237 = vadd.f32 %v2124, %v2236
    %2238 = vmatprep.mubr.bf16.mxu0 %v1372
    %2239 = vmatmul.mubr.bf16.gmra.mxu0 %v1371
    %v2240 = vpop.f32.mrf.mxu0
    %v2241 = vadd.f32 %v2128, %v2240
    %v2242 = vpop.f32.mrf.mxu0
    %v2243 = vadd.f32 %v2130, %v2242
    %v2244 = vpop.f32.mrf.mxu0
    %v2245 = vadd.f32 %v2132, %v2244
    %v2246 = vpop.f32.mrf.mxu0
    %v2247 = vadd.f32 %v2134, %v2246
    %2248 = vmatprep.mubr.bf16.mxu0 %v1376
    %2249 = vmatmul.mubr.bf16.gmra.mxu0 %v1375
    %v2250 = vpop.f32.mrf.mxu0
    %v2251 = vadd.f32 %v2138, %v2250
    %v2252 = vpop.f32.mrf.mxu0
    %v2253 = vadd.f32 %v2140, %v2252
    %v2254 = vpop.f32.mrf.mxu0
    %v2255 = vadd.f32 %v2142, %v2254
    %v2256 = vpop.f32.mrf.mxu0
    %v2257 = vadd.f32 %v2144, %v2256
    %2258 = vdwg.mxu0
    %2259 = vmatprep.subr.bf16.mxu0 %v1808
    %2260 = vmatpush1.bf16.msra.mxu0 %v1807
    %2261 = vmatprep.subr.bf16.mxu0 %v1804
    %2262 = vmatpush1.bf16.msra.mxu0 %v1803
    %2263 = vmatprep.subr.bf16.mxu0 %v1800
    %2264 = vmatpush1.bf16.msra.mxu0 %v1799
    %2265 = vmatprep.subr.bf16.mxu0 %v1796
    %2266 = vmatpush1.bf16.msra.mxu0 %v1795
    %2267 = vmatprep.subr.bf16.mxu0 %v1792
    %2268 = vmatpush1.bf16.msra.mxu0 %v1791
    %2269 = vmatprep.subr.bf16.mxu0 %v1788
    %2270 = vmatpush1.bf16.msra.mxu0 %v1787
    %2271 = vmatprep.subr.bf16.mxu0 %v1784
    %2272 = vmatpush1.bf16.msra.mxu0 %v1783
    %2273 = vmatprep.subr.bf16.mxu0 %v1780
    %2274 = vmatpush1.bf16.msra.mxu0 %v1779
    %2275 = vmatprep.subr.bf16.mxu0 %v1840
    %2276 = vmatpush2.bf16.msra.mxu0 %v1839
    %2277 = vmatprep.subr.bf16.mxu0 %v1836
    %2278 = vmatpush2.bf16.msra.mxu0 %v1835
    %2279 = vmatprep.subr.bf16.mxu0 %v1832
    %2280 = vmatpush2.bf16.msra.mxu0 %v1831
    %2281 = vmatprep.subr.bf16.mxu0 %v1828
    %2282 = vmatpush2.bf16.msra.mxu0 %v1827
    %2283 = vmatprep.subr.bf16.mxu0 %v1824
    %2284 = vmatpush2.bf16.msra.mxu0 %v1823
    %2285 = vmatprep.subr.bf16.mxu0 %v1820
    %2286 = vmatpush2.bf16.msra.mxu0 %v1819
    %2287 = vmatprep.subr.bf16.mxu0 %v1816
    %2288 = vmatpush2.bf16.msra.mxu0 %v1815
    %2289 = vmatprep.subr.bf16.mxu0 %v1812
    %2290 = vmatpush2.bf16.msra.mxu0 %v1811
    %2291 = vmatprep.mubr.bf16.mxu0 %v1346
    %2292 = vmatmul.mubr.bf16.gmra.mxu0 %v1345
    %v2293 = vpop.f32.mrf.mxu0
    %v2294 = vadd.f32 %v1388, %v2293
    %v2295 = vpop.f32.mrf.mxu0
    %v2296 = vadd.f32 %v1392, %v2295
    %v2297 = vpop.f32.mrf.mxu0
    %v2298 = vadd.f32 %v1388, %v2297
    %v2299 = vpop.f32.mrf.mxu0
    %v2300 = vadd.f32 %v1392, %v2299
    %2301 = vmatprep.mubr.bf16.mxu0 %v1350
    %2302 = vmatmul.mubr.bf16.gmra.mxu0 %v1349
    %v2303 = vpop.f32.mrf.mxu0
    %v2304 = vadd.f32 %v1388, %v2303
    %v2305 = vpop.f32.mrf.mxu0
    %v2306 = vadd.f32 %v1392, %v2305
    %v2307 = vpop.f32.mrf.mxu0
    %v2308 = vadd.f32 %v1388, %v2307
    %v2309 = vpop.f32.mrf.mxu0
    %v2310 = vadd.f32 %v1392, %v2309
    %2311 = vmatprep.mubr.bf16.mxu0 %v1354
    %2312 = vmatmul.mubr.bf16.gmra.mxu0 %v1353
    %v2313 = vpop.f32.mrf.mxu0
    %v2314 = vadd.f32 %v1388, %v2313
    %v2315 = vpop.f32.mrf.mxu0
    %v2316 = vadd.f32 %v1392, %v2315
    %v2317 = vpop.f32.mrf.mxu0
    %v2318 = vadd.f32 %v1388, %v2317
    %v2319 = vpop.f32.mrf.mxu0
    %v2320 = vadd.f32 %v1392, %v2319
    %2321 = vmatprep.mubr.bf16.mxu0 %v1358
    %2322 = vmatmul.mubr.bf16.gmra.mxu0 %v1357
    %v2323 = vpop.f32.mrf.mxu0
    %v2324 = vadd.f32 %v1388, %v2323
    %v2325 = vpop.f32.mrf.mxu0
    %v2326 = vadd.f32 %v1392, %v2325
    %v2327 = vpop.f32.mrf.mxu0
    %v2328 = vadd.f32 %v1388, %v2327
    %v2329 = vpop.f32.mrf.mxu0
    %v2330 = vadd.f32 %v1392, %v2329
    %2331 = vmatprep.mubr.bf16.mxu0 %v1362
    %2332 = vmatmul.mubr.bf16.gmra.mxu0 %v1361
    %v2333 = vpop.f32.mrf.mxu0
    %v2334 = vadd.f32 %v1388, %v2333
    %v2335 = vpop.f32.mrf.mxu0
    %v2336 = vadd.f32 %v1392, %v2335
    %v2337 = vpop.f32.mrf.mxu0
    %v2338 = vadd.f32 %v1388, %v2337
    %v2339 = vpop.f32.mrf.mxu0
    %v2340 = vadd.f32 %v1392, %v2339
    %2341 = vmatprep.mubr.bf16.mxu0 %v1366
    %2342 = vmatmul.mubr.bf16.gmra.mxu0 %v1365
    %v2343 = vpop.f32.mrf.mxu0
    %v2344 = vadd.f32 %v1388, %v2343
    %v2345 = vpop.f32.mrf.mxu0
    %v2346 = vadd.f32 %v1392, %v2345
    %v2347 = vpop.f32.mrf.mxu0
    %v2348 = vadd.f32 %v1388, %v2347
    %v2349 = vpop.f32.mrf.mxu0
    %v2350 = vadd.f32 %v1392, %v2349
    %2351 = vmatprep.mubr.bf16.mxu0 %v1370
    %2352 = vmatmul.mubr.bf16.gmra.mxu0 %v1369
    %v2353 = vpop.f32.mrf.mxu0
    %v2354 = vadd.f32 %v1388, %v2353
    %v2355 = vpop.f32.mrf.mxu0
    %v2356 = vadd.f32 %v1392, %v2355
    %v2357 = vpop.f32.mrf.mxu0
    %v2358 = vadd.f32 %v1388, %v2357
    %v2359 = vpop.f32.mrf.mxu0
    %v2360 = vadd.f32 %v1392, %v2359
    %2361 = vmatprep.mubr.bf16.mxu0 %v1374
    %2362 = vmatmul.mubr.bf16.gmra.mxu0 %v1373
    %v2363 = vpop.f32.mrf.mxu0
    %v2364 = vadd.f32 %v1388, %v2363
    %v2365 = vpop.f32.mrf.mxu0
    %v2366 = vadd.f32 %v1392, %v2365
    %v2367 = vpop.f32.mrf.mxu0
    %v2368 = vadd.f32 %v1388, %v2367
    %v2369 = vpop.f32.mrf.mxu0
    %v2370 = vadd.f32 %v1392, %v2369
    %2371 = vdwg.mxu0
    %2372 = vmatprep.subr.bf16.mxu0 %v1872
    %2373 = vmatpush1.bf16.msra.mxu0 %v1871
    %2374 = vmatprep.subr.bf16.mxu0 %v1868
    %2375 = vmatpush1.bf16.msra.mxu0 %v1867
    %2376 = vmatprep.subr.bf16.mxu0 %v1864
    %2377 = vmatpush1.bf16.msra.mxu0 %v1863
    %2378 = vmatprep.subr.bf16.mxu0 %v1860
    %2379 = vmatpush1.bf16.msra.mxu0 %v1859
    %2380 = vmatprep.subr.bf16.mxu0 %v1856
    %2381 = vmatpush1.bf16.msra.mxu0 %v1855
    %2382 = vmatprep.subr.bf16.mxu0 %v1852
    %2383 = vmatpush1.bf16.msra.mxu0 %v1851
    %2384 = vmatprep.subr.bf16.mxu0 %v1848
    %2385 = vmatpush1.bf16.msra.mxu0 %v1847
    %2386 = vmatprep.subr.bf16.mxu0 %v1844
    %2387 = vmatpush1.bf16.msra.mxu0 %v1843
    %2388 = vmatprep.subr.bf16.mxu0 %v1904
    %2389 = vmatpush2.bf16.msra.mxu0 %v1903
    %2390 = vmatprep.subr.bf16.mxu0 %v1900
    %2391 = vmatpush2.bf16.msra.mxu0 %v1899
    %2392 = vmatprep.subr.bf16.mxu0 %v1896
    %2393 = vmatpush2.bf16.msra.mxu0 %v1895
    %2394 = vmatprep.subr.bf16.mxu0 %v1892
    %2395 = vmatpush2.bf16.msra.mxu0 %v1891
    %2396 = vmatprep.subr.bf16.mxu0 %v1888
    %2397 = vmatpush2.bf16.msra.mxu0 %v1887
    %2398 = vmatprep.subr.bf16.mxu0 %v1884
    %2399 = vmatpush2.bf16.msra.mxu0 %v1883
    %2400 = vmatprep.subr.bf16.mxu0 %v1880
    %2401 = vmatpush2.bf16.msra.mxu0 %v1879
    %2402 = vmatprep.subr.bf16.mxu0 %v1876
    %2403 = vmatpush2.bf16.msra.mxu0 %v1875
    %2404 = vmatprep.mubr.bf16.mxu0 %v1348
    %2405 = vmatmul.mubr.bf16.gmra.mxu0 %v1347
    %v2406 = vpop.f32.mrf.mxu0
    %v2407 = vadd.f32 %v2294, %v2406
    %v2408 = vpop.f32.mrf.mxu0
    %v2409 = vadd.f32 %v2296, %v2408
    %v2410 = vpop.f32.mrf.mxu0
    %v2411 = vadd.f32 %v2298, %v2410
    %v2412 = vpop.f32.mrf.mxu0
    %v2413 = vadd.f32 %v2300, %v2412
    %2414 = vmatprep.mubr.bf16.mxu0 %v1352
    %2415 = vmatmul.mubr.bf16.gmra.mxu0 %v1351
    %v2416 = vpop.f32.mrf.mxu0
    %v2417 = vadd.f32 %v2304, %v2416
    %v2418 = vpop.f32.mrf.mxu0
    %v2419 = vadd.f32 %v2306, %v2418
    %v2420 = vpop.f32.mrf.mxu0
    %v2421 = vadd.f32 %v2308, %v2420
    %v2422 = vpop.f32.mrf.mxu0
    %v2423 = vadd.f32 %v2310, %v2422
    %2424 = vmatprep.mubr.bf16.mxu0 %v1356
    %2425 = vmatmul.mubr.bf16.gmra.mxu0 %v1355
    %v2426 = vpop.f32.mrf.mxu0
    %v2427 = vadd.f32 %v2314, %v2426
    %v2428 = vpop.f32.mrf.mxu0
    %v2429 = vadd.f32 %v2316, %v2428
    %v2430 = vpop.f32.mrf.mxu0
    %v2431 = vadd.f32 %v2318, %v2430
    %v2432 = vpop.f32.mrf.mxu0
    %v2433 = vadd.f32 %v2320, %v2432
    %2434 = vmatprep.mubr.bf16.mxu0 %v1360
    %2435 = vmatmul.mubr.bf16.gmra.mxu0 %v1359
    %v2436 = vpop.f32.mrf.mxu0
    %v2437 = vadd.f32 %v2324, %v2436
    %v2438 = vpop.f32.mrf.mxu0
    %v2439 = vadd.f32 %v2326, %v2438
    %v2440 = vpop.f32.mrf.mxu0
    %v2441 = vadd.f32 %v2328, %v2440
    %v2442 = vpop.f32.mrf.mxu0
    %v2443 = vadd.f32 %v2330, %v2442
    %2444 = vmatprep.mubr.bf16.mxu0 %v1364
    %2445 = vmatmul.mubr.bf16.gmra.mxu0 %v1363
    %v2446 = vpop.f32.mrf.mxu0
    %v2447 = vadd.f32 %v2334, %v2446
    %v2448 = vpop.f32.mrf.mxu0
    %v2449 = vadd.f32 %v2336, %v2448
    %v2450 = vpop.f32.mrf.mxu0
    %v2451 = vadd.f32 %v2338, %v2450
    %v2452 = vpop.f32.mrf.mxu0
    %v2453 = vadd.f32 %v2340, %v2452
    %2454 = vmatprep.mubr.bf16.mxu0 %v1368
    %2455 = vmatmul.mubr.bf16.gmra.mxu0 %v1367
    %v2456 = vpop.f32.mrf.mxu0
    %v2457 = vadd.f32 %v2344, %v2456
    %v2458 = vpop.f32.mrf.mxu0
    %v2459 = vadd.f32 %v2346, %v2458
    %v2460 = vpop.f32.mrf.mxu0
    %v2461 = vadd.f32 %v2348, %v2460
    %v2462 = vpop.f32.mrf.mxu0
    %v2463 = vadd.f32 %v2350, %v2462
    %2464 = vmatprep.mubr.bf16.mxu0 %v1372
    %2465 = vmatmul.mubr.bf16.gmra.mxu0 %v1371
    %v2466 = vpop.f32.mrf.mxu0
    %v2467 = vadd.f32 %v2354, %v2466
    %v2468 = vpop.f32.mrf.mxu0
    %v2469 = vadd.f32 %v2356, %v2468
    %v2470 = vpop.f32.mrf.mxu0
    %v2471 = vadd.f32 %v2358, %v2470
    %v2472 = vpop.f32.mrf.mxu0
    %v2473 = vadd.f32 %v2360, %v2472
    %2474 = vmatprep.mubr.bf16.mxu0 %v1376
    %2475 = vmatmul.mubr.bf16.gmra.mxu0 %v1375
    %v2476 = vpop.f32.mrf.mxu0
    %v2477 = vadd.f32 %v2364, %v2476
    %v2478 = vpop.f32.mrf.mxu0
    %v2479 = vadd.f32 %v2366, %v2478
    %v2480 = vpop.f32.mrf.mxu0
    %v2481 = vadd.f32 %v2368, %v2480
    %v2482 = vpop.f32.mrf.mxu0
    %v2483 = vadd.f32 %v2370, %v2482
    %2484 = vdwg.mxu0
    %vm2485 = vcmp.ge.f32.partialorder %v2181, 0.0
    %vm2486 = vcmp.ge.f32.partialorder %v2183, 0.0
    %vm2487 = vcmp.ge.f32.partialorder %v2407, 0.0
    %vm2488 = vcmp.ge.f32.partialorder %v2409, 0.0
    %vm2489 = vcmp.ge.f32.partialorder %v2185, 0.0
    %vm2490 = vcmp.ge.f32.partialorder %v2187, 0.0
    %vm2491 = vcmp.ge.f32.partialorder %v2411, 0.0
    %vm2492 = vcmp.ge.f32.partialorder %v2413, 0.0
    %vm2493 = vcmp.ge.f32.partialorder %v2191, 0.0
    %vm2494 = vcmp.ge.f32.partialorder %v2193, 0.0
    %vm2495 = vcmp.ge.f32.partialorder %v2417, 0.0
    %vm2496 = vcmp.ge.f32.partialorder %v2419, 0.0
    %vm2497 = vcmp.ge.f32.partialorder %v2195, 0.0
    %vm2498 = vcmp.ge.f32.partialorder %v2197, 0.0
    %vm2499 = vcmp.ge.f32.partialorder %v2421, 0.0
    %vm2500 = vcmp.ge.f32.partialorder %v2423, 0.0
    %vm2501 = vcmp.ge.f32.partialorder %v2201, 0.0
    %vm2502 = vcmp.ge.f32.partialorder %v2203, 0.0
    %vm2503 = vcmp.ge.f32.partialorder %v2427, 0.0
    %vm2504 = vcmp.ge.f32.partialorder %v2429, 0.0
    %vm2505 = vcmp.ge.f32.partialorder %v2205, 0.0
    %vm2506 = vcmp.ge.f32.partialorder %v2207, 0.0
    %vm2507 = vcmp.ge.f32.partialorder %v2431, 0.0
    %vm2508 = vcmp.ge.f32.partialorder %v2433, 0.0
    %vm2509 = vcmp.ge.f32.partialorder %v2211, 0.0
    %vm2510 = vcmp.ge.f32.partialorder %v2213, 0.0
    %vm2511 = vcmp.ge.f32.partialorder %v2437, 0.0
    %vm2512 = vcmp.ge.f32.partialorder %v2439, 0.0
    %vm2513 = vcmp.ge.f32.partialorder %v2215, 0.0
    %vm2514 = vcmp.ge.f32.partialorder %v2217, 0.0
    %vm2515 = vcmp.ge.f32.partialorder %v2441, 0.0
    %vm2516 = vcmp.ge.f32.partialorder %v2443, 0.0
    %vm2517 = vcmp.ge.f32.partialorder %v2221, 0.0
    %vm2518 = vcmp.ge.f32.partialorder %v2223, 0.0
    %vm2519 = vcmp.ge.f32.partialorder %v2447, 0.0
    %vm2520 = vcmp.ge.f32.partialorder %v2449, 0.0
    %vm2521 = vcmp.ge.f32.partialorder %v2225, 0.0
    %vm2522 = vcmp.ge.f32.partialorder %v2227, 0.0
    %vm2523 = vcmp.ge.f32.partialorder %v2451, 0.0
    %vm2524 = vcmp.ge.f32.partialorder %v2453, 0.0
    %vm2525 = vcmp.ge.f32.partialorder %v2231, 0.0
    %vm2526 = vcmp.ge.f32.partialorder %v2233, 0.0
    %vm2527 = vcmp.ge.f32.partialorder %v2457, 0.0
    %vm2528 = vcmp.ge.f32.partialorder %v2459, 0.0
    %vm2529 = vcmp.ge.f32.partialorder %v2235, 0.0
    %vm2530 = vcmp.ge.f32.partialorder %v2237, 0.0
    %vm2531 = vcmp.ge.f32.partialorder %v2461, 0.0
    %vm2532 = vcmp.ge.f32.partialorder %v2463, 0.0
    %vm2533 = vcmp.ge.f32.partialorder %v2241, 0.0
    %vm2534 = vcmp.ge.f32.partialorder %v2243, 0.0
    %vm2535 = vcmp.ge.f32.partialorder %v2467, 0.0
    %vm2536 = vcmp.ge.f32.partialorder %v2469, 0.0
    %vm2537 = vcmp.ge.f32.partialorder %v2245, 0.0
    %vm2538 = vcmp.ge.f32.partialorder %v2247, 0.0
    %vm2539 = vcmp.ge.f32.partialorder %v2471, 0.0
    %vm2540 = vcmp.ge.f32.partialorder %v2473, 0.0
    %vm2541 = vcmp.ge.f32.partialorder %v2251, 0.0
    %vm2542 = vcmp.ge.f32.partialorder %v2253, 0.0
    %vm2543 = vcmp.ge.f32.partialorder %v2477, 0.0
    %vm2544 = vcmp.ge.f32.partialorder %v2479, 0.0
    %vm2545 = vcmp.ge.f32.partialorder %v2255, 0.0
    %vm2546 = vcmp.ge.f32.partialorder %v2257, 0.0
    %vm2547 = vcmp.ge.f32.partialorder %v2481, 0.0
    %vm2548 = vcmp.ge.f32.partialorder %v2483, 0.0
    %v2549 = vmul.f32 %v2181, 0.01
    %v2550 = vmul.f32 %v2183, 0.01
    %v2551 = vmul.f32 %v2407, 0.01
    %v2552 = vmul.f32 %v2409, 0.01
    %v2553 = vmul.f32 %v2185, 0.01
    %v2554 = vmul.f32 %v2187, 0.01
    %v2555 = vmul.f32 %v2411, 0.01
    %v2556 = vmul.f32 %v2413, 0.01
    %v2557 = vmul.f32 %v2191, 0.01
    %v2558 = vmul.f32 %v2193, 0.01
    %v2559 = vmul.f32 %v2417, 0.01
    %v2560 = vmul.f32 %v2419, 0.01
    %v2561 = vmul.f32 %v2195, 0.01
    %v2562 = vmul.f32 %v2197, 0.01
    %v2563 = vmul.f32 %v2421, 0.01
    %v2564 = vmul.f32 %v2423, 0.01
    %v2565 = vmul.f32 %v2201, 0.01
    %v2566 = vmul.f32 %v2203, 0.01
    %v2567 = vmul.f32 %v2427, 0.01
    %v2568 = vmul.f32 %v2429, 0.01
    %v2569 = vmul.f32 %v2205, 0.01
    %v2570 = vmul.f32 %v2207, 0.01
    %v2571 = vmul.f32 %v2431, 0.01
    %v2572 = vmul.f32 %v2433, 0.01
    %v2573 = vmul.f32 %v2211, 0.01
    %v2574 = vmul.f32 %v2213, 0.01
    %v2575 = vmul.f32 %v2437, 0.01
    %v2576 = vmul.f32 %v2439, 0.01
    %v2577 = vmul.f32 %v2215, 0.01
    %v2578 = vmul.f32 %v2217, 0.01
    %v2579 = vmul.f32 %v2441, 0.01
    %v2580 = vmul.f32 %v2443, 0.01
    %v2581 = vmul.f32 %v2221, 0.01
    %v2582 = vmul.f32 %v2223, 0.01
    %v2583 = vmul.f32 %v2447, 0.01
    %v2584 = vmul.f32 %v2449, 0.01
    %v2585 = vmul.f32 %v2225, 0.01
    %v2586 = vmul.f32 %v2227, 0.01
    %v2587 = vmul.f32 %v2451, 0.01
    %v2588 = vmul.f32 %v2453, 0.01
    %v2589 = vmul.f32 %v2231, 0.01
    %v2590 = vmul.f32 %v2233, 0.01
    %v2591 = vmul.f32 %v2457, 0.01
    %v2592 = vmul.f32 %v2459, 0.01
    %v2593 = vmul.f32 %v2235, 0.01
    %v2594 = vmul.f32 %v2237, 0.01
    %v2595 = vmul.f32 %v2461, 0.01
    %v2596 = vmul.f32 %v2463, 0.01
    %v2597 = vmul.f32 %v2241, 0.01
    %v2598 = vmul.f32 %v2243, 0.01
    %v2599 = vmul.f32 %v2467, 0.01
    %v2600 = vmul.f32 %v2469, 0.01
    %v2601 = vmul.f32 %v2245, 0.01
    %v2602 = vmul.f32 %v2247, 0.01
    %v2603 = vmul.f32 %v2471, 0.01
    %v2604 = vmul.f32 %v2473, 0.01
    %v2605 = vmul.f32 %v2251, 0.01
    %v2606 = vmul.f32 %v2253, 0.01
    %v2607 = vmul.f32 %v2477, 0.01
    %v2608 = vmul.f32 %v2479, 0.01
    %v2609 = vmul.f32 %v2255, 0.01
    %v2610 = vmul.f32 %v2257, 0.01
    %v2611 = vmul.f32 %v2481, 0.01
    %v2612 = vmul.f32 %v2483, 0.01
    %v2613 = vsel %vm2485, %v2181, %v2549
    %v2614 = vsel %vm2486, %v2183, %v2550
    %v2615 = vsel %vm2487, %v2407, %v2551
    %v2616 = vsel %vm2488, %v2409, %v2552
    %v2617 = vsel %vm2489, %v2185, %v2553
    %v2618 = vsel %vm2490, %v2187, %v2554
    %v2619 = vsel %vm2491, %v2411, %v2555
    %v2620 = vsel %vm2492, %v2413, %v2556
    %v2621 = vsel %vm2493, %v2191, %v2557
    %v2622 = vsel %vm2494, %v2193, %v2558
    %v2623 = vsel %vm2495, %v2417, %v2559
    %v2624 = vsel %vm2496, %v2419, %v2560
    %v2625 = vsel %vm2497, %v2195, %v2561
    %v2626 = vsel %vm2498, %v2197, %v2562
    %v2627 = vsel %vm2499, %v2421, %v2563
    %v2628 = vsel %vm2500, %v2423, %v2564
    %v2629 = vsel %vm2501, %v2201, %v2565
    %v2630 = vsel %vm2502, %v2203, %v2566
    %v2631 = vsel %vm2503, %v2427, %v2567
    %v2632 = vsel %vm2504, %v2429, %v2568
    %v2633 = vsel %vm2505, %v2205, %v2569
    %v2634 = vsel %vm2506, %v2207, %v2570
    %v2635 = vsel %vm2507, %v2431, %v2571
    %v2636 = vsel %vm2508, %v2433, %v2572
    %v2637 = vsel %vm2509, %v2211, %v2573
    %v2638 = vsel %vm2510, %v2213, %v2574
    %v2639 = vsel %vm2511, %v2437, %v2575
    %v2640 = vsel %vm2512, %v2439, %v2576
    %v2641 = vsel %vm2513, %v2215, %v2577
    %v2642 = vsel %vm2514, %v2217, %v2578
    %v2643 = vsel %vm2515, %v2441, %v2579
    %v2644 = vsel %vm2516, %v2443, %v2580
    %v2645 = vsel %vm2517, %v2221, %v2581
    %v2646 = vsel %vm2518, %v2223, %v2582
    %v2647 = vsel %vm2519, %v2447, %v2583
    %v2648 = vsel %vm2520, %v2449, %v2584
    %v2649 = vsel %vm2521, %v2225, %v2585
    %v2650 = vsel %vm2522, %v2227, %v2586
    %v2651 = vsel %vm2523, %v2451, %v2587
    %v2652 = vsel %vm2524, %v2453, %v2588
    %v2653 = vsel %vm2525, %v2231, %v2589
    %v2654 = vsel %vm2526, %v2233, %v2590
    %v2655 = vsel %vm2527, %v2457, %v2591
    %v2656 = vsel %vm2528, %v2459, %v2592
    %v2657 = vsel %vm2529, %v2235, %v2593
    %v2658 = vsel %vm2530, %v2237, %v2594
    %v2659 = vsel %vm2531, %v2461, %v2595
    %v2660 = vsel %vm2532, %v2463, %v2596
    %v2661 = vsel %vm2533, %v2241, %v2597
    %v2662 = vsel %vm2534, %v2243, %v2598
    %v2663 = vsel %vm2535, %v2467, %v2599
    %v2664 = vsel %vm2536, %v2469, %v2600
    %v2665 = vsel %vm2537, %v2245, %v2601
    %v2666 = vsel %vm2538, %v2247, %v2602
    %v2667 = vsel %vm2539, %v2471, %v2603
    %v2668 = vsel %vm2540, %v2473, %v2604
    %v2669 = vsel %vm2541, %v2251, %v2605
    %v2670 = vsel %vm2542, %v2253, %v2606
    %v2671 = vsel %vm2543, %v2477, %v2607
    %v2672 = vsel %vm2544, %v2479, %v2608
    %v2673 = vsel %vm2545, %v2255, %v2609
    %v2674 = vsel %vm2546, %v2257, %v2610
    %v2675 = vsel %vm2547, %v2481, %v2611
    %v2676 = vsel %vm2548, %v2483, %v2612
    %v2677 = vadd.f32 %v2613, %v2617
    %v2678 = vadd.f32 %v2677, %v2621
    %v2679 = vadd.f32 %v2678, %v2625
    %v2680 = vadd.f32 %v2679, %v2629
    %v2681 = vadd.f32 %v2680, %v2633
    %v2682 = vadd.f32 %v2681, %v2637
    %v2683 = vadd.f32 %v2682, %v2641
    %v2684 = vadd.f32 %v2683, %v2645
    %v2685 = vadd.f32 %v2684, %v2649
    %v2686 = vadd.f32 %v2685, %v2653
    %v2687 = vadd.f32 %v2686, %v2657
    %v2688 = vadd.f32 %v2687, %v2661
    %v2689 = vadd.f32 %v2688, %v2665
    %v2690 = vadd.f32 %v2689, %v2669
    %v2691 = vadd.f32 %v2690, %v2673
    %v2692 = vrot.slane %v2691, 4
    %v2693 = vadd.f32 %v2691, %v2692
    %v2694 = vrot.slane %v2693, 2
    %v2695 = vadd.f32 %v2693, %v2694
    %v2696 = vrot.slane %v2695, 1
    %v2697 = vadd.f32 %v2695, %v2696
    %v2698 = vadd.f32 %v2614, %v2618
    %v2699 = vadd.f32 %v2698, %v2622
    %v2700 = vadd.f32 %v2699, %v2626
    %v2701 = vadd.f32 %v2700, %v2630
    %v2702 = vadd.f32 %v2701, %v2634
    %v2703 = vadd.f32 %v2702, %v2638
    %v2704 = vadd.f32 %v2703, %v2642
    %v2705 = vadd.f32 %v2704, %v2646
    %v2706 = vadd.f32 %v2705, %v2650
    %v2707 = vadd.f32 %v2706, %v2654
    %v2708 = vadd.f32 %v2707, %v2658
    %v2709 = vadd.f32 %v2708, %v2662
    %v2710 = vadd.f32 %v2709, %v2666
    %v2711 = vadd.f32 %v2710, %v2670
    %v2712 = vadd.f32 %v2711, %v2674
    %v2713 = vrot.slane %v2712, 4
    %v2714 = vadd.f32 %v2712, %v2713
    %v2715 = vrot.slane %v2714, 2
    %v2716 = vadd.f32 %v2714, %v2715
    %v2717 = vrot.slane %v2716, 1
    %v2718 = vadd.f32 %v2716, %v2717
    %v2719 = vadd.f32 %v2615, %v2619
    %v2720 = vadd.f32 %v2719, %v2623
    %v2721 = vadd.f32 %v2720, %v2627
    %v2722 = vadd.f32 %v2721, %v2631
    %v2723 = vadd.f32 %v2722, %v2635
    %v2724 = vadd.f32 %v2723, %v2639
    %v2725 = vadd.f32 %v2724, %v2643
    %v2726 = vadd.f32 %v2725, %v2647
    %v2727 = vadd.f32 %v2726, %v2651
    %v2728 = vadd.f32 %v2727, %v2655
    %v2729 = vadd.f32 %v2728, %v2659
    %v2730 = vadd.f32 %v2729, %v2663
    %v2731 = vadd.f32 %v2730, %v2667
    %v2732 = vadd.f32 %v2731, %v2671
    %v2733 = vadd.f32 %v2732, %v2675
    %v2734 = vrot.slane %v2733, 4
    %v2735 = vadd.f32 %v2733, %v2734
    %v2736 = vrot.slane %v2735, 2
    %v2737 = vadd.f32 %v2735, %v2736
    %v2738 = vrot.slane %v2737, 1
    %v2739 = vadd.f32 %v2737, %v2738
    %v2740 = vadd.f32 %v2616, %v2620
    %v2741 = vadd.f32 %v2740, %v2624
    %v2742 = vadd.f32 %v2741, %v2628
    %v2743 = vadd.f32 %v2742, %v2632
    %v2744 = vadd.f32 %v2743, %v2636
    %v2745 = vadd.f32 %v2744, %v2640
    %v2746 = vadd.f32 %v2745, %v2644
    %v2747 = vadd.f32 %v2746, %v2648
    %v2748 = vadd.f32 %v2747, %v2652
    %v2749 = vadd.f32 %v2748, %v2656
    %v2750 = vadd.f32 %v2749, %v2660
    %v2751 = vadd.f32 %v2750, %v2664
    %v2752 = vadd.f32 %v2751, %v2668
    %v2753 = vadd.f32 %v2752, %v2672
    %v2754 = vadd.f32 %v2753, %v2676
    %v2755 = vrot.slane %v2754, 4
    %v2756 = vadd.f32 %v2754, %v2755
    %v2757 = vrot.slane %v2756, 2
    %v2758 = vadd.f32 %v2756, %v2757
    %v2759 = vrot.slane %v2758, 1
    %v2760 = vadd.f32 %v2758, %v2759
    %v2761 = vmul.f32 %v2697, 0.0078125
    %v2762 = vmul.f32 %v2718, 0.0078125
    %v2763 = vmul.f32 %v2739, 0.0078125
    %v2764 = vmul.f32 %v2760, 0.0078125
    %v2765 = vmul.f32 %v2613, %v2613
    %v2766 = vmul.f32 %v2614, %v2614
    %v2767 = vmul.f32 %v2615, %v2615
    %v2768 = vmul.f32 %v2616, %v2616
    %v2769 = vmul.f32 %v2617, %v2617
    %v2770 = vmul.f32 %v2618, %v2618
    %v2771 = vmul.f32 %v2619, %v2619
    %v2772 = vmul.f32 %v2620, %v2620
    %v2773 = vmul.f32 %v2621, %v2621
    %v2774 = vmul.f32 %v2622, %v2622
    %v2775 = vmul.f32 %v2623, %v2623
    %v2776 = vmul.f32 %v2624, %v2624
    %v2777 = vmul.f32 %v2625, %v2625
    %v2778 = vmul.f32 %v2626, %v2626
    %v2779 = vmul.f32 %v2627, %v2627
    %v2780 = vmul.f32 %v2628, %v2628
    %v2781 = vmul.f32 %v2629, %v2629
    %v2782 = vmul.f32 %v2630, %v2630
    %v2783 = vmul.f32 %v2631, %v2631
    %v2784 = vmul.f32 %v2632, %v2632
    %v2785 = vmul.f32 %v2633, %v2633
    %v2786 = vmul.f32 %v2634, %v2634
    %v2787 = vmul.f32 %v2635, %v2635
    %v2788 = vmul.f32 %v2636, %v2636
    %v2789 = vmul.f32 %v2637, %v2637
    %v2790 = vmul.f32 %v2638, %v2638
    %v2791 = vmul.f32 %v2639, %v2639
    %v2792 = vmul.f32 %v2640, %v2640
    %v2793 = vmul.f32 %v2641, %v2641
    %v2794 = vmul.f32 %v2642, %v2642
    %v2795 = vmul.f32 %v2643, %v2643
    %v2796 = vmul.f32 %v2644, %v2644
    %v2797 = vmul.f32 %v2645, %v2645
    %v2798 = vmul.f32 %v2646, %v2646
    %v2799 = vmul.f32 %v2647, %v2647
    %v2800 = vmul.f32 %v2648, %v2648
    %v2801 = vmul.f32 %v2649, %v2649
    %v2802 = vmul.f32 %v2650, %v2650
    %v2803 = vmul.f32 %v2651, %v2651
    %v2804 = vmul.f32 %v2652, %v2652
    %v2805 = vmul.f32 %v2653, %v2653
    %v2806 = vmul.f32 %v2654, %v2654
    %v2807 = vmul.f32 %v2655, %v2655
    %v2808 = vmul.f32 %v2656, %v2656
    %v2809 = vmul.f32 %v2657, %v2657
    %v2810 = vmul.f32 %v2658, %v2658
    %v2811 = vmul.f32 %v2659, %v2659
    %v2812 = vmul.f32 %v2660, %v2660
    %v2813 = vmul.f32 %v2661, %v2661
    %v2814 = vmul.f32 %v2662, %v2662
    %v2815 = vmul.f32 %v2663, %v2663
    %v2816 = vmul.f32 %v2664, %v2664
    %v2817 = vmul.f32 %v2665, %v2665
    %v2818 = vmul.f32 %v2666, %v2666
    %v2819 = vmul.f32 %v2667, %v2667
    %v2820 = vmul.f32 %v2668, %v2668
    %v2821 = vmul.f32 %v2669, %v2669
    %v2822 = vmul.f32 %v2670, %v2670
    %v2823 = vmul.f32 %v2671, %v2671
    %v2824 = vmul.f32 %v2672, %v2672
    %v2825 = vmul.f32 %v2673, %v2673
    %v2826 = vmul.f32 %v2674, %v2674
    %v2827 = vmul.f32 %v2675, %v2675
    %v2828 = vmul.f32 %v2676, %v2676
    %v2829 = vadd.f32 %v2765, %v2769
    %v2830 = vadd.f32 %v2829, %v2773
    %v2831 = vadd.f32 %v2830, %v2777
    %v2832 = vadd.f32 %v2831, %v2781
    %v2833 = vadd.f32 %v2832, %v2785
    %v2834 = vadd.f32 %v2833, %v2789
    %v2835 = vadd.f32 %v2834, %v2793
    %v2836 = vadd.f32 %v2835, %v2797
    %v2837 = vadd.f32 %v2836, %v2801
    %v2838 = vadd.f32 %v2837, %v2805
    %v2839 = vadd.f32 %v2838, %v2809
    %v2840 = vadd.f32 %v2839, %v2813
    %v2841 = vadd.f32 %v2840, %v2817
    %v2842 = vadd.f32 %v2841, %v2821
    %v2843 = vadd.f32 %v2842, %v2825
    %v2844 = vrot.slane %v2843, 4
    %v2845 = vadd.f32 %v2843, %v2844
    %v2846 = vrot.slane %v2845, 2
    %v2847 = vadd.f32 %v2845, %v2846
    %v2848 = vrot.slane %v2847, 1
    %v2849 = vadd.f32 %v2847, %v2848
    %v2850 = vadd.f32 %v2766, %v2770
    %v2851 = vadd.f32 %v2850, %v2774
    %v2852 = vadd.f32 %v2851, %v2778
    %v2853 = vadd.f32 %v2852, %v2782
    %v2854 = vadd.f32 %v2853, %v2786
    %v2855 = vadd.f32 %v2854, %v2790
    %v2856 = vadd.f32 %v2855, %v2794
    %v2857 = vadd.f32 %v2856, %v2798
    %v2858 = vadd.f32 %v2857, %v2802
    %v2859 = vadd.f32 %v2858, %v2806
    %v2860 = vadd.f32 %v2859, %v2810
    %v2861 = vadd.f32 %v2860, %v2814
    %v2862 = vadd.f32 %v2861, %v2818
    %v2863 = vadd.f32 %v2862, %v2822
    %v2864 = vadd.f32 %v2863, %v2826
    %v2865 = vrot.slane %v2864, 4
    %v2866 = vadd.f32 %v2864, %v2865
    %v2867 = vrot.slane %v2866, 2
    %v2868 = vadd.f32 %v2866, %v2867
    %v2869 = vrot.slane %v2868, 1
    %v2870 = vadd.f32 %v2868, %v2869
    %v2871 = vadd.f32 %v2767, %v2771
    %v2872 = vadd.f32 %v2871, %v2775
    %v2873 = vadd.f32 %v2872, %v2779
    %v2874 = vadd.f32 %v2873, %v2783
    %v2875 = vadd.f32 %v2874, %v2787
    %v2876 = vadd.f32 %v2875, %v2791
    %v2877 = vadd.f32 %v2876, %v2795
    %v2878 = vadd.f32 %v2877, %v2799
    %v2879 = vadd.f32 %v2878, %v2803
    %v2880 = vadd.f32 %v2879, %v2807
    %v2881 = vadd.f32 %v2880, %v2811
    %v2882 = vadd.f32 %v2881, %v2815
    %v2883 = vadd.f32 %v2882, %v2819
    %v2884 = vadd.f32 %v2883, %v2823
    %v2885 = vadd.f32 %v2884, %v2827
    %v2886 = vrot.slane %v2885, 4
    %v2887 = vadd.f32 %v2885, %v2886
    %v2888 = vrot.slane %v2887, 2
    %v2889 = vadd.f32 %v2887, %v2888
    %v2890 = vrot.slane %v2889, 1
    %v2891 = vadd.f32 %v2889, %v2890
    %v2892 = vadd.f32 %v2768, %v2772
    %v2893 = vadd.f32 %v2892, %v2776
    %v2894 = vadd.f32 %v2893, %v2780
    %v2895 = vadd.f32 %v2894, %v2784
    %v2896 = vadd.f32 %v2895, %v2788
    %v2897 = vadd.f32 %v2896, %v2792
    %v2898 = vadd.f32 %v2897, %v2796
    %v2899 = vadd.f32 %v2898, %v2800
    %v2900 = vadd.f32 %v2899, %v2804
    %v2901 = vadd.f32 %v2900, %v2808
    %v2902 = vadd.f32 %v2901, %v2812
    %v2903 = vadd.f32 %v2902, %v2816
    %v2904 = vadd.f32 %v2903, %v2820
    %v2905 = vadd.f32 %v2904, %v2824
    %v2906 = vadd.f32 %v2905, %v2828
    %v2907 = vrot.slane %v2906, 4
    %v2908 = vadd.f32 %v2906, %v2907
    %v2909 = vrot.slane %v2908, 2
    %v2910 = vadd.f32 %v2908, %v2909
    %v2911 = vrot.slane %v2910, 1
    %v2912 = vadd.f32 %v2910, %v2911
    %v2913 = vmul.f32 %v2849, 0.0078125
    %v2914 = vmul.f32 %v2870, 0.0078125
    %v2915 = vmul.f32 %v2891, 0.0078125
    %v2916 = vmul.f32 %v2912, 0.0078125
    %v2917 = vmul.f32 %v2761, %v2761
    %v2918 = vmul.f32 %v2762, %v2762
    %v2919 = vmul.f32 %v2763, %v2763
    %v2920 = vmul.f32 %v2764, %v2764
    %v2921 = vsub.f32 %v2913, %v2917
    %v2922 = vsub.f32 %v2914, %v2918
    %v2923 = vsub.f32 %v2915, %v2919
    %v2924 = vsub.f32 %v2916, %v2920
    %v2925 = vmax.f32 %v2921, 0.0
    %v2926 = vmax.f32 %v2922, 0.0
    %v2927 = vmax.f32 %v2923, 0.0
    %v2928 = vmax.f32 %v2924, 0.0
    %v2929 = vadd.f32 %v2925, 1e-05
    %v2930 = vadd.f32 %v2926, 1e-05
    %v2931 = vadd.f32 %v2927, 1e-05
    %v2932 = vadd.f32 %v2928, 1e-05
    %v2933 = vrsqrt.pop %v2929
    %v2934 = vrsqrt.pop %v2930
    %v2935 = vrsqrt.pop %v2931
    %v2936 = vrsqrt.pop %v2932
    %v2937 = vmul.f32 %v115, %v2933
    %v2938 = vmul.f32 %v116, %v2934
    %v2939 = vmul.f32 %v117, %v2935
    %v2940 = vmul.f32 %v118, %v2936
    %v2941 = vmul.f32 %v2761, %v2937
    %v2942 = vmul.f32 %v2762, %v2938
    %v2943 = vmul.f32 %v2763, %v2939
    %v2944 = vmul.f32 %v2764, %v2940
    %v2949 = vrot.slane %v2941, 7
    %v2950 = vrot.slane %v2942, 7
    %v2951 = vrot.slane %v2943, 7
    %v2952 = vrot.slane %v2944, 7
    %v2957 = vsub.f32 %v115, %v2949
    %v2958 = vsub.f32 %v116, %v2950
    %v2959 = vsub.f32 %v117, %v2951
    %v2960 = vsub.f32 %v118, %v2952
    %v2961 = vlaneseq
    %v2962 = vshrl.u32 %v2961, 7
    %v2963 = vsub.s32 4, %v2962
    %v2964 = vrot.slane %v2937, %v2963
    %v2965 = vlaneseq
    %v2966 = vshrl.u32 %v2965, 7
    %v2967 = vsub.s32 4, %v2966
    %v2968 = vrot.slane %v2938, %v2967
    %v2969 = vlaneseq
    %v2970 = vshrl.u32 %v2969, 7
    %v2971 = vsub.s32 4, %v2970
    %v2972 = vrot.slane %v2939, %v2971
    %v2973 = vlaneseq
    %v2974 = vshrl.u32 %v2973, 7
    %v2975 = vsub.s32 4, %v2974
    %v2976 = vrot.slane %v2940, %v2975
    %v2977 = vmul.f32 %v2613, %v2964
    %v2978 = vmul.f32 %v2614, %v2968
    %v2979 = vmul.f32 %v2615, %v2972
    %v2980 = vmul.f32 %v2616, %v2976
    %v2981 = vmul.f32 %v2617, %v2964
    %v2982 = vmul.f32 %v2618, %v2968
    %v2983 = vmul.f32 %v2619, %v2972
    %v2984 = vmul.f32 %v2620, %v2976
    %v2985 = vmul.f32 %v2621, %v2964
    %v2986 = vmul.f32 %v2622, %v2968
    %v2987 = vmul.f32 %v2623, %v2972
    %v2988 = vmul.f32 %v2624, %v2976
    %v2989 = vmul.f32 %v2625, %v2964
    %v2990 = vmul.f32 %v2626, %v2968
    %v2991 = vmul.f32 %v2627, %v2972
    %v2992 = vmul.f32 %v2628, %v2976
    %v2993 = vmul.f32 %v2629, %v2964
    %v2994 = vmul.f32 %v2630, %v2968
    %v2995 = vmul.f32 %v2631, %v2972
    %v2996 = vmul.f32 %v2632, %v2976
    %v2997 = vmul.f32 %v2633, %v2964
    %v2998 = vmul.f32 %v2634, %v2968
    %v2999 = vmul.f32 %v2635, %v2972
    %v3000 = vmul.f32 %v2636, %v2976
    %v3001 = vmul.f32 %v2637, %v2964
    %v3002 = vmul.f32 %v2638, %v2968
    %v3003 = vmul.f32 %v2639, %v2972
    %v3004 = vmul.f32 %v2640, %v2976
    %v3005 = vmul.f32 %v2641, %v2964
    %v3006 = vmul.f32 %v2642, %v2968
    %v3007 = vmul.f32 %v2643, %v2972
    %v3008 = vmul.f32 %v2644, %v2976
    %v3009 = vmul.f32 %v2645, %v2964
    %v3010 = vmul.f32 %v2646, %v2968
    %v3011 = vmul.f32 %v2647, %v2972
    %v3012 = vmul.f32 %v2648, %v2976
    %v3013 = vmul.f32 %v2649, %v2964
    %v3014 = vmul.f32 %v2650, %v2968
    %v3015 = vmul.f32 %v2651, %v2972
    %v3016 = vmul.f32 %v2652, %v2976
    %v3017 = vmul.f32 %v2653, %v2964
    %v3018 = vmul.f32 %v2654, %v2968
    %v3019 = vmul.f32 %v2655, %v2972
    %v3020 = vmul.f32 %v2656, %v2976
    %v3021 = vmul.f32 %v2657, %v2964
    %v3022 = vmul.f32 %v2658, %v2968
    %v3023 = vmul.f32 %v2659, %v2972
    %v3024 = vmul.f32 %v2660, %v2976
    %v3025 = vmul.f32 %v2661, %v2964
    %v3026 = vmul.f32 %v2662, %v2968
    %v3027 = vmul.f32 %v2663, %v2972
    %v3028 = vmul.f32 %v2664, %v2976
    %v3029 = vmul.f32 %v2665, %v2964
    %v3030 = vmul.f32 %v2666, %v2968
    %v3031 = vmul.f32 %v2667, %v2972
    %v3032 = vmul.f32 %v2668, %v2976
    %v3033 = vmul.f32 %v2669, %v2964
    %v3034 = vmul.f32 %v2670, %v2968
    %v3035 = vmul.f32 %v2671, %v2972
    %v3036 = vmul.f32 %v2672, %v2976
    %v3037 = vmul.f32 %v2673, %v2964
    %v3038 = vmul.f32 %v2674, %v2968
    %v3039 = vmul.f32 %v2675, %v2972
    %v3040 = vmul.f32 %v2676, %v2976
    %v3041 = vlaneseq
    %v3042 = vshrl.u32 %v3041, 7
    %v3043 = vsub.s32 5, %v3042
    %v3044 = vrot.slane %v2957, %v3043
    %v3045 = vlaneseq
    %v3046 = vshrl.u32 %v3045, 7
    %v3047 = vsub.s32 5, %v3046
    %v3048 = vrot.slane %v2958, %v3047
    %v3049 = vlaneseq
    %v3050 = vshrl.u32 %v3049, 7
    %v3051 = vsub.s32 5, %v3050
    %v3052 = vrot.slane %v2959, %v3051
    %v3053 = vlaneseq
    %v3054 = vshrl.u32 %v3053, 7
    %v3055 = vsub.s32 5, %v3054
    %v3056 = vrot.slane %v2960, %v3055
    %v3057 = vadd.f32 %v2977, %v3044
    %v3058 = vadd.f32 %v2978, %v3048
    %v3059 = vadd.f32 %v2979, %v3052
    %v3060 = vadd.f32 %v2980, %v3056
    %v3061 = vadd.f32 %v2981, %v3044
    %v3062 = vadd.f32 %v2982, %v3048
    %v3063 = vadd.f32 %v2983, %v3052
    %v3064 = vadd.f32 %v2984, %v3056
    %v3065 = vadd.f32 %v2985, %v3044
    %v3066 = vadd.f32 %v2986, %v3048
    %v3067 = vadd.f32 %v2987, %v3052
    %v3068 = vadd.f32 %v2988, %v3056
    %v3069 = vadd.f32 %v2989, %v3044
    %v3070 = vadd.f32 %v2990, %v3048
    %v3071 = vadd.f32 %v2991, %v3052
    %v3072 = vadd.f32 %v2992, %v3056
    %v3073 = vadd.f32 %v2993, %v3044
    %v3074 = vadd.f32 %v2994, %v3048
    %v3075 = vadd.f32 %v2995, %v3052
    %v3076 = vadd.f32 %v2996, %v3056
    %v3077 = vadd.f32 %v2997, %v3044
    %v3078 = vadd.f32 %v2998, %v3048
    %v3079 = vadd.f32 %v2999, %v3052
    %v3080 = vadd.f32 %v3000, %v3056
    %v3081 = vadd.f32 %v3001, %v3044
    %v3082 = vadd.f32 %v3002, %v3048
    %v3083 = vadd.f32 %v3003, %v3052
    %v3084 = vadd.f32 %v3004, %v3056
    %v3085 = vadd.f32 %v3005, %v3044
    %v3086 = vadd.f32 %v3006, %v3048
    %v3087 = vadd.f32 %v3007, %v3052
    %v3088 = vadd.f32 %v3008, %v3056
    %v3089 = vadd.f32 %v3009, %v3044
    %v3090 = vadd.f32 %v3010, %v3048
    %v3091 = vadd.f32 %v3011, %v3052
    %v3092 = vadd.f32 %v3012, %v3056
    %v3093 = vadd.f32 %v3013, %v3044
    %v3094 = vadd.f32 %v3014, %v3048
    %v3095 = vadd.f32 %v3015, %v3052
    %v3096 = vadd.f32 %v3016, %v3056
    %v3097 = vadd.f32 %v3017, %v3044
    %v3098 = vadd.f32 %v3018, %v3048
    %v3099 = vadd.f32 %v3019, %v3052
    %v3100 = vadd.f32 %v3020, %v3056
    %v3101 = vadd.f32 %v3021, %v3044
    %v3102 = vadd.f32 %v3022, %v3048
    %v3103 = vadd.f32 %v3023, %v3052
    %v3104 = vadd.f32 %v3024, %v3056
    %v3105 = vadd.f32 %v3025, %v3044
    %v3106 = vadd.f32 %v3026, %v3048
    %v3107 = vadd.f32 %v3027, %v3052
    %v3108 = vadd.f32 %v3028, %v3056
    %v3109 = vadd.f32 %v3029, %v3044
    %v3110 = vadd.f32 %v3030, %v3048
    %v3111 = vadd.f32 %v3031, %v3052
    %v3112 = vadd.f32 %v3032, %v3056
    %v3113 = vadd.f32 %v3033, %v3044
    %v3114 = vadd.f32 %v3034, %v3048
    %v3115 = vadd.f32 %v3035, %v3052
    %v3116 = vadd.f32 %v3036, %v3056
    %v3117 = vadd.f32 %v3037, %v3044
    %v3118 = vadd.f32 %v3038, %v3048
    %v3119 = vadd.f32 %v3039, %v3052
    %v3120 = vadd.f32 %v3040, %v3056
    %v3121 = vld [vmem:[#allocation6] sm:$0xff]
    %v3122 = vld [vmem:[#allocation6 + $0x8] sm:$0xf]
    %v3123 = vld [vmem:[#allocation6 + $0xc] sm:$0xff]
    %v3124 = vld [vmem:[#allocation6 + $0x14] sm:$0xf]
    %v3125 = vld [vmem:[#allocation6 + $0x18] sm:$0xff]
    %v3126 = vld [vmem:[#allocation6 + $0x20] sm:$0xf]
    %v3127 = vld [vmem:[#allocation6 + $0x24] sm:$0xff]
    %v3128 = vld [vmem:[#allocation6 + $0x2c] sm:$0xf]
    %v3129 = vld [vmem:[#allocation6 + $0x30] sm:$0xff]
    %v3130 = vld [vmem:[#allocation6 + $0x38] sm:$0xf]
    %v3131 = vld [vmem:[#allocation6 + $0x3c] sm:$0xff]
    %v3132 = vld [vmem:[#allocation6 + $0x44] sm:$0xf]
    %v3133 = vld [vmem:[#allocation6 + $0x48] sm:$0xff]
    %v3134 = vld [vmem:[#allocation6 + $0x50] sm:$0xf]
    %v3135 = vld [vmem:[#allocation6 + $0x54] sm:$0xff]
    %v3136 = vld [vmem:[#allocation6 + $0x5c] sm:$0xf]
    %v3137 = vld [vmem:[#allocation6 + $0x60] sm:$0xff]
    %v3138 = vld [vmem:[#allocation6 + $0x68] sm:$0xf]
    %v3139 = vld [vmem:[#allocation6 + $0x6c] sm:$0xff]
    %v3140 = vld [vmem:[#allocation6 + $0x74] sm:$0xf]
    %v3141 = vld [vmem:[#allocation6 + $0x78] sm:$0xff]
    %v3142 = vld [vmem:[#allocation6 + $0x80] sm:$0xf]
    %v3143 = vld [vmem:[#allocation6 + $0x84] sm:$0xff]
    %v3144 = vld [vmem:[#allocation6 + $0x8c] sm:$0xf]
    %v3145 = vld [vmem:[#allocation6 + $0x90] sm:$0xff]
    %v3146 = vld [vmem:[#allocation6 + $0x98] sm:$0xf]
    %v3147 = vld [vmem:[#allocation6 + $0x9c] sm:$0xff]
    %v3148 = vld [vmem:[#allocation6 + $0xa4] sm:$0xf]
    %v3149 = vld [vmem:[#allocation6 + $0xa8] sm:$0xff]
    %v3150 = vld [vmem:[#allocation6 + $0xb0] sm:$0xf]
    %v3151 = vld [vmem:[#allocation6 + $0xb4] sm:$0xff]
    %v3152 = vld [vmem:[#allocation6 + $0xbc] sm:$0xf]
    %v3153 = vld [vmem:[#allocation6 + $0xc0] sm:$0xff]
    %v3154 = vld [vmem:[#allocation6 + $0xc8] sm:$0xf]
    %v3155 = vld [vmem:[#allocation6 + $0xcc] sm:$0xff]
    %v3156 = vld [vmem:[#allocation6 + $0xd4] sm:$0xf]
    %v3157 = vld [vmem:[#allocation6 + $0xd8] sm:$0xff]
    %v3158 = vld [vmem:[#allocation6 + $0xe0] sm:$0xf]
    %v3159 = vld [vmem:[#allocation6 + $0xe4] sm:$0xff]
    %v3160 = vld [vmem:[#allocation6 + $0xec] sm:$0xf]
    %v3161 = vld [vmem:[#allocation6 + $0xf0] sm:$0xff]
    %v3162 = vld [vmem:[#allocation6 + $0xf8] sm:$0xf]
    %v3163 = vld [vmem:[#allocation6 + $0xfc] sm:$0xff]
    %v3164 = vld [vmem:[#allocation6 + $0x104] sm:$0xf]
    %v3165 = vld [vmem:[#allocation6 + $0x108] sm:$0xff]
    %v3166 = vld [vmem:[#allocation6 + $0x110] sm:$0xf]
    %v3167 = vld [vmem:[#allocation6 + $0x114] sm:$0xff]
    %v3168 = vld [vmem:[#allocation6 + $0x11c] sm:$0xf]
    %v3169 = vld [vmem:[#allocation6 + $0x120] sm:$0xff]
    %v3170 = vld [vmem:[#allocation6 + $0x128] sm:$0xf]
    %v3171 = vld [vmem:[#allocation6 + $0x12c] sm:$0xff]
    %v3172 = vld [vmem:[#allocation6 + $0x134] sm:$0xf]
    %v3173 = vld [vmem:[#allocation6 + $0x138] sm:$0xff]
    %v3174 = vld [vmem:[#allocation6 + $0x140] sm:$0xf]
    %v3175 = vld [vmem:[#allocation6 + $0x144] sm:$0xff]
    %v3176 = vld [vmem:[#allocation6 + $0x14c] sm:$0xf]
    %v3177 = vld [vmem:[#allocation6 + $0x150] sm:$0xff]
    %v3178 = vld [vmem:[#allocation6 + $0x158] sm:$0xf]
    %v3179 = vld [vmem:[#allocation6 + $0x15c] sm:$0xff]
    %v3180 = vld [vmem:[#allocation6 + $0x164] sm:$0xf]
    %v3181 = vld [vmem:[#allocation6 + $0x168] sm:$0xff]
    %v3182 = vld [vmem:[#allocation6 + $0x170] sm:$0xf]
    %v3183 = vld [vmem:[#allocation6 + $0x174] sm:$0xff]
    %v3184 = vld [vmem:[#allocation6 + $0x17c] sm:$0xf]
    %v3185 = vld [vmem:[#allocation6 + $0x180] sm:$0xff]
    %v3186 = vld [vmem:[#allocation6 + $0x188] sm:$0xf]
    %v3187 = vld [vmem:[#allocation6 + $0x18c] sm:$0xff]
    %v3188 = vld [vmem:[#allocation6 + $0x194] sm:$0xf]
    %v3189 = vld [vmem:[#allocation6 + $0x198] sm:$0xff]
    %v3190 = vld [vmem:[#allocation6 + $0x1a0] sm:$0xf]
    %v3191 = vld [vmem:[#allocation6 + $0x1a4] sm:$0xff]
    %v3192 = vld [vmem:[#allocation6 + $0x1ac] sm:$0xf]
    %v3193 = vld [vmem:[#allocation6 + $0x1b0] sm:$0xff]
    %v3194 = vld [vmem:[#allocation6 + $0x1b8] sm:$0xf]
    %v3195 = vld [vmem:[#allocation6 + $0x1bc] sm:$0xff]
    %v3196 = vld [vmem:[#allocation6 + $0x1c4] sm:$0xf]
    %v3197 = vld [vmem:[#allocation6 + $0x1c8] sm:$0xff]
    %v3198 = vld [vmem:[#allocation6 + $0x1d0] sm:$0xf]
    %v3199 = vld [vmem:[#allocation6 + $0x1d4] sm:$0xff]
    %v3200 = vld [vmem:[#allocation6 + $0x1dc] sm:$0xf]
    %v3201 = vld [vmem:[#allocation6 + $0x1e0] sm:$0xff]
    %v3202 = vld [vmem:[#allocation6 + $0x1e8] sm:$0xf]
    %v3203 = vld [vmem:[#allocation6 + $0x1ec] sm:$0xff]
    %v3204 = vld [vmem:[#allocation6 + $0x1f4] sm:$0xf]
    %v3205 = vld [vmem:[#allocation6 + $0x1f8] sm:$0xff]
    %v3206 = vld [vmem:[#allocation6 + $0x200] sm:$0xf]
    %v3207 = vld [vmem:[#allocation6 + $0x204] sm:$0xff]
    %v3208 = vld [vmem:[#allocation6 + $0x20c] sm:$0xf]
    %v3209 = vld [vmem:[#allocation6 + $0x210] sm:$0xff]
    %v3210 = vld [vmem:[#allocation6 + $0x218] sm:$0xf]
    %v3211 = vld [vmem:[#allocation6 + $0x21c] sm:$0xff]
    %v3212 = vld [vmem:[#allocation6 + $0x224] sm:$0xf]
    %v3213 = vld [vmem:[#allocation6 + $0x228] sm:$0xff]
    %v3214 = vld [vmem:[#allocation6 + $0x230] sm:$0xf]
    %v3215 = vld [vmem:[#allocation6 + $0x234] sm:$0xff]
    %v3216 = vld [vmem:[#allocation6 + $0x23c] sm:$0xf]
    %v3217 = vld [vmem:[#allocation6 + $0x240] sm:$0xff]
    %v3218 = vld [vmem:[#allocation6 + $0x248] sm:$0xf]
    %v3219 = vld [vmem:[#allocation6 + $0x24c] sm:$0xff]
    %v3220 = vld [vmem:[#allocation6 + $0x254] sm:$0xf]
    %v3221 = vld [vmem:[#allocation6 + $0x258] sm:$0xff]
    %v3222 = vld [vmem:[#allocation6 + $0x260] sm:$0xf]
    %v3223 = vld [vmem:[#allocation6 + $0x264] sm:$0xff]
    %v3224 = vld [vmem:[#allocation6 + $0x26c] sm:$0xf]
    %v3225 = vld [vmem:[#allocation6 + $0x270] sm:$0xff]
    %v3226 = vld [vmem:[#allocation6 + $0x278] sm:$0xf]
    %v3227 = vld [vmem:[#allocation6 + $0x27c] sm:$0xff]
    %v3228 = vld [vmem:[#allocation6 + $0x284] sm:$0xf]
    %v3229 = vld [vmem:[#allocation6 + $0x288] sm:$0xff]
    %v3230 = vld [vmem:[#allocation6 + $0x290] sm:$0xf]
    %v3231 = vld [vmem:[#allocation6 + $0x294] sm:$0xff]
    %v3232 = vld [vmem:[#allocation6 + $0x29c] sm:$0xf]
    %v3233 = vld [vmem:[#allocation6 + $0x2a0] sm:$0xff]
    %v3234 = vld [vmem:[#allocation6 + $0x2a8] sm:$0xf]
    %v3235 = vld [vmem:[#allocation6 + $0x2ac] sm:$0xff]
    %v3236 = vld [vmem:[#allocation6 + $0x2b4] sm:$0xf]
    %v3237 = vld [vmem:[#allocation6 + $0x2b8] sm:$0xff]
    %v3238 = vld [vmem:[#allocation6 + $0x2c0] sm:$0xf]
    %v3239 = vld [vmem:[#allocation6 + $0x2c4] sm:$0xff]
    %v3240 = vld [vmem:[#allocation6 + $0x2cc] sm:$0xf]
    %v3241 = vld [vmem:[#allocation6 + $0x2d0] sm:$0xff]
    %v3242 = vld [vmem:[#allocation6 + $0x2d8] sm:$0xf]
    %v3243 = vld [vmem:[#allocation6 + $0x2dc] sm:$0xff]
    %v3244 = vld [vmem:[#allocation6 + $0x2e4] sm:$0xf]
    %v3245 = vld [vmem:[#allocation6 + $0x2e8] sm:$0xff]
    %v3246 = vld [vmem:[#allocation6 + $0x2f0] sm:$0xf]
    %v3247 = vld [vmem:[#allocation6 + $0x2f4] sm:$0xff]
    %v3248 = vld [vmem:[#allocation6 + $0x2fc] sm:$0xf]
    %v3249 = vpack.c.bf16 %v3061, %v3057
    %v3250 = vpack.c.bf16 %v3062, %v3058
    %v3251 = vpack.c.bf16 %v3063, %v3059
    %v3252 = vpack.c.bf16 %v3064, %v3060
    %v3253 = vpack.c.bf16 %v3069, %v3065
    %v3254 = vpack.c.bf16 %v3070, %v3066
    %v3255 = vpack.c.bf16 %v3071, %v3067
    %v3256 = vpack.c.bf16 %v3072, %v3068
    %v3257 = vpack.c.bf16 %v3077, %v3073
    %v3258 = vpack.c.bf16 %v3078, %v3074
    %v3259 = vpack.c.bf16 %v3079, %v3075
    %v3260 = vpack.c.bf16 %v3080, %v3076
    %v3261 = vpack.c.bf16 %v3085, %v3081
    %v3262 = vpack.c.bf16 %v3086, %v3082
    %v3263 = vpack.c.bf16 %v3087, %v3083
    %v3264 = vpack.c.bf16 %v3088, %v3084
    %v3265 = vpack.c.bf16 %v3093, %v3089
    %v3266 = vpack.c.bf16 %v3094, %v3090
    %v3267 = vpack.c.bf16 %v3095, %v3091
    %v3268 = vpack.c.bf16 %v3096, %v3092
    %v3269 = vpack.c.bf16 %v3101, %v3097
    %v3270 = vpack.c.bf16 %v3102, %v3098
    %v3271 = vpack.c.bf16 %v3103, %v3099
    %v3272 = vpack.c.bf16 %v3104, %v3100
    %v3273 = vpack.c.bf16 %v3109, %v3105
    %v3274 = vpack.c.bf16 %v3110, %v3106
    %v3275 = vpack.c.bf16 %v3111, %v3107
    %v3276 = vpack.c.bf16 %v3112, %v3108
    %v3277 = vpack.c.bf16 %v3117, %v3113
    %v3278 = vpack.c.bf16 %v3118, %v3114
    %v3279 = vpack.c.bf16 %v3119, %v3115
    %v3280 = vpack.c.bf16 %v3120, %v3116
    %v3281 = vlaneseq
    %v3282 = vshrl.u32 %v3281, 7
    %v3283 = vsub.s32 6, %v3282
    %v3284 = vrot.slane %v115, %v3283
    %v3285 = vlaneseq
    %v3286 = vshrl.u32 %v3285, 7
    %v3287 = vsub.s32 6, %v3286
    %v3288 = vrot.slane %v116, %v3287
    %v3289 = vlaneseq
    %v3290 = vshrl.u32 %v3289, 7
    %v3291 = vsub.s32 6, %v3290
    %v3292 = vrot.slane %v117, %v3291
    %v3421 = vunpack.c.l.b16 %v3121
    %v3422 = vunpack.c.h.b16 %v3121
    %v3423 = vunpack.c.l.b16 %v3122
    %v3424 = vunpack.c.l.b16 %v3123
    %v3425 = vunpack.c.h.b16 %v3123
    %v3426 = vunpack.c.l.b16 %v3124
    %v3427 = vunpack.c.l.b16 %v3125
    %v3428 = vunpack.c.h.b16 %v3125
    %v3429 = vunpack.c.l.b16 %v3126
    %v3430 = vunpack.c.l.b16 %v3127
    %v3431 = vunpack.c.h.b16 %v3127
    %v3432 = vunpack.c.l.b16 %v3128
    %v3433 = vunpack.c.l.b16 %v3129
    %v3434 = vunpack.c.h.b16 %v3129
    %v3435 = vunpack.c.l.b16 %v3130
    %v3436 = vunpack.c.l.b16 %v3131
    %v3437 = vunpack.c.h.b16 %v3131
    %v3438 = vunpack.c.l.b16 %v3132
    %v3439 = vunpack.c.l.b16 %v3133
    %v3440 = vunpack.c.h.b16 %v3133
    %v3441 = vunpack.c.l.b16 %v3134
    %v3442 = vunpack.c.l.b16 %v3135
    %v3443 = vunpack.c.h.b16 %v3135
    %v3444 = vunpack.c.l.b16 %v3136
    %v3445 = vunpack.c.l.b16 %v3137
    %v3446 = vunpack.c.h.b16 %v3137
    %v3447 = vunpack.c.l.b16 %v3138
    %v3448 = vunpack.c.l.b16 %v3139
    %v3449 = vunpack.c.h.b16 %v3139
    %v3450 = vunpack.c.l.b16 %v3140
    %v3451 = vunpack.c.l.b16 %v3141
    %v3452 = vunpack.c.h.b16 %v3141
    %v3453 = vunpack.c.l.b16 %v3142
    %v3454 = vunpack.c.l.b16 %v3143
    %v3455 = vunpack.c.h.b16 %v3143
    %v3456 = vunpack.c.l.b16 %v3144
    %v3457 = vunpack.c.l.b16 %v3145
    %v3458 = vunpack.c.h.b16 %v3145
    %v3459 = vunpack.c.l.b16 %v3146
    %v3460 = vunpack.c.l.b16 %v3147
    %v3461 = vunpack.c.h.b16 %v3147
    %v3462 = vunpack.c.l.b16 %v3148
    %v3463 = vunpack.c.l.b16 %v3149
    %v3464 = vunpack.c.h.b16 %v3149
    %v3465 = vunpack.c.l.b16 %v3150
    %v3466 = vunpack.c.l.b16 %v3151
    %v3467 = vunpack.c.h.b16 %v3151
    %v3468 = vunpack.c.l.b16 %v3152
    %v3469 = vunpack.c.l.b16 %v3153
    %v3470 = vunpack.c.h.b16 %v3153
    %v3471 = vunpack.c.l.b16 %v3154
    %v3472 = vunpack.c.l.b16 %v3155
    %v3473 = vunpack.c.h.b16 %v3155
    %v3474 = vunpack.c.l.b16 %v3156
    %v3475 = vunpack.c.l.b16 %v3157
    %v3476 = vunpack.c.h.b16 %v3157
    %v3477 = vunpack.c.l.b16 %v3158
    %v3478 = vunpack.c.l.b16 %v3159
    %v3479 = vunpack.c.h.b16 %v3159
    %v3480 = vunpack.c.l.b16 %v3160
    %v3481 = vunpack.c.l.b16 %v3161
    %v3482 = vunpack.c.h.b16 %v3161
    %v3483 = vunpack.c.l.b16 %v3162
    %v3484 = vunpack.c.l.b16 %v3163
    %v3485 = vunpack.c.h.b16 %v3163
    %v3486 = vunpack.c.l.b16 %v3164
    %v3487 = vunpack.c.l.b16 %v3165
    %v3488 = vunpack.c.h.b16 %v3165
    %v3489 = vunpack.c.l.b16 %v3166
    %v3490 = vunpack.c.l.b16 %v3167
    %v3491 = vunpack.c.h.b16 %v3167
    %v3492 = vunpack.c.l.b16 %v3168
    %v3493 = vunpack.c.l.b16 %v3169
    %v3494 = vunpack.c.h.b16 %v3169
    %v3495 = vunpack.c.l.b16 %v3170
    %v3496 = vunpack.c.l.b16 %v3171
    %v3497 = vunpack.c.h.b16 %v3171
    %v3498 = vunpack.c.l.b16 %v3172
    %v3499 = vunpack.c.l.b16 %v3173
    %v3500 = vunpack.c.h.b16 %v3173
    %v3501 = vunpack.c.l.b16 %v3174
    %v3502 = vunpack.c.l.b16 %v3175
    %v3503 = vunpack.c.h.b16 %v3175
    %v3504 = vunpack.c.l.b16 %v3176
    %v3505 = vunpack.c.l.b16 %v3177
    %v3506 = vunpack.c.h.b16 %v3177
    %v3507 = vunpack.c.l.b16 %v3178
    %v3508 = vunpack.c.l.b16 %v3179
    %v3509 = vunpack.c.h.b16 %v3179
    %v3510 = vunpack.c.l.b16 %v3180
    %v3511 = vunpack.c.l.b16 %v3181
    %v3512 = vunpack.c.h.b16 %v3181
    %v3513 = vunpack.c.l.b16 %v3182
    %v3514 = vunpack.c.l.b16 %v3183
    %v3515 = vunpack.c.h.b16 %v3183
    %v3516 = vunpack.c.l.b16 %v3184
    %v3517 = vunpack.c.l.b16 %v3185
    %v3518 = vunpack.c.h.b16 %v3185
    %v3519 = vunpack.c.l.b16 %v3186
    %v3520 = vunpack.c.l.b16 %v3187
    %v3521 = vunpack.c.h.b16 %v3187
    %v3522 = vunpack.c.l.b16 %v3188
    %v3523 = vunpack.c.l.b16 %v3189
    %v3524 = vunpack.c.h.b16 %v3189
    %v3525 = vunpack.c.l.b16 %v3190
    %v3526 = vunpack.c.l.b16 %v3191
    %v3527 = vunpack.c.h.b16 %v3191
    %v3528 = vunpack.c.l.b16 %v3192
    %v3529 = vunpack.c.l.b16 %v3193
    %v3530 = vunpack.c.h.b16 %v3193
    %v3531 = vunpack.c.l.b16 %v3194
    %v3532 = vunpack.c.l.b16 %v3195
    %v3533 = vunpack.c.h.b16 %v3195
    %v3534 = vunpack.c.l.b16 %v3196
    %v3535 = vunpack.c.l.b16 %v3197
    %v3536 = vunpack.c.h.b16 %v3197
    %v3537 = vunpack.c.l.b16 %v3198
    %v3538 = vunpack.c.l.b16 %v3199
    %v3539 = vunpack.c.h.b16 %v3199
    %v3540 = vunpack.c.l.b16 %v3200
    %v3541 = vunpack.c.l.b16 %v3201
    %v3542 = vunpack.c.h.b16 %v3201
    %v3543 = vunpack.c.l.b16 %v3202
    %v3544 = vunpack.c.l.b16 %v3203
    %v3545 = vunpack.c.h.b16 %v3203
    %v3546 = vunpack.c.l.b16 %v3204
    %v3547 = vunpack.c.l.b16 %v3205
    %v3548 = vunpack.c.h.b16 %v3205
    %v3549 = vunpack.c.l.b16 %v3206
    %v3550 = vunpack.c.l.b16 %v3207
    %v3551 = vunpack.c.h.b16 %v3207
    %v3552 = vunpack.c.l.b16 %v3208
    %v3553 = vunpack.c.l.b16 %v3209
    %v3554 = vunpack.c.h.b16 %v3209
    %v3555 = vunpack.c.l.b16 %v3210
    %v3556 = vunpack.c.l.b16 %v3211
    %v3557 = vunpack.c.h.b16 %v3211
    %v3558 = vunpack.c.l.b16 %v3212
    %v3559 = vunpack.c.l.b16 %v3213
    %v3560 = vunpack.c.h.b16 %v3213
    %v3561 = vunpack.c.l.b16 %v3214
    %v3562 = vunpack.c.l.b16 %v3215
    %v3563 = vunpack.c.h.b16 %v3215
    %v3564 = vunpack.c.l.b16 %v3216
    %v3565 = vunpack.c.l.b16 %v3217
    %v3566 = vunpack.c.h.b16 %v3217
    %v3567 = vunpack.c.l.b16 %v3218
    %v3568 = vunpack.c.l.b16 %v3219
    %v3569 = vunpack.c.h.b16 %v3219
    %v3570 = vunpack.c.l.b16 %v3220
    %v3571 = vunpack.c.l.b16 %v3221
    %v3572 = vunpack.c.h.b16 %v3221
    %v3573 = vunpack.c.l.b16 %v3222
    %v3574 = vunpack.c.l.b16 %v3223
    %v3575 = vunpack.c.h.b16 %v3223
    %v3576 = vunpack.c.l.b16 %v3224
    %v3577 = vunpack.c.l.b16 %v3225
    %v3578 = vunpack.c.h.b16 %v3225
    %v3579 = vunpack.c.l.b16 %v3226
    %v3580 = vunpack.c.l.b16 %v3227
    %v3581 = vunpack.c.h.b16 %v3227
    %v3582 = vunpack.c.l.b16 %v3228
    %v3583 = vunpack.c.l.b16 %v3229
    %v3584 = vunpack.c.h.b16 %v3229
    %v3585 = vunpack.c.l.b16 %v3230
    %v3586 = vunpack.c.l.b16 %v3231
    %v3587 = vunpack.c.h.b16 %v3231
    %v3588 = vunpack.c.l.b16 %v3232
    %v3589 = vunpack.c.l.b16 %v3233
    %v3590 = vunpack.c.h.b16 %v3233
    %v3591 = vunpack.c.l.b16 %v3234
    %v3592 = vunpack.c.l.b16 %v3235
    %v3593 = vunpack.c.h.b16 %v3235
    %v3594 = vunpack.c.l.b16 %v3236
    %v3595 = vunpack.c.l.b16 %v3237
    %v3596 = vunpack.c.h.b16 %v3237
    %v3597 = vunpack.c.l.b16 %v3238
    %v3598 = vunpack.c.l.b16 %v3239
    %v3599 = vunpack.c.h.b16 %v3239
    %v3600 = vunpack.c.l.b16 %v3240
    %v3601 = vunpack.c.l.b16 %v3241
    %v3602 = vunpack.c.h.b16 %v3241
    %v3603 = vunpack.c.l.b16 %v3242
    %v3604 = vunpack.c.l.b16 %v3243
    %v3605 = vunpack.c.h.b16 %v3243
    %v3606 = vunpack.c.l.b16 %v3244
    %v3607 = vunpack.c.l.b16 %v3245
    %v3608 = vunpack.c.h.b16 %v3245
    %v3609 = vunpack.c.l.b16 %v3246
    %v3610 = vunpack.c.l.b16 %v3247
    %v3611 = vunpack.c.h.b16 %v3247
    %v3612 = vunpack.c.l.b16 %v3248
    %v3613 = vpack.c.b16 %v3424, %v3421
    %v3614 = vpack.c.b16 %v3425, %v3422
    %v3615 = vpack.c.b16 %v3426, %v3423
    %v3616 = vpack.c.b16 %v3430, %v3427
    %v3617 = vpack.c.b16 %v3431, %v3428
    %v3618 = vpack.c.b16 %v3432, %v3429
    %v3619 = vpack.c.b16 %v3436, %v3433
    %v3620 = vpack.c.b16 %v3437, %v3434
    %v3621 = vpack.c.b16 %v3438, %v3435
    %v3622 = vpack.c.b16 %v3442, %v3439
    %v3623 = vpack.c.b16 %v3443, %v3440
    %v3624 = vpack.c.b16 %v3444, %v3441
    %v3625 = vpack.c.b16 %v3448, %v3445
    %v3626 = vpack.c.b16 %v3449, %v3446
    %v3627 = vpack.c.b16 %v3450, %v3447
    %v3628 = vpack.c.b16 %v3454, %v3451
    %v3629 = vpack.c.b16 %v3455, %v3452
    %v3630 = vpack.c.b16 %v3456, %v3453
    %v3631 = vpack.c.b16 %v3460, %v3457
    %v3632 = vpack.c.b16 %v3461, %v3458
    %v3633 = vpack.c.b16 %v3462, %v3459
    %v3634 = vpack.c.b16 %v3466, %v3463
    %v3635 = vpack.c.b16 %v3467, %v3464
    %v3636 = vpack.c.b16 %v3468, %v3465
    %v3637 = vpack.c.b16 %v3472, %v3469
    %v3638 = vpack.c.b16 %v3473, %v3470
    %v3639 = vpack.c.b16 %v3474, %v3471
    %v3640 = vpack.c.b16 %v3478, %v3475
    %v3641 = vpack.c.b16 %v3479, %v3476
    %v3642 = vpack.c.b16 %v3480, %v3477
    %v3643 = vpack.c.b16 %v3484, %v3481
    %v3644 = vpack.c.b16 %v3485, %v3482
    %v3645 = vpack.c.b16 %v3486, %v3483
    %v3646 = vpack.c.b16 %v3490, %v3487
    %v3647 = vpack.c.b16 %v3491, %v3488
    %v3648 = vpack.c.b16 %v3492, %v3489
    %v3649 = vpack.c.b16 %v3496, %v3493
    %v3650 = vpack.c.b16 %v3497, %v3494
    %v3651 = vpack.c.b16 %v3498, %v3495
    %v3652 = vpack.c.b16 %v3502, %v3499
    %v3653 = vpack.c.b16 %v3503, %v3500
    %v3654 = vpack.c.b16 %v3504, %v3501
    %v3655 = vpack.c.b16 %v3508, %v3505
    %v3656 = vpack.c.b16 %v3509, %v3506
    %v3657 = vpack.c.b16 %v3510, %v3507
    %v3658 = vpack.c.b16 %v3514, %v3511
    %v3659 = vpack.c.b16 %v3515, %v3512
    %v3660 = vpack.c.b16 %v3516, %v3513
    %v3661 = vpack.c.b16 %v3520, %v3517
    %v3662 = vpack.c.b16 %v3521, %v3518
    %v3663 = vpack.c.b16 %v3522, %v3519
    %v3664 = vpack.c.b16 %v3526, %v3523
    %v3665 = vpack.c.b16 %v3527, %v3524
    %v3666 = vpack.c.b16 %v3528, %v3525
    %v3667 = vpack.c.b16 %v3532, %v3529
    %v3668 = vpack.c.b16 %v3533, %v3530
    %v3669 = vpack.c.b16 %v3534, %v3531
    %v3670 = vpack.c.b16 %v3538, %v3535
    %v3671 = vpack.c.b16 %v3539, %v3536
    %v3672 = vpack.c.b16 %v3540, %v3537
    %v3673 = vpack.c.b16 %v3544, %v3541
    %v3674 = vpack.c.b16 %v3545, %v3542
    %v3675 = vpack.c.b16 %v3546, %v3543
    %v3676 = vpack.c.b16 %v3550, %v3547
    %v3677 = vpack.c.b16 %v3551, %v3548
    %v3678 = vpack.c.b16 %v3552, %v3549
    %v3679 = vpack.c.b16 %v3556, %v3553
    %v3680 = vpack.c.b16 %v3557, %v3554
    %v3681 = vpack.c.b16 %v3558, %v3555
    %v3682 = vpack.c.b16 %v3562, %v3559
    %v3683 = vpack.c.b16 %v3563, %v3560
    %v3684 = vpack.c.b16 %v3564, %v3561
    %v3685 = vpack.c.b16 %v3568, %v3565
    %v3686 = vpack.c.b16 %v3569, %v3566
    %v3687 = vpack.c.b16 %v3570, %v3567
    %v3688 = vpack.c.b16 %v3574, %v3571
    %v3689 = vpack.c.b16 %v3575, %v3572
    %v3690 = vpack.c.b16 %v3576, %v3573
    %v3691 = vpack.c.b16 %v3580, %v3577
    %v3692 = vpack.c.b16 %v3581, %v3578
    %v3693 = vpack.c.b16 %v3582, %v3579
    %v3694 = vpack.c.b16 %v3586, %v3583
    %v3695 = vpack.c.b16 %v3587, %v3584
    %v3696 = vpack.c.b16 %v3588, %v3585
    %v3697 = vpack.c.b16 %v3592, %v3589
    %v3698 = vpack.c.b16 %v3593, %v3590
    %v3699 = vpack.c.b16 %v3594, %v3591
    %v3700 = vpack.c.b16 %v3598, %v3595
    %v3701 = vpack.c.b16 %v3599, %v3596
    %v3702 = vpack.c.b16 %v3600, %v3597
    %v3703 = vpack.c.b16 %v3604, %v3601
    %v3704 = vpack.c.b16 %v3605, %v3602
    %v3705 = vpack.c.b16 %v3606, %v3603
    %v3706 = vpack.c.b16 %v3610, %v3607
    %v3707 = vpack.c.b16 %v3611, %v3608
    %v3708 = vpack.c.b16 %v3612, %v3609
    %3805 = vmatprep.subr.bf16.mxu0 %v3635
    %3806 = vmatpush1.bf16.msra.mxu0 %v3634
    %3807 = vmatprep.subr.bf16.mxu0 %v3632
    %3808 = vmatpush1.bf16.msra.mxu0 %v3631
    %3809 = vmatprep.subr.bf16.mxu0 %v3629
    %3810 = vmatpush1.bf16.msra.mxu0 %v3628
    %3811 = vmatprep.subr.bf16.mxu0 %v3626
    %3812 = vmatpush1.bf16.msra.mxu0 %v3625
    %3813 = vmatprep.subr.bf16.mxu0 %v3623
    %3814 = vmatpush1.bf16.msra.mxu0 %v3622
    %3815 = vmatprep.subr.bf16.mxu0 %v3620
    %3816 = vmatpush1.bf16.msra.mxu0 %v3619
    %3817 = vmatprep.subr.bf16.mxu0 %v3617
    %3818 = vmatpush1.bf16.msra.mxu0 %v3616
    %3819 = vmatprep.subr.bf16.mxu0 %v3614
    %3820 = vmatpush1.bf16.msra.mxu0 %v3613
    %3821 = vmatprep.subr.bf16.mxu0 %v3659
    %3822 = vmatpush2.bf16.msra.mxu0 %v3658
    %3823 = vmatprep.subr.bf16.mxu0 %v3656
    %3824 = vmatpush2.bf16.msra.mxu0 %v3655
    %3825 = vmatprep.subr.bf16.mxu0 %v3653
    %3826 = vmatpush2.bf16.msra.mxu0 %v3652
    %3827 = vmatprep.subr.bf16.mxu0 %v3650
    %3828 = vmatpush2.bf16.msra.mxu0 %v3649
    %3829 = vmatprep.subr.bf16.mxu0 %v3647
    %3830 = vmatpush2.bf16.msra.mxu0 %v3646
    %3831 = vmatprep.subr.bf16.mxu0 %v3644
    %3832 = vmatpush2.bf16.msra.mxu0 %v3643
    %3833 = vmatprep.subr.bf16.mxu0 %v3641
    %3834 = vmatpush2.bf16.msra.mxu0 %v3640
    %3835 = vmatprep.subr.bf16.mxu0 %v3638
    %3836 = vmatpush2.bf16.msra.mxu0 %v3637
    %3837 = vmatprep.mubr.bf16.mxu0 %v3250
    %3838 = vmatmul.mubr.bf16.gmra.mxu0 %v3249
    %v3839 = vpop.f32.mrf.mxu0
    %v3840 = vadd.f32 %v3284, %v3839
    %v3841 = vpop.f32.mrf.mxu0
    %v3842 = vadd.f32 %v3288, %v3841
    %v3843 = vpop.f32.mrf.mxu0
    %v3844 = vadd.f32 %v3284, %v3843
    %v3845 = vpop.f32.mrf.mxu0
    %v3846 = vadd.f32 %v3288, %v3845
    %3847 = vmatprep.mubr.bf16.mxu0 %v3254
    %3848 = vmatmul.mubr.bf16.gmra.mxu0 %v3253
    %v3849 = vpop.f32.mrf.mxu0
    %v3850 = vadd.f32 %v3284, %v3849
    %v3851 = vpop.f32.mrf.mxu0
    %v3852 = vadd.f32 %v3288, %v3851
    %v3853 = vpop.f32.mrf.mxu0
    %v3854 = vadd.f32 %v3284, %v3853
    %v3855 = vpop.f32.mrf.mxu0
    %v3856 = vadd.f32 %v3288, %v3855
    %3857 = vmatprep.mubr.bf16.mxu0 %v3258
    %3858 = vmatmul.mubr.bf16.gmra.mxu0 %v3257
    %v3859 = vpop.f32.mrf.mxu0
    %v3860 = vadd.f32 %v3284, %v3859
    %v3861 = vpop.f32.mrf.mxu0
    %v3862 = vadd.f32 %v3288, %v3861
    %v3863 = vpop.f32.mrf.mxu0
    %v3864 = vadd.f32 %v3284, %v3863
    %v3865 = vpop.f32.mrf.mxu0
    %v3866 = vadd.f32 %v3288, %v3865
    %3867 = vmatprep.mubr.bf16.mxu0 %v3262
    %3868 = vmatmul.mubr.bf16.gmra.mxu0 %v3261
    %v3869 = vpop.f32.mrf.mxu0
    %v3870 = vadd.f32 %v3284, %v3869
    %v3871 = vpop.f32.mrf.mxu0
    %v3872 = vadd.f32 %v3288, %v3871
    %v3873 = vpop.f32.mrf.mxu0
    %v3874 = vadd.f32 %v3284, %v3873
    %v3875 = vpop.f32.mrf.mxu0
    %v3876 = vadd.f32 %v3288, %v3875
    %3877 = vmatprep.mubr.bf16.mxu0 %v3266
    %3878 = vmatmul.mubr.bf16.gmra.mxu0 %v3265
    %v3879 = vpop.f32.mrf.mxu0
    %v3880 = vadd.f32 %v3284, %v3879
    %v3881 = vpop.f32.mrf.mxu0
    %v3882 = vadd.f32 %v3288, %v3881
    %v3883 = vpop.f32.mrf.mxu0
    %v3884 = vadd.f32 %v3284, %v3883
    %v3885 = vpop.f32.mrf.mxu0
    %v3886 = vadd.f32 %v3288, %v3885
    %3887 = vmatprep.mubr.bf16.mxu0 %v3270
    %3888 = vmatmul.mubr.bf16.gmra.mxu0 %v3269
    %v3889 = vpop.f32.mrf.mxu0
    %v3890 = vadd.f32 %v3284, %v3889
    %v3891 = vpop.f32.mrf.mxu0
    %v3892 = vadd.f32 %v3288, %v3891
    %v3893 = vpop.f32.mrf.mxu0
    %v3894 = vadd.f32 %v3284, %v3893
    %v3895 = vpop.f32.mrf.mxu0
    %v3896 = vadd.f32 %v3288, %v3895
    %3897 = vmatprep.mubr.bf16.mxu0 %v3274
    %3898 = vmatmul.mubr.bf16.gmra.mxu0 %v3273
    %v3899 = vpop.f32.mrf.mxu0
    %v3900 = vadd.f32 %v3284, %v3899
    %v3901 = vpop.f32.mrf.mxu0
    %v3902 = vadd.f32 %v3288, %v3901
    %v3903 = vpop.f32.mrf.mxu0
    %v3904 = vadd.f32 %v3284, %v3903
    %v3905 = vpop.f32.mrf.mxu0
    %v3906 = vadd.f32 %v3288, %v3905
    %3907 = vmatprep.mubr.bf16.mxu0 %v3278
    %3908 = vmatmul.mubr.bf16.gmra.mxu0 %v3277
    %v3909 = vpop.f32.mrf.mxu0
    %v3910 = vadd.f32 %v3284, %v3909
    %v3911 = vpop.f32.mrf.mxu0
    %v3912 = vadd.f32 %v3288, %v3911
    %v3913 = vpop.f32.mrf.mxu0
    %v3914 = vadd.f32 %v3284, %v3913
    %v3915 = vpop.f32.mrf.mxu0
    %v3916 = vadd.f32 %v3288, %v3915
    %3917 = vdwg.mxu0
    %3918 = vmatprep.subr.bf16.mxu0 %v3683
    %3919 = vmatpush1.bf16.msra.mxu0 %v3682
    %3920 = vmatprep.subr.bf16.mxu0 %v3680
    %3921 = vmatpush1.bf16.msra.mxu0 %v3679
    %3922 = vmatprep.subr.bf16.mxu0 %v3677
    %3923 = vmatpush1.bf16.msra.mxu0 %v3676
    %3924 = vmatprep.subr.bf16.mxu0 %v3674
    %3925 = vmatpush1.bf16.msra.mxu0 %v3673
    %3926 = vmatprep.subr.bf16.mxu0 %v3671
    %3927 = vmatpush1.bf16.msra.mxu0 %v3670
    %3928 = vmatprep.subr.bf16.mxu0 %v3668
    %3929 = vmatpush1.bf16.msra.mxu0 %v3667
    %3930 = vmatprep.subr.bf16.mxu0 %v3665
    %3931 = vmatpush1.bf16.msra.mxu0 %v3664
    %3932 = vmatprep.subr.bf16.mxu0 %v3662
    %3933 = vmatpush1.bf16.msra.mxu0 %v3661
    %3934 = vmatprep.subr.bf16.mxu0 %v3707
    %3935 = vmatpush2.bf16.msra.mxu0 %v3706
    %3936 = vmatprep.subr.bf16.mxu0 %v3704
    %3937 = vmatpush2.bf16.msra.mxu0 %v3703
    %3938 = vmatprep.subr.bf16.mxu0 %v3701
    %3939 = vmatpush2.bf16.msra.mxu0 %v3700
    %3940 = vmatprep.subr.bf16.mxu0 %v3698
    %3941 = vmatpush2.bf16.msra.mxu0 %v3697
    %3942 = vmatprep.subr.bf16.mxu0 %v3695
    %3943 = vmatpush2.bf16.msra.mxu0 %v3694
    %3944 = vmatprep.subr.bf16.mxu0 %v3692
    %3945 = vmatpush2.bf16.msra.mxu0 %v3691
    %3946 = vmatprep.subr.bf16.mxu0 %v3689
    %3947 = vmatpush2.bf16.msra.mxu0 %v3688
    %3948 = vmatprep.subr.bf16.mxu0 %v3686
    %3949 = vmatpush2.bf16.msra.mxu0 %v3685
    %3950 = vmatprep.mubr.bf16.mxu0 %v3252
    %3951 = vmatmul.mubr.bf16.gmra.mxu0 %v3251
    %v3952 = vpop.f32.mrf.mxu0
    %v3953 = vadd.f32 %v3840, %v3952
    %v3954 = vpop.f32.mrf.mxu0
    %v3955 = vadd.f32 %v3842, %v3954
    %v3956 = vpop.f32.mrf.mxu0
    %v3957 = vadd.f32 %v3844, %v3956
    %v3958 = vpop.f32.mrf.mxu0
    %v3959 = vadd.f32 %v3846, %v3958
    %3960 = vmatprep.mubr.bf16.mxu0 %v3256
    %3961 = vmatmul.mubr.bf16.gmra.mxu0 %v3255
    %v3962 = vpop.f32.mrf.mxu0
    %v3963 = vadd.f32 %v3850, %v3962
    %v3964 = vpop.f32.mrf.mxu0
    %v3965 = vadd.f32 %v3852, %v3964
    %v3966 = vpop.f32.mrf.mxu0
    %v3967 = vadd.f32 %v3854, %v3966
    %v3968 = vpop.f32.mrf.mxu0
    %v3969 = vadd.f32 %v3856, %v3968
    %3970 = vmatprep.mubr.bf16.mxu0 %v3260
    %3971 = vmatmul.mubr.bf16.gmra.mxu0 %v3259
    %v3972 = vpop.f32.mrf.mxu0
    %v3973 = vadd.f32 %v3860, %v3972
    %v3974 = vpop.f32.mrf.mxu0
    %v3975 = vadd.f32 %v3862, %v3974
    %v3976 = vpop.f32.mrf.mxu0
    %v3977 = vadd.f32 %v3864, %v3976
    %v3978 = vpop.f32.mrf.mxu0
    %v3979 = vadd.f32 %v3866, %v3978
    %3980 = vmatprep.mubr.bf16.mxu0 %v3264
    %3981 = vmatmul.mubr.bf16.gmra.mxu0 %v3263
    %v3982 = vpop.f32.mrf.mxu0
    %v3983 = vadd.f32 %v3870, %v3982
    %v3984 = vpop.f32.mrf.mxu0
    %v3985 = vadd.f32 %v3872, %v3984
    %v3986 = vpop.f32.mrf.mxu0
    %v3987 = vadd.f32 %v3874, %v3986
    %v3988 = vpop.f32.mrf.mxu0
    %v3989 = vadd.f32 %v3876, %v3988
    %3990 = vmatprep.mubr.bf16.mxu0 %v3268
    %3991 = vmatmul.mubr.bf16.gmra.mxu0 %v3267
    %v3992 = vpop.f32.mrf.mxu0
    %v3993 = vadd.f32 %v3880, %v3992
    %v3994 = vpop.f32.mrf.mxu0
    %v3995 = vadd.f32 %v3882, %v3994
    %v3996 = vpop.f32.mrf.mxu0
    %v3997 = vadd.f32 %v3884, %v3996
    %v3998 = vpop.f32.mrf.mxu0
    %v3999 = vadd.f32 %v3886, %v3998
    %4000 = vmatprep.mubr.bf16.mxu0 %v3272
    %4001 = vmatmul.mubr.bf16.gmra.mxu0 %v3271
    %v4002 = vpop.f32.mrf.mxu0
    %v4003 = vadd.f32 %v3890, %v4002
    %v4004 = vpop.f32.mrf.mxu0
    %v4005 = vadd.f32 %v3892, %v4004
    %v4006 = vpop.f32.mrf.mxu0
    %v4007 = vadd.f32 %v3894, %v4006
    %v4008 = vpop.f32.mrf.mxu0
    %v4009 = vadd.f32 %v3896, %v4008
    %4010 = vmatprep.mubr.bf16.mxu0 %v3276
    %4011 = vmatmul.mubr.bf16.gmra.mxu0 %v3275
    %v4012 = vpop.f32.mrf.mxu0
    %v4013 = vadd.f32 %v3900, %v4012
    %v4014 = vpop.f32.mrf.mxu0
    %v4015 = vadd.f32 %v3902, %v4014
    %v4016 = vpop.f32.mrf.mxu0
    %v4017 = vadd.f32 %v3904, %v4016
    %v4018 = vpop.f32.mrf.mxu0
    %v4019 = vadd.f32 %v3906, %v4018
    %4020 = vmatprep.mubr.bf16.mxu0 %v3280
    %4021 = vmatmul.mubr.bf16.gmra.mxu0 %v3279
    %v4022 = vpop.f32.mrf.mxu0
    %v4023 = vadd.f32 %v3910, %v4022
    %v4024 = vpop.f32.mrf.mxu0
    %v4025 = vadd.f32 %v3912, %v4024
    %v4026 = vpop.f32.mrf.mxu0
    %v4027 = vadd.f32 %v3914, %v4026
    %v4028 = vpop.f32.mrf.mxu0
    %v4029 = vadd.f32 %v3916, %v4028
    %4030 = vdwg.mxu0
    %4031 = vmatprep.subr.bf16.mxu0 0
    %4032 = vmatpush1.bf16.msra.mxu0 %v3636
    %4033 = vmatprep.subr.bf16.mxu0 0
    %4034 = vmatpush1.bf16.msra.mxu0 %v3633
    %4035 = vmatprep.subr.bf16.mxu0 0
    %4036 = vmatpush1.bf16.msra.mxu0 %v3630
    %4037 = vmatprep.subr.bf16.mxu0 0
    %4038 = vmatpush1.bf16.msra.mxu0 %v3627
    %4039 = vmatprep.subr.bf16.mxu0 0
    %4040 = vmatpush1.bf16.msra.mxu0 %v3624
    %4041 = vmatprep.subr.bf16.mxu0 0
    %4042 = vmatpush1.bf16.msra.mxu0 %v3621
    %4043 = vmatprep.subr.bf16.mxu0 0
    %4044 = vmatpush1.bf16.msra.mxu0 %v3618
    %4045 = vmatprep.subr.bf16.mxu0 0
    %4046 = vmatpush1.bf16.msra.mxu0 %v3615
    %4047 = vmatprep.subr.bf16.mxu0 0
    %4048 = vmatpush2.bf16.msra.mxu0 %v3660
    %4049 = vmatprep.subr.bf16.mxu0 0
    %4050 = vmatpush2.bf16.msra.mxu0 %v3657
    %4051 = vmatprep.subr.bf16.mxu0 0
    %4052 = vmatpush2.bf16.msra.mxu0 %v3654
    %4053 = vmatprep.subr.bf16.mxu0 0
    %4054 = vmatpush2.bf16.msra.mxu0 %v3651
    %4055 = vmatprep.subr.bf16.mxu0 0
    %4056 = vmatpush2.bf16.msra.mxu0 %v3648
    %4057 = vmatprep.subr.bf16.mxu0 0
    %4058 = vmatpush2.bf16.msra.mxu0 %v3645
    %4059 = vmatprep.subr.bf16.mxu0 0
    %4060 = vmatpush2.bf16.msra.mxu0 %v3642
    %4061 = vmatprep.subr.bf16.mxu0 0
    %4062 = vmatpush2.bf16.msra.mxu0 %v3639
    %4063 = vmatprep.mubr.bf16.mxu0 %v3250
    %4064 = vmatmul.mubr.bf16.gmra.mxu0 %v3249
    %v4065 = vpop.f32.mrf.mxu0
    %v4066 = vadd.f32 %v3292, %v4065
    %v4067 = vpop.f32.mrf.mxu0
    %v4068 = vpop.f32.mrf.mxu0
    %v4069 = vadd.f32 %v3292, %v4068
    %v4070 = vpop.f32.mrf.mxu0
    %4071 = vmatprep.mubr.bf16.mxu0 %v3254
    %4072 = vmatmul.mubr.bf16.gmra.mxu0 %v3253
    %v4073 = vpop.f32.mrf.mxu0
    %v4074 = vadd.f32 %v3292, %v4073
    %v4075 = vpop.f32.mrf.mxu0
    %v4076 = vpop.f32.mrf.mxu0
    %v4077 = vadd.f32 %v3292, %v4076
    %v4078 = vpop.f32.mrf.mxu0
    %4079 = vmatprep.mubr.bf16.mxu0 %v3258
    %4080 = vmatmul.mubr.bf16.gmra.mxu0 %v3257
    %v4081 = vpop.f32.mrf.mxu0
    %v4082 = vadd.f32 %v3292, %v4081
    %v4083 = vpop.f32.mrf.mxu0
    %v4084 = vpop.f32.mrf.mxu0
    %v4085 = vadd.f32 %v3292, %v4084
    %v4086 = vpop.f32.mrf.mxu0
    %4087 = vmatprep.mubr.bf16.mxu0 %v3262
    %4088 = vmatmul.mubr.bf16.gmra.mxu0 %v3261
    %v4089 = vpop.f32.mrf.mxu0
    %v4090 = vadd.f32 %v3292, %v4089
    %v4091 = vpop.f32.mrf.mxu0
    %v4092 = vpop.f32.mrf.mxu0
    %v4093 = vadd.f32 %v3292, %v4092
    %v4094 = vpop.f32.mrf.mxu0
    %4095 = vmatprep.mubr.bf16.mxu0 %v3266
    %4096 = vmatmul.mubr.bf16.gmra.mxu0 %v3265
    %v4097 = vpop.f32.mrf.mxu0
    %v4098 = vadd.f32 %v3292, %v4097
    %v4099 = vpop.f32.mrf.mxu0
    %v4100 = vpop.f32.mrf.mxu0
    %v4101 = vadd.f32 %v3292, %v4100
    %v4102 = vpop.f32.mrf.mxu0
    %4103 = vmatprep.mubr.bf16.mxu0 %v3270
    %4104 = vmatmul.mubr.bf16.gmra.mxu0 %v3269
    %v4105 = vpop.f32.mrf.mxu0
    %v4106 = vadd.f32 %v3292, %v4105
    %v4107 = vpop.f32.mrf.mxu0
    %v4108 = vpop.f32.mrf.mxu0
    %v4109 = vadd.f32 %v3292, %v4108
    %v4110 = vpop.f32.mrf.mxu0
    %4111 = vmatprep.mubr.bf16.mxu0 %v3274
    %4112 = vmatmul.mubr.bf16.gmra.mxu0 %v3273
    %v4113 = vpop.f32.mrf.mxu0
    %v4114 = vadd.f32 %v3292, %v4113
    %v4115 = vpop.f32.mrf.mxu0
    %v4116 = vpop.f32.mrf.mxu0
    %v4117 = vadd.f32 %v3292, %v4116
    %v4118 = vpop.f32.mrf.mxu0
    %4119 = vmatprep.mubr.bf16.mxu0 %v3278
    %4120 = vmatmul.mubr.bf16.gmra.mxu0 %v3277
    %v4121 = vpop.f32.mrf.mxu0
    %v4122 = vadd.f32 %v3292, %v4121
    %v4123 = vpop.f32.mrf.mxu0
    %v4124 = vpop.f32.mrf.mxu0
    %v4125 = vadd.f32 %v3292, %v4124
    %v4126 = vpop.f32.mrf.mxu0
    %4127 = vdwg.mxu0
    %4128 = vmatprep.subr.bf16.mxu0 0
    %4129 = vmatpush1.bf16.msra.mxu0 %v3684
    %4130 = vmatprep.subr.bf16.mxu0 0
    %4131 = vmatpush1.bf16.msra.mxu0 %v3681
    %4132 = vmatprep.subr.bf16.mxu0 0
    %4133 = vmatpush1.bf16.msra.mxu0 %v3678
    %4134 = vmatprep.subr.bf16.mxu0 0
    %4135 = vmatpush1.bf16.msra.mxu0 %v3675
    %4136 = vmatprep.subr.bf16.mxu0 0
    %4137 = vmatpush1.bf16.msra.mxu0 %v3672
    %4138 = vmatprep.subr.bf16.mxu0 0
    %4139 = vmatpush1.bf16.msra.mxu0 %v3669
    %4140 = vmatprep.subr.bf16.mxu0 0
    %4141 = vmatpush1.bf16.msra.mxu0 %v3666
    %4142 = vmatprep.subr.bf16.mxu0 0
    %4143 = vmatpush1.bf16.msra.mxu0 %v3663
    %4144 = vmatprep.subr.bf16.mxu0 0
    %4145 = vmatpush2.bf16.msra.mxu0 %v3708
    %4146 = vmatprep.subr.bf16.mxu0 0
    %4147 = vmatpush2.bf16.msra.mxu0 %v3705
    %4148 = vmatprep.subr.bf16.mxu0 0
    %4149 = vmatpush2.bf16.msra.mxu0 %v3702
    %4150 = vmatprep.subr.bf16.mxu0 0
    %4151 = vmatpush2.bf16.msra.mxu0 %v3699
    %4152 = vmatprep.subr.bf16.mxu0 0
    %4153 = vmatpush2.bf16.msra.mxu0 %v3696
    %4154 = vmatprep.subr.bf16.mxu0 0
    %4155 = vmatpush2.bf16.msra.mxu0 %v3693
    %4156 = vmatprep.subr.bf16.mxu0 0
    %4157 = vmatpush2.bf16.msra.mxu0 %v3690
    %4158 = vmatprep.subr.bf16.mxu0 0
    %4159 = vmatpush2.bf16.msra.mxu0 %v3687
    %4160 = vmatprep.mubr.bf16.mxu0 %v3252
    %4161 = vmatmul.mubr.bf16.gmra.mxu0 %v3251
    %v4162 = vpop.f32.mrf.mxu0
    %v4163 = vadd.f32 %v4066, %v4162
    %v4164 = vpop.f32.mrf.mxu0
    %v4165 = vpop.f32.mrf.mxu0
    %v4166 = vadd.f32 %v4069, %v4165
    %v4167 = vpop.f32.mrf.mxu0
    %4168 = vmatprep.mubr.bf16.mxu0 %v3256
    %4169 = vmatmul.mubr.bf16.gmra.mxu0 %v3255
    %v4170 = vpop.f32.mrf.mxu0
    %v4171 = vadd.f32 %v4074, %v4170
    %v4172 = vpop.f32.mrf.mxu0
    %v4173 = vpop.f32.mrf.mxu0
    %v4174 = vadd.f32 %v4077, %v4173
    %v4175 = vpop.f32.mrf.mxu0
    %4176 = vmatprep.mubr.bf16.mxu0 %v3260
    %4177 = vmatmul.mubr.bf16.gmra.mxu0 %v3259
    %v4178 = vpop.f32.mrf.mxu0
    %v4179 = vadd.f32 %v4082, %v4178
    %v4180 = vpop.f32.mrf.mxu0
    %v4181 = vpop.f32.mrf.mxu0
    %v4182 = vadd.f32 %v4085, %v4181
    %v4183 = vpop.f32.mrf.mxu0
    %4184 = vmatprep.mubr.bf16.mxu0 %v3264
    %4185 = vmatmul.mubr.bf16.gmra.mxu0 %v3263
    %v4186 = vpop.f32.mrf.mxu0
    %v4187 = vadd.f32 %v4090, %v4186
    %v4188 = vpop.f32.mrf.mxu0
    %v4189 = vpop.f32.mrf.mxu0
    %v4190 = vadd.f32 %v4093, %v4189
    %v4191 = vpop.f32.mrf.mxu0
    %4192 = vmatprep.mubr.bf16.mxu0 %v3268
    %4193 = vmatmul.mubr.bf16.gmra.mxu0 %v3267
    %v4194 = vpop.f32.mrf.mxu0
    %v4195 = vadd.f32 %v4098, %v4194
    %v4196 = vpop.f32.mrf.mxu0
    %v4197 = vpop.f32.mrf.mxu0
    %v4198 = vadd.f32 %v4101, %v4197
    %v4199 = vpop.f32.mrf.mxu0
    %4200 = vmatprep.mubr.bf16.mxu0 %v3272
    %4201 = vmatmul.mubr.bf16.gmra.mxu0 %v3271
    %v4202 = vpop.f32.mrf.mxu0
    %v4203 = vadd.f32 %v4106, %v4202
    %v4204 = vpop.f32.mrf.mxu0
    %v4205 = vpop.f32.mrf.mxu0
    %v4206 = vadd.f32 %v4109, %v4205
    %v4207 = vpop.f32.mrf.mxu0
    %4208 = vmatprep.mubr.bf16.mxu0 %v3276
    %4209 = vmatmul.mubr.bf16.gmra.mxu0 %v3275
    %v4210 = vpop.f32.mrf.mxu0
    %v4211 = vadd.f32 %v4114, %v4210
    %v4212 = vpop.f32.mrf.mxu0
    %v4213 = vpop.f32.mrf.mxu0
    %v4214 = vadd.f32 %v4117, %v4213
    %v4215 = vpop.f32.mrf.mxu0
    %4216 = vmatprep.mubr.bf16.mxu0 %v3280
    %4217 = vmatmul.mubr.bf16.gmra.mxu0 %v3279
    %v4218 = vpop.f32.mrf.mxu0
    %v4219 = vadd.f32 %v4122, %v4218
    %v4220 = vpop.f32.mrf.mxu0
    %v4221 = vpop.f32.mrf.mxu0
    %v4222 = vadd.f32 %v4125, %v4221
    %v4223 = vpop.f32.mrf.mxu0
    %4224 = vdwg.mxu0
    %vm4225 = vcmp.ge.f32.partialorder %v3953, 0.0
    %vm4226 = vcmp.ge.f32.partialorder %v3955, 0.0
    %vm4227 = vcmp.ge.f32.partialorder %v4163, 0.0
    %vm4228 = vcmp.ge.f32.partialorder %v3957, 0.0
    %vm4229 = vcmp.ge.f32.partialorder %v3959, 0.0
    %vm4230 = vcmp.ge.f32.partialorder %v4166, 0.0
    %vm4231 = vcmp.ge.f32.partialorder %v3963, 0.0
    %vm4232 = vcmp.ge.f32.partialorder %v3965, 0.0
    %vm4233 = vcmp.ge.f32.partialorder %v4171, 0.0
    %vm4234 = vcmp.ge.f32.partialorder %v3967, 0.0
    %vm4235 = vcmp.ge.f32.partialorder %v3969, 0.0
    %vm4236 = vcmp.ge.f32.partialorder %v4174, 0.0
    %vm4237 = vcmp.ge.f32.partialorder %v3973, 0.0
    %vm4238 = vcmp.ge.f32.partialorder %v3975, 0.0
    %vm4239 = vcmp.ge.f32.partialorder %v4179, 0.0
    %vm4240 = vcmp.ge.f32.partialorder %v3977, 0.0
    %vm4241 = vcmp.ge.f32.partialorder %v3979, 0.0
    %vm4242 = vcmp.ge.f32.partialorder %v4182, 0.0
    %vm4243 = vcmp.ge.f32.partialorder %v3983, 0.0
    %vm4244 = vcmp.ge.f32.partialorder %v3985, 0.0
    %vm4245 = vcmp.ge.f32.partialorder %v4187, 0.0
    %vm4246 = vcmp.ge.f32.partialorder %v3987, 0.0
    %vm4247 = vcmp.ge.f32.partialorder %v3989, 0.0
    %vm4248 = vcmp.ge.f32.partialorder %v4190, 0.0
    %vm4249 = vcmp.ge.f32.partialorder %v3993, 0.0
    %vm4250 = vcmp.ge.f32.partialorder %v3995, 0.0
    %vm4251 = vcmp.ge.f32.partialorder %v4195, 0.0
    %vm4252 = vcmp.ge.f32.partialorder %v3997, 0.0
    %vm4253 = vcmp.ge.f32.partialorder %v3999, 0.0
    %vm4254 = vcmp.ge.f32.partialorder %v4198, 0.0
    %vm4255 = vcmp.ge.f32.partialorder %v4003, 0.0
    %vm4256 = vcmp.ge.f32.partialorder %v4005, 0.0
    %vm4257 = vcmp.ge.f32.partialorder %v4203, 0.0
    %vm4258 = vcmp.ge.f32.partialorder %v4007, 0.0
    %vm4259 = vcmp.ge.f32.partialorder %v4009, 0.0
    %vm4260 = vcmp.ge.f32.partialorder %v4206, 0.0
    %vm4261 = vcmp.ge.f32.partialorder %v4013, 0.0
    %vm4262 = vcmp.ge.f32.partialorder %v4015, 0.0
    %vm4263 = vcmp.ge.f32.partialorder %v4211, 0.0
    %vm4264 = vcmp.ge.f32.partialorder %v4017, 0.0
    %vm4265 = vcmp.ge.f32.partialorder %v4019, 0.0
    %vm4266 = vcmp.ge.f32.partialorder %v4214, 0.0
    %vm4267 = vcmp.ge.f32.partialorder %v4023, 0.0
    %vm4268 = vcmp.ge.f32.partialorder %v4025, 0.0
    %vm4269 = vcmp.ge.f32.partialorder %v4219, 0.0
    %vm4270 = vcmp.ge.f32.partialorder %v4027, 0.0
    %vm4271 = vcmp.ge.f32.partialorder %v4029, 0.0
    %vm4272 = vcmp.ge.f32.partialorder %v4222, 0.0
    %v4273 = vmul.f32 %v3953, 0.01
    %v4274 = vmul.f32 %v3955, 0.01
    %v4275 = vmul.f32 %v4163, 0.01
    %v4276 = vmul.f32 %v3957, 0.01
    %v4277 = vmul.f32 %v3959, 0.01
    %v4278 = vmul.f32 %v4166, 0.01
    %v4279 = vmul.f32 %v3963, 0.01
    %v4280 = vmul.f32 %v3965, 0.01
    %v4281 = vmul.f32 %v4171, 0.01
    %v4282 = vmul.f32 %v3967, 0.01
    %v4283 = vmul.f32 %v3969, 0.01
    %v4284 = vmul.f32 %v4174, 0.01
    %v4285 = vmul.f32 %v3973, 0.01
    %v4286 = vmul.f32 %v3975, 0.01
    %v4287 = vmul.f32 %v4179, 0.01
    %v4288 = vmul.f32 %v3977, 0.01
    %v4289 = vmul.f32 %v3979, 0.01
    %v4290 = vmul.f32 %v4182, 0.01
    %v4291 = vmul.f32 %v3983, 0.01
    %v4292 = vmul.f32 %v3985, 0.01
    %v4293 = vmul.f32 %v4187, 0.01
    %v4294 = vmul.f32 %v3987, 0.01
    %v4295 = vmul.f32 %v3989, 0.01
    %v4296 = vmul.f32 %v4190, 0.01
    %v4297 = vmul.f32 %v3993, 0.01
    %v4298 = vmul.f32 %v3995, 0.01
    %v4299 = vmul.f32 %v4195, 0.01
    %v4300 = vmul.f32 %v3997, 0.01
    %v4301 = vmul.f32 %v3999, 0.01
    %v4302 = vmul.f32 %v4198, 0.01
    %v4303 = vmul.f32 %v4003, 0.01
    %v4304 = vmul.f32 %v4005, 0.01
    %v4305 = vmul.f32 %v4203, 0.01
    %v4306 = vmul.f32 %v4007, 0.01
    %v4307 = vmul.f32 %v4009, 0.01
    %v4308 = vmul.f32 %v4206, 0.01
    %v4309 = vmul.f32 %v4013, 0.01
    %v4310 = vmul.f32 %v4015, 0.01
    %v4311 = vmul.f32 %v4211, 0.01
    %v4312 = vmul.f32 %v4017, 0.01
    %v4313 = vmul.f32 %v4019, 0.01
    %v4314 = vmul.f32 %v4214, 0.01
    %v4315 = vmul.f32 %v4023, 0.01
    %v4316 = vmul.f32 %v4025, 0.01
    %v4317 = vmul.f32 %v4219, 0.01
    %v4318 = vmul.f32 %v4027, 0.01
    %v4319 = vmul.f32 %v4029, 0.01
    %v4320 = vmul.f32 %v4222, 0.01
    %v4321 = vsel %vm4225, %v3953, %v4273
    %v4322 = vsel %vm4226, %v3955, %v4274
    %v4323 = vsel %vm4227, %v4163, %v4275
    %v4324 = vsel %vm4228, %v3957, %v4276
    %v4325 = vsel %vm4229, %v3959, %v4277
    %v4326 = vsel %vm4230, %v4166, %v4278
    %v4327 = vsel %vm4231, %v3963, %v4279
    %v4328 = vsel %vm4232, %v3965, %v4280
    %v4329 = vsel %vm4233, %v4171, %v4281
    %v4330 = vsel %vm4234, %v3967, %v4282
    %v4331 = vsel %vm4235, %v3969, %v4283
    %v4332 = vsel %vm4236, %v4174, %v4284
    %v4333 = vsel %vm4237, %v3973, %v4285
    %v4334 = vsel %vm4238, %v3975, %v4286
    %v4335 = vsel %vm4239, %v4179, %v4287
    %v4336 = vsel %vm4240, %v3977, %v4288
    %v4337 = vsel %vm4241, %v3979, %v4289
    %v4338 = vsel %vm4242, %v4182, %v4290
    %v4339 = vsel %vm4243, %v3983, %v4291
    %v4340 = vsel %vm4244, %v3985, %v4292
    %v4341 = vsel %vm4245, %v4187, %v4293
    %v4342 = vsel %vm4246, %v3987, %v4294
    %v4343 = vsel %vm4247, %v3989, %v4295
    %v4344 = vsel %vm4248, %v4190, %v4296
    %v4345 = vsel %vm4249, %v3993, %v4297
    %v4346 = vsel %vm4250, %v3995, %v4298
    %v4347 = vsel %vm4251, %v4195, %v4299
    %v4348 = vsel %vm4252, %v3997, %v4300
    %v4349 = vsel %vm4253, %v3999, %v4301
    %v4350 = vsel %vm4254, %v4198, %v4302
    %v4351 = vsel %vm4255, %v4003, %v4303
    %v4352 = vsel %vm4256, %v4005, %v4304
    %v4353 = vsel %vm4257, %v4203, %v4305
    %v4354 = vsel %vm4258, %v4007, %v4306
    %v4355 = vsel %vm4259, %v4009, %v4307
    %v4356 = vsel %vm4260, %v4206, %v4308
    %v4357 = vsel %vm4261, %v4013, %v4309
    %v4358 = vsel %vm4262, %v4015, %v4310
    %v4359 = vsel %vm4263, %v4211, %v4311
    %v4360 = vsel %vm4264, %v4017, %v4312
    %v4361 = vsel %vm4265, %v4019, %v4313
    %v4362 = vsel %vm4266, %v4214, %v4314
    %v4363 = vsel %vm4267, %v4023, %v4315
    %v4364 = vsel %vm4268, %v4025, %v4316
    %v4365 = vsel %vm4269, %v4219, %v4317
    %v4366 = vsel %vm4270, %v4027, %v4318
    %v4367 = vsel %vm4271, %v4029, %v4319
    %v4368 = vsel %vm4272, %v4222, %v4320
    %v4369 = vadd.f32 %v4321, %v4324
    %v4370 = vadd.f32 %v4369, %v4327
    %v4371 = vadd.f32 %v4370, %v4330
    %v4372 = vadd.f32 %v4371, %v4333
    %v4373 = vadd.f32 %v4372, %v4336
    %v4374 = vadd.f32 %v4373, %v4339
    %v4375 = vadd.f32 %v4374, %v4342
    %v4376 = vadd.f32 %v4375, %v4345
    %v4377 = vadd.f32 %v4376, %v4348
    %v4378 = vadd.f32 %v4377, %v4351
    %v4379 = vadd.f32 %v4378, %v4354
    %v4380 = vadd.f32 %v4379, %v4357
    %v4381 = vadd.f32 %v4380, %v4360
    %v4382 = vadd.f32 %v4381, %v4363
    %v4383 = vadd.f32 %v4382, %v4366
    %v4384 = vrot.slane %v4383, 4
    %v4385 = vadd.f32 %v4383, %v4384
    %v4386 = vrot.slane %v4385, 2
    %v4387 = vadd.f32 %v4385, %v4386
    %v4388 = vrot.slane %v4387, 1
    %v4389 = vadd.f32 %v4387, %v4388
    %v4390 = vadd.f32 %v4322, %v4325
    %v4391 = vadd.f32 %v4390, %v4328
    %v4392 = vadd.f32 %v4391, %v4331
    %v4393 = vadd.f32 %v4392, %v4334
    %v4394 = vadd.f32 %v4393, %v4337
    %v4395 = vadd.f32 %v4394, %v4340
    %v4396 = vadd.f32 %v4395, %v4343
    %v4397 = vadd.f32 %v4396, %v4346
    %v4398 = vadd.f32 %v4397, %v4349
    %v4399 = vadd.f32 %v4398, %v4352
    %v4400 = vadd.f32 %v4399, %v4355
    %v4401 = vadd.f32 %v4400, %v4358
    %v4402 = vadd.f32 %v4401, %v4361
    %v4403 = vadd.f32 %v4402, %v4364
    %v4404 = vadd.f32 %v4403, %v4367
    %v4405 = vrot.slane %v4404, 4
    %v4406 = vadd.f32 %v4404, %v4405
    %v4407 = vrot.slane %v4406, 2
    %v4408 = vadd.f32 %v4406, %v4407
    %v4409 = vrot.slane %v4408, 1
    %v4410 = vadd.f32 %v4408, %v4409
    %v4411 = vadd.f32 %v4323, %v4326
    %v4412 = vadd.f32 %v4411, %v4329
    %v4413 = vadd.f32 %v4412, %v4332
    %v4414 = vadd.f32 %v4413, %v4335
    %v4415 = vadd.f32 %v4414, %v4338
    %v4416 = vadd.f32 %v4415, %v4341
    %v4417 = vadd.f32 %v4416, %v4344
    %v4418 = vadd.f32 %v4417, %v4347
    %v4419 = vadd.f32 %v4418, %v4350
    %v4420 = vadd.f32 %v4419, %v4353
    %v4421 = vadd.f32 %v4420, %v4356
    %v4422 = vadd.f32 %v4421, %v4359
    %v4423 = vadd.f32 %v4422, %v4362
    %v4424 = vadd.f32 %v4423, %v4365
    %v4425 = vadd.f32 %v4424, %v4368
    %v4426 = vrot.slane %v4425, 4
    %v4427 = vadd.f32 %v4425, %v4426
    %v4428 = vrot.slane %v4427, 2
    %v4429 = vadd.f32 %v4427, %v4428
    %v4430 = vrot.slane %v4429, 1
    %v4431 = vadd.f32 %v4429, %v4430
    %v4432 = vmul.f32 %v4389, 0.0078125
    %v4433 = vmul.f32 %v4410, 0.0078125
    %v4434 = vmul.f32 %v4431, 0.0078125
    %v4435 = vmul.f32 %v4321, %v4321
    %v4436 = vmul.f32 %v4322, %v4322
    %v4437 = vmul.f32 %v4323, %v4323
    %v4438 = vmul.f32 %v4324, %v4324
    %v4439 = vmul.f32 %v4325, %v4325
    %v4440 = vmul.f32 %v4326, %v4326
    %v4441 = vmul.f32 %v4327, %v4327
    %v4442 = vmul.f32 %v4328, %v4328
    %v4443 = vmul.f32 %v4329, %v4329
    %v4444 = vmul.f32 %v4330, %v4330
    %v4445 = vmul.f32 %v4331, %v4331
    %v4446 = vmul.f32 %v4332, %v4332
    %v4447 = vmul.f32 %v4333, %v4333
    %v4448 = vmul.f32 %v4334, %v4334
    %v4449 = vmul.f32 %v4335, %v4335
    %v4450 = vmul.f32 %v4336, %v4336
    %v4451 = vmul.f32 %v4337, %v4337
    %v4452 = vmul.f32 %v4338, %v4338
    %v4453 = vmul.f32 %v4339, %v4339
    %v4454 = vmul.f32 %v4340, %v4340
    %v4455 = vmul.f32 %v4341, %v4341
    %v4456 = vmul.f32 %v4342, %v4342
    %v4457 = vmul.f32 %v4343, %v4343
    %v4458 = vmul.f32 %v4344, %v4344
    %v4459 = vmul.f32 %v4345, %v4345
    %v4460 = vmul.f32 %v4346, %v4346
    %v4461 = vmul.f32 %v4347, %v4347
    %v4462 = vmul.f32 %v4348, %v4348
    %v4463 = vmul.f32 %v4349, %v4349
    %v4464 = vmul.f32 %v4350, %v4350
    %v4465 = vmul.f32 %v4351, %v4351
    %v4466 = vmul.f32 %v4352, %v4352
    %v4467 = vmul.f32 %v4353, %v4353
    %v4468 = vmul.f32 %v4354, %v4354
    %v4469 = vmul.f32 %v4355, %v4355
    %v4470 = vmul.f32 %v4356, %v4356
    %v4471 = vmul.f32 %v4357, %v4357
    %v4472 = vmul.f32 %v4358, %v4358
    %v4473 = vmul.f32 %v4359, %v4359
    %v4474 = vmul.f32 %v4360, %v4360
    %v4475 = vmul.f32 %v4361, %v4361
    %v4476 = vmul.f32 %v4362, %v4362
    %v4477 = vmul.f32 %v4363, %v4363
    %v4478 = vmul.f32 %v4364, %v4364
    %v4479 = vmul.f32 %v4365, %v4365
    %v4480 = vmul.f32 %v4366, %v4366
    %v4481 = vmul.f32 %v4367, %v4367
    %v4482 = vmul.f32 %v4368, %v4368
    %v4483 = vadd.f32 %v4435, %v4438
    %v4484 = vadd.f32 %v4483, %v4441
    %v4485 = vadd.f32 %v4484, %v4444
    %v4486 = vadd.f32 %v4485, %v4447
    %v4487 = vadd.f32 %v4486, %v4450
    %v4488 = vadd.f32 %v4487, %v4453
    %v4489 = vadd.f32 %v4488, %v4456
    %v4490 = vadd.f32 %v4489, %v4459
    %v4491 = vadd.f32 %v4490, %v4462
    %v4492 = vadd.f32 %v4491, %v4465
    %v4493 = vadd.f32 %v4492, %v4468
    %v4494 = vadd.f32 %v4493, %v4471
    %v4495 = vadd.f32 %v4494, %v4474
    %v4496 = vadd.f32 %v4495, %v4477
    %v4497 = vadd.f32 %v4496, %v4480
    %v4498 = vrot.slane %v4497, 4
    %v4499 = vadd.f32 %v4497, %v4498
    %v4500 = vrot.slane %v4499, 2
    %v4501 = vadd.f32 %v4499, %v4500
    %v4502 = vrot.slane %v4501, 1
    %v4503 = vadd.f32 %v4501, %v4502
    %v4504 = vadd.f32 %v4436, %v4439
    %v4505 = vadd.f32 %v4504, %v4442
    %v4506 = vadd.f32 %v4505, %v4445
    %v4507 = vadd.f32 %v4506, %v4448
    %v4508 = vadd.f32 %v4507, %v4451
    %v4509 = vadd.f32 %v4508, %v4454
    %v4510 = vadd.f32 %v4509, %v4457
    %v4511 = vadd.f32 %v4510, %v4460
    %v4512 = vadd.f32 %v4511, %v4463
    %v4513 = vadd.f32 %v4512, %v4466
    %v4514 = vadd.f32 %v4513, %v4469
    %v4515 = vadd.f32 %v4514, %v4472
    %v4516 = vadd.f32 %v4515, %v4475
    %v4517 = vadd.f32 %v4516, %v4478
    %v4518 = vadd.f32 %v4517, %v4481
    %v4519 = vrot.slane %v4518, 4
    %v4520 = vadd.f32 %v4518, %v4519
    %v4521 = vrot.slane %v4520, 2
    %v4522 = vadd.f32 %v4520, %v4521
    %v4523 = vrot.slane %v4522, 1
    %v4524 = vadd.f32 %v4522, %v4523
    %v4525 = vadd.f32 %v4437, %v4440
    %v4526 = vadd.f32 %v4525, %v4443
    %v4527 = vadd.f32 %v4526, %v4446
    %v4528 = vadd.f32 %v4527, %v4449
    %v4529 = vadd.f32 %v4528, %v4452
    %v4530 = vadd.f32 %v4529, %v4455
    %v4531 = vadd.f32 %v4530, %v4458
    %v4532 = vadd.f32 %v4531, %v4461
    %v4533 = vadd.f32 %v4532, %v4464
    %v4534 = vadd.f32 %v4533, %v4467
    %v4535 = vadd.f32 %v4534, %v4470
    %v4536 = vadd.f32 %v4535, %v4473
    %v4537 = vadd.f32 %v4536, %v4476
    %v4538 = vadd.f32 %v4537, %v4479
    %v4539 = vadd.f32 %v4538, %v4482
    %v4540 = vrot.slane %v4539, 4
    %v4541 = vadd.f32 %v4539, %v4540
    %v4542 = vrot.slane %v4541, 2
    %v4543 = vadd.f32 %v4541, %v4542
    %v4544 = vrot.slane %v4543, 1
    %v4545 = vadd.f32 %v4543, %v4544
    %v4546 = vmul.f32 %v4503, 0.0078125
    %v4547 = vmul.f32 %v4524, 0.0078125
    %v4548 = vmul.f32 %v4545, 0.0078125
    %v4549 = vmul.f32 %v4432, %v4432
    %v4550 = vmul.f32 %v4433, %v4433
    %v4551 = vmul.f32 %v4434, %v4434
    %v4552 = vsub.f32 %v4546, %v4549
    %v4553 = vsub.f32 %v4547, %v4550
    %v4554 = vsub.f32 %v4548, %v4551
    %v4555 = vmax.f32 %v4552, 0.0
    %v4556 = vmax.f32 %v4553, 0.0
    %v4557 = vmax.f32 %v4554, 0.0
    %v4558 = vadd.f32 %v4555, 1e-05
    %v4559 = vadd.f32 %v4556, 1e-05
    %v4560 = vadd.f32 %v4557, 1e-05
    %v4561 = vrsqrt.pop %v4558
    %v4562 = vrsqrt.pop %v4559
    %v4563 = vrsqrt.pop %v4560
    %v4564 = vmul.f32 %v115, %v4561
    %v4565 = vmul.f32 %v116, %v4562
    %v4566 = vmul.f32 %v117, %v4563
    %v4567 = vmul.f32 %v4432, %v4564
    %v4568 = vmul.f32 %v4433, %v4565
    %v4569 = vmul.f32 %v4434, %v4566
    %v4573 = vrot.slane %v4567, 7
    %v4574 = vrot.slane %v4568, 7
    %v4575 = vrot.slane %v4569, 7
    %v4579 = vsub.f32 %v119, %v4573
    %v4580 = vsub.f32 %v120, %v4574
    %v4581 = vsub.f32 %v121, %v4575
    %v4582 = vlaneseq
    %v4583 = vshrl.u32 %v4582, 7
    %v4584 = vsub.s32 7, %v4583
    %v4585 = vrot.slane %v4564, %v4584
    %v4586 = vlaneseq
    %v4587 = vshrl.u32 %v4586, 7
    %v4588 = vsub.s32 7, %v4587
    %v4589 = vrot.slane %v4565, %v4588
    %v4590 = vlaneseq
    %v4591 = vshrl.u32 %v4590, 7
    %v4592 = vsub.s32 7, %v4591
    %v4593 = vrot.slane %v4566, %v4592
    %v4594 = vmul.f32 %v4321, %v4585
    %v4595 = vmul.f32 %v4322, %v4589
    %v4596 = vmul.f32 %v4323, %v4593
    %v4597 = vmul.f32 %v4324, %v4585
    %v4598 = vmul.f32 %v4325, %v4589
    %v4599 = vmul.f32 %v4326, %v4593
    %v4600 = vmul.f32 %v4327, %v4585
    %v4601 = vmul.f32 %v4328, %v4589
    %v4602 = vmul.f32 %v4329, %v4593
    %v4603 = vmul.f32 %v4330, %v4585
    %v4604 = vmul.f32 %v4331, %v4589
    %v4605 = vmul.f32 %v4332, %v4593
    %v4606 = vmul.f32 %v4333, %v4585
    %v4607 = vmul.f32 %v4334, %v4589
    %v4608 = vmul.f32 %v4335, %v4593
    %v4609 = vmul.f32 %v4336, %v4585
    %v4610 = vmul.f32 %v4337, %v4589
    %v4611 = vmul.f32 %v4338, %v4593
    %v4612 = vmul.f32 %v4339, %v4585
    %v4613 = vmul.f32 %v4340, %v4589
    %v4614 = vmul.f32 %v4341, %v4593
    %v4615 = vmul.f32 %v4342, %v4585
    %v4616 = vmul.f32 %v4343, %v4589
    %v4617 = vmul.f32 %v4344, %v4593
    %v4618 = vmul.f32 %v4345, %v4585
    %v4619 = vmul.f32 %v4346, %v4589
    %v4620 = vmul.f32 %v4347, %v4593
    %v4621 = vmul.f32 %v4348, %v4585
    %v4622 = vmul.f32 %v4349, %v4589
    %v4623 = vmul.f32 %v4350, %v4593
    %v4624 = vmul.f32 %v4351, %v4585
    %v4625 = vmul.f32 %v4352, %v4589
    %v4626 = vmul.f32 %v4353, %v4593
    %v4627 = vmul.f32 %v4354, %v4585
    %v4628 = vmul.f32 %v4355, %v4589
    %v4629 = vmul.f32 %v4356, %v4593
    %v4630 = vmul.f32 %v4357, %v4585
    %v4631 = vmul.f32 %v4358, %v4589
    %v4632 = vmul.f32 %v4359, %v4593
    %v4633 = vmul.f32 %v4360, %v4585
    %v4634 = vmul.f32 %v4361, %v4589
    %v4635 = vmul.f32 %v4362, %v4593
    %v4636 = vmul.f32 %v4363, %v4585
    %v4637 = vmul.f32 %v4364, %v4589
    %v4638 = vmul.f32 %v4365, %v4593
    %v4639 = vmul.f32 %v4366, %v4585
    %v4640 = vmul.f32 %v4367, %v4589
    %v4641 = vmul.f32 %v4368, %v4593
    %v4642 = vlaneseq
    %v4643 = vshrl.u32 %v4642, 7
    %v4644 = vsub.s32 0, %v4643
    %v4645 = vrot.slane %v4579, %v4644
    %v4646 = vlaneseq
    %v4647 = vshrl.u32 %v4646, 7
    %v4648 = vsub.s32 0, %v4647
    %v4649 = vrot.slane %v4580, %v4648
    %v4650 = vlaneseq
    %v4651 = vshrl.u32 %v4650, 7
    %v4652 = vsub.s32 0, %v4651
    %v4653 = vrot.slane %v4581, %v4652
    %v4654 = vadd.f32 %v4594, %v4645
    %v4655 = vadd.f32 %v4595, %v4649
    %v4656 = vadd.f32 %v4596, %v4653
    %v4657 = vadd.f32 %v4597, %v4645
    %v4658 = vadd.f32 %v4598, %v4649
    %v4659 = vadd.f32 %v4599, %v4653
    %v4660 = vadd.f32 %v4600, %v4645
    %v4661 = vadd.f32 %v4601, %v4649
    %v4662 = vadd.f32 %v4602, %v4653
    %v4663 = vadd.f32 %v4603, %v4645
    %v4664 = vadd.f32 %v4604, %v4649
    %v4665 = vadd.f32 %v4605, %v4653
    %v4666 = vadd.f32 %v4606, %v4645
    %v4667 = vadd.f32 %v4607, %v4649
    %v4668 = vadd.f32 %v4608, %v4653
    %v4669 = vadd.f32 %v4609, %v4645
    %v4670 = vadd.f32 %v4610, %v4649
    %v4671 = vadd.f32 %v4611, %v4653
    %v4672 = vadd.f32 %v4612, %v4645
    %v4673 = vadd.f32 %v4613, %v4649
    %v4674 = vadd.f32 %v4614, %v4653
    %v4675 = vadd.f32 %v4615, %v4645
    %v4676 = vadd.f32 %v4616, %v4649
    %v4677 = vadd.f32 %v4617, %v4653
    %v4678 = vadd.f32 %v4618, %v4645
    %v4679 = vadd.f32 %v4619, %v4649
    %v4680 = vadd.f32 %v4620, %v4653
    %v4681 = vadd.f32 %v4621, %v4645
    %v4682 = vadd.f32 %v4622, %v4649
    %v4683 = vadd.f32 %v4623, %v4653
    %v4684 = vadd.f32 %v4624, %v4645
    %v4685 = vadd.f32 %v4625, %v4649
    %v4686 = vadd.f32 %v4626, %v4653
    %v4687 = vadd.f32 %v4627, %v4645
    %v4688 = vadd.f32 %v4628, %v4649
    %v4689 = vadd.f32 %v4629, %v4653
    %v4690 = vadd.f32 %v4630, %v4645
    %v4691 = vadd.f32 %v4631, %v4649
    %v4692 = vadd.f32 %v4632, %v4653
    %v4693 = vadd.f32 %v4633, %v4645
    %v4694 = vadd.f32 %v4634, %v4649
    %v4695 = vadd.f32 %v4635, %v4653
    %v4696 = vadd.f32 %v4636, %v4645
    %v4697 = vadd.f32 %v4637, %v4649
    %v4698 = vadd.f32 %v4638, %v4653
    %v4699 = vadd.f32 %v4639, %v4645
    %v4700 = vadd.f32 %v4640, %v4649
    %v4701 = vadd.f32 %v4641, %v4653
    %v4702 = vld [vmem:[%s4] sm:$0xff]
    %v4703 = vld [vmem:[%s4 + $0x8] sm:$0xff]
    %v4704 = vld [vmem:[%s4 + $0x10] sm:$0xff]
    %v4705 = vld [vmem:[%s4 + $0x18] sm:$0xff]
    %v4706 = vld [vmem:[%s4 + $0x20] sm:$0xff]
    %v4707 = vld [vmem:[%s4 + $0x28] sm:$0xff]
    %v4708 = vld [vmem:[%s4 + $0x30] sm:$0xff]
    %v4709 = vld [vmem:[%s4 + $0x38] sm:$0xff]
    %v4710 = vld [vmem:[%s4 + $0x40] sm:$0xff]
    %v4711 = vld [vmem:[%s4 + $0x48] sm:$0xff]
    %v4712 = vld [vmem:[%s4 + $0x50] sm:$0xff]
    %v4713 = vld [vmem:[%s4 + $0x58] sm:$0xff]
    %v4714 = vld [vmem:[%s4 + $0x60] sm:$0xff]
    %v4715 = vld [vmem:[%s4 + $0x68] sm:$0xff]
    %v4716 = vld [vmem:[%s4 + $0x70] sm:$0xff]
    %v4717 = vld [vmem:[%s4 + $0x78] sm:$0xff]
    %v4718 = vld [vmem:[%s4 + $0x80] sm:$0xff]
    %v4719 = vld [vmem:[%s4 + $0x88] sm:$0xff]
    %v4720 = vld [vmem:[%s4 + $0x90] sm:$0xff]
    %v4721 = vld [vmem:[%s4 + $0x98] sm:$0xff]
    %v4722 = vld [vmem:[%s4 + $0xa0] sm:$0xff]
    %v4723 = vld [vmem:[%s4 + $0xa8] sm:$0xff]
    %v4724 = vld [vmem:[%s4 + $0xb0] sm:$0xff]
    %v4725 = vld [vmem:[%s4 + $0xb8] sm:$0xff]
    %v4726 = vld [vmem:[%s4 + $0xc0] sm:$0xff]
    %v4727 = vld [vmem:[%s4 + $0xc8] sm:$0xff]
    %v4728 = vld [vmem:[%s4 + $0xd0] sm:$0xff]
    %v4729 = vld [vmem:[%s4 + $0xd8] sm:$0xff]
    %v4730 = vld [vmem:[%s4 + $0xe0] sm:$0xff]
    %v4731 = vld [vmem:[%s4 + $0xe8] sm:$0xff]
    %v4732 = vld [vmem:[%s4 + $0xf0] sm:$0xff]
    %v4733 = vld [vmem:[%s4 + $0xf8] sm:$0xff]
    %v4734 = vld [vmem:[%s4 + $0x100] sm:$0xff]
    %v4735 = vld [vmem:[%s4 + $0x108] sm:$0xff]
    %v4736 = vld [vmem:[%s4 + $0x110] sm:$0xff]
    %v4737 = vld [vmem:[%s4 + $0x118] sm:$0xff]
    %v4738 = vld [vmem:[%s4 + $0x120] sm:$0xff]
    %v4739 = vld [vmem:[%s4 + $0x128] sm:$0xff]
    %v4740 = vld [vmem:[%s4 + $0x130] sm:$0xff]
    %v4741 = vld [vmem:[%s4 + $0x138] sm:$0xff]
    %v4742 = vld [vmem:[%s4 + $0x140] sm:$0xff]
    %v4743 = vld [vmem:[%s4 + $0x148] sm:$0xff]
    %v4744 = vld [vmem:[%s4 + $0x150] sm:$0xff]
    %v4745 = vld [vmem:[%s4 + $0x158] sm:$0xff]
    %v4746 = vld [vmem:[%s4 + $0x160] sm:$0xff]
    %v4747 = vld [vmem:[%s4 + $0x168] sm:$0xff]
    %v4748 = vld [vmem:[%s4 + $0x170] sm:$0xff]
    %v4749 = vld [vmem:[%s4 + $0x178] sm:$0xff]
    %v4750 = vpack.c.bf16 %v4657, %v4654
    %v4751 = vpack.c.bf16 %v4658, %v4655
    %v4752 = vpack.c.bf16 %v4659, %v4656
    %v4753 = vpack.c.bf16 %v4663, %v4660
    %v4754 = vpack.c.bf16 %v4664, %v4661
    %v4755 = vpack.c.bf16 %v4665, %v4662
    %v4756 = vpack.c.bf16 %v4669, %v4666
    %v4757 = vpack.c.bf16 %v4670, %v4667
    %v4758 = vpack.c.bf16 %v4671, %v4668
    %v4759 = vpack.c.bf16 %v4675, %v4672
    %v4760 = vpack.c.bf16 %v4676, %v4673
    %v4761 = vpack.c.bf16 %v4677, %v4674
    %v4762 = vpack.c.bf16 %v4681, %v4678
    %v4763 = vpack.c.bf16 %v4682, %v4679
    %v4764 = vpack.c.bf16 %v4683, %v4680
    %v4765 = vpack.c.bf16 %v4687, %v4684
    %v4766 = vpack.c.bf16 %v4688, %v4685
    %v4767 = vpack.c.bf16 %v4689, %v4686
    %v4768 = vpack.c.bf16 %v4693, %v4690
    %v4769 = vpack.c.bf16 %v4694, %v4691
    %v4770 = vpack.c.bf16 %v4695, %v4692
    %v4771 = vpack.c.bf16 %v4699, %v4696
    %v4772 = vpack.c.bf16 %v4700, %v4697
    %v4773 = vpack.c.bf16 %v4701, %v4698
    %v4774 = vlaneseq
    %v4775 = vshrl.u32 %v4774, 7
    %v4776 = vsub.s32 1, %v4775
    %v4777 = vrot.slane %v119, %v4776
    %v4778 = vlaneseq
    %v4779 = vshrl.u32 %v4778, 7
    %v4780 = vsub.s32 1, %v4779
    %v4781 = vrot.slane %v120, %v4780
    %v4830 = vunpack.c.l.b16 %v4702
    %v4831 = vunpack.c.h.b16 %v4702
    %v4832 = vunpack.c.l.b16 %v4703
    %v4833 = vunpack.c.h.b16 %v4703
    %v4834 = vunpack.c.l.b16 %v4704
    %v4835 = vunpack.c.h.b16 %v4704
    %v4836 = vunpack.c.l.b16 %v4705
    %v4837 = vunpack.c.h.b16 %v4705
    %v4838 = vunpack.c.l.b16 %v4706
    %v4839 = vunpack.c.h.b16 %v4706
    %v4840 = vunpack.c.l.b16 %v4707
    %v4841 = vunpack.c.h.b16 %v4707
    %v4842 = vunpack.c.l.b16 %v4708
    %v4843 = vunpack.c.h.b16 %v4708
    %v4844 = vunpack.c.l.b16 %v4709
    %v4845 = vunpack.c.h.b16 %v4709
    %v4846 = vunpack.c.l.b16 %v4710
    %v4847 = vunpack.c.h.b16 %v4710
    %v4848 = vunpack.c.l.b16 %v4711
    %v4849 = vunpack.c.h.b16 %v4711
    %v4850 = vunpack.c.l.b16 %v4712
    %v4851 = vunpack.c.h.b16 %v4712
    %v4852 = vunpack.c.l.b16 %v4713
    %v4853 = vunpack.c.h.b16 %v4713
    %v4854 = vunpack.c.l.b16 %v4714
    %v4855 = vunpack.c.h.b16 %v4714
    %v4856 = vunpack.c.l.b16 %v4715
    %v4857 = vunpack.c.h.b16 %v4715
    %v4858 = vunpack.c.l.b16 %v4716
    %v4859 = vunpack.c.h.b16 %v4716
    %v4860 = vunpack.c.l.b16 %v4717
    %v4861 = vunpack.c.h.b16 %v4717
    %v4862 = vunpack.c.l.b16 %v4718
    %v4863 = vunpack.c.h.b16 %v4718
    %v4864 = vunpack.c.l.b16 %v4719
    %v4865 = vunpack.c.h.b16 %v4719
    %v4866 = vunpack.c.l.b16 %v4720
    %v4867 = vunpack.c.h.b16 %v4720
    %v4868 = vunpack.c.l.b16 %v4721
    %v4869 = vunpack.c.h.b16 %v4721
    %v4870 = vunpack.c.l.b16 %v4722
    %v4871 = vunpack.c.h.b16 %v4722
    %v4872 = vunpack.c.l.b16 %v4723
    %v4873 = vunpack.c.h.b16 %v4723
    %v4874 = vunpack.c.l.b16 %v4724
    %v4875 = vunpack.c.h.b16 %v4724
    %v4876 = vunpack.c.l.b16 %v4725
    %v4877 = vunpack.c.h.b16 %v4725
    %v4878 = vunpack.c.l.b16 %v4726
    %v4879 = vunpack.c.h.b16 %v4726
    %v4880 = vunpack.c.l.b16 %v4727
    %v4881 = vunpack.c.h.b16 %v4727
    %v4882 = vunpack.c.l.b16 %v4728
    %v4883 = vunpack.c.h.b16 %v4728
    %v4884 = vunpack.c.l.b16 %v4729
    %v4885 = vunpack.c.h.b16 %v4729
    %v4886 = vunpack.c.l.b16 %v4730
    %v4887 = vunpack.c.h.b16 %v4730
    %v4888 = vunpack.c.l.b16 %v4731
    %v4889 = vunpack.c.h.b16 %v4731
    %v4890 = vunpack.c.l.b16 %v4732
    %v4891 = vunpack.c.h.b16 %v4732
    %v4892 = vunpack.c.l.b16 %v4733
    %v4893 = vunpack.c.h.b16 %v4733
    %v4894 = vunpack.c.l.b16 %v4734
    %v4895 = vunpack.c.h.b16 %v4734
    %v4896 = vunpack.c.l.b16 %v4735
    %v4897 = vunpack.c.h.b16 %v4735
    %v4898 = vunpack.c.l.b16 %v4736
    %v4899 = vunpack.c.h.b16 %v4736
    %v4900 = vunpack.c.l.b16 %v4737
    %v4901 = vunpack.c.h.b16 %v4737
    %v4902 = vunpack.c.l.b16 %v4738
    %v4903 = vunpack.c.h.b16 %v4738
    %v4904 = vunpack.c.l.b16 %v4739
    %v4905 = vunpack.c.h.b16 %v4739
    %v4906 = vunpack.c.l.b16 %v4740
    %v4907 = vunpack.c.h.b16 %v4740
    %v4908 = vunpack.c.l.b16 %v4741
    %v4909 = vunpack.c.h.b16 %v4741
    %v4910 = vunpack.c.l.b16 %v4742
    %v4911 = vunpack.c.h.b16 %v4742
    %v4912 = vunpack.c.l.b16 %v4743
    %v4913 = vunpack.c.h.b16 %v4743
    %v4914 = vunpack.c.l.b16 %v4744
    %v4915 = vunpack.c.h.b16 %v4744
    %v4916 = vunpack.c.l.b16 %v4745
    %v4917 = vunpack.c.h.b16 %v4745
    %v4918 = vunpack.c.l.b16 %v4746
    %v4919 = vunpack.c.h.b16 %v4746
    %v4920 = vunpack.c.l.b16 %v4747
    %v4921 = vunpack.c.h.b16 %v4747
    %v4922 = vunpack.c.l.b16 %v4748
    %v4923 = vunpack.c.h.b16 %v4748
    %v4924 = vunpack.c.l.b16 %v4749
    %v4925 = vunpack.c.h.b16 %v4749
    %v4926 = vpack.c.b16 %v4832, %v4830
    %v4927 = vpack.c.b16 %v4833, %v4831
    %v4928 = vpack.c.b16 %v4836, %v4834
    %v4929 = vpack.c.b16 %v4837, %v4835
    %v4930 = vpack.c.b16 %v4840, %v4838
    %v4931 = vpack.c.b16 %v4841, %v4839
    %v4932 = vpack.c.b16 %v4844, %v4842
    %v4933 = vpack.c.b16 %v4845, %v4843
    %v4934 = vpack.c.b16 %v4848, %v4846
    %v4935 = vpack.c.b16 %v4849, %v4847
    %v4936 = vpack.c.b16 %v4852, %v4850
    %v4937 = vpack.c.b16 %v4853, %v4851
    %v4938 = vpack.c.b16 %v4856, %v4854
    %v4939 = vpack.c.b16 %v4857, %v4855
    %v4940 = vpack.c.b16 %v4860, %v4858
    %v4941 = vpack.c.b16 %v4861, %v4859
    %v4942 = vpack.c.b16 %v4864, %v4862
    %v4943 = vpack.c.b16 %v4865, %v4863
    %v4944 = vpack.c.b16 %v4868, %v4866
    %v4945 = vpack.c.b16 %v4869, %v4867
    %v4946 = vpack.c.b16 %v4872, %v4870
    %v4947 = vpack.c.b16 %v4873, %v4871
    %v4948 = vpack.c.b16 %v4876, %v4874
    %v4949 = vpack.c.b16 %v4877, %v4875
    %v4950 = vpack.c.b16 %v4880, %v4878
    %v4951 = vpack.c.b16 %v4881, %v4879
    %v4952 = vpack.c.b16 %v4884, %v4882
    %v4953 = vpack.c.b16 %v4885, %v4883
    %v4954 = vpack.c.b16 %v4888, %v4886
    %v4955 = vpack.c.b16 %v4889, %v4887
    %v4956 = vpack.c.b16 %v4892, %v4890
    %v4957 = vpack.c.b16 %v4893, %v4891
    %v4958 = vpack.c.b16 %v4896, %v4894
    %v4959 = vpack.c.b16 %v4897, %v4895
    %v4960 = vpack.c.b16 %v4900, %v4898
    %v4961 = vpack.c.b16 %v4901, %v4899
    %v4962 = vpack.c.b16 %v4904, %v4902
    %v4963 = vpack.c.b16 %v4905, %v4903
    %v4964 = vpack.c.b16 %v4908, %v4906
    %v4965 = vpack.c.b16 %v4909, %v4907
    %v4966 = vpack.c.b16 %v4912, %v4910
    %v4967 = vpack.c.b16 %v4913, %v4911
    %v4968 = vpack.c.b16 %v4916, %v4914
    %v4969 = vpack.c.b16 %v4917, %v4915
    %v4970 = vpack.c.b16 %v4920, %v4918
    %v4971 = vpack.c.b16 %v4921, %v4919
    %v4972 = vpack.c.b16 %v4924, %v4922
    %v4973 = vpack.c.b16 %v4925, %v4923
    %5022 = vmatprep.subr.bf16.mxu0 %v4941
    %5023 = vmatpush1.bf16.msra.mxu0 %v4940
    %5024 = vmatprep.subr.bf16.mxu0 %v4939
    %5025 = vmatpush1.bf16.msra.mxu0 %v4938
    %5026 = vmatprep.subr.bf16.mxu0 %v4937
    %5027 = vmatpush1.bf16.msra.mxu0 %v4936
    %5028 = vmatprep.subr.bf16.mxu0 %v4935
    %5029 = vmatpush1.bf16.msra.mxu0 %v4934
    %5030 = vmatprep.subr.bf16.mxu0 %v4933
    %5031 = vmatpush1.bf16.msra.mxu0 %v4932
    %5032 = vmatprep.subr.bf16.mxu0 %v4931
    %5033 = vmatpush1.bf16.msra.mxu0 %v4930
    %5034 = vmatprep.subr.bf16.mxu0 %v4929
    %5035 = vmatpush1.bf16.msra.mxu0 %v4928
    %5036 = vmatprep.subr.bf16.mxu0 %v4927
    %5037 = vmatpush1.bf16.msra.mxu0 %v4926
    %5038 = vmatprep.subr.bf16.mxu0 %v4957
    %5039 = vmatpush2.bf16.msra.mxu0 %v4956
    %5040 = vmatprep.subr.bf16.mxu0 %v4955
    %5041 = vmatpush2.bf16.msra.mxu0 %v4954
    %5042 = vmatprep.subr.bf16.mxu0 %v4953
    %5043 = vmatpush2.bf16.msra.mxu0 %v4952
    %5044 = vmatprep.subr.bf16.mxu0 %v4951
    %5045 = vmatpush2.bf16.msra.mxu0 %v4950
    %5046 = vmatprep.subr.bf16.mxu0 %v4949
    %5047 = vmatpush2.bf16.msra.mxu0 %v4948
    %5048 = vmatprep.subr.bf16.mxu0 %v4947
    %5049 = vmatpush2.bf16.msra.mxu0 %v4946
    %5050 = vmatprep.subr.bf16.mxu0 %v4945
    %5051 = vmatpush2.bf16.msra.mxu0 %v4944
    %5052 = vmatprep.subr.bf16.mxu0 %v4943
    %5053 = vmatpush2.bf16.msra.mxu0 %v4942
    %5054 = vmatprep.mubr.bf16.mxu0 %v4751
    %5055 = vmatmul.mubr.bf16.gmra.mxu0 %v4750
    %v5056 = vpop.f32.mrf.mxu0
    %v5057 = vadd.f32 %v4777, %v5056
    %v5058 = vpop.f32.mrf.mxu0
    %v5059 = vadd.f32 %v4781, %v5058
    %v5060 = vpop.f32.mrf.mxu0
    %v5061 = vadd.f32 %v4777, %v5060
    %v5062 = vpop.f32.mrf.mxu0
    %v5063 = vadd.f32 %v4781, %v5062
    %5064 = vmatprep.mubr.bf16.mxu0 %v4754
    %5065 = vmatmul.mubr.bf16.gmra.mxu0 %v4753
    %v5066 = vpop.f32.mrf.mxu0
    %v5067 = vadd.f32 %v4777, %v5066
    %v5068 = vpop.f32.mrf.mxu0
    %v5069 = vadd.f32 %v4781, %v5068
    %v5070 = vpop.f32.mrf.mxu0
    %v5071 = vadd.f32 %v4777, %v5070
    %v5072 = vpop.f32.mrf.mxu0
    %v5073 = vadd.f32 %v4781, %v5072
    %5074 = vmatprep.mubr.bf16.mxu0 %v4757
    %5075 = vmatmul.mubr.bf16.gmra.mxu0 %v4756
    %v5076 = vpop.f32.mrf.mxu0
    %v5077 = vadd.f32 %v4777, %v5076
    %v5078 = vpop.f32.mrf.mxu0
    %v5079 = vadd.f32 %v4781, %v5078
    %v5080 = vpop.f32.mrf.mxu0
    %v5081 = vadd.f32 %v4777, %v5080
    %v5082 = vpop.f32.mrf.mxu0
    %v5083 = vadd.f32 %v4781, %v5082
    %5084 = vmatprep.mubr.bf16.mxu0 %v4760
    %5085 = vmatmul.mubr.bf16.gmra.mxu0 %v4759
    %v5086 = vpop.f32.mrf.mxu0
    %v5087 = vadd.f32 %v4777, %v5086
    %v5088 = vpop.f32.mrf.mxu0
    %v5089 = vadd.f32 %v4781, %v5088
    %v5090 = vpop.f32.mrf.mxu0
    %v5091 = vadd.f32 %v4777, %v5090
    %v5092 = vpop.f32.mrf.mxu0
    %v5093 = vadd.f32 %v4781, %v5092
    %5094 = vmatprep.mubr.bf16.mxu0 %v4763
    %5095 = vmatmul.mubr.bf16.gmra.mxu0 %v4762
    %v5096 = vpop.f32.mrf.mxu0
    %v5097 = vadd.f32 %v4777, %v5096
    %v5098 = vpop.f32.mrf.mxu0
    %v5099 = vadd.f32 %v4781, %v5098
    %v5100 = vpop.f32.mrf.mxu0
    %v5101 = vadd.f32 %v4777, %v5100
    %v5102 = vpop.f32.mrf.mxu0
    %v5103 = vadd.f32 %v4781, %v5102
    %5104 = vmatprep.mubr.bf16.mxu0 %v4766
    %5105 = vmatmul.mubr.bf16.gmra.mxu0 %v4765
    %v5106 = vpop.f32.mrf.mxu0
    %v5107 = vadd.f32 %v4777, %v5106
    %v5108 = vpop.f32.mrf.mxu0
    %v5109 = vadd.f32 %v4781, %v5108
    %v5110 = vpop.f32.mrf.mxu0
    %v5111 = vadd.f32 %v4777, %v5110
    %v5112 = vpop.f32.mrf.mxu0
    %v5113 = vadd.f32 %v4781, %v5112
    %5114 = vmatprep.mubr.bf16.mxu0 %v4769
    %5115 = vmatmul.mubr.bf16.gmra.mxu0 %v4768
    %v5116 = vpop.f32.mrf.mxu0
    %v5117 = vadd.f32 %v4777, %v5116
    %v5118 = vpop.f32.mrf.mxu0
    %v5119 = vadd.f32 %v4781, %v5118
    %v5120 = vpop.f32.mrf.mxu0
    %v5121 = vadd.f32 %v4777, %v5120
    %v5122 = vpop.f32.mrf.mxu0
    %v5123 = vadd.f32 %v4781, %v5122
    %5124 = vmatprep.mubr.bf16.mxu0 %v4772
    %5125 = vmatmul.mubr.bf16.gmra.mxu0 %v4771
    %v5126 = vpop.f32.mrf.mxu0
    %v5127 = vadd.f32 %v4777, %v5126
    %v5128 = vpop.f32.mrf.mxu0
    %v5129 = vadd.f32 %v4781, %v5128
    %v5130 = vpop.f32.mrf.mxu0
    %v5131 = vadd.f32 %v4777, %v5130
    %v5132 = vpop.f32.mrf.mxu0
    %v5133 = vadd.f32 %v4781, %v5132
    %5134 = vdwg.mxu0
    %5135 = vmatprep.subr.bf16.mxu0 %v4973
    %5136 = vmatpush1.bf16.msra.mxu0 %v4972
    %5137 = vmatprep.subr.bf16.mxu0 %v4971
    %5138 = vmatpush1.bf16.msra.mxu0 %v4970
    %5139 = vmatprep.subr.bf16.mxu0 %v4969
    %5140 = vmatpush1.bf16.msra.mxu0 %v4968
    %5141 = vmatprep.subr.bf16.mxu0 %v4967
    %5142 = vmatpush1.bf16.msra.mxu0 %v4966
    %5143 = vmatprep.subr.bf16.mxu0 %v4965
    %5144 = vmatpush1.bf16.msra.mxu0 %v4964
    %5145 = vmatprep.subr.bf16.mxu0 %v4963
    %5146 = vmatpush1.bf16.msra.mxu0 %v4962
    %5147 = vmatprep.subr.bf16.mxu0 %v4961
    %5148 = vmatpush1.bf16.msra.mxu0 %v4960
    %5149 = vmatprep.subr.bf16.mxu0 %v4959
    %5150 = vmatpush1.bf16.msra.mxu0 %v4958
    %5151 = vmatprep.subr.bf16.mxu0 0
    %5152 = vmatpush2.bf16.msra.mxu0 0
    %5153 = vmatprep.subr.bf16.mxu0 0
    %5154 = vmatpush2.bf16.msra.mxu0 0
    %5155 = vmatprep.subr.bf16.mxu0 0
    %5156 = vmatpush2.bf16.msra.mxu0 0
    %5157 = vmatprep.subr.bf16.mxu0 0
    %5158 = vmatpush2.bf16.msra.mxu0 0
    %5159 = vmatprep.subr.bf16.mxu0 0
    %5160 = vmatpush2.bf16.msra.mxu0 0
    %5161 = vmatprep.subr.bf16.mxu0 0
    %5162 = vmatpush2.bf16.msra.mxu0 0
    %5163 = vmatprep.subr.bf16.mxu0 0
    %5164 = vmatpush2.bf16.msra.mxu0 0
    %5165 = vmatprep.subr.bf16.mxu0 0
    %5166 = vmatpush2.bf16.msra.mxu0 0
    %5167 = vmatprep.mubr.bf16.mxu0 0
    %5168 = vmatmul.mubr.bf16.gmra.mxu0 %v4752
    %v5169 = vpop.f32.mrf.mxu0
    %v5170 = vadd.f32 %v5057, %v5169
    %v5171 = vpop.f32.mrf.mxu0
    %v5172 = vadd.f32 %v5059, %v5171
    %v5173 = vpop.f32.mrf.mxu0
    %v5174 = vadd.f32 %v5061, %v5173
    %v5175 = vpop.f32.mrf.mxu0
    %v5176 = vadd.f32 %v5063, %v5175
    %5177 = vmatprep.mubr.bf16.mxu0 0
    %5178 = vmatmul.mubr.bf16.gmra.mxu0 %v4755
    %v5179 = vpop.f32.mrf.mxu0
    %v5180 = vadd.f32 %v5067, %v5179
    %v5181 = vpop.f32.mrf.mxu0
    %v5182 = vadd.f32 %v5069, %v5181
    %v5183 = vpop.f32.mrf.mxu0
    %v5184 = vadd.f32 %v5071, %v5183
    %v5185 = vpop.f32.mrf.mxu0
    %v5186 = vadd.f32 %v5073, %v5185
    %5187 = vmatprep.mubr.bf16.mxu0 0
    %5188 = vmatmul.mubr.bf16.gmra.mxu0 %v4758
    %v5189 = vpop.f32.mrf.mxu0
    %v5190 = vadd.f32 %v5077, %v5189
    %v5191 = vpop.f32.mrf.mxu0
    %v5192 = vadd.f32 %v5079, %v5191
    %v5193 = vpop.f32.mrf.mxu0
    %v5194 = vadd.f32 %v5081, %v5193
    %v5195 = vpop.f32.mrf.mxu0
    %v5196 = vadd.f32 %v5083, %v5195
    %5197 = vmatprep.mubr.bf16.mxu0 0
    %5198 = vmatmul.mubr.bf16.gmra.mxu0 %v4761
    %v5199 = vpop.f32.mrf.mxu0
    %v5200 = vadd.f32 %v5087, %v5199
    %v5201 = vpop.f32.mrf.mxu0
    %v5202 = vadd.f32 %v5089, %v5201
    %v5203 = vpop.f32.mrf.mxu0
    %v5204 = vadd.f32 %v5091, %v5203
    %v5205 = vpop.f32.mrf.mxu0
    %v5206 = vadd.f32 %v5093, %v5205
    %5207 = vmatprep.mubr.bf16.mxu0 0
    %5208 = vmatmul.mubr.bf16.gmra.mxu0 %v4764
    %v5209 = vpop.f32.mrf.mxu0
    %v5210 = vadd.f32 %v5097, %v5209
    %v5211 = vpop.f32.mrf.mxu0
    %v5212 = vadd.f32 %v5099, %v5211
    %v5213 = vpop.f32.mrf.mxu0
    %v5214 = vadd.f32 %v5101, %v5213
    %v5215 = vpop.f32.mrf.mxu0
    %v5216 = vadd.f32 %v5103, %v5215
    %5217 = vmatprep.mubr.bf16.mxu0 0
    %5218 = vmatmul.mubr.bf16.gmra.mxu0 %v4767
    %v5219 = vpop.f32.mrf.mxu0
    %v5220 = vadd.f32 %v5107, %v5219
    %v5221 = vpop.f32.mrf.mxu0
    %v5222 = vadd.f32 %v5109, %v5221
    %v5223 = vpop.f32.mrf.mxu0
    %v5224 = vadd.f32 %v5111, %v5223
    %v5225 = vpop.f32.mrf.mxu0
    %v5226 = vadd.f32 %v5113, %v5225
    %5227 = vmatprep.mubr.bf16.mxu0 0
    %5228 = vmatmul.mubr.bf16.gmra.mxu0 %v4770
    %v5229 = vpop.f32.mrf.mxu0
    %v5230 = vadd.f32 %v5117, %v5229
    %v5231 = vpop.f32.mrf.mxu0
    %v5232 = vadd.f32 %v5119, %v5231
    %v5233 = vpop.f32.mrf.mxu0
    %v5234 = vadd.f32 %v5121, %v5233
    %v5235 = vpop.f32.mrf.mxu0
    %v5236 = vadd.f32 %v5123, %v5235
    %5237 = vmatprep.mubr.bf16.mxu0 0
    %5238 = vmatmul.mubr.bf16.gmra.mxu0 %v4773
    %v5239 = vpop.f32.mrf.mxu0
    %v5240 = vadd.f32 %v5127, %v5239
    %v5241 = vpop.f32.mrf.mxu0
    %v5242 = vadd.f32 %v5129, %v5241
    %v5243 = vpop.f32.mrf.mxu0
    %v5244 = vadd.f32 %v5131, %v5243
    %v5245 = vpop.f32.mrf.mxu0
    %v5246 = vadd.f32 %v5133, %v5245
    %5247 = vdwg.mxu0
    %vm5248 = vcmp.ge.f32.partialorder %v5170, 0.0
    %vm5249 = vcmp.ge.f32.partialorder %v5172, 0.0
    %vm5250 = vcmp.ge.f32.partialorder %v5174, 0.0
    %vm5251 = vcmp.ge.f32.partialorder %v5176, 0.0
    %vm5252 = vcmp.ge.f32.partialorder %v5180, 0.0
    %vm5253 = vcmp.ge.f32.partialorder %v5182, 0.0
    %vm5254 = vcmp.ge.f32.partialorder %v5184, 0.0
    %vm5255 = vcmp.ge.f32.partialorder %v5186, 0.0
    %vm5256 = vcmp.ge.f32.partialorder %v5190, 0.0
    %vm5257 = vcmp.ge.f32.partialorder %v5192, 0.0
    %vm5258 = vcmp.ge.f32.partialorder %v5194, 0.0
    %vm5259 = vcmp.ge.f32.partialorder %v5196, 0.0
    %vm5260 = vcmp.ge.f32.partialorder %v5200, 0.0
    %vm5261 = vcmp.ge.f32.partialorder %v5202, 0.0
    %vm5262 = vcmp.ge.f32.partialorder %v5204, 0.0
    %vm5263 = vcmp.ge.f32.partialorder %v5206, 0.0
    %vm5264 = vcmp.ge.f32.partialorder %v5210, 0.0
    %vm5265 = vcmp.ge.f32.partialorder %v5212, 0.0
    %vm5266 = vcmp.ge.f32.partialorder %v5214, 0.0
    %vm5267 = vcmp.ge.f32.partialorder %v5216, 0.0
    %vm5268 = vcmp.ge.f32.partialorder %v5220, 0.0
    %vm5269 = vcmp.ge.f32.partialorder %v5222, 0.0
    %vm5270 = vcmp.ge.f32.partialorder %v5224, 0.0
    %vm5271 = vcmp.ge.f32.partialorder %v5226, 0.0
    %vm5272 = vcmp.ge.f32.partialorder %v5230, 0.0
    %vm5273 = vcmp.ge.f32.partialorder %v5232, 0.0
    %vm5274 = vcmp.ge.f32.partialorder %v5234, 0.0
    %vm5275 = vcmp.ge.f32.partialorder %v5236, 0.0
    %vm5276 = vcmp.ge.f32.partialorder %v5240, 0.0
    %vm5277 = vcmp.ge.f32.partialorder %v5242, 0.0
    %vm5278 = vcmp.ge.f32.partialorder %v5244, 0.0
    %vm5279 = vcmp.ge.f32.partialorder %v5246, 0.0
    %v5280 = vmul.f32 %v5170, 0.01
    %v5281 = vmul.f32 %v5172, 0.01
    %v5282 = vmul.f32 %v5174, 0.01
    %v5283 = vmul.f32 %v5176, 0.01
    %v5284 = vmul.f32 %v5180, 0.01
    %v5285 = vmul.f32 %v5182, 0.01
    %v5286 = vmul.f32 %v5184, 0.01
    %v5287 = vmul.f32 %v5186, 0.01
    %v5288 = vmul.f32 %v5190, 0.01
    %v5289 = vmul.f32 %v5192, 0.01
    %v5290 = vmul.f32 %v5194, 0.01
    %v5291 = vmul.f32 %v5196, 0.01
    %v5292 = vmul.f32 %v5200, 0.01
    %v5293 = vmul.f32 %v5202, 0.01
    %v5294 = vmul.f32 %v5204, 0.01
    %v5295 = vmul.f32 %v5206, 0.01
    %v5296 = vmul.f32 %v5210, 0.01
    %v5297 = vmul.f32 %v5212, 0.01
    %v5298 = vmul.f32 %v5214, 0.01
    %v5299 = vmul.f32 %v5216, 0.01
    %v5300 = vmul.f32 %v5220, 0.01
    %v5301 = vmul.f32 %v5222, 0.01
    %v5302 = vmul.f32 %v5224, 0.01
    %v5303 = vmul.f32 %v5226, 0.01
    %v5304 = vmul.f32 %v5230, 0.01
    %v5305 = vmul.f32 %v5232, 0.01
    %v5306 = vmul.f32 %v5234, 0.01
    %v5307 = vmul.f32 %v5236, 0.01
    %v5308 = vmul.f32 %v5240, 0.01
    %v5309 = vmul.f32 %v5242, 0.01
    %v5310 = vmul.f32 %v5244, 0.01
    %v5311 = vmul.f32 %v5246, 0.01
    %v5312 = vsel %vm5248, %v5170, %v5280
    %v5313 = vsel %vm5249, %v5172, %v5281
    %v5314 = vsel %vm5250, %v5174, %v5282
    %v5315 = vsel %vm5251, %v5176, %v5283
    %v5316 = vsel %vm5252, %v5180, %v5284
    %v5317 = vsel %vm5253, %v5182, %v5285
    %v5318 = vsel %vm5254, %v5184, %v5286
    %v5319 = vsel %vm5255, %v5186, %v5287
    %v5320 = vsel %vm5256, %v5190, %v5288
    %v5321 = vsel %vm5257, %v5192, %v5289
    %v5322 = vsel %vm5258, %v5194, %v5290
    %v5323 = vsel %vm5259, %v5196, %v5291
    %v5324 = vsel %vm5260, %v5200, %v5292
    %v5325 = vsel %vm5261, %v5202, %v5293
    %v5326 = vsel %vm5262, %v5204, %v5294
    %v5327 = vsel %vm5263, %v5206, %v5295
    %v5328 = vsel %vm5264, %v5210, %v5296
    %v5329 = vsel %vm5265, %v5212, %v5297
    %v5330 = vsel %vm5266, %v5214, %v5298
    %v5331 = vsel %vm5267, %v5216, %v5299
    %v5332 = vsel %vm5268, %v5220, %v5300
    %v5333 = vsel %vm5269, %v5222, %v5301
    %v5334 = vsel %vm5270, %v5224, %v5302
    %v5335 = vsel %vm5271, %v5226, %v5303
    %v5336 = vsel %vm5272, %v5230, %v5304
    %v5337 = vsel %vm5273, %v5232, %v5305
    %v5338 = vsel %vm5274, %v5234, %v5306
    %v5339 = vsel %vm5275, %v5236, %v5307
    %v5340 = vsel %vm5276, %v5240, %v5308
    %v5341 = vsel %vm5277, %v5242, %v5309
    %v5342 = vsel %vm5278, %v5244, %v5310
    %v5343 = vsel %vm5279, %v5246, %v5311
    %v5344 = vadd.f32 %v5312, %v5314
    %v5345 = vadd.f32 %v5344, %v5316
    %v5346 = vadd.f32 %v5345, %v5318
    %v5347 = vadd.f32 %v5346, %v5320
    %v5348 = vadd.f32 %v5347, %v5322
    %v5349 = vadd.f32 %v5348, %v5324
    %v5350 = vadd.f32 %v5349, %v5326
    %v5351 = vadd.f32 %v5350, %v5328
    %v5352 = vadd.f32 %v5351, %v5330
    %v5353 = vadd.f32 %v5352, %v5332
    %v5354 = vadd.f32 %v5353, %v5334
    %v5355 = vadd.f32 %v5354, %v5336
    %v5356 = vadd.f32 %v5355, %v5338
    %v5357 = vadd.f32 %v5356, %v5340
    %v5358 = vadd.f32 %v5357, %v5342
    %v5359 = vrot.slane %v5358, 4
    %v5360 = vadd.f32 %v5358, %v5359
    %v5361 = vrot.slane %v5360, 2
    %v5362 = vadd.f32 %v5360, %v5361
    %v5363 = vrot.slane %v5362, 1
    %v5364 = vadd.f32 %v5362, %v5363
    %v5365 = vadd.f32 %v5313, %v5315
    %v5366 = vadd.f32 %v5365, %v5317
    %v5367 = vadd.f32 %v5366, %v5319
    %v5368 = vadd.f32 %v5367, %v5321
    %v5369 = vadd.f32 %v5368, %v5323
    %v5370 = vadd.f32 %v5369, %v5325
    %v5371 = vadd.f32 %v5370, %v5327
    %v5372 = vadd.f32 %v5371, %v5329
    %v5373 = vadd.f32 %v5372, %v5331
    %v5374 = vadd.f32 %v5373, %v5333
    %v5375 = vadd.f32 %v5374, %v5335
    %v5376 = vadd.f32 %v5375, %v5337
    %v5377 = vadd.f32 %v5376, %v5339
    %v5378 = vadd.f32 %v5377, %v5341
    %v5379 = vadd.f32 %v5378, %v5343
    %v5380 = vrot.slane %v5379, 4
    %v5381 = vadd.f32 %v5379, %v5380
    %v5382 = vrot.slane %v5381, 2
    %v5383 = vadd.f32 %v5381, %v5382
    %v5384 = vrot.slane %v5383, 1
    %v5385 = vadd.f32 %v5383, %v5384
    %v5386 = vmul.f32 %v5364, 0.0078125
    %v5387 = vmul.f32 %v5385, 0.0078125
    %v5388 = vmul.f32 %v5312, %v5312
    %v5389 = vmul.f32 %v5313, %v5313
    %v5390 = vmul.f32 %v5314, %v5314
    %v5391 = vmul.f32 %v5315, %v5315
    %v5392 = vmul.f32 %v5316, %v5316
    %v5393 = vmul.f32 %v5317, %v5317
    %v5394 = vmul.f32 %v5318, %v5318
    %v5395 = vmul.f32 %v5319, %v5319
    %v5396 = vmul.f32 %v5320, %v5320
    %v5397 = vmul.f32 %v5321, %v5321
    %v5398 = vmul.f32 %v5322, %v5322
    %v5399 = vmul.f32 %v5323, %v5323
    %v5400 = vmul.f32 %v5324, %v5324
    %v5401 = vmul.f32 %v5325, %v5325
    %v5402 = vmul.f32 %v5326, %v5326
    %v5403 = vmul.f32 %v5327, %v5327
    %v5404 = vmul.f32 %v5328, %v5328
    %v5405 = vmul.f32 %v5329, %v5329
    %v5406 = vmul.f32 %v5330, %v5330
    %v5407 = vmul.f32 %v5331, %v5331
    %v5408 = vmul.f32 %v5332, %v5332
    %v5409 = vmul.f32 %v5333, %v5333
    %v5410 = vmul.f32 %v5334, %v5334
    %v5411 = vmul.f32 %v5335, %v5335
    %v5412 = vmul.f32 %v5336, %v5336
    %v5413 = vmul.f32 %v5337, %v5337
    %v5414 = vmul.f32 %v5338, %v5338
    %v5415 = vmul.f32 %v5339, %v5339
    %v5416 = vmul.f32 %v5340, %v5340
    %v5417 = vmul.f32 %v5341, %v5341
    %v5418 = vmul.f32 %v5342, %v5342
    %v5419 = vmul.f32 %v5343, %v5343
    %v5420 = vadd.f32 %v5388, %v5390
    %v5421 = vadd.f32 %v5420, %v5392
    %v5422 = vadd.f32 %v5421, %v5394
    %v5423 = vadd.f32 %v5422, %v5396
    %v5424 = vadd.f32 %v5423, %v5398
    %v5425 = vadd.f32 %v5424, %v5400
    %v5426 = vadd.f32 %v5425, %v5402
    %v5427 = vadd.f32 %v5426, %v5404
    %v5428 = vadd.f32 %v5427, %v5406
    %v5429 = vadd.f32 %v5428, %v5408
    %v5430 = vadd.f32 %v5429, %v5410
    %v5431 = vadd.f32 %v5430, %v5412
    %v5432 = vadd.f32 %v5431, %v5414
    %v5433 = vadd.f32 %v5432, %v5416
    %v5434 = vadd.f32 %v5433, %v5418
    %v5435 = vrot.slane %v5434, 4
    %v5436 = vadd.f32 %v5434, %v5435
    %v5437 = vrot.slane %v5436, 2
    %v5438 = vadd.f32 %v5436, %v5437
    %v5439 = vrot.slane %v5438, 1
    %v5440 = vadd.f32 %v5438, %v5439
    %v5441 = vadd.f32 %v5389, %v5391
    %v5442 = vadd.f32 %v5441, %v5393
    %v5443 = vadd.f32 %v5442, %v5395
    %v5444 = vadd.f32 %v5443, %v5397
    %v5445 = vadd.f32 %v5444, %v5399
    %v5446 = vadd.f32 %v5445, %v5401
    %v5447 = vadd.f32 %v5446, %v5403
    %v5448 = vadd.f32 %v5447, %v5405
    %v5449 = vadd.f32 %v5448, %v5407
    %v5450 = vadd.f32 %v5449, %v5409
    %v5451 = vadd.f32 %v5450, %v5411
    %v5452 = vadd.f32 %v5451, %v5413
    %v5453 = vadd.f32 %v5452, %v5415
    %v5454 = vadd.f32 %v5453, %v5417
    %v5455 = vadd.f32 %v5454, %v5419
    %v5456 = vrot.slane %v5455, 4
    %v5457 = vadd.f32 %v5455, %v5456
    %v5458 = vrot.slane %v5457, 2
    %v5459 = vadd.f32 %v5457, %v5458
    %v5460 = vrot.slane %v5459, 1
    %v5461 = vadd.f32 %v5459, %v5460
    %v5462 = vmul.f32 %v5440, 0.0078125
    %v5463 = vmul.f32 %v5461, 0.0078125
    %v5464 = vmul.f32 %v5386, %v5386
    %v5465 = vmul.f32 %v5387, %v5387
    %v5466 = vsub.f32 %v5462, %v5464
    %v5467 = vsub.f32 %v5463, %v5465
    %v5468 = vmax.f32 %v5466, 0.0
    %v5469 = vmax.f32 %v5467, 0.0
    %v5470 = vadd.f32 %v5468, 1e-05
    %v5471 = vadd.f32 %v5469, 1e-05
    %v5472 = vrsqrt.pop %v5470
    %v5473 = vrsqrt.pop %v5471
    %v5474 = vmul.f32 %v119, %v5472
    %v5475 = vmul.f32 %v120, %v5473
    %v5476 = vmul.f32 %v5386, %v5474
    %v5477 = vmul.f32 %v5387, %v5475
    %v5480 = vrot.slane %v5476, 7
    %v5481 = vrot.slane %v5477, 7
    %v5484 = vsub.f32 %v119, %v5480
    %v5485 = vsub.f32 %v120, %v5481
    %v5486 = vlaneseq
    %v5487 = vshrl.u32 %v5486, 7
    %v5488 = vsub.s32 2, %v5487
    %v5489 = vrot.slane %v5474, %v5488
    %v5490 = vlaneseq
    %v5491 = vshrl.u32 %v5490, 7
    %v5492 = vsub.s32 2, %v5491
    %v5493 = vrot.slane %v5475, %v5492
    %v5494 = vmul.f32 %v5312, %v5489
    %v5495 = vmul.f32 %v5313, %v5493
    %v5496 = vmul.f32 %v5314, %v5489
    %v5497 = vmul.f32 %v5315, %v5493
    %v5498 = vmul.f32 %v5316, %v5489
    %v5499 = vmul.f32 %v5317, %v5493
    %v5500 = vmul.f32 %v5318, %v5489
    %v5501 = vmul.f32 %v5319, %v5493
    %v5502 = vmul.f32 %v5320, %v5489
    %v5503 = vmul.f32 %v5321, %v5493
    %v5504 = vmul.f32 %v5322, %v5489
    %v5505 = vmul.f32 %v5323, %v5493
    %v5506 = vmul.f32 %v5324, %v5489
    %v5507 = vmul.f32 %v5325, %v5493
    %v5508 = vmul.f32 %v5326, %v5489
    %v5509 = vmul.f32 %v5327, %v5493
    %v5510 = vmul.f32 %v5328, %v5489
    %v5511 = vmul.f32 %v5329, %v5493
    %v5512 = vmul.f32 %v5330, %v5489
    %v5513 = vmul.f32 %v5331, %v5493
    %v5514 = vmul.f32 %v5332, %v5489
    %v5515 = vmul.f32 %v5333, %v5493
    %v5516 = vmul.f32 %v5334, %v5489
    %v5517 = vmul.f32 %v5335, %v5493
    %v5518 = vmul.f32 %v5336, %v5489
    %v5519 = vmul.f32 %v5337, %v5493
    %v5520 = vmul.f32 %v5338, %v5489
    %v5521 = vmul.f32 %v5339, %v5493
    %v5522 = vmul.f32 %v5340, %v5489
    %v5523 = vmul.f32 %v5341, %v5493
    %v5524 = vmul.f32 %v5342, %v5489
    %v5525 = vmul.f32 %v5343, %v5493
    %v5526 = vlaneseq
    %v5527 = vshrl.u32 %v5526, 7
    %v5528 = vsub.s32 3, %v5527
    %v5529 = vrot.slane %v5484, %v5528
    %v5530 = vlaneseq
    %v5531 = vshrl.u32 %v5530, 7
    %v5532 = vsub.s32 3, %v5531
    %v5533 = vrot.slane %v5485, %v5532
    %v5534 = vadd.f32 %v5494, %v5529
    %v5535 = vadd.f32 %v5495, %v5533
    %v5536 = vadd.f32 %v5496, %v5529
    %v5537 = vadd.f32 %v5497, %v5533
    %v5538 = vadd.f32 %v5498, %v5529
    %v5539 = vadd.f32 %v5499, %v5533
    %v5540 = vadd.f32 %v5500, %v5529
    %v5541 = vadd.f32 %v5501, %v5533
    %v5542 = vadd.f32 %v5502, %v5529
    %v5543 = vadd.f32 %v5503, %v5533
    %v5544 = vadd.f32 %v5504, %v5529
    %v5545 = vadd.f32 %v5505, %v5533
    %v5546 = vadd.f32 %v5506, %v5529
    %v5547 = vadd.f32 %v5507, %v5533
    %v5548 = vadd.f32 %v5508, %v5529
    %v5549 = vadd.f32 %v5509, %v5533
    %v5550 = vadd.f32 %v5510, %v5529
    %v5551 = vadd.f32 %v5511, %v5533
    %v5552 = vadd.f32 %v5512, %v5529
    %v5553 = vadd.f32 %v5513, %v5533
    %v5554 = vadd.f32 %v5514, %v5529
    %v5555 = vadd.f32 %v5515, %v5533
    %v5556 = vadd.f32 %v5516, %v5529
    %v5557 = vadd.f32 %v5517, %v5533
    %v5558 = vadd.f32 %v5518, %v5529
    %v5559 = vadd.f32 %v5519, %v5533
    %v5560 = vadd.f32 %v5520, %v5529
    %v5561 = vadd.f32 %v5521, %v5533
    %v5562 = vadd.f32 %v5522, %v5529
    %v5563 = vadd.f32 %v5523, %v5533
    %v5564 = vadd.f32 %v5524, %v5529
    %v5565 = vadd.f32 %v5525, %v5533
    %v5566 = vld [vmem:[#allocation7] sm:$0xf]
    %v5567 = vld [vmem:[#allocation7 + $0x4] sm:$0xf]
    %v5568 = vld [vmem:[#allocation7 + $0x8] sm:$0xf]
    %v5569 = vld [vmem:[#allocation7 + $0xc] sm:$0xf]
    %v5570 = vld [vmem:[#allocation7 + $0x10] sm:$0xf]
    %v5571 = vld [vmem:[#allocation7 + $0x14] sm:$0xf]
    %v5572 = vld [vmem:[#allocation7 + $0x18] sm:$0xf]
    %v5573 = vld [vmem:[#allocation7 + $0x1c] sm:$0xf]
    %v5574 = vld [vmem:[#allocation7 + $0x20] sm:$0xf]
    %v5575 = vld [vmem:[#allocation7 + $0x24] sm:$0xf]
    %v5576 = vld [vmem:[#allocation7 + $0x28] sm:$0xf]
    %v5577 = vld [vmem:[#allocation7 + $0x2c] sm:$0xf]
    %v5578 = vld [vmem:[#allocation7 + $0x30] sm:$0xf]
    %v5579 = vld [vmem:[#allocation7 + $0x34] sm:$0xf]
    %v5580 = vld [vmem:[#allocation7 + $0x38] sm:$0xf]
    %v5581 = vld [vmem:[#allocation7 + $0x3c] sm:$0xf]
    %v5582 = vld [vmem:[#allocation7 + $0x40] sm:$0xf]
    %v5583 = vld [vmem:[#allocation7 + $0x44] sm:$0xf]
    %v5584 = vld [vmem:[#allocation7 + $0x48] sm:$0xf]
    %v5585 = vld [vmem:[#allocation7 + $0x4c] sm:$0xf]
    %v5586 = vld [vmem:[#allocation7 + $0x50] sm:$0xf]
    %v5587 = vld [vmem:[#allocation7 + $0x54] sm:$0xf]
    %v5588 = vld [vmem:[#allocation7 + $0x58] sm:$0xf]
    %v5589 = vld [vmem:[#allocation7 + $0x5c] sm:$0xf]
    %v5590 = vld [vmem:[#allocation7 + $0x60] sm:$0xf]
    %v5591 = vld [vmem:[#allocation7 + $0x64] sm:$0xf]
    %v5592 = vld [vmem:[#allocation7 + $0x68] sm:$0xf]
    %v5593 = vld [vmem:[#allocation7 + $0x6c] sm:$0xf]
    %v5594 = vld [vmem:[#allocation7 + $0x70] sm:$0xf]
    %v5595 = vld [vmem:[#allocation7 + $0x74] sm:$0xf]
    %v5596 = vld [vmem:[#allocation7 + $0x78] sm:$0xf]
    %v5597 = vld [vmem:[#allocation7 + $0x7c] sm:$0xf]
    %v5598 = vpack.c.bf16 %v5536, %v5534
    %v5599 = vpack.c.bf16 %v5537, %v5535
    %v5600 = vpack.c.bf16 %v5540, %v5538
    %v5601 = vpack.c.bf16 %v5541, %v5539
    %v5602 = vpack.c.bf16 %v5544, %v5542
    %v5603 = vpack.c.bf16 %v5545, %v5543
    %v5604 = vpack.c.bf16 %v5548, %v5546
    %v5605 = vpack.c.bf16 %v5549, %v5547
    %v5606 = vpack.c.bf16 %v5552, %v5550
    %v5607 = vpack.c.bf16 %v5553, %v5551
    %v5608 = vpack.c.bf16 %v5556, %v5554
    %v5609 = vpack.c.bf16 %v5557, %v5555
    %v5610 = vpack.c.bf16 %v5560, %v5558
    %v5611 = vpack.c.bf16 %v5561, %v5559
    %v5612 = vpack.c.bf16 %v5564, %v5562
    %v5613 = vpack.c.bf16 %v5565, %v5563
    %v5614 = vlaneseq
    %v5615 = vshrl.u32 %v5614, 7
    %v5616 = vsub.s32 4, %v5615
    %v5617 = vrot.slane %v119, %v5616
    %v5650 = vunpack.c.l.b16 %v5566
    %v5651 = vunpack.c.l.b16 %v5567
    %v5652 = vunpack.c.l.b16 %v5568
    %v5653 = vunpack.c.l.b16 %v5569
    %v5654 = vunpack.c.l.b16 %v5570
    %v5655 = vunpack.c.l.b16 %v5571
    %v5656 = vunpack.c.l.b16 %v5572
    %v5657 = vunpack.c.l.b16 %v5573
    %v5658 = vunpack.c.l.b16 %v5574
    %v5659 = vunpack.c.l.b16 %v5575
    %v5660 = vunpack.c.l.b16 %v5576
    %v5661 = vunpack.c.l.b16 %v5577
    %v5662 = vunpack.c.l.b16 %v5578
    %v5663 = vunpack.c.l.b16 %v5579
    %v5664 = vunpack.c.l.b16 %v5580
    %v5665 = vunpack.c.l.b16 %v5581
    %v5666 = vunpack.c.l.b16 %v5582
    %v5667 = vunpack.c.l.b16 %v5583
    %v5668 = vunpack.c.l.b16 %v5584
    %v5669 = vunpack.c.l.b16 %v5585
    %v5670 = vunpack.c.l.b16 %v5586
    %v5671 = vunpack.c.l.b16 %v5587
    %v5672 = vunpack.c.l.b16 %v5588
    %v5673 = vunpack.c.l.b16 %v5589
    %v5674 = vunpack.c.l.b16 %v5590
    %v5675 = vunpack.c.l.b16 %v5591
    %v5676 = vunpack.c.l.b16 %v5592
    %v5677 = vunpack.c.l.b16 %v5593
    %v5678 = vunpack.c.l.b16 %v5594
    %v5679 = vunpack.c.l.b16 %v5595
    %v5680 = vunpack.c.l.b16 %v5596
    %v5681 = vunpack.c.l.b16 %v5597
    %v5682 = vpack.c.b16 %v5651, %v5650
    %v5683 = vpack.c.b16 %v5653, %v5652
    %v5684 = vpack.c.b16 %v5655, %v5654
    %v5685 = vpack.c.b16 %v5657, %v5656
    %v5686 = vpack.c.b16 %v5659, %v5658
    %v5687 = vpack.c.b16 %v5661, %v5660
    %v5688 = vpack.c.b16 %v5663, %v5662
    %v5689 = vpack.c.b16 %v5665, %v5664
    %v5690 = vpack.c.b16 %v5667, %v5666
    %v5691 = vpack.c.b16 %v5669, %v5668
    %v5692 = vpack.c.b16 %v5671, %v5670
    %v5693 = vpack.c.b16 %v5673, %v5672
    %v5694 = vpack.c.b16 %v5675, %v5674
    %v5695 = vpack.c.b16 %v5677, %v5676
    %v5696 = vpack.c.b16 %v5679, %v5678
    %v5697 = vpack.c.b16 %v5681, %v5680
    %5714 = vmatprep.subr.bf16.mxu0 0
    %5715 = vmatpush1.bf16.msra.mxu0 %v5689
    %5716 = vmatprep.subr.bf16.mxu0 0
    %5717 = vmatpush1.bf16.msra.mxu0 %v5688
    %5718 = vmatprep.subr.bf16.mxu0 0
    %5719 = vmatpush1.bf16.msra.mxu0 %v5687
    %5720 = vmatprep.subr.bf16.mxu0 0
    %5721 = vmatpush1.bf16.msra.mxu0 %v5686
    %5722 = vmatprep.subr.bf16.mxu0 0
    %5723 = vmatpush1.bf16.msra.mxu0 %v5685
    %5724 = vmatprep.subr.bf16.mxu0 0
    %5725 = vmatpush1.bf16.msra.mxu0 %v5684
    %5726 = vmatprep.subr.bf16.mxu0 0
    %5727 = vmatpush1.bf16.msra.mxu0 %v5683
    %5728 = vmatprep.subr.bf16.mxu0 0
    %5729 = vmatpush1.bf16.msra.mxu0 %v5682
    %5730 = vmatprep.subr.bf16.mxu0 0
    %5731 = vmatpush2.bf16.msra.mxu0 %v5697
    %5732 = vmatprep.subr.bf16.mxu0 0
    %5733 = vmatpush2.bf16.msra.mxu0 %v5696
    %5734 = vmatprep.subr.bf16.mxu0 0
    %5735 = vmatpush2.bf16.msra.mxu0 %v5695
    %5736 = vmatprep.subr.bf16.mxu0 0
    %5737 = vmatpush2.bf16.msra.mxu0 %v5694
    %5738 = vmatprep.subr.bf16.mxu0 0
    %5739 = vmatpush2.bf16.msra.mxu0 %v5693
    %5740 = vmatprep.subr.bf16.mxu0 0
    %5741 = vmatpush2.bf16.msra.mxu0 %v5692
    %5742 = vmatprep.subr.bf16.mxu0 0
    %5743 = vmatpush2.bf16.msra.mxu0 %v5691
    %5744 = vmatprep.subr.bf16.mxu0 0
    %5745 = vmatpush2.bf16.msra.mxu0 %v5690
    %5746 = vmatprep.mubr.bf16.mxu0 %v5599
    %5747 = vmatmul.mubr.bf16.gmra.mxu0 %v5598
    %v5748 = vpop.f32.mrf.mxu0
    %v5749 = vadd.f32 %v5617, %v5748
    %v5750 = vpop.f32.mrf.mxu0
    %v5751 = vpop.f32.mrf.mxu0
    %v5752 = vadd.f32 %v5617, %v5751
    %v5753 = vpop.f32.mrf.mxu0
    %5754 = vmatprep.mubr.bf16.mxu0 %v5601
    %5755 = vmatmul.mubr.bf16.gmra.mxu0 %v5600
    %v5756 = vpop.f32.mrf.mxu0
    %v5757 = vadd.f32 %v5617, %v5756
    %v5758 = vpop.f32.mrf.mxu0
    %v5759 = vpop.f32.mrf.mxu0
    %v5760 = vadd.f32 %v5617, %v5759
    %v5761 = vpop.f32.mrf.mxu0
    %5762 = vmatprep.mubr.bf16.mxu0 %v5603
    %5763 = vmatmul.mubr.bf16.gmra.mxu0 %v5602
    %v5764 = vpop.f32.mrf.mxu0
    %v5765 = vadd.f32 %v5617, %v5764
    %v5766 = vpop.f32.mrf.mxu0
    %v5767 = vpop.f32.mrf.mxu0
    %v5768 = vadd.f32 %v5617, %v5767
    %v5769 = vpop.f32.mrf.mxu0
    %5770 = vmatprep.mubr.bf16.mxu0 %v5605
    %5771 = vmatmul.mubr.bf16.gmra.mxu0 %v5604
    %v5772 = vpop.f32.mrf.mxu0
    %v5773 = vadd.f32 %v5617, %v5772
    %v5774 = vpop.f32.mrf.mxu0
    %v5775 = vpop.f32.mrf.mxu0
    %v5776 = vadd.f32 %v5617, %v5775
    %v5777 = vpop.f32.mrf.mxu0
    %5778 = vmatprep.mubr.bf16.mxu0 %v5607
    %5779 = vmatmul.mubr.bf16.gmra.mxu0 %v5606
    %v5780 = vpop.f32.mrf.mxu0
    %v5781 = vadd.f32 %v5617, %v5780
    %v5782 = vpop.f32.mrf.mxu0
    %v5783 = vpop.f32.mrf.mxu0
    %v5784 = vadd.f32 %v5617, %v5783
    %v5785 = vpop.f32.mrf.mxu0
    %5786 = vmatprep.mubr.bf16.mxu0 %v5609
    %5787 = vmatmul.mubr.bf16.gmra.mxu0 %v5608
    %v5788 = vpop.f32.mrf.mxu0
    %v5789 = vadd.f32 %v5617, %v5788
    %v5790 = vpop.f32.mrf.mxu0
    %v5791 = vpop.f32.mrf.mxu0
    %v5792 = vadd.f32 %v5617, %v5791
    %v5793 = vpop.f32.mrf.mxu0
    %5794 = vmatprep.mubr.bf16.mxu0 %v5611
    %5795 = vmatmul.mubr.bf16.gmra.mxu0 %v5610
    %v5796 = vpop.f32.mrf.mxu0
    %v5797 = vadd.f32 %v5617, %v5796
    %v5798 = vpop.f32.mrf.mxu0
    %v5799 = vpop.f32.mrf.mxu0
    %v5800 = vadd.f32 %v5617, %v5799
    %v5801 = vpop.f32.mrf.mxu0
    %5802 = vmatprep.mubr.bf16.mxu0 %v5613
    %5803 = vmatmul.mubr.bf16.gmra.mxu0 %v5612
    %v5804 = vpop.f32.mrf.mxu0
    %v5805 = vadd.f32 %v5617, %v5804
    %v5806 = vpop.f32.mrf.mxu0
    %v5807 = vpop.f32.mrf.mxu0
    %v5808 = vadd.f32 %v5617, %v5807
    %v5809 = vpop.f32.mrf.mxu0
    %5810 = vdwg.mxu0
    %vm5811 = vcmp.ge.f32.partialorder %v5749, 0.0
    %vm5812 = vcmp.ge.f32.partialorder %v5752, 0.0
    %vm5813 = vcmp.ge.f32.partialorder %v5757, 0.0
    %vm5814 = vcmp.ge.f32.partialorder %v5760, 0.0
    %vm5815 = vcmp.ge.f32.partialorder %v5765, 0.0
    %vm5816 = vcmp.ge.f32.partialorder %v5768, 0.0
    %vm5817 = vcmp.ge.f32.partialorder %v5773, 0.0
    %vm5818 = vcmp.ge.f32.partialorder %v5776, 0.0
    %vm5819 = vcmp.ge.f32.partialorder %v5781, 0.0
    %vm5820 = vcmp.ge.f32.partialorder %v5784, 0.0
    %vm5821 = vcmp.ge.f32.partialorder %v5789, 0.0
    %vm5822 = vcmp.ge.f32.partialorder %v5792, 0.0
    %vm5823 = vcmp.ge.f32.partialorder %v5797, 0.0
    %vm5824 = vcmp.ge.f32.partialorder %v5800, 0.0
    %vm5825 = vcmp.ge.f32.partialorder %v5805, 0.0
    %vm5826 = vcmp.ge.f32.partialorder %v5808, 0.0
    %v5827 = vmul.f32 %v5749, 0.01
    %v5828 = vmul.f32 %v5752, 0.01
    %v5829 = vmul.f32 %v5757, 0.01
    %v5830 = vmul.f32 %v5760, 0.01
    %v5831 = vmul.f32 %v5765, 0.01
    %v5832 = vmul.f32 %v5768, 0.01
    %v5833 = vmul.f32 %v5773, 0.01
    %v5834 = vmul.f32 %v5776, 0.01
    %v5835 = vmul.f32 %v5781, 0.01
    %v5836 = vmul.f32 %v5784, 0.01
    %v5837 = vmul.f32 %v5789, 0.01
    %v5838 = vmul.f32 %v5792, 0.01
    %v5839 = vmul.f32 %v5797, 0.01
    %v5840 = vmul.f32 %v5800, 0.01
    %v5841 = vmul.f32 %v5805, 0.01
    %v5842 = vmul.f32 %v5808, 0.01
    %v5843 = vsel %vm5811, %v5749, %v5827
    %v5844 = vsel %vm5812, %v5752, %v5828
    %v5845 = vsel %vm5813, %v5757, %v5829
    %v5846 = vsel %vm5814, %v5760, %v5830
    %v5847 = vsel %vm5815, %v5765, %v5831
    %v5848 = vsel %vm5816, %v5768, %v5832
    %v5849 = vsel %vm5817, %v5773, %v5833
    %v5850 = vsel %vm5818, %v5776, %v5834
    %v5851 = vsel %vm5819, %v5781, %v5835
    %v5852 = vsel %vm5820, %v5784, %v5836
    %v5853 = vsel %vm5821, %v5789, %v5837
    %v5854 = vsel %vm5822, %v5792, %v5838
    %v5855 = vsel %vm5823, %v5797, %v5839
    %v5856 = vsel %vm5824, %v5800, %v5840
    %v5857 = vsel %vm5825, %v5805, %v5841
    %v5858 = vsel %vm5826, %v5808, %v5842
    %v5859 = vadd.f32 %v5843, %v5844
    %v5860 = vadd.f32 %v5859, %v5845
    %v5861 = vadd.f32 %v5860, %v5846
    %v5862 = vadd.f32 %v5861, %v5847
    %v5863 = vadd.f32 %v5862, %v5848
    %v5864 = vadd.f32 %v5863, %v5849
    %v5865 = vadd.f32 %v5864, %v5850
    %v5866 = vadd.f32 %v5865, %v5851
    %v5867 = vadd.f32 %v5866, %v5852
    %v5868 = vadd.f32 %v5867, %v5853
    %v5869 = vadd.f32 %v5868, %v5854
    %v5870 = vadd.f32 %v5869, %v5855
    %v5871 = vadd.f32 %v5870, %v5856
    %v5872 = vadd.f32 %v5871, %v5857
    %v5873 = vadd.f32 %v5872, %v5858
    %v5874 = vrot.slane %v5873, 4
    %v5875 = vadd.f32 %v5873, %v5874
    %v5876 = vrot.slane %v5875, 2
    %v5877 = vadd.f32 %v5875, %v5876
    %v5878 = vrot.slane %v5877, 1
    %v5879 = vadd.f32 %v5877, %v5878
    %v5880 = vmul.f32 %v5879, 0.0078125
    %v5881 = vmul.f32 %v5843, %v5843
    %v5882 = vmul.f32 %v5844, %v5844
    %v5883 = vmul.f32 %v5845, %v5845
    %v5884 = vmul.f32 %v5846, %v5846
    %v5885 = vmul.f32 %v5847, %v5847
    %v5886 = vmul.f32 %v5848, %v5848
    %v5887 = vmul.f32 %v5849, %v5849
    %v5888 = vmul.f32 %v5850, %v5850
    %v5889 = vmul.f32 %v5851, %v5851
    %v5890 = vmul.f32 %v5852, %v5852
    %v5891 = vmul.f32 %v5853, %v5853
    %v5892 = vmul.f32 %v5854, %v5854
    %v5893 = vmul.f32 %v5855, %v5855
    %v5894 = vmul.f32 %v5856, %v5856
    %v5895 = vmul.f32 %v5857, %v5857
    %v5896 = vmul.f32 %v5858, %v5858
    %v5897 = vadd.f32 %v5881, %v5882
    %v5898 = vadd.f32 %v5897, %v5883
    %v5899 = vadd.f32 %v5898, %v5884
    %v5900 = vadd.f32 %v5899, %v5885
    %v5901 = vadd.f32 %v5900, %v5886
    %v5902 = vadd.f32 %v5901, %v5887
    %v5903 = vadd.f32 %v5902, %v5888
    %v5904 = vadd.f32 %v5903, %v5889
    %v5905 = vadd.f32 %v5904, %v5890
    %v5906 = vadd.f32 %v5905, %v5891
    %v5907 = vadd.f32 %v5906, %v5892
    %v5908 = vadd.f32 %v5907, %v5893
    %v5909 = vadd.f32 %v5908, %v5894
    %v5910 = vadd.f32 %v5909, %v5895
    %v5911 = vadd.f32 %v5910, %v5896
    %v5912 = vrot.slane %v5911, 4
    %v5913 = vadd.f32 %v5911, %v5912
    %v5914 = vrot.slane %v5913, 2
    %v5915 = vadd.f32 %v5913, %v5914
    %v5916 = vrot.slane %v5915, 1
    %v5917 = vadd.f32 %v5915, %v5916
    %v5918 = vmul.f32 %v5917, 0.0078125
    %v5919 = vmul.f32 %v5880, %v5880
    %v5920 = vsub.f32 %v5918, %v5919
    %v5921 = vmax.f32 %v5920, 0.0
    %v5922 = vadd.f32 %v5921, 1e-05
    %v5923 = vrsqrt.pop %v5922
    %v5924 = vmul.f32 %v119, %v5923
    %v5925 = vmul.f32 %v5880, %v5924
    %v5927 = vrot.slane %v5925, 7
    %v5929 = vsub.f32 %v119, %v5927
    %v5930 = vlaneseq
    %v5931 = vshrl.u32 %v5930, 7
    %v5932 = vsub.s32 5, %v5931
    %v5933 = vrot.slane %v5924, %v5932
    %v5934 = vmul.f32 %v5843, %v5933
    %v5935 = vmul.f32 %v5844, %v5933
    %v5936 = vmul.f32 %v5845, %v5933
    %v5937 = vmul.f32 %v5846, %v5933
    %v5938 = vmul.f32 %v5847, %v5933
    %v5939 = vmul.f32 %v5848, %v5933
    %v5940 = vmul.f32 %v5849, %v5933
    %v5941 = vmul.f32 %v5850, %v5933
    %v5942 = vmul.f32 %v5851, %v5933
    %v5943 = vmul.f32 %v5852, %v5933
    %v5944 = vmul.f32 %v5853, %v5933
    %v5945 = vmul.f32 %v5854, %v5933
    %v5946 = vmul.f32 %v5855, %v5933
    %v5947 = vmul.f32 %v5856, %v5933
    %v5948 = vmul.f32 %v5857, %v5933
    %v5949 = vmul.f32 %v5858, %v5933
    %v5950 = vlaneseq
    %v5951 = vshrl.u32 %v5950, 7
    %v5952 = vsub.s32 6, %v5951
    %v5953 = vrot.slane %v5929, %v5952
    %v5954 = vadd.f32 %v5934, %v5953
    %v5955 = vadd.f32 %v5935, %v5953
    %v5956 = vadd.f32 %v5936, %v5953
    %v5957 = vadd.f32 %v5937, %v5953
    %v5958 = vadd.f32 %v5938, %v5953
    %v5959 = vadd.f32 %v5939, %v5953
    %v5960 = vadd.f32 %v5940, %v5953
    %v5961 = vadd.f32 %v5941, %v5953
    %v5962 = vadd.f32 %v5942, %v5953
    %v5963 = vadd.f32 %v5943, %v5953
    %v5964 = vadd.f32 %v5944, %v5953
    %v5965 = vadd.f32 %v5945, %v5953
    %v5966 = vadd.f32 %v5946, %v5953
    %v5967 = vadd.f32 %v5947, %v5953
    %v5968 = vadd.f32 %v5948, %v5953
    %v5969 = vadd.f32 %v5949, %v5953
    %v5970 = vld [vmem:[%s6] sm:$0xf]
    %v5971 = vld [vmem:[%s6 + $0x4] sm:$0xf]
    %v5972 = vld [vmem:[%s6 + $0x8] sm:$0xf]
    %v5973 = vld [vmem:[%s6 + $0xc] sm:$0xf]
    %v5974 = vld [vmem:[%s6 + $0x10] sm:$0xf]
    %v5975 = vld [vmem:[%s6 + $0x14] sm:$0xf]
    %v5976 = vld [vmem:[%s6 + $0x18] sm:$0xf]
    %v5977 = vld [vmem:[%s6 + $0x1c] sm:$0xf]
    %v5978 = vld [vmem:[%s6 + $0x20] sm:$0xf]
    %v5979 = vld [vmem:[%s6 + $0x24] sm:$0xf]
    %v5980 = vld [vmem:[%s6 + $0x28] sm:$0xf]
    %v5981 = vld [vmem:[%s6 + $0x2c] sm:$0xf]
    %v5982 = vld [vmem:[%s6 + $0x30] sm:$0xf]
    %v5983 = vld [vmem:[%s6 + $0x34] sm:$0xf]
    %v5984 = vld [vmem:[%s6 + $0x38] sm:$0xf]
    %v5985 = vld [vmem:[%s6 + $0x3c] sm:$0xf]
    %v5986 = vpack.c.bf16 %v5955, %v5954
    %v5987 = vpack.c.bf16 %v5957, %v5956
    %v5988 = vpack.c.bf16 %v5959, %v5958
    %v5989 = vpack.c.bf16 %v5961, %v5960
    %v5990 = vpack.c.bf16 %v5963, %v5962
    %v5991 = vpack.c.bf16 %v5965, %v5964
    %v5992 = vpack.c.bf16 %v5967, %v5966
    %v5993 = vpack.c.bf16 %v5969, %v5968
    %v5994 = vlaneseq
    %v5995 = vshrl.u32 %v5994, 7
    %v5996 = vsub.s32 7, %v5995
    %v5997 = vrot.slane %v119, %v5996
    %v6014 = vunpack.c.l.b16 %v5970
    %v6015 = vunpack.c.l.b16 %v5971
    %v6016 = vunpack.c.l.b16 %v5972
    %v6017 = vunpack.c.l.b16 %v5973
    %v6018 = vunpack.c.l.b16 %v5974
    %v6019 = vunpack.c.l.b16 %v5975
    %v6020 = vunpack.c.l.b16 %v5976
    %v6021 = vunpack.c.l.b16 %v5977
    %v6022 = vunpack.c.l.b16 %v5978
    %v6023 = vunpack.c.l.b16 %v5979
    %v6024 = vunpack.c.l.b16 %v5980
    %v6025 = vunpack.c.l.b16 %v5981
    %v6026 = vunpack.c.l.b16 %v5982
    %v6027 = vunpack.c.l.b16 %v5983
    %v6028 = vunpack.c.l.b16 %v5984
    %v6029 = vunpack.c.l.b16 %v5985
    %v6030 = vpack.c.b16 %v6015, %v6014
    %v6031 = vpack.c.b16 %v6017, %v6016
    %v6032 = vpack.c.b16 %v6019, %v6018
    %v6033 = vpack.c.b16 %v6021, %v6020
    %v6034 = vpack.c.b16 %v6023, %v6022
    %v6035 = vpack.c.b16 %v6025, %v6024
    %v6036 = vpack.c.b16 %v6027, %v6026
    %v6037 = vpack.c.b16 %v6029, %v6028
    %6046 = vmatprep.subr.bf16.mxu0 0
    %6047 = vmatpush1.bf16.msra.mxu0 %v6037
    %6048 = vmatprep.subr.bf16.mxu0 0
    %6049 = vmatpush1.bf16.msra.mxu0 %v6036
    %6050 = vmatprep.subr.bf16.mxu0 0
    %6051 = vmatpush1.bf16.msra.mxu0 %v6035
    %6052 = vmatprep.subr.bf16.mxu0 0
    %6053 = vmatpush1.bf16.msra.mxu0 %v6034
    %6054 = vmatprep.subr.bf16.mxu0 0
    %6055 = vmatpush1.bf16.msra.mxu0 %v6033
    %6056 = vmatprep.subr.bf16.mxu0 0
    %6057 = vmatpush1.bf16.msra.mxu0 %v6032
    %6058 = vmatprep.subr.bf16.mxu0 0
    %6059 = vmatpush1.bf16.msra.mxu0 %v6031
    %6060 = vmatprep.subr.bf16.mxu0 0
    %6061 = vmatpush1.bf16.msra.mxu0 %v6030
    %6062 = vmatprep.subr.bf16.mxu0 0
    %6063 = vmatpush2.bf16.msra.mxu0 0
    %6064 = vmatprep.subr.bf16.mxu0 0
    %6065 = vmatpush2.bf16.msra.mxu0 0
    %6066 = vmatprep.subr.bf16.mxu0 0
    %6067 = vmatpush2.bf16.msra.mxu0 0
    %6068 = vmatprep.subr.bf16.mxu0 0
    %6069 = vmatpush2.bf16.msra.mxu0 0
    %6070 = vmatprep.subr.bf16.mxu0 0
    %6071 = vmatpush2.bf16.msra.mxu0 0
    %6072 = vmatprep.subr.bf16.mxu0 0
    %6073 = vmatpush2.bf16.msra.mxu0 0
    %6074 = vmatprep.subr.bf16.mxu0 0
    %6075 = vmatpush2.bf16.msra.mxu0 0
    %6076 = vmatprep.subr.bf16.mxu0 0
    %6077 = vmatpush2.bf16.msra.mxu0 0
    %6078 = vmatprep.mubr.bf16.mxu0 0
    %6079 = vmatmul.mubr.bf16.gmra.mxu0 %v5986
    %v6080 = vpop.f32.mrf.mxu0
    %v6081 = vadd.f32 %v5997, %v6080
    %v6082 = vpop.f32.mrf.mxu0
    %v6083 = vpop.f32.mrf.mxu0
    %v6084 = vadd.f32 %v5997, %v6083
    %v6085 = vpop.f32.mrf.mxu0
    %6086 = vmatprep.mubr.bf16.mxu0 0
    %6087 = vmatmul.mubr.bf16.gmra.mxu0 %v5987
    %v6088 = vpop.f32.mrf.mxu0
    %v6089 = vadd.f32 %v5997, %v6088
    %v6090 = vpop.f32.mrf.mxu0
    %v6091 = vpop.f32.mrf.mxu0
    %v6092 = vadd.f32 %v5997, %v6091
    %v6093 = vpop.f32.mrf.mxu0
    %6094 = vmatprep.mubr.bf16.mxu0 0
    %6095 = vmatmul.mubr.bf16.gmra.mxu0 %v5988
    %v6096 = vpop.f32.mrf.mxu0
    %v6097 = vadd.f32 %v5997, %v6096
    %v6098 = vpop.f32.mrf.mxu0
    %v6099 = vpop.f32.mrf.mxu0
    %v6100 = vadd.f32 %v5997, %v6099
    %v6101 = vpop.f32.mrf.mxu0
    %6102 = vmatprep.mubr.bf16.mxu0 0
    %6103 = vmatmul.mubr.bf16.gmra.mxu0 %v5989
    %v6104 = vpop.f32.mrf.mxu0
    %v6105 = vadd.f32 %v5997, %v6104
    %v6106 = vpop.f32.mrf.mxu0
    %v6107 = vpop.f32.mrf.mxu0
    %v6108 = vadd.f32 %v5997, %v6107
    %v6109 = vpop.f32.mrf.mxu0
    %6110 = vmatprep.mubr.bf16.mxu0 0
    %6111 = vmatmul.mubr.bf16.gmra.mxu0 %v5990
    %v6112 = vpop.f32.mrf.mxu0
    %v6113 = vadd.f32 %v5997, %v6112
    %v6114 = vpop.f32.mrf.mxu0
    %v6115 = vpop.f32.mrf.mxu0
    %v6116 = vadd.f32 %v5997, %v6115
    %v6117 = vpop.f32.mrf.mxu0
    %6118 = vmatprep.mubr.bf16.mxu0 0
    %6119 = vmatmul.mubr.bf16.gmra.mxu0 %v5991
    %v6120 = vpop.f32.mrf.mxu0
    %v6121 = vadd.f32 %v5997, %v6120
    %v6122 = vpop.f32.mrf.mxu0
    %v6123 = vpop.f32.mrf.mxu0
    %v6124 = vadd.f32 %v5997, %v6123
    %v6125 = vpop.f32.mrf.mxu0
    %6126 = vmatprep.mubr.bf16.mxu0 0
    %6127 = vmatmul.mubr.bf16.gmra.mxu0 %v5992
    %v6128 = vpop.f32.mrf.mxu0
    %v6129 = vadd.f32 %v5997, %v6128
    %v6130 = vpop.f32.mrf.mxu0
    %v6131 = vpop.f32.mrf.mxu0
    %v6132 = vadd.f32 %v5997, %v6131
    %v6133 = vpop.f32.mrf.mxu0
    %6134 = vmatprep.mubr.bf16.mxu0 0
    %6135 = vmatmul.mubr.bf16.gmra.mxu0 %v5993
    %v6136 = vpop.f32.mrf.mxu0
    %v6137 = vadd.f32 %v5997, %v6136
    %v6138 = vpop.f32.mrf.mxu0
    %v6139 = vpop.f32.mrf.mxu0
    %v6140 = vadd.f32 %v5997, %v6139
    %v6141 = vpop.f32.mrf.mxu0
    %6142 = vdwg.mxu0
    %vm6143 = vcmp.ge.f32.partialorder %v6081, 0.0
    %vm6144 = vcmp.ge.f32.partialorder %v6084, 0.0
    %vm6145 = vcmp.ge.f32.partialorder %v6089, 0.0
    %vm6146 = vcmp.ge.f32.partialorder %v6092, 0.0
    %vm6147 = vcmp.ge.f32.partialorder %v6097, 0.0
    %vm6148 = vcmp.ge.f32.partialorder %v6100, 0.0
    %vm6149 = vcmp.ge.f32.partialorder %v6105, 0.0
    %vm6150 = vcmp.ge.f32.partialorder %v6108, 0.0
    %vm6151 = vcmp.ge.f32.partialorder %v6113, 0.0
    %vm6152 = vcmp.ge.f32.partialorder %v6116, 0.0
    %vm6153 = vcmp.ge.f32.partialorder %v6121, 0.0
    %vm6154 = vcmp.ge.f32.partialorder %v6124, 0.0
    %vm6155 = vcmp.ge.f32.partialorder %v6129, 0.0
    %vm6156 = vcmp.ge.f32.partialorder %v6132, 0.0
    %vm6157 = vcmp.ge.f32.partialorder %v6137, 0.0
    %vm6158 = vcmp.ge.f32.partialorder %v6140, 0.0
    %v6159 = vmul.f32 %v6081, 0.01
    %v6160 = vmul.f32 %v6084, 0.01
    %v6161 = vmul.f32 %v6089, 0.01
    %v6162 = vmul.f32 %v6092, 0.01
    %v6163 = vmul.f32 %v6097, 0.01
    %v6164 = vmul.f32 %v6100, 0.01
    %v6165 = vmul.f32 %v6105, 0.01
    %v6166 = vmul.f32 %v6108, 0.01
    %v6167 = vmul.f32 %v6113, 0.01
    %v6168 = vmul.f32 %v6116, 0.01
    %v6169 = vmul.f32 %v6121, 0.01
    %v6170 = vmul.f32 %v6124, 0.01
    %v6171 = vmul.f32 %v6129, 0.01
    %v6172 = vmul.f32 %v6132, 0.01
    %v6173 = vmul.f32 %v6137, 0.01
    %v6174 = vmul.f32 %v6140, 0.01
    %v6175 = vsel %vm6143, %v6081, %v6159
    %v6176 = vsel %vm6144, %v6084, %v6160
    %v6177 = vsel %vm6145, %v6089, %v6161
    %v6178 = vsel %vm6146, %v6092, %v6162
    %v6179 = vsel %vm6147, %v6097, %v6163
    %v6180 = vsel %vm6148, %v6100, %v6164
    %v6181 = vsel %vm6149, %v6105, %v6165
    %v6182 = vsel %vm6150, %v6108, %v6166
    %v6183 = vsel %vm6151, %v6113, %v6167
    %v6184 = vsel %vm6152, %v6116, %v6168
    %v6185 = vsel %vm6153, %v6121, %v6169
    %v6186 = vsel %vm6154, %v6124, %v6170
    %v6187 = vsel %vm6155, %v6129, %v6171
    %v6188 = vsel %vm6156, %v6132, %v6172
    %v6189 = vsel %vm6157, %v6137, %v6173
    %v6190 = vsel %vm6158, %v6140, %v6174
    %v6191 = vadd.f32 %v6175, %v6176
    %v6192 = vadd.f32 %v6191, %v6177
    %v6193 = vadd.f32 %v6192, %v6178
    %v6194 = vadd.f32 %v6193, %v6179
    %v6195 = vadd.f32 %v6194, %v6180
    %v6196 = vadd.f32 %v6195, %v6181
    %v6197 = vadd.f32 %v6196, %v6182
    %v6198 = vadd.f32 %v6197, %v6183
    %v6199 = vadd.f32 %v6198, %v6184
    %v6200 = vadd.f32 %v6199, %v6185
    %v6201 = vadd.f32 %v6200, %v6186
    %v6202 = vadd.f32 %v6201, %v6187
    %v6203 = vadd.f32 %v6202, %v6188
    %v6204 = vadd.f32 %v6203, %v6189
    %v6205 = vadd.f32 %v6204, %v6190
    %v6206 = vrot.slane %v6205, 4
    %v6207 = vadd.f32 %v6205, %v6206
    %v6208 = vrot.slane %v6207, 2
    %v6209 = vadd.f32 %v6207, %v6208
    %v6210 = vrot.slane %v6209, 1
    %v6211 = vadd.f32 %v6209, %v6210
    %v6212 = vmul.f32 %v6211, 0.0078125
    %v6213 = vmul.f32 %v6175, %v6175
    %v6214 = vmul.f32 %v6176, %v6176
    %v6215 = vmul.f32 %v6177, %v6177
    %v6216 = vmul.f32 %v6178, %v6178
    %v6217 = vmul.f32 %v6179, %v6179
    %v6218 = vmul.f32 %v6180, %v6180
    %v6219 = vmul.f32 %v6181, %v6181
    %v6220 = vmul.f32 %v6182, %v6182
    %v6221 = vmul.f32 %v6183, %v6183
    %v6222 = vmul.f32 %v6184, %v6184
    %v6223 = vmul.f32 %v6185, %v6185
    %v6224 = vmul.f32 %v6186, %v6186
    %v6225 = vmul.f32 %v6187, %v6187
    %v6226 = vmul.f32 %v6188, %v6188
    %v6227 = vmul.f32 %v6189, %v6189
    %v6228 = vmul.f32 %v6190, %v6190
    %v6229 = vadd.f32 %v6213, %v6214
    %v6230 = vadd.f32 %v6229, %v6215
    %v6231 = vadd.f32 %v6230, %v6216
    %v6232 = vadd.f32 %v6231, %v6217
    %v6233 = vadd.f32 %v6232, %v6218
    %v6234 = vadd.f32 %v6233, %v6219
    %v6235 = vadd.f32 %v6234, %v6220
    %v6236 = vadd.f32 %v6235, %v6221
    %v6237 = vadd.f32 %v6236, %v6222
    %v6238 = vadd.f32 %v6237, %v6223
    %v6239 = vadd.f32 %v6238, %v6224
    %v6240 = vadd.f32 %v6239, %v6225
    %v6241 = vadd.f32 %v6240, %v6226
    %v6242 = vadd.f32 %v6241, %v6227
    %v6243 = vadd.f32 %v6242, %v6228
    %v6244 = vrot.slane %v6243, 4
    %v6245 = vadd.f32 %v6243, %v6244
    %v6246 = vrot.slane %v6245, 2
    %v6247 = vadd.f32 %v6245, %v6246
    %v6248 = vrot.slane %v6247, 1
    %v6249 = vadd.f32 %v6247, %v6248
    %v6250 = vmul.f32 %v6249, 0.0078125
    %v6251 = vmul.f32 %v6212, %v6212
    %v6252 = vsub.f32 %v6250, %v6251
    %v6253 = vmax.f32 %v6252, 0.0
    %v6254 = vadd.f32 %v6253, 1e-05
    %v6255 = vrsqrt.pop %v6254
    %v6256 = vmul.f32 %v122, %v6255
    %v6257 = vmul.f32 %v6212, %v6256
    %v6259 = vrot.slane %v6257, 7
    %v6261 = vsub.f32 %v122, %v6259
    %v6262 = vlaneseq
    %v6263 = vshrl.u32 %v6262, 7
    %v6264 = vsub.s32 0, %v6263
    %v6265 = vrot.slane %v6256, %v6264
    %v6266 = vmul.f32 %v6175, %v6265
    %v6267 = vmul.f32 %v6176, %v6265
    %v6268 = vmul.f32 %v6177, %v6265
    %v6269 = vmul.f32 %v6178, %v6265
    %v6270 = vmul.f32 %v6179, %v6265
    %v6271 = vmul.f32 %v6180, %v6265
    %v6272 = vmul.f32 %v6181, %v6265
    %v6273 = vmul.f32 %v6182, %v6265
    %v6274 = vmul.f32 %v6183, %v6265
    %v6275 = vmul.f32 %v6184, %v6265
    %v6276 = vmul.f32 %v6185, %v6265
    %v6277 = vmul.f32 %v6186, %v6265
    %v6278 = vmul.f32 %v6187, %v6265
    %v6279 = vmul.f32 %v6188, %v6265
    %v6280 = vmul.f32 %v6189, %v6265
    %v6281 = vmul.f32 %v6190, %v6265
    %v6282 = vlaneseq
    %v6283 = vshrl.u32 %v6282, 7
    %v6284 = vsub.s32 1, %v6283
    %v6285 = vrot.slane %v6261, %v6284
    %v6286 = vadd.f32 %v6266, %v6285
    %v6287 = vadd.f32 %v6267, %v6285
    %v6288 = vadd.f32 %v6268, %v6285
    %v6289 = vadd.f32 %v6269, %v6285
    %v6290 = vadd.f32 %v6270, %v6285
    %v6291 = vadd.f32 %v6271, %v6285
    %v6292 = vadd.f32 %v6272, %v6285
    %v6293 = vadd.f32 %v6273, %v6285
    %v6294 = vadd.f32 %v6274, %v6285
    %v6295 = vadd.f32 %v6275, %v6285
    %v6296 = vadd.f32 %v6276, %v6285
    %v6297 = vadd.f32 %v6277, %v6285
    %v6298 = vadd.f32 %v6278, %v6285
    %v6299 = vadd.f32 %v6279, %v6285
    %v6300 = vadd.f32 %v6280, %v6285
    %v6301 = vadd.f32 %v6281, %v6285
    %v6302 = vld [vmem:[#allocation9] sm:$0xf]
    %v6303 = vld [vmem:[#allocation9 + $0x4] sm:$0xf]
    %v6304 = vld [vmem:[#allocation9 + $0x8] sm:$0xf]
    %v6305 = vld [vmem:[#allocation9 + $0xc] sm:$0xf]
    %v6306 = vld [vmem:[#allocation9 + $0x10] sm:$0xf]
    %v6307 = vld [vmem:[#allocation9 + $0x14] sm:$0xf]
    %v6308 = vld [vmem:[#allocation9 + $0x18] sm:$0xf]
    %v6309 = vld [vmem:[#allocation9 + $0x1c] sm:$0xf]
    %v6310 = vld [vmem:[#allocation9 + $0x20] sm:$0xf]
    %v6311 = vld [vmem:[#allocation9 + $0x24] sm:$0xf]
    %v6312 = vld [vmem:[#allocation9 + $0x28] sm:$0xf]
    %v6313 = vld [vmem:[#allocation9 + $0x2c] sm:$0xf]
    %v6314 = vld [vmem:[#allocation9 + $0x30] sm:$0xf]
    %v6315 = vld [vmem:[#allocation9 + $0x34] sm:$0xf]
    %v6316 = vld [vmem:[#allocation9 + $0x38] sm:$0xf]
    %v6317 = vld [vmem:[#allocation9 + $0x3c] sm:$0xf]
    %v6318 = vpack.c.bf16 %v6287, %v6286
    %v6319 = vpack.c.bf16 %v6289, %v6288
    %v6320 = vpack.c.bf16 %v6291, %v6290
    %v6321 = vpack.c.bf16 %v6293, %v6292
    %v6322 = vpack.c.bf16 %v6295, %v6294
    %v6323 = vpack.c.bf16 %v6297, %v6296
    %v6324 = vpack.c.bf16 %v6299, %v6298
    %v6325 = vpack.c.bf16 %v6301, %v6300
    %v6326 = vlaneseq
    %v6327 = vshrl.u32 %v6326, 7
    %v6328 = vsub.s32 2, %v6327
    %v6329 = vrot.slane %v122, %v6328
    %v6346 = vunpack.c.l.b16 %v6302
    %v6347 = vunpack.c.l.b16 %v6303
    %v6348 = vunpack.c.l.b16 %v6304
    %v6349 = vunpack.c.l.b16 %v6305
    %v6350 = vunpack.c.l.b16 %v6306
    %v6351 = vunpack.c.l.b16 %v6307
    %v6352 = vunpack.c.l.b16 %v6308
    %v6353 = vunpack.c.l.b16 %v6309
    %v6354 = vunpack.c.l.b16 %v6310
    %v6355 = vunpack.c.l.b16 %v6311
    %v6356 = vunpack.c.l.b16 %v6312
    %v6357 = vunpack.c.l.b16 %v6313
    %v6358 = vunpack.c.l.b16 %v6314
    %v6359 = vunpack.c.l.b16 %v6315
    %v6360 = vunpack.c.l.b16 %v6316
    %v6361 = vunpack.c.l.b16 %v6317
    %v6362 = vpack.c.b16 %v6347, %v6346
    %v6363 = vpack.c.b16 %v6349, %v6348
    %v6364 = vpack.c.b16 %v6351, %v6350
    %v6365 = vpack.c.b16 %v6353, %v6352
    %v6366 = vpack.c.b16 %v6355, %v6354
    %v6367 = vpack.c.b16 %v6357, %v6356
    %v6368 = vpack.c.b16 %v6359, %v6358
    %v6369 = vpack.c.b16 %v6361, %v6360
    %6378 = vmatprep.subr.bf16.mxu0 0
    %6379 = vmatpush1.bf16.msra.mxu0 %v6369
    %6380 = vmatprep.subr.bf16.mxu0 0
    %6381 = vmatpush1.bf16.msra.mxu0 %v6368
    %6382 = vmatprep.subr.bf16.mxu0 0
    %6383 = vmatpush1.bf16.msra.mxu0 %v6367
    %6384 = vmatprep.subr.bf16.mxu0 0
    %6385 = vmatpush1.bf16.msra.mxu0 %v6366
    %6386 = vmatprep.subr.bf16.mxu0 0
    %6387 = vmatpush1.bf16.msra.mxu0 %v6365
    %6388 = vmatprep.subr.bf16.mxu0 0
    %6389 = vmatpush1.bf16.msra.mxu0 %v6364
    %6390 = vmatprep.subr.bf16.mxu0 0
    %6391 = vmatpush1.bf16.msra.mxu0 %v6363
    %6392 = vmatprep.subr.bf16.mxu0 0
    %6393 = vmatpush1.bf16.msra.mxu0 %v6362
    %6394 = vmatprep.subr.bf16.mxu0 0
    %6395 = vmatpush2.bf16.msra.mxu0 0
    %6396 = vmatprep.subr.bf16.mxu0 0
    %6397 = vmatpush2.bf16.msra.mxu0 0
    %6398 = vmatprep.subr.bf16.mxu0 0
    %6399 = vmatpush2.bf16.msra.mxu0 0
    %6400 = vmatprep.subr.bf16.mxu0 0
    %6401 = vmatpush2.bf16.msra.mxu0 0
    %6402 = vmatprep.subr.bf16.mxu0 0
    %6403 = vmatpush2.bf16.msra.mxu0 0
    %6404 = vmatprep.subr.bf16.mxu0 0
    %6405 = vmatpush2.bf16.msra.mxu0 0
    %6406 = vmatprep.subr.bf16.mxu0 0
    %6407 = vmatpush2.bf16.msra.mxu0 0
    %6408 = vmatprep.subr.bf16.mxu0 0
    %6409 = vmatpush2.bf16.msra.mxu0 0
    %6410 = vmatprep.mubr.bf16.mxu0 0
    %6411 = vmatmul.mubr.bf16.gmra.mxu0 %v6318
    %v6412 = vpop.f32.mrf.mxu0
    %v6413 = vadd.f32 %v6329, %v6412
    %v6414 = vpop.f32.mrf.mxu0
    %v6415 = vpop.f32.mrf.mxu0
    %v6416 = vadd.f32 %v6329, %v6415
    %v6417 = vpop.f32.mrf.mxu0
    %6418 = vmatprep.mubr.bf16.mxu0 0
    %6419 = vmatmul.mubr.bf16.gmra.mxu0 %v6319
    %v6420 = vpop.f32.mrf.mxu0
    %v6421 = vadd.f32 %v6329, %v6420
    %v6422 = vpop.f32.mrf.mxu0
    %v6423 = vpop.f32.mrf.mxu0
    %v6424 = vadd.f32 %v6329, %v6423
    %v6425 = vpop.f32.mrf.mxu0
    %6426 = vmatprep.mubr.bf16.mxu0 0
    %6427 = vmatmul.mubr.bf16.gmra.mxu0 %v6320
    %v6428 = vpop.f32.mrf.mxu0
    %v6429 = vadd.f32 %v6329, %v6428
    %v6430 = vpop.f32.mrf.mxu0
    %v6431 = vpop.f32.mrf.mxu0
    %v6432 = vadd.f32 %v6329, %v6431
    %v6433 = vpop.f32.mrf.mxu0
    %6434 = vmatprep.mubr.bf16.mxu0 0
    %6435 = vmatmul.mubr.bf16.gmra.mxu0 %v6321
    %v6436 = vpop.f32.mrf.mxu0
    %v6437 = vadd.f32 %v6329, %v6436
    %v6438 = vpop.f32.mrf.mxu0
    %v6439 = vpop.f32.mrf.mxu0
    %v6440 = vadd.f32 %v6329, %v6439
    %v6441 = vpop.f32.mrf.mxu0
    %6442 = vmatprep.mubr.bf16.mxu0 0
    %6443 = vmatmul.mubr.bf16.gmra.mxu0 %v6322
    %v6444 = vpop.f32.mrf.mxu0
    %v6445 = vadd.f32 %v6329, %v6444
    %v6446 = vpop.f32.mrf.mxu0
    %v6447 = vpop.f32.mrf.mxu0
    %v6448 = vadd.f32 %v6329, %v6447
    %v6449 = vpop.f32.mrf.mxu0
    %6450 = vmatprep.mubr.bf16.mxu0 0
    %6451 = vmatmul.mubr.bf16.gmra.mxu0 %v6323
    %v6452 = vpop.f32.mrf.mxu0
    %v6453 = vadd.f32 %v6329, %v6452
    %v6454 = vpop.f32.mrf.mxu0
    %v6455 = vpop.f32.mrf.mxu0
    %v6456 = vadd.f32 %v6329, %v6455
    %v6457 = vpop.f32.mrf.mxu0
    %6458 = vmatprep.mubr.bf16.mxu0 0
    %6459 = vmatmul.mubr.bf16.gmra.mxu0 %v6324
    %v6460 = vpop.f32.mrf.mxu0
    %v6461 = vadd.f32 %v6329, %v6460
    %v6462 = vpop.f32.mrf.mxu0
    %v6463 = vpop.f32.mrf.mxu0
    %v6464 = vadd.f32 %v6329, %v6463
    %v6465 = vpop.f32.mrf.mxu0
    %6466 = vmatprep.mubr.bf16.mxu0 0
    %6467 = vmatmul.mubr.bf16.gmra.mxu0 %v6325
    %v6468 = vpop.f32.mrf.mxu0
    %v6469 = vadd.f32 %v6329, %v6468
    %v6470 = vpop.f32.mrf.mxu0
    %v6471 = vpop.f32.mrf.mxu0
    %v6472 = vadd.f32 %v6329, %v6471
    %v6473 = vpop.f32.mrf.mxu0
    %6474 = vdwg.mxu0
    %v6475 = vlaneseq
    %v6476 = vand.u32 %v6475, 127
    %vm6477 = vcmp.lt.s32.totalorder %v6476, 10
    %v6478 = vsel %vm6477, %v6413, -1e+30
    %v6479 = vsel %vm6477, %v6416, -1e+30
    %v6480 = vsel %vm6477, %v6421, -1e+30
    %v6481 = vsel %vm6477, %v6424, -1e+30
    %v6482 = vsel %vm6477, %v6429, -1e+30
    %v6483 = vsel %vm6477, %v6432, -1e+30
    %v6484 = vsel %vm6477, %v6437, -1e+30
    %v6485 = vsel %vm6477, %v6440, -1e+30
    %v6486 = vsel %vm6477, %v6445, -1e+30
    %v6487 = vsel %vm6477, %v6448, -1e+30
    %v6488 = vsel %vm6477, %v6453, -1e+30
    %v6489 = vsel %vm6477, %v6456, -1e+30
    %v6490 = vsel %vm6477, %v6461, -1e+30
    %v6491 = vsel %vm6477, %v6464, -1e+30
    %v6492 = vsel %vm6477, %v6469, -1e+30
    %v6493 = vsel %vm6477, %v6472, -1e+30
    %6494 = vmax.xlane.f32.xlu0 %v6478
    %v6495 = vpop.xlane.xlu0 %6494
    %6496 = vmax.xlane.f32.xlu0 %v6479
    %v6497 = vpop.xlane.xlu0 %6496
    %6498 = vmax.xlane.f32.xlu0 %v6480
    %v6499 = vpop.xlane.xlu0 %6498
    %6500 = vmax.xlane.f32.xlu0 %v6481
    %v6501 = vpop.xlane.xlu0 %6500
    %6502 = vmax.xlane.f32.xlu0 %v6482
    %v6503 = vpop.xlane.xlu0 %6502
    %6504 = vmax.xlane.f32.xlu0 %v6483
    %v6505 = vpop.xlane.xlu0 %6504
    %6506 = vmax.xlane.f32.xlu0 %v6484
    %v6507 = vpop.xlane.xlu0 %6506
    %6508 = vmax.xlane.f32.xlu0 %v6485
    %v6509 = vpop.xlane.xlu0 %6508
    %6510 = vmax.xlane.f32.xlu0 %v6486
    %v6511 = vpop.xlane.xlu0 %6510
    %6512 = vmax.xlane.f32.xlu0 %v6487
    %v6513 = vpop.xlane.xlu0 %6512
    %6514 = vmax.xlane.f32.xlu0 %v6488
    %v6515 = vpop.xlane.xlu0 %6514
    %6516 = vmax.xlane.f32.xlu0 %v6489
    %v6517 = vpop.xlane.xlu0 %6516
    %6518 = vmax.xlane.f32.xlu0 %v6490
    %v6519 = vpop.xlane.xlu0 %6518
    %6520 = vmax.xlane.f32.xlu0 %v6491
    %v6521 = vpop.xlane.xlu0 %6520
    %6522 = vmax.xlane.f32.xlu0 %v6492
    %v6523 = vpop.xlane.xlu0 %6522
    %6524 = vmax.xlane.f32.xlu0 %v6493
    %v6525 = vpop.xlane.xlu0 %6524
    %v6526 = vsub.f32 %v6478, %v6495
    %v6527 = vsub.f32 %v6479, %v6497
    %v6528 = vsub.f32 %v6480, %v6499
    %v6529 = vsub.f32 %v6481, %v6501
    %v6530 = vsub.f32 %v6482, %v6503
    %v6531 = vsub.f32 %v6483, %v6505
    %v6532 = vsub.f32 %v6484, %v6507
    %v6533 = vsub.f32 %v6485, %v6509
    %v6534 = vsub.f32 %v6486, %v6511
    %v6535 = vsub.f32 %v6487, %v6513
    %v6536 = vsub.f32 %v6488, %v6515
    %v6537 = vsub.f32 %v6489, %v6517
    %v6538 = vsub.f32 %v6490, %v6519
    %v6539 = vsub.f32 %v6491, %v6521
    %v6540 = vsub.f32 %v6492, %v6523
    %v6541 = vsub.f32 %v6493, %v6525
    %v6542 = vmul.f32 %v6526, 1.442695
    %v6543 = vpow.pop %v6542
    %v6544 = vmul.f32 %v6527, 1.442695
    %v6545 = vpow.pop %v6544
    %v6546 = vmul.f32 %v6528, 1.442695
    %v6547 = vpow.pop %v6546
    %v6548 = vmul.f32 %v6529, 1.442695
    %v6549 = vpow.pop %v6548
    %v6550 = vmul.f32 %v6530, 1.442695
    %v6551 = vpow.pop %v6550
    %v6552 = vmul.f32 %v6531, 1.442695
    %v6553 = vpow.pop %v6552
    %v6554 = vmul.f32 %v6532, 1.442695
    %v6555 = vpow.pop %v6554
    %v6556 = vmul.f32 %v6533, 1.442695
    %v6557 = vpow.pop %v6556
    %v6558 = vmul.f32 %v6534, 1.442695
    %v6559 = vpow.pop %v6558
    %v6560 = vmul.f32 %v6535, 1.442695
    %v6561 = vpow.pop %v6560
    %v6562 = vmul.f32 %v6536, 1.442695
    %v6563 = vpow.pop %v6562
    %v6564 = vmul.f32 %v6537, 1.442695
    %v6565 = vpow.pop %v6564
    %v6566 = vmul.f32 %v6538, 1.442695
    %v6567 = vpow.pop %v6566
    %v6568 = vmul.f32 %v6539, 1.442695
    %v6569 = vpow.pop %v6568
    %v6570 = vmul.f32 %v6540, 1.442695
    %v6571 = vpow.pop %v6570
    %v6572 = vmul.f32 %v6541, 1.442695
    %v6573 = vpow.pop %v6572
    %6574 = vadd.xlane.f32.xlu0 %v6543
    %v6575 = vpop.xlane.xlu0 %6574
    %6576 = vadd.xlane.f32.xlu0 %v6545
    %v6577 = vpop.xlane.xlu0 %6576
    %6578 = vadd.xlane.f32.xlu0 %v6547
    %v6579 = vpop.xlane.xlu0 %6578
    %6580 = vadd.xlane.f32.xlu0 %v6549
    %v6581 = vpop.xlane.xlu0 %6580
    %6582 = vadd.xlane.f32.xlu0 %v6551
    %v6583 = vpop.xlane.xlu0 %6582
    %6584 = vadd.xlane.f32.xlu0 %v6553
    %v6585 = vpop.xlane.xlu0 %6584
    %6586 = vadd.xlane.f32.xlu0 %v6555
    %v6587 = vpop.xlane.xlu0 %6586
    %6588 = vadd.xlane.f32.xlu0 %v6557
    %v6589 = vpop.xlane.xlu0 %6588
    %6590 = vadd.xlane.f32.xlu0 %v6559
    %v6591 = vpop.xlane.xlu0 %6590
    %6592 = vadd.xlane.f32.xlu0 %v6561
    %v6593 = vpop.xlane.xlu0 %6592
    %6594 = vadd.xlane.f32.xlu0 %v6563
    %v6595 = vpop.xlane.xlu0 %6594
    %6596 = vadd.xlane.f32.xlu0 %v6565
    %v6597 = vpop.xlane.xlu0 %6596
    %6598 = vadd.xlane.f32.xlu0 %v6567
    %v6599 = vpop.xlane.xlu0 %6598
    %6600 = vadd.xlane.f32.xlu0 %v6569
    %v6601 = vpop.xlane.xlu0 %6600
    %6602 = vadd.xlane.f32.xlu0 %v6571
    %v6603 = vpop.xlane.xlu0 %6602
    %6604 = vadd.xlane.f32.xlu0 %v6573
    %v6605 = vpop.xlane.xlu0 %6604
    %v6606 = vlog2.pop %v6575
    %v6607 = vmul.f32 %v6606, 0.6931472
    %v6608 = vlog2.pop %v6577
    %v6609 = vmul.f32 %v6608, 0.6931472
    %v6610 = vlog2.pop %v6579
    %v6611 = vmul.f32 %v6610, 0.6931472
    %v6612 = vlog2.pop %v6581
    %v6613 = vmul.f32 %v6612, 0.6931472
    %v6614 = vlog2.pop %v6583
    %v6615 = vmul.f32 %v6614, 0.6931472
    %v6616 = vlog2.pop %v6585
    %v6617 = vmul.f32 %v6616, 0.6931472
    %v6618 = vlog2.pop %v6587
    %v6619 = vmul.f32 %v6618, 0.6931472
    %v6620 = vlog2.pop %v6589
    %v6621 = vmul.f32 %v6620, 0.6931472
    %v6622 = vlog2.pop %v6591
    %v6623 = vmul.f32 %v6622, 0.6931472
    %v6624 = vlog2.pop %v6593
    %v6625 = vmul.f32 %v6624, 0.6931472
    %v6626 = vlog2.pop %v6595
    %v6627 = vmul.f32 %v6626, 0.6931472
    %v6628 = vlog2.pop %v6597
    %v6629 = vmul.f32 %v6628, 0.6931472
    %v6630 = vlog2.pop %v6599
    %v6631 = vmul.f32 %v6630, 0.6931472
    %v6632 = vlog2.pop %v6601
    %v6633 = vmul.f32 %v6632, 0.6931472
    %v6634 = vlog2.pop %v6603
    %v6635 = vmul.f32 %v6634, 0.6931472
    %v6636 = vlog2.pop %v6605
    %v6637 = vmul.f32 %v6636, 0.6931472
    %v6638 = vsub.f32 %v6526, %v6607
    %v6639 = vsub.f32 %v6527, %v6609
    %v6640 = vsub.f32 %v6528, %v6611
    %v6641 = vsub.f32 %v6529, %v6613
    %v6642 = vsub.f32 %v6530, %v6615
    %v6643 = vsub.f32 %v6531, %v6617
    %v6644 = vsub.f32 %v6532, %v6619
    %v6645 = vsub.f32 %v6533, %v6621
    %v6646 = vsub.f32 %v6534, %v6623
    %v6647 = vsub.f32 %v6535, %v6625
    %v6648 = vsub.f32 %v6536, %v6627
    %v6649 = vsub.f32 %v6537, %v6629
    %v6650 = vsub.f32 %v6538, %v6631
    %v6651 = vsub.f32 %v6539, %v6633
    %v6652 = vsub.f32 %v6540, %v6635
    %v6653 = vsub.f32 %v6541, %v6637
    %6654 = vst [vmem:[%s9] sm:$0xff] %v6638
    %6655 = vst [vmem:[%s9 + $0x8] sm:$0xff] %v6639
    %6656 = vst [vmem:[%s9 + $0x10] sm:$0xff] %v6640
    %6657 = vst [vmem:[%s9 + $0x18] sm:$0xff] %v6641
    %6658 = vst [vmem:[%s9 + $0x20] sm:$0xff] %v6642
    %6659 = vst [vmem:[%s9 + $0x28] sm:$0xff] %v6643
    %6660 = vst [vmem:[%s9 + $0x30] sm:$0xff] %v6644
    %6661 = vst [vmem:[%s9 + $0x38] sm:$0xff] %v6645
    %6662 = vst [vmem:[%s9 + $0x40] sm:$0xff] %v6646
    %6663 = vst [vmem:[%s9 + $0x48] sm:$0xff] %v6647
    %6664 = vst [vmem:[%s9 + $0x50] sm:$0xff] %v6648
    %6665 = vst [vmem:[%s9 + $0x58] sm:$0xff] %v6649
    %6666 = vst [vmem:[%s9 + $0x60] sm:$0xff] %v6650
    %6667 = vst [vmem:[%s9 + $0x68] sm:$0xff] %v6651
    %6668 = vst [vmem:[%s9 + $0x70] sm:$0xff] %v6652
    %6669 = vst [vmem:[%s9 + $0x78] sm:$0xff] %v6653
    // Predicated region
    $region62: #{fc_classifier_forward.1} parent=1 // pred_check
      _
    $region63: #{fc_classifier_forward.1} parent=1 // pred_check_branch
      %6671 = sbr.rel (0) target = $region65
    $region64: #{fc_classifier_forward.1} parent=1 // pred_region
      _
    $region65: #{fc_classifier_forward.1} parent=1 // pred_fallthru
      _
    // Predicated region
    $region66: #{fc_classifier_forward.1} parent=1 // pred_check
      _
    $region67: #{fc_classifier_forward.1} parent=1 // pred_check_branch
      %6673 = sbr.rel (0) target = $region69
    $region68: #{fc_classifier_forward.1} parent=1 // pred_region
      _
    $region69: #{fc_classifier_forward.1} parent=1 // pred_fallthru
      _
    %6674 = vsyncpa [#allocation3], 1
    %6675 = vsyncpa [#allocation5], 1
    %6676 = vsyncpa [#allocation8], 1
    %6677 = vsyncpa [#allocation11], 1

</llo_original>
